<compile_context>
chip_gen: v7x
topology: tpu7x:2x2x1
jax: 0.10.0
libtpu: 0.0.40
codegen_flags: <defaults>
</compile_context>

<pallas_src>
import math

import numpy as np
import jax
import jax.numpy as jnp
from jax import lax
from jax.experimental import pallas as pl
from jax.experimental.pallas import tpu as pltpu

D_MODEL = 128                 # fixed by nn.TransformerEncoderLayer(d_model=128, ...)
N_HEAD = 4
HEAD_DIM = D_MODEL // N_HEAD
FFN_DIM = 2048                # PyTorch default dim_feedforward
N_LAYERS = 2
LN_EPS = 1e-5
PE_MAX_LEN = 500              # positional-encoding table length (matches module)
MAX_LEN = 63                  # truncation/padding length (500 in module; small here)
SEQ = MAX_LEN + 1             # +1 for prepended BOS token
NEG_BIG = -1e30               # additive key-padding bias (finite: NaN-proof softmax)


# ----------------------------- fused Pallas kernel -----------------------------

def _encoder_kernel(x_ref, bias_ref,
                    w_in_ref, b_in_ref, w_out_ref, b_out_ref,
                    w_ff1_ref, b_ff1_ref, w_ff2_ref, b_ff2_ref,
                    ln1_g_ref, ln1_b_ref, ln2_g_ref, ln2_b_ref,
                    fc_w_ref, fc_b_ref, o_ref):
    """One grid step = one batch element: full 2-layer encoder + BOS fc."""
    x = x_ref[0]                       # (S, D) f32, already emb*sqrt(D) + PE
    bias = bias_ref[0]                 # (1, S) f32 additive key-padding bias

    def layernorm(y, g, b):
        mean = jnp.mean(y, axis=-1, keepdims=True)
        yc = y - mean
        var = jnp.mean(yc * yc, axis=-1, keepdims=True)
        return yc * lax.rsqrt(var + LN_EPS) * g + b

    def dot_f32(a, w_bf16):            # bf16 MXU op, f32 accumulation
        return jnp.dot(a.astype(jnp.bfloat16), w_bf16,
                       preferred_element_type=jnp.float32)

    scale = 1.0 / math.sqrt(HEAD_DIM)

    for l in range(N_LAYERS):          # static unroll, weights stay in VMEM
        # ---------------- self attention (all heads in one step) ----------------
        qkv = dot_f32(x, w_in_ref[l]) + b_in_ref[l]          # (S, 3D) f32
        q = qkv[:, :D_MODEL] * scale                         # scale folded once
        k = qkv[:, D_MODEL:2 * D_MODEL]
        v = qkv[:, 2 * D_MODEL:]
        heads = []
        for h in range(N_HEAD):
            sl = slice(h * HEAD_DIM, (h + 1) * HEAD_DIM)
            qh = q[:, sl].astype(jnp.bfloat16)               # (S, Dh)
            kh = k[:, sl].astype(jnp.bfloat16)
            vh = v[:, sl].astype(jnp.bfloat16)
            # 'qd,kd->qk' : contract minor dims, no materialized transpose.
            s = lax.dot_general(qh, kh, (((1,), (1,)), ((), ())),
                                preferred_element_type=jnp.float32)   # (S, S)
            s = s + bias
            m = jnp.max(s, axis=-1, keepdims=True)
            e = jnp.exp(s - m)
            p = e * pl.reciprocal(jnp.sum(e, axis=-1, keepdims=True), approx=True)
            heads.append(jnp.dot(p.astype(jnp.bfloat16), vh,
                                 preferred_element_type=jnp.float32))  # (S, Dh)
        attn = jnp.concatenate(heads, axis=-1)                          # (S, D)
        attn = dot_f32(attn, w_out_ref[l]) + b_out_ref[l]
        x = layernorm(x + attn, ln1_g_ref[l], ln1_b_ref[l])             # norm1

        # ---------------- feed forward ----------------
        hdn = jnp.maximum(dot_f32(x, w_ff1_ref[l]) + b_ff1_ref[l], 0.0)  # (S, F)
        ff = dot_f32(hdn, w_ff2_ref[l]) + b_ff2_ref[l]                   # (S, D)
        x = layernorm(x + ff, ln2_g_ref[l], ln2_b_ref[l])                # norm2

    # ---------------- BOS row -> final fc (fused) ----------------
    bos = x[0:1, :]                                                      # (1, D)
    out = dot_f32(bos, fc_w_ref[...]) + fc_b_ref[...]
    o_ref[0] = out.astype(o_ref.dtype)


def _const_spec(shape):
    """Full-array block, constant index map (loaded once, VMEM-resident)."""
    nd = len(shape)
    return pl.BlockSpec(shape, lambda b, _nd=nd: (0,) * _nd)


# ----------------------------- parameters / glue -----------------------------

def build_pe_table(max_len, dim):
    pos = jnp.arange(max_len, dtype=jnp.float32)[:, None]
    div = jnp.exp(jnp.arange(0, dim, 2, dtype=jnp.float32) * (-math.log(10000.0) / dim))
    ang = pos * div
    # interleave sin (even cols) / cos (odd cols)
    return jnp.stack([jnp.sin(ang), jnp.cos(ang)], axis=-1).reshape(max_len, dim)


def init_params(key, vocab_size, embedding_dim=D_MODEL):
    ks = jax.random.split(key, 6)
    s = 0.02
    emb = jax.random.normal(ks[0], (vocab_size + 2, embedding_dim), jnp.float32)
    emb = emb.at[0].set(0.0)                                # padding_idx=0
    L, D, F = N_LAYERS, embedding_dim, FFN_DIM

    def w(k, shape):                                        # bf16 matmul weights
        return (jax.random.normal(k, shape, jnp.float32) * s).astype(jnp.bfloat16)

    return dict(
        embedding=emb,
        w_in=w(ks[1], (L, D, 3 * D)),  b_in=jnp.zeros((L, 1, 3 * D), jnp.float32),
        w_out=w(ks[2], (L, D, D)),     b_out=jnp.zeros((L, 1, D), jnp.float32),
        w_ff1=w(ks[3], (L, D, F)),     b_ff1=jnp.zeros((L, 1, F), jnp.float32),
        w_ff2=w(ks[4], (L, F, D)),     b_ff2=jnp.zeros((L, 1, D), jnp.float32),
        ln1_g=jnp.ones((L, 1, D), jnp.float32),  ln1_b=jnp.zeros((L, 1, D), jnp.float32),
        ln2_g=jnp.ones((L, 1, D), jnp.float32),  ln2_b=jnp.zeros((L, 1, D), jnp.float32),
        fc_w=w(ks[5], (D, D)),         fc_b=jnp.zeros((1, D), jnp.float32),
    )


def preprocess(x, max_len=MAX_LEN):
    """Replicates the module's Python-side padding/truncation + BOS prepend."""
    seq = []
    for docstring in x:
        if len(docstring) > max_len:
            seq.append(list(docstring[:max_len]))
        else:
            seq.append(np.pad(np.array(docstring), (0, max_len - len(docstring)),
                              'constant', constant_values=-2).tolist())
    encodes = np.asarray(seq, dtype=np.int32)
    bos = np.ones((encodes.shape[0], 1), dtype=np.int32)
    return jnp.asarray(np.concatenate([bos, encodes + 2], axis=1))   # (B, SEQ)


@jax.jit
def transformer_encoder_forward(params, pe_table, inputs):
    # inputs: (B, S) int32 token ids; 0 == padding token
    B, S = inputs.shape
    D = D_MODEL

    # key-padding mask -> additive bias (lane-last layout (B, 1, S))
    bias = jnp.where(inputs == 0, NEG_BIG, 0.0).astype(jnp.float32).reshape(B, 1, S)

    # embedding gather; positional encoding fused into the gather epilogue.
    # NOTE: bug-for-bug with the reference module, the PE row is indexed by the
    # *batch* position (pe[:emb.size(0)] is applied to a batch-first tensor),
    # not by sequence position.
    emb = jnp.take(params["embedding"], inputs, axis=0)              # (B, S, D) f32
    x0 = emb * math.sqrt(D) + pe_table[:B][:, None, :]               # (B, S, D) f32

    p = params
    out = pl.pallas_call(
        _encoder_kernel,
        out_shape=jax.ShapeDtypeStruct((B, 1, D), jnp.float32),
        grid=(B,),
        in_specs=[
            pl.BlockSpec((1, S, D), lambda b: (b, 0, 0)),            # per-batch tokens
            pl.BlockSpec((1, 1, S), lambda b: (b, 0, 0)),            # per-batch key bias
            _const_spec(p["w_in"].shape),  _const_spec(p["b_in"].shape),
            _const_spec(p["w_out"].shape), _const_spec(p["b_out"].shape),
            _const_spec(p["w_ff1"].shape), _const_spec(p["b_ff1"].shape),
            _const_spec(p["w_ff2"].shape), _const_spec(p["b_ff2"].shape),
            _const_spec(p["ln1_g"].shape), _const_spec(p["ln1_b"].shape),
            _const_spec(p["ln2_g"].shape), _const_spec(p["ln2_b"].shape),
            _const_spec(p["fc_w"].shape),  _const_spec(p["fc_b"].shape),
        ],
        out_specs=pl.BlockSpec((1, 1, D), lambda b: (b, 0, 0)),
        compiler_params=pltpu.CompilerParams(
            dimension_semantics=("parallel",)),                      # v7x: 2nd TC
    )(x0, bias,
      p["w_in"], p["b_in"], p["w_out"], p["b_out"],
      p["w_ff1"], p["b_ff1"], p["w_ff2"], p["b_ff2"],
      p["ln1_g"], p["ln1_b"], p["ln2_g"], p["ln2_b"],
      p["fc_w"], p["fc_b"])
    return out.reshape(B, D)


# TODO(synk): dropout layers (p=0.2 / p=0.1) are intentionally identity (eval mode).

if __name__ == "__main__":
    key = jax.random.PRNGKey(0)
    vocab_size = 50
    params = init_params(key, vocab_size)
    pe_table = build_pe_table(PE_MAX_LEN, D_MODEL)

    # two "docstrings" of different lengths (one longer than MAX_LEN -> truncated)
    rng = np.random.RandomState(0)
    doc0 = rng.randint(0, vocab_size, size=20).tolist()
    doc1 = rng.randint(0, vocab_size, size=90).tolist()
    inputs = preprocess([doc0, doc1])                           # (2, 64) int32

    out = transformer_encoder_forward(params, pe_table, inputs)
    out = jax.block_until_ready(out)
    assert out.shape == (2, D_MODEL), out.shape
    assert bool(jnp.all(jnp.isfinite(out)))
    print("KERNEL_OK")
</pallas_src>

<mosaic_0001>
module attributes {stable_mosaic.version = 11 : i64} {
  func.func @_encoder_kernel(%arg0: i32, %arg1: memref<1x64x128xf32, #tpu.memory_space<vmem>>, %arg2: memref<1x1x64xf32, #tpu.memory_space<vmem>>, %arg3: memref<2x128x384xbf16, #tpu.memory_space<vmem>>, %arg4: memref<2x1x384xf32, #tpu.memory_space<vmem>>, %arg5: memref<2x128x128xbf16, #tpu.memory_space<vmem>>, %arg6: memref<2x1x128xf32, #tpu.memory_space<vmem>>, %arg7: memref<2x128x2048xbf16, #tpu.memory_space<vmem>>, %arg8: memref<2x1x2048xf32, #tpu.memory_space<vmem>>, %arg9: memref<2x2048x128xbf16, #tpu.memory_space<vmem>>, %arg10: memref<2x1x128xf32, #tpu.memory_space<vmem>>, %arg11: memref<2x1x128xf32, #tpu.memory_space<vmem>>, %arg12: memref<2x1x128xf32, #tpu.memory_space<vmem>>, %arg13: memref<2x1x128xf32, #tpu.memory_space<vmem>>, %arg14: memref<2x1x128xf32, #tpu.memory_space<vmem>>, %arg15: memref<128x128xbf16, #tpu.memory_space<vmem>>, %arg16: memref<1x128xf32, #tpu.memory_space<vmem>>, %arg17: memref<1x1x128xf32, #tpu.memory_space<vmem>>) attributes {dimension_semantics = [#tpu.dimension_semantics<parallel>], iteration_bounds = array<i64: 2>, scalar_prefetch = 0 : i64, scratch_operands = 0 : i64, tpu.core_type = #tpu.core_type<tc>, window_params = [{transform_indices = @transform_0, window_bounds = array<i64: 1, 64, 128>}, {transform_indices = @transform_1, window_bounds = array<i64: 1, 1, 64>}, {pipeline_mode = #tpu.pipeline_mode<synchronous>, transform_indices = @transform_2, window_bounds = array<i64: 2, 128, 384>}, {pipeline_mode = #tpu.pipeline_mode<synchronous>, transform_indices = @transform_3, window_bounds = array<i64: 2, 1, 384>}, {pipeline_mode = #tpu.pipeline_mode<synchronous>, transform_indices = @transform_4, window_bounds = array<i64: 2, 128, 128>}, {pipeline_mode = #tpu.pipeline_mode<synchronous>, transform_indices = @transform_5, window_bounds = array<i64: 2, 1, 128>}, {pipeline_mode = #tpu.pipeline_mode<synchronous>, transform_indices = @transform_6, window_bounds = array<i64: 2, 128, 2048>}, {pipeline_mode = #tpu.pipeline_mode<synchronous>, transform_indices = @transform_7, window_bounds = array<i64: 2, 1, 2048>}, {pipeline_mode = #tpu.pipeline_mode<synchronous>, transform_indices = @transform_8, window_bounds = array<i64: 2, 2048, 128>}, {pipeline_mode = #tpu.pipeline_mode<synchronous>, transform_indices = @transform_9, window_bounds = array<i64: 2, 1, 128>}, {pipeline_mode = #tpu.pipeline_mode<synchronous>, transform_indices = @transform_10, window_bounds = array<i64: 2, 1, 128>}, {pipeline_mode = #tpu.pipeline_mode<synchronous>, transform_indices = @transform_11, window_bounds = array<i64: 2, 1, 128>}, {pipeline_mode = #tpu.pipeline_mode<synchronous>, transform_indices = @transform_12, window_bounds = array<i64: 2, 1, 128>}, {pipeline_mode = #tpu.pipeline_mode<synchronous>, transform_indices = @transform_13, window_bounds = array<i64: 2, 1, 128>}, {pipeline_mode = #tpu.pipeline_mode<synchronous>, transform_indices = @transform_14, window_bounds = array<i64: 128, 128>}, {pipeline_mode = #tpu.pipeline_mode<synchronous>, transform_indices = @transform_15, window_bounds = array<i64: 1, 128>}, {transform_indices = @transform_16, window_bounds = array<i64: 1, 1, 128>}]} {
    %c0 = arith.constant 0 : index
    %c0_0 = arith.constant 0 : index
    %c0_1 = arith.constant 0 : index
    %0 = vector.load %arg1[%c0, %c0_0, %c0_1] : memref<1x64x128xf32, #tpu.memory_space<vmem>>, vector<1x64x128xf32>
    %1 = vector.shape_cast %0 : vector<1x64x128xf32> to vector<64x128xf32>
    %c0_2 = arith.constant 0 : index
    %c0_3 = arith.constant 0 : index
    %c0_4 = arith.constant 0 : index
    %2 = vector.load %arg2[%c0_2, %c0_3, %c0_4] : memref<1x1x64xf32, #tpu.memory_space<vmem>>, vector<1x1x64xf32>
    %3 = vector.shape_cast %2 : vector<1x1x64xf32> to vector<1x64xf32>
    %c0_5 = arith.constant 0 : index
    %c0_6 = arith.constant 0 : index
    %c0_7 = arith.constant 0 : index
    %4 = vector.load %arg3[%c0_5, %c0_6, %c0_7] : memref<2x128x384xbf16, #tpu.memory_space<vmem>>, vector<1x128x384xbf16>
    %5 = vector.shape_cast %4 : vector<1x128x384xbf16> to vector<128x384xbf16>
    %6 = arith.truncf %1 : vector<64x128xf32> to vector<64x128xbf16>
    %cst = arith.constant dense<0.000000e+00> : vector<64x384xf32>
    %7 = tpu.matmul %6, %5, %cst {dimension_numbers = #tpu.dot_dimension_numbers<[1], [0], [0], [1], [0, 0, 1, 1], [], []>} : vector<64x128xbf16>, vector<128x384xbf16>, vector<64x384xf32> -> vector<64x384xf32>
    %c0_8 = arith.constant 0 : index
    %c0_9 = arith.constant 0 : index
    %c0_10 = arith.constant 0 : index
    %8 = vector.load %arg4[%c0_8, %c0_9, %c0_10] : memref<2x1x384xf32, #tpu.memory_space<vmem>>, vector<1x1x384xf32>
    %9 = vector.shape_cast %8 : vector<1x1x384xf32> to vector<1x384xf32>
    %10 = vector.broadcast %9 : vector<1x384xf32> to vector<64x384xf32>
    %11 = arith.addf %7, %10 : vector<64x384xf32>
    %12 = vector.extract_strided_slice %11 {offsets = [0, 0], sizes = [64, 128], strides = [1, 1]} : vector<64x384xf32> to vector<64x128xf32>
    %cst_11 = arith.constant 0.176776692 : f32
    %13 = vector.broadcast %cst_11 : f32 to vector<64x128xf32>
    %14 = arith.mulf %12, %13 : vector<64x128xf32>
    %15 = vector.extract_strided_slice %11 {offsets = [0, 128], sizes = [64, 128], strides = [1, 1]} : vector<64x384xf32> to vector<64x128xf32>
    %16 = vector.extract_strided_slice %11 {offsets = [0, 256], sizes = [64, 128], strides = [1, 1]} : vector<64x384xf32> to vector<64x128xf32>
    %17 = vector.extract_strided_slice %14 {offsets = [0, 0], sizes = [64, 32], strides = [1, 1]} : vector<64x128xf32> to vector<64x32xf32>
    %18 = arith.truncf %17 : vector<64x32xf32> to vector<64x32xbf16>
    %19 = vector.extract_strided_slice %15 {offsets = [0, 0], sizes = [64, 32], strides = [1, 1]} : vector<64x128xf32> to vector<64x32xf32>
    %20 = arith.truncf %19 : vector<64x32xf32> to vector<64x32xbf16>
    %21 = vector.extract_strided_slice %16 {offsets = [0, 0], sizes = [64, 32], strides = [1, 1]} : vector<64x128xf32> to vector<64x32xf32>
    %22 = arith.truncf %21 : vector<64x32xf32> to vector<64x32xbf16>
    %cst_12 = arith.constant dense<0.000000e+00> : vector<64x64xf32>
    %23 = tpu.matmul %18, %20, %cst_12 {dimension_numbers = #tpu.dot_dimension_numbers<[1], [1], [0], [0], [0, 0, 1, 0], [], []>} : vector<64x32xbf16>, vector<64x32xbf16>, vector<64x64xf32> -> vector<64x64xf32>
    %24 = vector.broadcast %3 : vector<1x64xf32> to vector<64x64xf32>
    %25 = arith.addf %23, %24 : vector<64x64xf32>
    %cst_13 = arith.constant dense<0xFF800000> : vector<64xf32>
    %26 = vector.multi_reduction <maximumf>, %25, %cst_13 [1] : vector<64x64xf32> to vector<64xf32>
    %27 = vector.shape_cast %26 : vector<64xf32> to vector<64x1xf32>
    %28 = vector.broadcast %27 : vector<64x1xf32> to vector<64x64xf32>
    %29 = arith.subf %25, %28 : vector<64x64xf32>
    %30 = math.exp %29 : vector<64x64xf32>
    %cst_14 = arith.constant dense<0.000000e+00> : vector<64xf32>
    %31 = vector.multi_reduction <add>, %30, %cst_14 [1] : vector<64x64xf32> to vector<64xf32>
    %32 = vector.shape_cast %31 : vector<64xf32> to vector<64x1xf32>
    %33 = tpu.reciprocal %32 {approx = true} : vector<64x1xf32> -> vector<64x1xf32>
    %34 = vector.broadcast %33 : vector<64x1xf32> to vector<64x64xf32>
    %35 = arith.mulf %30, %34 : vector<64x64xf32>
    %36 = arith.truncf %35 : vector<64x64xf32> to vector<64x64xbf16>
    %cst_15 = arith.constant dense<0.000000e+00> : vector<64x32xf32>
    %37 = tpu.matmul %36, %22, %cst_15 {dimension_numbers = #tpu.dot_dimension_numbers<[1], [0], [0], [1], [0, 0, 1, 1], [], []>} : vector<64x64xbf16>, vector<64x32xbf16>, vector<64x32xf32> -> vector<64x32xf32>
    %38 = vector.extract_strided_slice %14 {offsets = [0, 32], sizes = [64, 32], strides = [1, 1]} : vector<64x128xf32> to vector<64x32xf32>
    %39 = arith.truncf %38 : vector<64x32xf32> to vector<64x32xbf16>
    %40 = vector.extract_strided_slice %15 {offsets = [0, 32], sizes = [64, 32], strides = [1, 1]} : vector<64x128xf32> to vector<64x32xf32>
    %41 = arith.truncf %40 : vector<64x32xf32> to vector<64x32xbf16>
    %42 = vector.extract_strided_slice %16 {offsets = [0, 32], sizes = [64, 32], strides = [1, 1]} : vector<64x128xf32> to vector<64x32xf32>
    %43 = arith.truncf %42 : vector<64x32xf32> to vector<64x32xbf16>
    %cst_16 = arith.constant dense<0.000000e+00> : vector<64x64xf32>
    %44 = tpu.matmul %39, %41, %cst_16 {dimension_numbers = #tpu.dot_dimension_numbers<[1], [1], [0], [0], [0, 0, 1, 0], [], []>} : vector<64x32xbf16>, vector<64x32xbf16>, vector<64x64xf32> -> vector<64x64xf32>
    %45 = vector.broadcast %3 : vector<1x64xf32> to vector<64x64xf32>
    %46 = arith.addf %44, %45 : vector<64x64xf32>
    %cst_17 = arith.constant dense<0xFF800000> : vector<64xf32>
    %47 = vector.multi_reduction <maximumf>, %46, %cst_17 [1] : vector<64x64xf32> to vector<64xf32>
    %48 = vector.shape_cast %47 : vector<64xf32> to vector<64x1xf32>
    %49 = vector.broadcast %48 : vector<64x1xf32> to vector<64x64xf32>
    %50 = arith.subf %46, %49 : vector<64x64xf32>
    %51 = math.exp %50 : vector<64x64xf32>
    %cst_18 = arith.constant dense<0.000000e+00> : vector<64xf32>
    %52 = vector.multi_reduction <add>, %51, %cst_18 [1] : vector<64x64xf32> to vector<64xf32>
    %53 = vector.shape_cast %52 : vector<64xf32> to vector<64x1xf32>
    %54 = tpu.reciprocal %53 {approx = true} : vector<64x1xf32> -> vector<64x1xf32>
    %55 = vector.broadcast %54 : vector<64x1xf32> to vector<64x64xf32>
    %56 = arith.mulf %51, %55 : vector<64x64xf32>
    %57 = arith.truncf %56 : vector<64x64xf32> to vector<64x64xbf16>
    %cst_19 = arith.constant dense<0.000000e+00> : vector<64x32xf32>
    %58 = tpu.matmul %57, %43, %cst_19 {dimension_numbers = #tpu.dot_dimension_numbers<[1], [0], [0], [1], [0, 0, 1, 1], [], []>} : vector<64x64xbf16>, vector<64x32xbf16>, vector<64x32xf32> -> vector<64x32xf32>
    %59 = vector.extract_strided_slice %14 {offsets = [0, 64], sizes = [64, 32], strides = [1, 1]} : vector<64x128xf32> to vector<64x32xf32>
    %60 = arith.truncf %59 : vector<64x32xf32> to vector<64x32xbf16>
    %61 = vector.extract_strided_slice %15 {offsets = [0, 64], sizes = [64, 32], strides = [1, 1]} : vector<64x128xf32> to vector<64x32xf32>
    %62 = arith.truncf %61 : vector<64x32xf32> to vector<64x32xbf16>
    %63 = vector.extract_strided_slice %16 {offsets = [0, 64], sizes = [64, 32], strides = [1, 1]} : vector<64x128xf32> to vector<64x32xf32>
    %64 = arith.truncf %63 : vector<64x32xf32> to vector<64x32xbf16>
    %cst_20 = arith.constant dense<0.000000e+00> : vector<64x64xf32>
    %65 = tpu.matmul %60, %62, %cst_20 {dimension_numbers = #tpu.dot_dimension_numbers<[1], [1], [0], [0], [0, 0, 1, 0], [], []>} : vector<64x32xbf16>, vector<64x32xbf16>, vector<64x64xf32> -> vector<64x64xf32>
    %66 = vector.broadcast %3 : vector<1x64xf32> to vector<64x64xf32>
    %67 = arith.addf %65, %66 : vector<64x64xf32>
    %cst_21 = arith.constant dense<0xFF800000> : vector<64xf32>
    %68 = vector.multi_reduction <maximumf>, %67, %cst_21 [1] : vector<64x64xf32> to vector<64xf32>
    %69 = vector.shape_cast %68 : vector<64xf32> to vector<64x1xf32>
    %70 = vector.broadcast %69 : vector<64x1xf32> to vector<64x64xf32>
    %71 = arith.subf %67, %70 : vector<64x64xf32>
    %72 = math.exp %71 : vector<64x64xf32>
    %cst_22 = arith.constant dense<0.000000e+00> : vector<64xf32>
    %73 = vector.multi_reduction <add>, %72, %cst_22 [1] : vector<64x64xf32> to vector<64xf32>
    %74 = vector.shape_cast %73 : vector<64xf32> to vector<64x1xf32>
    %75 = tpu.reciprocal %74 {approx = true} : vector<64x1xf32> -> vector<64x1xf32>
    %76 = vector.broadcast %75 : vector<64x1xf32> to vector<64x64xf32>
    %77 = arith.mulf %72, %76 : vector<64x64xf32>
    %78 = arith.truncf %77 : vector<64x64xf32> to vector<64x64xbf16>
    %cst_23 = arith.constant dense<0.000000e+00> : vector<64x32xf32>
    %79 = tpu.matmul %78, %64, %cst_23 {dimension_numbers = #tpu.dot_dimension_numbers<[1], [0], [0], [1], [0, 0, 1, 1], [], []>} : vector<64x64xbf16>, vector<64x32xbf16>, vector<64x32xf32> -> vector<64x32xf32>
    %80 = vector.extract_strided_slice %14 {offsets = [0, 96], sizes = [64, 32], strides = [1, 1]} : vector<64x128xf32> to vector<64x32xf32>
    %81 = arith.truncf %80 : vector<64x32xf32> to vector<64x32xbf16>
    %82 = vector.extract_strided_slice %15 {offsets = [0, 96], sizes = [64, 32], strides = [1, 1]} : vector<64x128xf32> to vector<64x32xf32>
    %83 = arith.truncf %82 : vector<64x32xf32> to vector<64x32xbf16>
    %84 = vector.extract_strided_slice %16 {offsets = [0, 96], sizes = [64, 32], strides = [1, 1]} : vector<64x128xf32> to vector<64x32xf32>
    %85 = arith.truncf %84 : vector<64x32xf32> to vector<64x32xbf16>
    %cst_24 = arith.constant dense<0.000000e+00> : vector<64x64xf32>
    %86 = tpu.matmul %81, %83, %cst_24 {dimension_numbers = #tpu.dot_dimension_numbers<[1], [1], [0], [0], [0, 0, 1, 0], [], []>} : vector<64x32xbf16>, vector<64x32xbf16>, vector<64x64xf32> -> vector<64x64xf32>
    %87 = vector.broadcast %3 : vector<1x64xf32> to vector<64x64xf32>
    %88 = arith.addf %86, %87 : vector<64x64xf32>
    %cst_25 = arith.constant dense<0xFF800000> : vector<64xf32>
    %89 = vector.multi_reduction <maximumf>, %88, %cst_25 [1] : vector<64x64xf32> to vector<64xf32>
    %90 = vector.shape_cast %89 : vector<64xf32> to vector<64x1xf32>
    %91 = vector.broadcast %90 : vector<64x1xf32> to vector<64x64xf32>
    %92 = arith.subf %88, %91 : vector<64x64xf32>
    %93 = math.exp %92 : vector<64x64xf32>
    %cst_26 = arith.constant dense<0.000000e+00> : vector<64xf32>
    %94 = vector.multi_reduction <add>, %93, %cst_26 [1] : vector<64x64xf32> to vector<64xf32>
    %95 = vector.shape_cast %94 : vector<64xf32> to vector<64x1xf32>
    %96 = tpu.reciprocal %95 {approx = true} : vector<64x1xf32> -> vector<64x1xf32>
    %97 = vector.broadcast %96 : vector<64x1xf32> to vector<64x64xf32>
    %98 = arith.mulf %93, %97 : vector<64x64xf32>
    %99 = arith.truncf %98 : vector<64x64xf32> to vector<64x64xbf16>
    %cst_27 = arith.constant dense<0.000000e+00> : vector<64x32xf32>
    %100 = tpu.matmul %99, %85, %cst_27 {dimension_numbers = #tpu.dot_dimension_numbers<[1], [0], [0], [1], [0, 0, 1, 1], [], []>} : vector<64x64xbf16>, vector<64x32xbf16>, vector<64x32xf32> -> vector<64x32xf32>
    %101 = tpu.concatenate %37, %58, %79, %100 in 1 : vector<64x32xf32>, vector<64x32xf32>, vector<64x32xf32>, vector<64x32xf32> -> vector<64x128xf32>
    %c0_28 = arith.constant 0 : index
    %c0_29 = arith.constant 0 : index
    %c0_30 = arith.constant 0 : index
    %102 = vector.load %arg5[%c0_28, %c0_29, %c0_30] : memref<2x128x128xbf16, #tpu.memory_space<vmem>>, vector<1x128x128xbf16>
    %103 = vector.shape_cast %102 : vector<1x128x128xbf16> to vector<128x128xbf16>
    %104 = arith.truncf %101 : vector<64x128xf32> to vector<64x128xbf16>
    %cst_31 = arith.constant dense<0.000000e+00> : vector<64x128xf32>
    %105 = tpu.matmul %104, %103, %cst_31 {dimension_numbers = #tpu.dot_dimension_numbers<[1], [0], [0], [1], [0, 0, 1, 1], [], []>} : vector<64x128xbf16>, vector<128x128xbf16>, vector<64x128xf32> -> vector<64x128xf32>
    %c0_32 = arith.constant 0 : index
    %c0_33 = arith.constant 0 : index
    %c0_34 = arith.constant 0 : index
    %106 = vector.load %arg6[%c0_32, %c0_33, %c0_34] : memref<2x1x128xf32, #tpu.memory_space<vmem>>, vector<1x1x128xf32>
    %107 = vector.shape_cast %106 : vector<1x1x128xf32> to vector<1x128xf32>
    %108 = vector.broadcast %107 : vector<1x128xf32> to vector<64x128xf32>
    %109 = arith.addf %105, %108 : vector<64x128xf32>
    %110 = arith.addf %1, %109 : vector<64x128xf32>
    %c0_35 = arith.constant 0 : index
    %c0_36 = arith.constant 0 : index
    %c0_37 = arith.constant 0 : index
    %111 = vector.load %arg11[%c0_35, %c0_36, %c0_37] : memref<2x1x128xf32, #tpu.memory_space<vmem>>, vector<1x1x128xf32>
    %112 = vector.shape_cast %111 : vector<1x1x128xf32> to vector<1x128xf32>
    %c0_38 = arith.constant 0 : index
    %c0_39 = arith.constant 0 : index
    %c0_40 = arith.constant 0 : index
    %113 = vector.load %arg12[%c0_38, %c0_39, %c0_40] : memref<2x1x128xf32, #tpu.memory_space<vmem>>, vector<1x1x128xf32>
    %114 = vector.shape_cast %113 : vector<1x1x128xf32> to vector<1x128xf32>
    %cst_41 = arith.constant dense<0.000000e+00> : vector<64xf32>
    %115 = vector.multi_reduction <add>, %110, %cst_41 [1] : vector<64x128xf32> to vector<64xf32>
    %116 = vector.shape_cast %115 : vector<64xf32> to vector<64x1xf32>
    %cst_42 = arith.constant 1.280000e+02 : f32
    %117 = vector.broadcast %cst_42 : f32 to vector<64x1xf32>
    %118 = arith.divf %116, %117 : vector<64x1xf32>
    %119 = vector.broadcast %118 : vector<64x1xf32> to vector<64x128xf32>
    %120 = arith.subf %110, %119 : vector<64x128xf32>
    %121 = arith.mulf %120, %120 : vector<64x128xf32>
    %cst_43 = arith.constant dense<0.000000e+00> : vector<64xf32>
    %122 = vector.multi_reduction <add>, %121, %cst_43 [1] : vector<64x128xf32> to vector<64xf32>
    %123 = vector.shape_cast %122 : vector<64xf32> to vector<64x1xf32>
    %cst_44 = arith.constant 1.280000e+02 : f32
    %124 = vector.broadcast %cst_44 : f32 to vector<64x1xf32>
    %125 = arith.divf %123, %124 : vector<64x1xf32>
    %cst_45 = arith.constant 9.99999974E-6 : f32
    %126 = vector.broadcast %cst_45 : f32 to vector<64x1xf32>
    %127 = arith.addf %125, %126 : vector<64x1xf32>
    %128 = math.rsqrt %127 : vector<64x1xf32>
    %129 = vector.broadcast %128 : vector<64x1xf32> to vector<64x128xf32>
    %130 = arith.mulf %120, %129 : vector<64x128xf32>
    %131 = vector.broadcast %112 : vector<1x128xf32> to vector<64x128xf32>
    %132 = arith.mulf %130, %131 : vector<64x128xf32>
    %133 = vector.broadcast %114 : vector<1x128xf32> to vector<64x128xf32>
    %134 = arith.addf %132, %133 : vector<64x128xf32>
    %c0_46 = arith.constant 0 : index
    %c0_47 = arith.constant 0 : index
    %c0_48 = arith.constant 0 : index
    %135 = vector.load %arg7[%c0_46, %c0_47, %c0_48] : memref<2x128x2048xbf16, #tpu.memory_space<vmem>>, vector<1x128x2048xbf16>
    %136 = vector.shape_cast %135 : vector<1x128x2048xbf16> to vector<128x2048xbf16>
    %137 = arith.truncf %134 : vector<64x128xf32> to vector<64x128xbf16>
    %cst_49 = arith.constant dense<0.000000e+00> : vector<64x2048xf32>
    %138 = tpu.matmul %137, %136, %cst_49 {dimension_numbers = #tpu.dot_dimension_numbers<[1], [0], [0], [1], [0, 0, 1, 1], [], []>} : vector<64x128xbf16>, vector<128x2048xbf16>, vector<64x2048xf32> -> vector<64x2048xf32>
    %c0_50 = arith.constant 0 : index
    %c0_51 = arith.constant 0 : index
    %c0_52 = arith.constant 0 : index
    %139 = vector.load %arg8[%c0_50, %c0_51, %c0_52] : memref<2x1x2048xf32, #tpu.memory_space<vmem>>, vector<1x1x2048xf32>
    %140 = vector.shape_cast %139 : vector<1x1x2048xf32> to vector<1x2048xf32>
    %141 = vector.broadcast %140 : vector<1x2048xf32> to vector<64x2048xf32>
    %142 = arith.addf %138, %141 : vector<64x2048xf32>
    %cst_53 = arith.constant 0.000000e+00 : f32
    %143 = vector.broadcast %cst_53 : f32 to vector<64x2048xf32>
    %144 = arith.maximumf %142, %143 : vector<64x2048xf32>
    %c0_54 = arith.constant 0 : index
    %c0_55 = arith.constant 0 : index
    %c0_56 = arith.constant 0 : index
    %145 = vector.load %arg9[%c0_54, %c0_55, %c0_56] : memref<2x2048x128xbf16, #tpu.memory_space<vmem>>, vector<1x2048x128xbf16>
    %146 = vector.shape_cast %145 : vector<1x2048x128xbf16> to vector<2048x128xbf16>
    %147 = arith.truncf %144 : vector<64x2048xf32> to vector<64x2048xbf16>
    %cst_57 = arith.constant dense<0.000000e+00> : vector<64x128xf32>
    %148 = tpu.matmul %147, %146, %cst_57 {dimension_numbers = #tpu.dot_dimension_numbers<[1], [0], [0], [1], [0, 0, 1, 1], [], []>} : vector<64x2048xbf16>, vector<2048x128xbf16>, vector<64x128xf32> -> vector<64x128xf32>
    %c0_58 = arith.constant 0 : index
    %c0_59 = arith.constant 0 : index
    %c0_60 = arith.constant 0 : index
    %149 = vector.load %arg10[%c0_58, %c0_59, %c0_60] : memref<2x1x128xf32, #tpu.memory_space<vmem>>, vector<1x1x128xf32>
    %150 = vector.shape_cast %149 : vector<1x1x128xf32> to vector<1x128xf32>
    %151 = vector.broadcast %150 : vector<1x128xf32> to vector<64x128xf32>
    %152 = arith.addf %148, %151 : vector<64x128xf32>
    %153 = arith.addf %134, %152 : vector<64x128xf32>
    %c0_61 = arith.constant 0 : index
    %c0_62 = arith.constant 0 : index
    %c0_63 = arith.constant 0 : index
    %154 = vector.load %arg13[%c0_61, %c0_62, %c0_63] : memref<2x1x128xf32, #tpu.memory_space<vmem>>, vector<1x1x128xf32>
    %155 = vector.shape_cast %154 : vector<1x1x128xf32> to vector<1x128xf32>
    %c0_64 = arith.constant 0 : index
    %c0_65 = arith.constant 0 : index
    %c0_66 = arith.constant 0 : index
    %156 = vector.load %arg14[%c0_64, %c0_65, %c0_66] : memref<2x1x128xf32, #tpu.memory_space<vmem>>, vector<1x1x128xf32>
    %157 = vector.shape_cast %156 : vector<1x1x128xf32> to vector<1x128xf32>
    %cst_67 = arith.constant dense<0.000000e+00> : vector<64xf32>
    %158 = vector.multi_reduction <add>, %153, %cst_67 [1] : vector<64x128xf32> to vector<64xf32>
    %159 = vector.shape_cast %158 : vector<64xf32> to vector<64x1xf32>
    %cst_68 = arith.constant 1.280000e+02 : f32
    %160 = vector.broadcast %cst_68 : f32 to vector<64x1xf32>
    %161 = arith.divf %159, %160 : vector<64x1xf32>
    %162 = vector.broadcast %161 : vector<64x1xf32> to vector<64x128xf32>
    %163 = arith.subf %153, %162 : vector<64x128xf32>
    %164 = arith.mulf %163, %163 : vector<64x128xf32>
    %cst_69 = arith.constant dense<0.000000e+00> : vector<64xf32>
    %165 = vector.multi_reduction <add>, %164, %cst_69 [1] : vector<64x128xf32> to vector<64xf32>
    %166 = vector.shape_cast %165 : vector<64xf32> to vector<64x1xf32>
    %cst_70 = arith.constant 1.280000e+02 : f32
    %167 = vector.broadcast %cst_70 : f32 to vector<64x1xf32>
    %168 = arith.divf %166, %167 : vector<64x1xf32>
    %cst_71 = arith.constant 9.99999974E-6 : f32
    %169 = vector.broadcast %cst_71 : f32 to vector<64x1xf32>
    %170 = arith.addf %168, %169 : vector<64x1xf32>
    %171 = math.rsqrt %170 : vector<64x1xf32>
    %172 = vector.broadcast %171 : vector<64x1xf32> to vector<64x128xf32>
    %173 = arith.mulf %163, %172 : vector<64x128xf32>
    %174 = vector.broadcast %155 : vector<1x128xf32> to vector<64x128xf32>
    %175 = arith.mulf %173, %174 : vector<64x128xf32>
    %176 = vector.broadcast %157 : vector<1x128xf32> to vector<64x128xf32>
    %177 = arith.addf %175, %176 : vector<64x128xf32>
    %c1 = arith.constant 1 : index
    %c0_72 = arith.constant 0 : index
    %c0_73 = arith.constant 0 : index
    %178 = vector.load %arg3[%c1, %c0_72, %c0_73] : memref<2x128x384xbf16, #tpu.memory_space<vmem>>, vector<1x128x384xbf16>
    %179 = vector.shape_cast %178 : vector<1x128x384xbf16> to vector<128x384xbf16>
    %180 = arith.truncf %177 : vector<64x128xf32> to vector<64x128xbf16>
    %cst_74 = arith.constant dense<0.000000e+00> : vector<64x384xf32>
    %181 = tpu.matmul %180, %179, %cst_74 {dimension_numbers = #tpu.dot_dimension_numbers<[1], [0], [0], [1], [0, 0, 1, 1], [], []>} : vector<64x128xbf16>, vector<128x384xbf16>, vector<64x384xf32> -> vector<64x384xf32>
    %c1_75 = arith.constant 1 : index
    %c0_76 = arith.constant 0 : index
    %c0_77 = arith.constant 0 : index
    %182 = vector.load %arg4[%c1_75, %c0_76, %c0_77] : memref<2x1x384xf32, #tpu.memory_space<vmem>>, vector<1x1x384xf32>
    %183 = vector.shape_cast %182 : vector<1x1x384xf32> to vector<1x384xf32>
    %184 = vector.broadcast %183 : vector<1x384xf32> to vector<64x384xf32>
    %185 = arith.addf %181, %184 : vector<64x384xf32>
    %186 = vector.extract_strided_slice %185 {offsets = [0, 0], sizes = [64, 128], strides = [1, 1]} : vector<64x384xf32> to vector<64x128xf32>
    %cst_78 = arith.constant 0.176776692 : f32
    %187 = vector.broadcast %cst_78 : f32 to vector<64x128xf32>
    %188 = arith.mulf %186, %187 : vector<64x128xf32>
    %189 = vector.extract_strided_slice %185 {offsets = [0, 128], sizes = [64, 128], strides = [1, 1]} : vector<64x384xf32> to vector<64x128xf32>
    %190 = vector.extract_strided_slice %185 {offsets = [0, 256], sizes = [64, 128], strides = [1, 1]} : vector<64x384xf32> to vector<64x128xf32>
    %191 = vector.extract_strided_slice %188 {offsets = [0, 0], sizes = [64, 32], strides = [1, 1]} : vector<64x128xf32> to vector<64x32xf32>
    %192 = arith.truncf %191 : vector<64x32xf32> to vector<64x32xbf16>
    %193 = vector.extract_strided_slice %189 {offsets = [0, 0], sizes = [64, 32], strides = [1, 1]} : vector<64x128xf32> to vector<64x32xf32>
    %194 = arith.truncf %193 : vector<64x32xf32> to vector<64x32xbf16>
    %195 = vector.extract_strided_slice %190 {offsets = [0, 0], sizes = [64, 32], strides = [1, 1]} : vector<64x128xf32> to vector<64x32xf32>
    %196 = arith.truncf %195 : vector<64x32xf32> to vector<64x32xbf16>
    %cst_79 = arith.constant dense<0.000000e+00> : vector<64x64xf32>
    %197 = tpu.matmul %192, %194, %cst_79 {dimension_numbers = #tpu.dot_dimension_numbers<[1], [1], [0], [0], [0, 0, 1, 0], [], []>} : vector<64x32xbf16>, vector<64x32xbf16>, vector<64x64xf32> -> vector<64x64xf32>
    %198 = vector.broadcast %3 : vector<1x64xf32> to vector<64x64xf32>
    %199 = arith.addf %197, %198 : vector<64x64xf32>
    %cst_80 = arith.constant dense<0xFF800000> : vector<64xf32>
    %200 = vector.multi_reduction <maximumf>, %199, %cst_80 [1] : vector<64x64xf32> to vector<64xf32>
    %201 = vector.shape_cast %200 : vector<64xf32> to vector<64x1xf32>
    %202 = vector.broadcast %201 : vector<64x1xf32> to vector<64x64xf32>
    %203 = arith.subf %199, %202 : vector<64x64xf32>
    %204 = math.exp %203 : vector<64x64xf32>
    %cst_81 = arith.constant dense<0.000000e+00> : vector<64xf32>
    %205 = vector.multi_reduction <add>, %204, %cst_81 [1] : vector<64x64xf32> to vector<64xf32>
    %206 = vector.shape_cast %205 : vector<64xf32> to vector<64x1xf32>
    %207 = tpu.reciprocal %206 {approx = true} : vector<64x1xf32> -> vector<64x1xf32>
    %208 = vector.broadcast %207 : vector<64x1xf32> to vector<64x64xf32>
    %209 = arith.mulf %204, %208 : vector<64x64xf32>
    %210 = arith.truncf %209 : vector<64x64xf32> to vector<64x64xbf16>
    %cst_82 = arith.constant dense<0.000000e+00> : vector<64x32xf32>
    %211 = tpu.matmul %210, %196, %cst_82 {dimension_numbers = #tpu.dot_dimension_numbers<[1], [0], [0], [1], [0, 0, 1, 1], [], []>} : vector<64x64xbf16>, vector<64x32xbf16>, vector<64x32xf32> -> vector<64x32xf32>
    %212 = vector.extract_strided_slice %188 {offsets = [0, 32], sizes = [64, 32], strides = [1, 1]} : vector<64x128xf32> to vector<64x32xf32>
    %213 = arith.truncf %212 : vector<64x32xf32> to vector<64x32xbf16>
    %214 = vector.extract_strided_slice %189 {offsets = [0, 32], sizes = [64, 32], strides = [1, 1]} : vector<64x128xf32> to vector<64x32xf32>
    %215 = arith.truncf %214 : vector<64x32xf32> to vector<64x32xbf16>
    %216 = vector.extract_strided_slice %190 {offsets = [0, 32], sizes = [64, 32], strides = [1, 1]} : vector<64x128xf32> to vector<64x32xf32>
    %217 = arith.truncf %216 : vector<64x32xf32> to vector<64x32xbf16>
    %cst_83 = arith.constant dense<0.000000e+00> : vector<64x64xf32>
    %218 = tpu.matmul %213, %215, %cst_83 {dimension_numbers = #tpu.dot_dimension_numbers<[1], [1], [0], [0], [0, 0, 1, 0], [], []>} : vector<64x32xbf16>, vector<64x32xbf16>, vector<64x64xf32> -> vector<64x64xf32>
    %219 = vector.broadcast %3 : vector<1x64xf32> to vector<64x64xf32>
    %220 = arith.addf %218, %219 : vector<64x64xf32>
    %cst_84 = arith.constant dense<0xFF800000> : vector<64xf32>
    %221 = vector.multi_reduction <maximumf>, %220, %cst_84 [1] : vector<64x64xf32> to vector<64xf32>
    %222 = vector.shape_cast %221 : vector<64xf32> to vector<64x1xf32>
    %223 = vector.broadcast %222 : vector<64x1xf32> to vector<64x64xf32>
    %224 = arith.subf %220, %223 : vector<64x64xf32>
    %225 = math.exp %224 : vector<64x64xf32>
    %cst_85 = arith.constant dense<0.000000e+00> : vector<64xf32>
    %226 = vector.multi_reduction <add>, %225, %cst_85 [1] : vector<64x64xf32> to vector<64xf32>
    %227 = vector.shape_cast %226 : vector<64xf32> to vector<64x1xf32>
    %228 = tpu.reciprocal %227 {approx = true} : vector<64x1xf32> -> vector<64x1xf32>
    %229 = vector.broadcast %228 : vector<64x1xf32> to vector<64x64xf32>
    %230 = arith.mulf %225, %229 : vector<64x64xf32>
    %231 = arith.truncf %230 : vector<64x64xf32> to vector<64x64xbf16>
    %cst_86 = arith.constant dense<0.000000e+00> : vector<64x32xf32>
    %232 = tpu.matmul %231, %217, %cst_86 {dimension_numbers = #tpu.dot_dimension_numbers<[1], [0], [0], [1], [0, 0, 1, 1], [], []>} : vector<64x64xbf16>, vector<64x32xbf16>, vector<64x32xf32> -> vector<64x32xf32>
    %233 = vector.extract_strided_slice %188 {offsets = [0, 64], sizes = [64, 32], strides = [1, 1]} : vector<64x128xf32> to vector<64x32xf32>
    %234 = arith.truncf %233 : vector<64x32xf32> to vector<64x32xbf16>
    %235 = vector.extract_strided_slice %189 {offsets = [0, 64], sizes = [64, 32], strides = [1, 1]} : vector<64x128xf32> to vector<64x32xf32>
    %236 = arith.truncf %235 : vector<64x32xf32> to vector<64x32xbf16>
    %237 = vector.extract_strided_slice %190 {offsets = [0, 64], sizes = [64, 32], strides = [1, 1]} : vector<64x128xf32> to vector<64x32xf32>
    %238 = arith.truncf %237 : vector<64x32xf32> to vector<64x32xbf16>
    %cst_87 = arith.constant dense<0.000000e+00> : vector<64x64xf32>
    %239 = tpu.matmul %234, %236, %cst_87 {dimension_numbers = #tpu.dot_dimension_numbers<[1], [1], [0], [0], [0, 0, 1, 0], [], []>} : vector<64x32xbf16>, vector<64x32xbf16>, vector<64x64xf32> -> vector<64x64xf32>
    %240 = vector.broadcast %3 : vector<1x64xf32> to vector<64x64xf32>
    %241 = arith.addf %239, %240 : vector<64x64xf32>
    %cst_88 = arith.constant dense<0xFF800000> : vector<64xf32>
    %242 = vector.multi_reduction <maximumf>, %241, %cst_88 [1] : vector<64x64xf32> to vector<64xf32>
    %243 = vector.shape_cast %242 : vector<64xf32> to vector<64x1xf32>
    %244 = vector.broadcast %243 : vector<64x1xf32> to vector<64x64xf32>
    %245 = arith.subf %241, %244 : vector<64x64xf32>
    %246 = math.exp %245 : vector<64x64xf32>
    %cst_89 = arith.constant dense<0.000000e+00> : vector<64xf32>
    %247 = vector.multi_reduction <add>, %246, %cst_89 [1] : vector<64x64xf32> to vector<64xf32>
    %248 = vector.shape_cast %247 : vector<64xf32> to vector<64x1xf32>
    %249 = tpu.reciprocal %248 {approx = true} : vector<64x1xf32> -> vector<64x1xf32>
    %250 = vector.broadcast %249 : vector<64x1xf32> to vector<64x64xf32>
    %251 = arith.mulf %246, %250 : vector<64x64xf32>
    %252 = arith.truncf %251 : vector<64x64xf32> to vector<64x64xbf16>
    %cst_90 = arith.constant dense<0.000000e+00> : vector<64x32xf32>
    %253 = tpu.matmul %252, %238, %cst_90 {dimension_numbers = #tpu.dot_dimension_numbers<[1], [0], [0], [1], [0, 0, 1, 1], [], []>} : vector<64x64xbf16>, vector<64x32xbf16>, vector<64x32xf32> -> vector<64x32xf32>
    %254 = vector.extract_strided_slice %188 {offsets = [0, 96], sizes = [64, 32], strides = [1, 1]} : vector<64x128xf32> to vector<64x32xf32>
    %255 = arith.truncf %254 : vector<64x32xf32> to vector<64x32xbf16>
    %256 = vector.extract_strided_slice %189 {offsets = [0, 96], sizes = [64, 32], strides = [1, 1]} : vector<64x128xf32> to vector<64x32xf32>
    %257 = arith.truncf %256 : vector<64x32xf32> to vector<64x32xbf16>
    %258 = vector.extract_strided_slice %190 {offsets = [0, 96], sizes = [64, 32], strides = [1, 1]} : vector<64x128xf32> to vector<64x32xf32>
    %259 = arith.truncf %258 : vector<64x32xf32> to vector<64x32xbf16>
    %cst_91 = arith.constant dense<0.000000e+00> : vector<64x64xf32>
    %260 = tpu.matmul %255, %257, %cst_91 {dimension_numbers = #tpu.dot_dimension_numbers<[1], [1], [0], [0], [0, 0, 1, 0], [], []>} : vector<64x32xbf16>, vector<64x32xbf16>, vector<64x64xf32> -> vector<64x64xf32>
    %261 = vector.broadcast %3 : vector<1x64xf32> to vector<64x64xf32>
    %262 = arith.addf %260, %261 : vector<64x64xf32>
    %cst_92 = arith.constant dense<0xFF800000> : vector<64xf32>
    %263 = vector.multi_reduction <maximumf>, %262, %cst_92 [1] : vector<64x64xf32> to vector<64xf32>
    %264 = vector.shape_cast %263 : vector<64xf32> to vector<64x1xf32>
    %265 = vector.broadcast %264 : vector<64x1xf32> to vector<64x64xf32>
    %266 = arith.subf %262, %265 : vector<64x64xf32>
    %267 = math.exp %266 : vector<64x64xf32>
    %cst_93 = arith.constant dense<0.000000e+00> : vector<64xf32>
    %268 = vector.multi_reduction <add>, %267, %cst_93 [1] : vector<64x64xf32> to vector<64xf32>
    %269 = vector.shape_cast %268 : vector<64xf32> to vector<64x1xf32>
    %270 = tpu.reciprocal %269 {approx = true} : vector<64x1xf32> -> vector<64x1xf32>
    %271 = vector.broadcast %270 : vector<64x1xf32> to vector<64x64xf32>
    %272 = arith.mulf %267, %271 : vector<64x64xf32>
    %273 = arith.truncf %272 : vector<64x64xf32> to vector<64x64xbf16>
    %cst_94 = arith.constant dense<0.000000e+00> : vector<64x32xf32>
    %274 = tpu.matmul %273, %259, %cst_94 {dimension_numbers = #tpu.dot_dimension_numbers<[1], [0], [0], [1], [0, 0, 1, 1], [], []>} : vector<64x64xbf16>, vector<64x32xbf16>, vector<64x32xf32> -> vector<64x32xf32>
    %275 = tpu.concatenate %211, %232, %253, %274 in 1 : vector<64x32xf32>, vector<64x32xf32>, vector<64x32xf32>, vector<64x32xf32> -> vector<64x128xf32>
    %c1_95 = arith.constant 1 : index
    %c0_96 = arith.constant 0 : index
    %c0_97 = arith.constant 0 : index
    %276 = vector.load %arg5[%c1_95, %c0_96, %c0_97] : memref<2x128x128xbf16, #tpu.memory_space<vmem>>, vector<1x128x128xbf16>
    %277 = vector.shape_cast %276 : vector<1x128x128xbf16> to vector<128x128xbf16>
    %278 = arith.truncf %275 : vector<64x128xf32> to vector<64x128xbf16>
    %cst_98 = arith.constant dense<0.000000e+00> : vector<64x128xf32>
    %279 = tpu.matmul %278, %277, %cst_98 {dimension_numbers = #tpu.dot_dimension_numbers<[1], [0], [0], [1], [0, 0, 1, 1], [], []>} : vector<64x128xbf16>, vector<128x128xbf16>, vector<64x128xf32> -> vector<64x128xf32>
    %c1_99 = arith.constant 1 : index
    %c0_100 = arith.constant 0 : index
    %c0_101 = arith.constant 0 : index
    %280 = vector.load %arg6[%c1_99, %c0_100, %c0_101] : memref<2x1x128xf32, #tpu.memory_space<vmem>>, vector<1x1x128xf32>
    %281 = vector.shape_cast %280 : vector<1x1x128xf32> to vector<1x128xf32>
    %282 = vector.broadcast %281 : vector<1x128xf32> to vector<64x128xf32>
    %283 = arith.addf %279, %282 : vector<64x128xf32>
    %284 = arith.addf %177, %283 : vector<64x128xf32>
    %c1_102 = arith.constant 1 : index
    %c0_103 = arith.constant 0 : index
    %c0_104 = arith.constant 0 : index
    %285 = vector.load %arg11[%c1_102, %c0_103, %c0_104] : memref<2x1x128xf32, #tpu.memory_space<vmem>>, vector<1x1x128xf32>
    %286 = vector.shape_cast %285 : vector<1x1x128xf32> to vector<1x128xf32>
    %c1_105 = arith.constant 1 : index
    %c0_106 = arith.constant 0 : index
    %c0_107 = arith.constant 0 : index
    %287 = vector.load %arg12[%c1_105, %c0_106, %c0_107] : memref<2x1x128xf32, #tpu.memory_space<vmem>>, vector<1x1x128xf32>
    %288 = vector.shape_cast %287 : vector<1x1x128xf32> to vector<1x128xf32>
    %cst_108 = arith.constant dense<0.000000e+00> : vector<64xf32>
    %289 = vector.multi_reduction <add>, %284, %cst_108 [1] : vector<64x128xf32> to vector<64xf32>
    %290 = vector.shape_cast %289 : vector<64xf32> to vector<64x1xf32>
    %cst_109 = arith.constant 1.280000e+02 : f32
    %291 = vector.broadcast %cst_109 : f32 to vector<64x1xf32>
    %292 = arith.divf %290, %291 : vector<64x1xf32>
    %293 = vector.broadcast %292 : vector<64x1xf32> to vector<64x128xf32>
    %294 = arith.subf %284, %293 : vector<64x128xf32>
    %295 = arith.mulf %294, %294 : vector<64x128xf32>
    %cst_110 = arith.constant dense<0.000000e+00> : vector<64xf32>
    %296 = vector.multi_reduction <add>, %295, %cst_110 [1] : vector<64x128xf32> to vector<64xf32>
    %297 = vector.shape_cast %296 : vector<64xf32> to vector<64x1xf32>
    %cst_111 = arith.constant 1.280000e+02 : f32
    %298 = vector.broadcast %cst_111 : f32 to vector<64x1xf32>
    %299 = arith.divf %297, %298 : vector<64x1xf32>
    %cst_112 = arith.constant 9.99999974E-6 : f32
    %300 = vector.broadcast %cst_112 : f32 to vector<64x1xf32>
    %301 = arith.addf %299, %300 : vector<64x1xf32>
    %302 = math.rsqrt %301 : vector<64x1xf32>
    %303 = vector.broadcast %302 : vector<64x1xf32> to vector<64x128xf32>
    %304 = arith.mulf %294, %303 : vector<64x128xf32>
    %305 = vector.broadcast %286 : vector<1x128xf32> to vector<64x128xf32>
    %306 = arith.mulf %304, %305 : vector<64x128xf32>
    %307 = vector.broadcast %288 : vector<1x128xf32> to vector<64x128xf32>
    %308 = arith.addf %306, %307 : vector<64x128xf32>
    %c1_113 = arith.constant 1 : index
    %c0_114 = arith.constant 0 : index
    %c0_115 = arith.constant 0 : index
    %309 = vector.load %arg7[%c1_113, %c0_114, %c0_115] : memref<2x128x2048xbf16, #tpu.memory_space<vmem>>, vector<1x128x2048xbf16>
    %310 = vector.shape_cast %309 : vector<1x128x2048xbf16> to vector<128x2048xbf16>
    %311 = arith.truncf %308 : vector<64x128xf32> to vector<64x128xbf16>
    %cst_116 = arith.constant dense<0.000000e+00> : vector<64x2048xf32>
    %312 = tpu.matmul %311, %310, %cst_116 {dimension_numbers = #tpu.dot_dimension_numbers<[1], [0], [0], [1], [0, 0, 1, 1], [], []>} : vector<64x128xbf16>, vector<128x2048xbf16>, vector<64x2048xf32> -> vector<64x2048xf32>
    %c1_117 = arith.constant 1 : index
    %c0_118 = arith.constant 0 : index
    %c0_119 = arith.constant 0 : index
    %313 = vector.load %arg8[%c1_117, %c0_118, %c0_119] : memref<2x1x2048xf32, #tpu.memory_space<vmem>>, vector<1x1x2048xf32>
    %314 = vector.shape_cast %313 : vector<1x1x2048xf32> to vector<1x2048xf32>
    %315 = vector.broadcast %314 : vector<1x2048xf32> to vector<64x2048xf32>
    %316 = arith.addf %312, %315 : vector<64x2048xf32>
    %cst_120 = arith.constant 0.000000e+00 : f32
    %317 = vector.broadcast %cst_120 : f32 to vector<64x2048xf32>
    %318 = arith.maximumf %316, %317 : vector<64x2048xf32>
    %c1_121 = arith.constant 1 : index
    %c0_122 = arith.constant 0 : index
    %c0_123 = arith.constant 0 : index
    %319 = vector.load %arg9[%c1_121, %c0_122, %c0_123] : memref<2x2048x128xbf16, #tpu.memory_space<vmem>>, vector<1x2048x128xbf16>
    %320 = vector.shape_cast %319 : vector<1x2048x128xbf16> to vector<2048x128xbf16>
    %321 = arith.truncf %318 : vector<64x2048xf32> to vector<64x2048xbf16>
    %cst_124 = arith.constant dense<0.000000e+00> : vector<64x128xf32>
    %322 = tpu.matmul %321, %320, %cst_124 {dimension_numbers = #tpu.dot_dimension_numbers<[1], [0], [0], [1], [0, 0, 1, 1], [], []>} : vector<64x2048xbf16>, vector<2048x128xbf16>, vector<64x128xf32> -> vector<64x128xf32>
    %c1_125 = arith.constant 1 : index
    %c0_126 = arith.constant 0 : index
    %c0_127 = arith.constant 0 : index
    %323 = vector.load %arg10[%c1_125, %c0_126, %c0_127] : memref<2x1x128xf32, #tpu.memory_space<vmem>>, vector<1x1x128xf32>
    %324 = vector.shape_cast %323 : vector<1x1x128xf32> to vector<1x128xf32>
    %325 = vector.broadcast %324 : vector<1x128xf32> to vector<64x128xf32>
    %326 = arith.addf %322, %325 : vector<64x128xf32>
    %327 = arith.addf %308, %326 : vector<64x128xf32>
    %c1_128 = arith.constant 1 : index
    %c0_129 = arith.constant 0 : index
    %c0_130 = arith.constant 0 : index
    %328 = vector.load %arg13[%c1_128, %c0_129, %c0_130] : memref<2x1x128xf32, #tpu.memory_space<vmem>>, vector<1x1x128xf32>
    %329 = vector.shape_cast %328 : vector<1x1x128xf32> to vector<1x128xf32>
    %c1_131 = arith.constant 1 : index
    %c0_132 = arith.constant 0 : index
    %c0_133 = arith.constant 0 : index
    %330 = vector.load %arg14[%c1_131, %c0_132, %c0_133] : memref<2x1x128xf32, #tpu.memory_space<vmem>>, vector<1x1x128xf32>
    %331 = vector.shape_cast %330 : vector<1x1x128xf32> to vector<1x128xf32>
    %cst_134 = arith.constant dense<0.000000e+00> : vector<64xf32>
    %332 = vector.multi_reduction <add>, %327, %cst_134 [1] : vector<64x128xf32> to vector<64xf32>
    %333 = vector.shape_cast %332 : vector<64xf32> to vector<64x1xf32>
    %cst_135 = arith.constant 1.280000e+02 : f32
    %334 = vector.broadcast %cst_135 : f32 to vector<64x1xf32>
    %335 = arith.divf %333, %334 : vector<64x1xf32>
    %336 = vector.broadcast %335 : vector<64x1xf32> to vector<64x128xf32>
    %337 = arith.subf %327, %336 : vector<64x128xf32>
    %338 = arith.mulf %337, %337 : vector<64x128xf32>
    %cst_136 = arith.constant dense<0.000000e+00> : vector<64xf32>
    %339 = vector.multi_reduction <add>, %338, %cst_136 [1] : vector<64x128xf32> to vector<64xf32>
    %340 = vector.shape_cast %339 : vector<64xf32> to vector<64x1xf32>
    %cst_137 = arith.constant 1.280000e+02 : f32
    %341 = vector.broadcast %cst_137 : f32 to vector<64x1xf32>
    %342 = arith.divf %340, %341 : vector<64x1xf32>
    %cst_138 = arith.constant 9.99999974E-6 : f32
    %343 = vector.broadcast %cst_138 : f32 to vector<64x1xf32>
    %344 = arith.addf %342, %343 : vector<64x1xf32>
    %345 = math.rsqrt %344 : vector<64x1xf32>
    %346 = vector.broadcast %345 : vector<64x1xf32> to vector<64x128xf32>
    %347 = arith.mulf %337, %346 : vector<64x128xf32>
    %348 = vector.broadcast %329 : vector<1x128xf32> to vector<64x128xf32>
    %349 = arith.mulf %347, %348 : vector<64x128xf32>
    %350 = vector.broadcast %331 : vector<1x128xf32> to vector<64x128xf32>
    %351 = arith.addf %349, %350 : vector<64x128xf32>
    %352 = vector.extract_strided_slice %351 {offsets = [0, 0], sizes = [1, 128], strides = [1, 1]} : vector<64x128xf32> to vector<1x128xf32>
    %c0_139 = arith.constant 0 : index
    %c0_140 = arith.constant 0 : index
    %353 = vector.load %arg15[%c0_139, %c0_140] : memref<128x128xbf16, #tpu.memory_space<vmem>>, vector<128x128xbf16>
    %354 = arith.truncf %352 : vector<1x128xf32> to vector<1x128xbf16>
    %cst_141 = arith.constant dense<0.000000e+00> : vector<1x128xf32>
    %355 = tpu.matmul %354, %353, %cst_141 {dimension_numbers = #tpu.dot_dimension_numbers<[1], [0], [0], [1], [0, 0, 1, 1], [], []>} : vector<1x128xbf16>, vector<128x128xbf16>, vector<1x128xf32> -> vector<1x128xf32>
    %c0_142 = arith.constant 0 : index
    %c0_143 = arith.constant 0 : index
    %356 = vector.load %arg16[%c0_142, %c0_143] : memref<1x128xf32, #tpu.memory_space<vmem>>, vector<1x128xf32>
    %357 = arith.addf %355, %356 : vector<1x128xf32>
    %c0_144 = arith.constant 0 : index
    %c0_145 = arith.constant 0 : index
    %c0_146 = arith.constant 0 : index
    %358 = vector.load %arg17[%c0_144, %c0_145, %c0_146] : memref<1x1x128xf32, #tpu.memory_space<vmem>>, vector<1x1x128xf32>
    %359 = vector.shape_cast %358 : vector<1x1x128xf32> to vector<1x128xf32>
    %360 = vector.shape_cast %357 : vector<1x128xf32> to vector<1x1x128xf32>
    tpu.vector_store %arg17[%c0_144, %c0_145, %c0_146], %360 {strides = array<i32>} : memref<1x1x128xf32, #tpu.memory_space<vmem>>, vector<1x1x128xf32>,
    return
  }
  func.func @transform_0(%arg0: i32) -> (i32, i32, i32) {
    %c0_i32 = arith.constant 0 : i32
    %c0_i32_0 = arith.constant 0 : i32
    %c0_i32_1 = arith.constant 0 : i32
    return %arg0, %c0_i32, %c0_i32_0 : i32, i32, i32
  }
  func.func @transform_1(%arg0: i32) -> (i32, i32, i32) {
    %c0_i32 = arith.constant 0 : i32
    %c0_i32_0 = arith.constant 0 : i32
    %c0_i32_1 = arith.constant 0 : i32
    return %arg0, %c0_i32, %c0_i32_0 : i32, i32, i32
  }
  func.func @transform_2(%arg0: i32) -> (i32, i32, i32) {
    %c0_i32 = arith.constant 0 : i32
    %c0_i32_0 = arith.constant 0 : i32
    %c0_i32_1 = arith.constant 0 : i32
    %c0_i32_2 = arith.constant 0 : i32
    return %c0_i32, %c0_i32_0, %c0_i32_1 : i32, i32, i32
  }
  func.func @transform_3(%arg0: i32) -> (i32, i32, i32) {
    %c0_i32 = arith.constant 0 : i32
    %c0_i32_0 = arith.constant 0 : i32
    %c0_i32_1 = arith.constant 0 : i32
    %c0_i32_2 = arith.constant 0 : i32
    return %c0_i32, %c0_i32_0, %c0_i32_1 : i32, i32, i32
  }
  func.func @transform_4(%arg0: i32) -> (i32, i32, i32) {
    %c0_i32 = arith.constant 0 : i32
    %c0_i32_0 = arith.constant 0 : i32
    %c0_i32_1 = arith.constant 0 : i32
    %c0_i32_2 = arith.constant 0 : i32
    return %c0_i32, %c0_i32_0, %c0_i32_1 : i32, i32, i32
  }
  func.func @transform_5(%arg0: i32) -> (i32, i32, i32) {
    %c0_i32 = arith.constant 0 : i32
    %c0_i32_0 = arith.constant 0 : i32
    %c0_i32_1 = arith.constant 0 : i32
    %c0_i32_2 = arith.constant 0 : i32
    return %c0_i32, %c0_i32_0, %c0_i32_1 : i32, i32, i32
  }
  func.func @transform_6(%arg0: i32) -> (i32, i32, i32) {
    %c0_i32 = arith.constant 0 : i32
    %c0_i32_0 = arith.constant 0 : i32
    %c0_i32_1 = arith.constant 0 : i32
    %c0_i32_2 = arith.constant 0 : i32
    return %c0_i32, %c0_i32_0, %c0_i32_1 : i32, i32, i32
  }
  func.func @transform_7(%arg0: i32) -> (i32, i32, i32) {
    %c0_i32 = arith.constant 0 : i32
    %c0_i32_0 = arith.constant 0 : i32
    %c0_i32_1 = arith.constant 0 : i32
    %c0_i32_2 = arith.constant 0 : i32
    return %c0_i32, %c0_i32_0, %c0_i32_1 : i32, i32, i32
  }
  func.func @transform_8(%arg0: i32) -> (i32, i32, i32) {
    %c0_i32 = arith.constant 0 : i32
    %c0_i32_0 = arith.constant 0 : i32
    %c0_i32_1 = arith.constant 0 : i32
    %c0_i32_2 = arith.constant 0 : i32
    return %c0_i32, %c0_i32_0, %c0_i32_1 : i32, i32, i32
  }
  func.func @transform_9(%arg0: i32) -> (i32, i32, i32) {
    %c0_i32 = arith.constant 0 : i32
    %c0_i32_0 = arith.constant 0 : i32
    %c0_i32_1 = arith.constant 0 : i32
    %c0_i32_2 = arith.constant 0 : i32
    return %c0_i32, %c0_i32_0, %c0_i32_1 : i32, i32, i32
  }
  func.func @transform_10(%arg0: i32) -> (i32, i32, i32) {
    %c0_i32 = arith.constant 0 : i32
    %c0_i32_0 = arith.constant 0 : i32
    %c0_i32_1 = arith.constant 0 : i32
    %c0_i32_2 = arith.constant 0 : i32
    return %c0_i32, %c0_i32_0, %c0_i32_1 : i32, i32, i32
  }
  func.func @transform_11(%arg0: i32) -> (i32, i32, i32) {
    %c0_i32 = arith.constant 0 : i32
    %c0_i32_0 = arith.constant 0 : i32
    %c0_i32_1 = arith.constant 0 : i32
    %c0_i32_2 = arith.constant 0 : i32
    return %c0_i32, %c0_i32_0, %c0_i32_1 : i32, i32, i32
  }
  func.func @transform_12(%arg0: i32) -> (i32, i32, i32) {
    %c0_i32 = arith.constant 0 : i32
    %c0_i32_0 = arith.constant 0 : i32
    %c0_i32_1 = arith.constant 0 : i32
    %c0_i32_2 = arith.constant 0 : i32
    return %c0_i32, %c0_i32_0, %c0_i32_1 : i32, i32, i32
  }
  func.func @transform_13(%arg0: i32) -> (i32, i32, i32) {
    %c0_i32 = arith.constant 0 : i32
    %c0_i32_0 = arith.constant 0 : i32
    %c0_i32_1 = arith.constant 0 : i32
    %c0_i32_2 = arith.constant 0 : i32
    return %c0_i32, %c0_i32_0, %c0_i32_1 : i32, i32, i32
  }
  func.func @transform_14(%arg0: i32) -> (i32, i32) {
    %c0_i32 = arith.constant 0 : i32
    %c0_i32_0 = arith.constant 0 : i32
    %c0_i32_1 = arith.constant 0 : i32
    return %c0_i32, %c0_i32_0 : i32, i32
  }
  func.func @transform_15(%arg0: i32) -> (i32, i32) {
    %c0_i32 = arith.constant 0 : i32
    %c0_i32_0 = arith.constant 0 : i32
    %c0_i32_1 = arith.constant 0 : i32
    return %c0_i32, %c0_i32_0 : i32, i32
  }
  func.func @transform_16(%arg0: i32) -> (i32, i32, i32) {
    %c0_i32 = arith.constant 0 : i32
    %c0_i32_0 = arith.constant 0 : i32
    %c0_i32_1 = arith.constant 0 : i32
    return %arg0, %c0_i32, %c0_i32_0 : i32, i32, i32
  }
}

</mosaic_0001>

<llo_original>
// kernel: transformer_encoder_forward.1
$region0: #{transformer_encoder_forward.1}
  #allocation0 [shape = 'u32[]', space=smem, size = 0x4, offset = 0x4, fixed_abs, tag = 'smem constant byte address 0x4 - core index']
  #allocation1 [shape = 'u32[144,128]{1,0:T(1,128)}', space=vmem, size = 0x12000, scoped, tag = 'internal scratch']
  %s0 = inlined_call_operand.vmem [shape: f32[2,64,128], index: 0, kind: input, shape index: {}]
  %s1 = inlined_call_operand.vmem [shape: f32[2,1,64], index: 1, kind: input, shape index: {}]
  %s2 = inlined_call_operand.vmem [shape: bf16[2,128,384], index: 2, kind: input, shape index: {}]
  %s3 = inlined_call_operand.vmem [shape: f32[2,1,384], index: 3, kind: input, shape index: {}]
  %s4 = inlined_call_operand.vmem [shape: bf16[2,128,128], index: 4, kind: input, shape index: {}]
  %s5 = inlined_call_operand.vmem [shape: f32[2,1,128], index: 5, kind: input, shape index: {}]
  %s6 = inlined_call_operand.hbm [shape: bf16[2,128,2048], index: 6, kind: input, shape index: {}]
  %s7 = inlined_call_operand.vmem [shape: f32[2,1,2048], index: 7, kind: input, shape index: {}]
  %s8 = inlined_call_operand.hbm [shape: bf16[2,2048,128], index: 8, kind: input, shape index: {}]
  %s9 = inlined_call_operand.vmem [shape: f32[2,1,128], index: 9, kind: input, shape index: {}]
  %s10 = inlined_call_operand.vmem [shape: f32[2,1,128], index: 10, kind: input, shape index: {}]
  %s11 = inlined_call_operand.vmem [shape: f32[2,1,128], index: 11, kind: input, shape index: {}]
  %s12 = inlined_call_operand.vmem [shape: f32[2,1,128], index: 12, kind: input, shape index: {}]
  %s13 = inlined_call_operand.vmem [shape: f32[2,1,128], index: 13, kind: input, shape index: {}]
  %s14 = inlined_call_operand.vmem [shape: bf16[128,128], index: 14, kind: input, shape index: {}]
  %s15 = inlined_call_operand.vmem [shape: f32[1,128], index: 15, kind: input, shape index: {}]
  %s16 = inlined_call_operand.hbm [shape: f32[2,1,128], index: 16, kind: output, shape index: {}]
  %s17 = sld [smem:[#allocation0]]
  $region105: #{transformer_encoder_forward.1} parent=0
    _
  %s19 = ssub.s32 1, %s17
  %s20 = scalar_select 0, %s19, %s17
  $region1: #{transformer_encoder_forward.1} parent=0
    #allocation2 [shape = 'u8[1048576]{0}', space=vmem, size = 0x100000, scoped, tag = 'input window, operand 6, single buffered']
    #allocation3 [shape = 's32[2]{0}', space=sflag, size = 0x8, scoped, tag = 'scoped memory for transformer_encoder_forward.1']
    #allocation4 [shape = 's32[2]{0}', space=sflag, size = 0x8, scoped, tag = 'scoped memory for transformer_encoder_forward.1']
    #allocation5 [shape = 'u8[1048576]{0}', space=vmem, size = 0x100000, scoped, tag = 'input window, operand 8, single buffered']
    #allocation6 [shape = 's32[1]{0}', space=sflag, size = 0x4, scoped, tag = 'scoped memory for transformer_encoder_forward.1']
    #allocation7 [shape = 'u8[1024]{0}', space=vmem, size = 0x400, scoped, tag = 'output window, operand 0']
    %21 = vsyncpa [#allocation3], 0
    %22 = vsyncpa [#allocation6], 0
    %23 = vsyncpa [#allocation4], 0
    %s24 = scalar_lea.sflag [#allocation4], 1
    %25 = vsyncpa %s24, 0
    loop: start=0, step=1, limit=4
    $region2: #{transformer_encoder_forward.1} parent=1 // loop_pre_header
      _
    $region3: #{transformer_encoder_forward.1} parent=1 // loop_header
      %s27 = sphi 0, %s31
      %p28 = scmp.ge.s32.totalorder %s27, 4
      %s37 = sphi 0, %s39
      %s40 = sphi 0, %s37
      %s41 = sphi 0, %s40
      %s57 = sphi 0, %s41
      %s63 = sphi 0, %s65
      %s66 = sphi 0, %s63
      %s67 = sphi 0, %s66
      %s83 = sphi 0, %s67
      %s87 = sphi 0, %s87
      %s89 = sphi 0, %s87
      %s90 = sphi 0, %s89
      %s104 = sphi 0, %s90
      %s108 = sphi 0, %s108
      %s110 = sphi 0, %s108
      %s111 = sphi 0, %s110
      %s125 = sphi 0, %s111
      %s129 = sphi 0, %s129
      %s131 = sphi 0, %s129
      %s132 = sphi 0, %s131
      %s146 = sphi 0, %s132
      %s150 = sphi 0, %s150
      %s152 = sphi 0, %s150
      %s153 = sphi 0, %s152
      %s167 = sphi 0, %s153
      %s171 = sphi 0, %s171
      %s173 = sphi 0, %s171
      %s174 = sphi 0, %s173
      %s188 = sphi 0, %s174
      %s192 = sphi 0, %s192
      %s194 = sphi 0, %s192
      %s195 = sphi 0, %s194
      %s209 = sphi 0, %s195
      %s213 = sphi 0, %s213
      %s215 = sphi 0, %s213
      %s216 = sphi 0, %s215
      %s230 = sphi 0, %s216
      %s234 = sphi 0, %s234
      %s236 = sphi 0, %s234
      %s237 = sphi 0, %s236
      %s251 = sphi 0, %s237
      %s255 = sphi 0, %s255
      %s257 = sphi 0, %s255
      %s258 = sphi 0, %s257
      %s272 = sphi 0, %s258
      %s276 = sphi 0, %s276
      %s278 = sphi 0, %s276
      %s279 = sphi 0, %s278
      %s293 = sphi 0, %s279
      %s297 = sphi 0, %s297
      %s299 = sphi 0, %s297
      %s300 = sphi 0, %s299
      %s314 = sphi 0, %s300
      %s318 = sphi 0, %s318
      %s320 = sphi 0, %s318
      %s321 = sphi 0, %s320
      %s335 = sphi 0, %s321
      %s339 = sphi 0, %s339
      %s341 = sphi 0, %s339
      %s342 = sphi 0, %s341
      %s356 = sphi 0, %s342
      %s360 = sphi 0, %s360
      %s362 = sphi 0, %s360
      %s363 = sphi 0, %s362
      %s377 = sphi 0, %s363
      %s383 = sphi 0, %s385
      %s386 = sphi 0, %s383
      %s387 = sphi 0, %s386
      %s403 = sphi 0, %s387
    $region4: #{transformer_encoder_forward.1} parent=1 // loop_header_branch
      %30 = sbr.rel (%p28) target = $region8
    $region5: #{transformer_encoder_forward.1} parent=1 // loop_body
      %s32 = ssub.s32 %s27, 1
      %s33 = ssub.s32 %s27, 2
      %s34 = sadd.s32 %s27, 1
      %s35 = ssub.s32 %s27, %s34
      %p36 = scmp.eq.s32.totalorder %s35, 0
      %s38 = sadd.s32 %s37, 1
      %s39 = scalar_select %p36, %s37, %s38
      %p42 = pneg %p36
      %p43 = scmp.eq.s32.totalorder %s27, 1
      %p44 = por %p42, %p43
      %p45 = scmp.ne.s32.totalorder %s37, %s40
      %p46 = scmp.eq.s32.totalorder %s27, 0
      %p47 = por %p45, %p46
      %p48 = scmp.ne.s32.totalorder %s37, %s40
      %p49 = scmp.eq.s32.totalorder %s32, 1
      %p50 = por %p48, %p49
      %p51 = scmp.ne.s32.totalorder %s40, %s41
      %p52 = scmp.eq.s32.totalorder %s32, 0
      %p53 = por %p51, %p52
      %p54 = scmp.ne.s32.totalorder %s40, %s41
      %p55 = scmp.eq.s32.totalorder %s33, 1
      %p56 = por %p54, %p55
      %p58 = scmp.ne.s32.totalorder %s41, %s57
      %p59 = scmp.eq.s32.totalorder %s33, 0
      %p60 = por %p58, %p59
      %s61 = ssub.s32 %s27, %s34
      %p62 = scmp.eq.s32.totalorder %s61, 0
      %s64 = sadd.s32 %s63, 1
      %s65 = scalar_select %p62, %s63, %s64
      %p68 = pneg %p62
      %p69 = scmp.eq.s32.totalorder %s27, 1
      %p70 = por %p68, %p69
      %p71 = scmp.ne.s32.totalorder %s63, %s66
      %p72 = scmp.eq.s32.totalorder %s27, 0
      %p73 = por %p71, %p72
      %p74 = scmp.ne.s32.totalorder %s63, %s66
      %p75 = scmp.eq.s32.totalorder %s32, 1
      %p76 = por %p74, %p75
      %p77 = scmp.ne.s32.totalorder %s66, %s67
      %p78 = scmp.eq.s32.totalorder %s32, 0
      %p79 = por %p77, %p78
      %p80 = scmp.ne.s32.totalorder %s66, %s67
      %p81 = scmp.eq.s32.totalorder %s33, 1
      %p82 = por %p80, %p81
      %p84 = scmp.ne.s32.totalorder %s67, %s83
      %p85 = scmp.eq.s32.totalorder %s33, 0
      %p86 = por %p84, %p85
      %s88 = sadd.s32 %s87, 1
      %p91 = scmp.eq.s32.totalorder %s27, 1
      %p92 = scmp.ne.s32.totalorder %s87, %s89
      %p93 = scmp.eq.s32.totalorder %s27, 0
      %p94 = por %p92, %p93
      %p95 = scmp.ne.s32.totalorder %s87, %s89
      %p96 = scmp.eq.s32.totalorder %s32, 1
      %p97 = por %p95, %p96
      %p98 = scmp.ne.s32.totalorder %s89, %s90
      %p99 = scmp.eq.s32.totalorder %s32, 0
      %p100 = por %p98, %p99
      %p101 = scmp.ne.s32.totalorder %s89, %s90
      %p102 = scmp.eq.s32.totalorder %s33, 1
      %p103 = por %p101, %p102
      %p105 = scmp.ne.s32.totalorder %s90, %s104
      %p106 = scmp.eq.s32.totalorder %s33, 0
      %p107 = por %p105, %p106
      %s109 = sadd.s32 %s108, 1
      %p112 = scmp.eq.s32.totalorder %s27, 1
      %p113 = scmp.ne.s32.totalorder %s108, %s110
      %p114 = scmp.eq.s32.totalorder %s27, 0
      %p115 = por %p113, %p114
      %p116 = scmp.ne.s32.totalorder %s108, %s110
      %p117 = scmp.eq.s32.totalorder %s32, 1
      %p118 = por %p116, %p117
      %p119 = scmp.ne.s32.totalorder %s110, %s111
      %p120 = scmp.eq.s32.totalorder %s32, 0
      %p121 = por %p119, %p120
      %p122 = scmp.ne.s32.totalorder %s110, %s111
      %p123 = scmp.eq.s32.totalorder %s33, 1
      %p124 = por %p122, %p123
      %p126 = scmp.ne.s32.totalorder %s111, %s125
      %p127 = scmp.eq.s32.totalorder %s33, 0
      %p128 = por %p126, %p127
      %s130 = sadd.s32 %s129, 1
      %p133 = scmp.eq.s32.totalorder %s27, 1
      %p134 = scmp.ne.s32.totalorder %s129, %s131
      %p135 = scmp.eq.s32.totalorder %s27, 0
      %p136 = por %p134, %p135
      %p137 = scmp.ne.s32.totalorder %s129, %s131
      %p138 = scmp.eq.s32.totalorder %s32, 1
      %p139 = por %p137, %p138
      %p140 = scmp.ne.s32.totalorder %s131, %s132
      %p141 = scmp.eq.s32.totalorder %s32, 0
      %p142 = por %p140, %p141
      %p143 = scmp.ne.s32.totalorder %s131, %s132
      %p144 = scmp.eq.s32.totalorder %s33, 1
      %p145 = por %p143, %p144
      %p147 = scmp.ne.s32.totalorder %s132, %s146
      %p148 = scmp.eq.s32.totalorder %s33, 0
      %p149 = por %p147, %p148
      %s151 = sadd.s32 %s150, 1
      %p154 = scmp.eq.s32.totalorder %s27, 1
      %p155 = scmp.ne.s32.totalorder %s150, %s152
      %p156 = scmp.eq.s32.totalorder %s27, 0
      %p157 = por %p155, %p156
      %p158 = scmp.ne.s32.totalorder %s150, %s152
      %p159 = scmp.eq.s32.totalorder %s32, 1
      %p160 = por %p158, %p159
      %p161 = scmp.ne.s32.totalorder %s152, %s153
      %p162 = scmp.eq.s32.totalorder %s32, 0
      %p163 = por %p161, %p162
      %p164 = scmp.ne.s32.totalorder %s152, %s153
      %p165 = scmp.eq.s32.totalorder %s33, 1
      %p166 = por %p164, %p165
      %p168 = scmp.ne.s32.totalorder %s153, %s167
      %p169 = scmp.eq.s32.totalorder %s33, 0
      %p170 = por %p168, %p169
      %s172 = sadd.s32 %s171, 1
      %p175 = scmp.eq.s32.totalorder %s27, 1
      %p176 = scmp.ne.s32.totalorder %s171, %s173
      %p177 = scmp.eq.s32.totalorder %s27, 0
      %p178 = por %p176, %p177
      %p179 = scmp.ne.s32.totalorder %s171, %s173
      %p180 = scmp.eq.s32.totalorder %s32, 1
      %p181 = por %p179, %p180
      %p182 = scmp.ne.s32.totalorder %s173, %s174
      %p183 = scmp.eq.s32.totalorder %s32, 0
      %p184 = por %p182, %p183
      %p185 = scmp.ne.s32.totalorder %s173, %s174
      %p186 = scmp.eq.s32.totalorder %s33, 1
      %p187 = por %p185, %p186
      %p189 = scmp.ne.s32.totalorder %s174, %s188
      %p190 = scmp.eq.s32.totalorder %s33, 0
      %p191 = por %p189, %p190
      %s193 = sadd.s32 %s192, 1
      %p196 = scmp.eq.s32.totalorder %s27, 1
      %p197 = scmp.ne.s32.totalorder %s192, %s194
      %p198 = scmp.eq.s32.totalorder %s27, 0
      %p199 = por %p197, %p198
      %p200 = scmp.ne.s32.totalorder %s192, %s194
      %p201 = scmp.eq.s32.totalorder %s32, 1
      %p202 = por %p200, %p201
      %p203 = scmp.ne.s32.totalorder %s194, %s195
      %p204 = scmp.eq.s32.totalorder %s32, 0
      %p205 = por %p203, %p204
      %p206 = scmp.ne.s32.totalorder %s194, %s195
      %p207 = scmp.eq.s32.totalorder %s33, 1
      %p208 = por %p206, %p207
      %p210 = scmp.ne.s32.totalorder %s195, %s209
      %p211 = scmp.eq.s32.totalorder %s33, 0
      %p212 = por %p210, %p211
      %s214 = sadd.s32 %s213, 1
      %p217 = scmp.eq.s32.totalorder %s27, 1
      %p218 = scmp.ne.s32.totalorder %s213, %s215
      %p219 = scmp.eq.s32.totalorder %s27, 0
      %p220 = por %p218, %p219
      %p221 = scmp.ne.s32.totalorder %s213, %s215
      %p222 = scmp.eq.s32.totalorder %s32, 1
      %p223 = por %p221, %p222
      %p224 = scmp.ne.s32.totalorder %s215, %s216
      %p225 = scmp.eq.s32.totalorder %s32, 0
      %p226 = por %p224, %p225
      %p227 = scmp.ne.s32.totalorder %s215, %s216
      %p228 = scmp.eq.s32.totalorder %s33, 1
      %p229 = por %p227, %p228
      %p231 = scmp.ne.s32.totalorder %s216, %s230
      %p232 = scmp.eq.s32.totalorder %s33, 0
      %p233 = por %p231, %p232
      %s235 = sadd.s32 %s234, 1
      %p238 = scmp.eq.s32.totalorder %s27, 1
      %p239 = scmp.ne.s32.totalorder %s234, %s236
      %p240 = scmp.eq.s32.totalorder %s27, 0
      %p241 = por %p239, %p240
      %p242 = scmp.ne.s32.totalorder %s234, %s236
      %p243 = scmp.eq.s32.totalorder %s32, 1
      %p244 = por %p242, %p243
      %p245 = scmp.ne.s32.totalorder %s236, %s237
      %p246 = scmp.eq.s32.totalorder %s32, 0
      %p247 = por %p245, %p246
      %p248 = scmp.ne.s32.totalorder %s236, %s237
      %p249 = scmp.eq.s32.totalorder %s33, 1
      %p250 = por %p248, %p249
      %p252 = scmp.ne.s32.totalorder %s237, %s251
      %p253 = scmp.eq.s32.totalorder %s33, 0
      %p254 = por %p252, %p253
      %s256 = sadd.s32 %s255, 1
      %p259 = scmp.eq.s32.totalorder %s27, 1
      %p260 = scmp.ne.s32.totalorder %s255, %s257
      %p261 = scmp.eq.s32.totalorder %s27, 0
      %p262 = por %p260, %p261
      %p263 = scmp.ne.s32.totalorder %s255, %s257
      %p264 = scmp.eq.s32.totalorder %s32, 1
      %p265 = por %p263, %p264
      %p266 = scmp.ne.s32.totalorder %s257, %s258
      %p267 = scmp.eq.s32.totalorder %s32, 0
      %p268 = por %p266, %p267
      %p269 = scmp.ne.s32.totalorder %s257, %s258
      %p270 = scmp.eq.s32.totalorder %s33, 1
      %p271 = por %p269, %p270
      %p273 = scmp.ne.s32.totalorder %s258, %s272
      %p274 = scmp.eq.s32.totalorder %s33, 0
      %p275 = por %p273, %p274
      %s277 = sadd.s32 %s276, 1
      %p280 = scmp.eq.s32.totalorder %s27, 1
      %p281 = scmp.ne.s32.totalorder %s276, %s278
      %p282 = scmp.eq.s32.totalorder %s27, 0
      %p283 = por %p281, %p282
      %p284 = scmp.ne.s32.totalorder %s276, %s278
      %p285 = scmp.eq.s32.totalorder %s32, 1
      %p286 = por %p284, %p285
      %p287 = scmp.ne.s32.totalorder %s278, %s279
      %p288 = scmp.eq.s32.totalorder %s32, 0
      %p289 = por %p287, %p288
      %p290 = scmp.ne.s32.totalorder %s278, %s279
      %p291 = scmp.eq.s32.totalorder %s33, 1
      %p292 = por %p290, %p291
      %p294 = scmp.ne.s32.totalorder %s279, %s293
      %p295 = scmp.eq.s32.totalorder %s33, 0
      %p296 = por %p294, %p295
      %s298 = sadd.s32 %s297, 1
      %p301 = scmp.eq.s32.totalorder %s27, 1
      %p302 = scmp.ne.s32.totalorder %s297, %s299
      %p303 = scmp.eq.s32.totalorder %s27, 0
      %p304 = por %p302, %p303
      %p305 = scmp.ne.s32.totalorder %s297, %s299
      %p306 = scmp.eq.s32.totalorder %s32, 1
      %p307 = por %p305, %p306
      %p308 = scmp.ne.s32.totalorder %s299, %s300
      %p309 = scmp.eq.s32.totalorder %s32, 0
      %p310 = por %p308, %p309
      %p311 = scmp.ne.s32.totalorder %s299, %s300
      %p312 = scmp.eq.s32.totalorder %s33, 1
      %p313 = por %p311, %p312
      %p315 = scmp.ne.s32.totalorder %s300, %s314
      %p316 = scmp.eq.s32.totalorder %s33, 0
      %p317 = por %p315, %p316
      %s319 = sadd.s32 %s318, 1
      %p322 = scmp.eq.s32.totalorder %s27, 1
      %p323 = scmp.ne.s32.totalorder %s318, %s320
      %p324 = scmp.eq.s32.totalorder %s27, 0
      %p325 = por %p323, %p324
      %p326 = scmp.ne.s32.totalorder %s318, %s320
      %p327 = scmp.eq.s32.totalorder %s32, 1
      %p328 = por %p326, %p327
      %p329 = scmp.ne.s32.totalorder %s320, %s321
      %p330 = scmp.eq.s32.totalorder %s32, 0
      %p331 = por %p329, %p330
      %p332 = scmp.ne.s32.totalorder %s320, %s321
      %p333 = scmp.eq.s32.totalorder %s33, 1
      %p334 = por %p332, %p333
      %p336 = scmp.ne.s32.totalorder %s321, %s335
      %p337 = scmp.eq.s32.totalorder %s33, 0
      %p338 = por %p336, %p337
      %s340 = sadd.s32 %s339, 1
      %p343 = scmp.eq.s32.totalorder %s27, 1
      %p344 = scmp.ne.s32.totalorder %s339, %s341
      %p345 = scmp.eq.s32.totalorder %s27, 0
      %p346 = por %p344, %p345
      %p347 = scmp.ne.s32.totalorder %s339, %s341
      %p348 = scmp.eq.s32.totalorder %s32, 1
      %p349 = por %p347, %p348
      %p350 = scmp.ne.s32.totalorder %s341, %s342
      %p351 = scmp.eq.s32.totalorder %s32, 0
      %p352 = por %p350, %p351
      %p353 = scmp.ne.s32.totalorder %s341, %s342
      %p354 = scmp.eq.s32.totalorder %s33, 1
      %p355 = por %p353, %p354
      %p357 = scmp.ne.s32.totalorder %s342, %s356
      %p358 = scmp.eq.s32.totalorder %s33, 0
      %p359 = por %p357, %p358
      %s361 = sadd.s32 %s360, 1
      %p364 = scmp.eq.s32.totalorder %s27, 1
      %p365 = scmp.ne.s32.totalorder %s360, %s362
      %p366 = scmp.eq.s32.totalorder %s27, 0
      %p367 = por %p365, %p366
      %p368 = scmp.ne.s32.totalorder %s360, %s362
      %p369 = scmp.eq.s32.totalorder %s32, 1
      %p370 = por %p368, %p369
      %p371 = scmp.ne.s32.totalorder %s362, %s363
      %p372 = scmp.eq.s32.totalorder %s32, 0
      %p373 = por %p371, %p372
      %p374 = scmp.ne.s32.totalorder %s362, %s363
      %p375 = scmp.eq.s32.totalorder %s33, 1
      %p376 = por %p374, %p375
      %p378 = scmp.ne.s32.totalorder %s363, %s377
      %p379 = scmp.eq.s32.totalorder %s33, 0
      %p380 = por %p378, %p379
      %s381 = ssub.s32 %s27, %s34
      %p382 = scmp.eq.s32.totalorder %s381, 0
      %s384 = sadd.s32 %s383, 1
      %s385 = scalar_select %p382, %s383, %s384
      %p388 = pneg %p382
      %p389 = scmp.eq.s32.totalorder %s27, 1
      %p390 = por %p388, %p389
      %p391 = scmp.ne.s32.totalorder %s383, %s386
      %p392 = scmp.eq.s32.totalorder %s27, 0
      %p393 = por %p391, %p392
      %p394 = scmp.ne.s32.totalorder %s383, %s386
      %p395 = scmp.eq.s32.totalorder %s32, 1
      %p396 = por %p394, %p395
      %p397 = scmp.ne.s32.totalorder %s386, %s387
      %p398 = scmp.eq.s32.totalorder %s32, 0
      %p399 = por %p397, %p398
      %p400 = scmp.ne.s32.totalorder %s386, %s387
      %p401 = scmp.eq.s32.totalorder %s33, 1
      %p402 = por %p400, %p401
      %p404 = scmp.ne.s32.totalorder %s387, %s403
      %p405 = scmp.eq.s32.totalorder %s33, 0
      %p406 = por %p404, %p405
      %p407 = scmp.le.s32.totalorder 1, %s27
      %p408 = scmp.lt.s32.totalorder %s27, 3
      %p409 = pnand %p407, %p408
      %p410 = pneg %p409
      // Predicated region
      $region9: #{transformer_encoder_forward.1} parent=5 // pred_check
        _
      $region10: #{transformer_encoder_forward.1} parent=5 // pred_check_branch
        %412 = sbr.rel (%p409) target = $region12
      $region11: #{transformer_encoder_forward.1} parent=5 // pred_region
        %s413 = ssub.s32 %s27, 1
        // Predicated region
        $region13: #{transformer_encoder_forward.1} parent=11 // pred_check
          %p414 = pneg %p100
        $region14: #{transformer_encoder_forward.1} parent=11 // pred_check_branch
          %416 = sbr.rel (%p414) target = $region16
        $region15: #{transformer_encoder_forward.1} parent=11 // pred_region
          _
        $region16: #{transformer_encoder_forward.1} parent=11 // pred_fallthru
          _
        // Predicated region
        $region17: #{transformer_encoder_forward.1} parent=11 // pred_check
          %p417 = pneg %p121
        $region18: #{transformer_encoder_forward.1} parent=11 // pred_check_branch
          %419 = sbr.rel (%p417) target = $region20
        $region19: #{transformer_encoder_forward.1} parent=11 // pred_region
          _
        $region20: #{transformer_encoder_forward.1} parent=11 // pred_fallthru
          _
        // Predicated region
        $region21: #{transformer_encoder_forward.1} parent=11 // pred_check
          %p420 = pneg %p142
        $region22: #{transformer_encoder_forward.1} parent=11 // pred_check_branch
          %422 = sbr.rel (%p420) target = $region24
        $region23: #{transformer_encoder_forward.1} parent=11 // pred_region
          _
        $region24: #{transformer_encoder_forward.1} parent=11 // pred_fallthru
          _
        // Predicated region
        $region25: #{transformer_encoder_forward.1} parent=11 // pred_check
          %p423 = pneg %p163
        $region26: #{transformer_encoder_forward.1} parent=11 // pred_check_branch
          %425 = sbr.rel (%p423) target = $region28
        $region27: #{transformer_encoder_forward.1} parent=11 // pred_region
          _
        $region28: #{transformer_encoder_forward.1} parent=11 // pred_fallthru
          _
        // Predicated region
        $region29: #{transformer_encoder_forward.1} parent=11 // pred_check
          %p426 = pneg %p184
        $region30: #{transformer_encoder_forward.1} parent=11 // pred_check_branch
          %428 = sbr.rel (%p426) target = $region32
        $region31: #{transformer_encoder_forward.1} parent=11 // pred_region
          %s430 = ssub.s32 32768, 32768
          %431 = vsyncadd [#allocation3], %s430
          %s432 = sshll.u32 [#allocation2], 4
          %s433 = int_to_ptr.vmem [resolvable:$true] %s432
          %438 = dma.hbm_to_vmem [thread:$0]  %s6, 32768, %s433, [#allocation3], 1024, 1024, 64
        $region32: #{transformer_encoder_forward.1} parent=11 // pred_fallthru
          _
        // Predicated region
        $region33: #{transformer_encoder_forward.1} parent=11 // pred_check
          %p439 = pneg %p205
        $region34: #{transformer_encoder_forward.1} parent=11 // pred_check_branch
          %441 = sbr.rel (%p439) target = $region36
        $region35: #{transformer_encoder_forward.1} parent=11 // pred_region
          _
        $region36: #{transformer_encoder_forward.1} parent=11 // pred_fallthru
          _
        // Predicated region
        $region37: #{transformer_encoder_forward.1} parent=11 // pred_check
          %p442 = pneg %p226
        $region38: #{transformer_encoder_forward.1} parent=11 // pred_check_branch
          %444 = sbr.rel (%p442) target = $region40
        $region39: #{transformer_encoder_forward.1} parent=11 // pred_region
          %s446 = ssub.s32 32768, 32768
          %447 = vsyncadd [#allocation6], %s446
          %s448 = sshll.u32 [#allocation5], 4
          %s449 = int_to_ptr.vmem [resolvable:$true] %s448
          %454 = dma.hbm_to_vmem [thread:$0]  %s8, 32768, %s449, [#allocation6], 64, 64, 4
        $region40: #{transformer_encoder_forward.1} parent=11 // pred_fallthru
          _
        // Predicated region
        $region41: #{transformer_encoder_forward.1} parent=11 // pred_check
          %p455 = pneg %p247
        $region42: #{transformer_encoder_forward.1} parent=11 // pred_check_branch
          %457 = sbr.rel (%p455) target = $region44
        $region43: #{transformer_encoder_forward.1} parent=11 // pred_region
          _
        $region44: #{transformer_encoder_forward.1} parent=11 // pred_fallthru
          _
        // Predicated region
        $region45: #{transformer_encoder_forward.1} parent=11 // pred_check
          %p458 = pneg %p268
        $region46: #{transformer_encoder_forward.1} parent=11 // pred_check_branch
          %460 = sbr.rel (%p458) target = $region48
        $region47: #{transformer_encoder_forward.1} parent=11 // pred_region
          _
        $region48: #{transformer_encoder_forward.1} parent=11 // pred_fallthru
          _
        // Predicated region
        $region49: #{transformer_encoder_forward.1} parent=11 // pred_check
          %p461 = pneg %p289
        $region50: #{transformer_encoder_forward.1} parent=11 // pred_check_branch
          %463 = sbr.rel (%p461) target = $region52
        $region51: #{transformer_encoder_forward.1} parent=11 // pred_region
          _
        $region52: #{transformer_encoder_forward.1} parent=11 // pred_fallthru
          _
        // Predicated region
        $region53: #{transformer_encoder_forward.1} parent=11 // pred_check
          %p464 = pneg %p310
        $region54: #{transformer_encoder_forward.1} parent=11 // pred_check_branch
          %466 = sbr.rel (%p464) target = $region56
        $region55: #{transformer_encoder_forward.1} parent=11 // pred_region
          _
        $region56: #{transformer_encoder_forward.1} parent=11 // pred_fallthru
          _
        // Predicated region
        $region57: #{transformer_encoder_forward.1} parent=11 // pred_check
          %p467 = pneg %p331
        $region58: #{transformer_encoder_forward.1} parent=11 // pred_check_branch
          %469 = sbr.rel (%p467) target = $region60
        $region59: #{transformer_encoder_forward.1} parent=11 // pred_region
          _
        $region60: #{transformer_encoder_forward.1} parent=11 // pred_fallthru
          _
        // Predicated region
        $region61: #{transformer_encoder_forward.1} parent=11 // pred_check
          %p470 = pneg %p352
        $region62: #{transformer_encoder_forward.1} parent=11 // pred_check_branch
          %472 = sbr.rel (%p470) target = $region64
        $region63: #{transformer_encoder_forward.1} parent=11 // pred_region
          _
        $region64: #{transformer_encoder_forward.1} parent=11 // pred_fallthru
          _
        // Predicated region
        $region65: #{transformer_encoder_forward.1} parent=11 // pred_check
          %p473 = pneg %p373
        $region66: #{transformer_encoder_forward.1} parent=11 // pred_check_branch
          %475 = sbr.rel (%p473) target = $region68
        $region67: #{transformer_encoder_forward.1} parent=11 // pred_region
          _
        $region68: #{transformer_encoder_forward.1} parent=11 // pred_fallthru
          _
      $region12: #{transformer_encoder_forward.1} parent=5 // pred_fallthru
        _
      %p476 = scmp.lt.s32.totalorder %s27, 2
      // Predicated region
      $region69: #{transformer_encoder_forward.1} parent=5 // pred_check
        %p477 = pneg %p476
      $region70: #{transformer_encoder_forward.1} parent=5 // pred_check_branch
        %479 = sbr.rel (%p477) target = $region72
      $region71: #{transformer_encoder_forward.1} parent=5 // pred_region
        // Predicated region
        $region73: #{transformer_encoder_forward.1} parent=71 // pred_check
          %p480 = pneg %p47
        $region74: #{transformer_encoder_forward.1} parent=71 // pred_check_branch
          %482 = sbr.rel (%p480) target = $region76
        $region75: #{transformer_encoder_forward.1} parent=71 // pred_region
          %p483 = scmp.lt.s32.totalorder %s27, 1
          %s484 = scalar_select %p483, %s27, 1
          %s485 = smul.addr %s484, 8
          %s486 = smul.addr %s485, 8
          %s487 = scalar_lea.vmem %s0, %s486
        $region76: #{transformer_encoder_forward.1} parent=71 // pred_fallthru
          _
        // Predicated region
        $region77: #{transformer_encoder_forward.1} parent=71 // pred_check
          %p488 = pneg %p73
        $region78: #{transformer_encoder_forward.1} parent=71 // pred_check_branch
          %490 = sbr.rel (%p488) target = $region80
        $region79: #{transformer_encoder_forward.1} parent=71 // pred_region
          %p491 = scmp.lt.s32.totalorder %s27, 1
          %s492 = scalar_select %p491, %s27, 1
          %s493 = scalar_lea.vmem %s1, %s492
        $region80: #{transformer_encoder_forward.1} parent=71 // pred_fallthru
          _
      $region72: #{transformer_encoder_forward.1} parent=5 // pred_fallthru
        _
      %p494 = scmp.le.s32.totalorder 1, %s27
      %p495 = scmp.lt.s32.totalorder %s27, 3
      %p496 = pnand %p494, %p495
      %p497 = pneg %p496
      // Predicated region
      $region81: #{transformer_encoder_forward.1} parent=5 // pred_check
        _
      $region82: #{transformer_encoder_forward.1} parent=5 // pred_check_branch
        %499 = sbr.rel (%p496) target = $region84
      $region83: #{transformer_encoder_forward.1} parent=5 // pred_region
        %s500 = ssub.s32 %s27, 1
        // Predicated region
        $region85: #{transformer_encoder_forward.1} parent=83 // pred_check
          %p501 = pneg %p184
        $region86: #{transformer_encoder_forward.1} parent=83 // pred_check_branch
          %503 = sbr.rel (%p501) target = $region88
        $region87: #{transformer_encoder_forward.1} parent=83 // pred_region
          %504 = dma.done [#allocation3], 32768
        $region88: #{transformer_encoder_forward.1} parent=83 // pred_fallthru
          _
        // Predicated region
        $region89: #{transformer_encoder_forward.1} parent=83 // pred_check
          %p505 = pneg %p226
        $region90: #{transformer_encoder_forward.1} parent=83 // pred_check_branch
          %507 = sbr.rel (%p505) target = $region92
        $region91: #{transformer_encoder_forward.1} parent=83 // pred_region
          %508 = dma.done [#allocation6], 32768
        $region92: #{transformer_encoder_forward.1} parent=83 // pred_fallthru
          _
        %p509 = scmp.lt.s32.totalorder %s32, 1
        %s510 = scalar_select %p509, %s32, 1
        %s511 = smul.addr %s510, 8
        %s512 = smul.addr %s511, 8
        %s513 = scalar_lea.vmem %s0, %s512
        %p514 = pneg %p53
        %p515 = pneg %p50
        %p516 = scmp.lt.s32.totalorder %s32, 1
        %s517 = scalar_select %p516, %s32, 1
        %s518 = scalar_lea.vmem %s1, %s517
        %p519 = pneg %p79
        %p520 = pneg %p76
        %p521 = pneg %p100
        %p522 = pneg %p97
        %p523 = pneg %p121
        %p524 = pneg %p118
        %p525 = pneg %p142
        %p526 = pneg %p139
        %p527 = pneg %p163
        %p528 = pneg %p160
        %p529 = pneg %p184
        %p530 = pneg %p181
        %p531 = pneg %p205
        %p532 = pneg %p202
        %p533 = pneg %p226
        %p534 = pneg %p223
        %p535 = pneg %p247
        %p536 = pneg %p244
        %p537 = pneg %p268
        %p538 = pneg %p265
        %p539 = pneg %p289
        %p540 = pneg %p286
        %p541 = pneg %p310
        %p542 = pneg %p307
        %p543 = pneg %p331
        %p544 = pneg %p328
        %p545 = pneg %p352
        %p546 = pneg %p349
        %p547 = pneg %p373
        %p548 = pneg %p370
        %p549 = pneg %p399
        %p550 = pneg %p396
        %s551 = sand.u32 %s386, 1
        %s552 = scalar_lea.sflag [#allocation4], %s551
        %s553 = sand.u32 %s386, 1
        %s554 = scalar_lea.vmem [#allocation7], %s553
        %p555 = scmp.lt.s32.totalorder %s32, 1
        %s556 = scalar_select %p555, %s32, 1
        %s557 = smul.addr %s556, 8
        %s558 = smul.addr %s557, 8
        %s559 = scalar_lea.vmem %s0, %s558
        %p560 = scmp.lt.s32.totalorder %s32, 1
        %s561 = scalar_select %p560, %s32, 1
        %s562 = scalar_lea.vmem %s1, %s561
        %v564 = vld [vmem:[%s559] sm:$0xff]
        %v565 = vld [vmem:[%s559 + $0x8] sm:$0xff]
        %v566 = vld [vmem:[%s559 + $0x10] sm:$0xff]
        %v567 = vld [vmem:[%s559 + $0x18] sm:$0xff]
        %v568 = vld [vmem:[%s559 + $0x20] sm:$0xff]
        %v569 = vld [vmem:[%s559 + $0x28] sm:$0xff]
        %v570 = vld [vmem:[%s559 + $0x30] sm:$0xff]
        %v571 = vld [vmem:[%s559 + $0x38] sm:$0xff]
        %v572 = vld [vmem:[%s562] sm:$0x1]
        %v573 = vld [vmem:[%s2] sm:$0xff]
        %v574 = vld [vmem:[%s2 + $0x8] sm:$0xf]
        %v575 = vld [vmem:[%s2 + $0xc] sm:$0xff]
        %v576 = vld [vmem:[%s2 + $0x14] sm:$0xf]
        %v577 = vld [vmem:[%s2 + $0x18] sm:$0xff]
        %v578 = vld [vmem:[%s2 + $0x20] sm:$0xf]
        %v579 = vld [vmem:[%s2 + $0x24] sm:$0xff]
        %v580 = vld [vmem:[%s2 + $0x2c] sm:$0xf]
        %v581 = vld [vmem:[%s2 + $0x30] sm:$0xff]
        %v582 = vld [vmem:[%s2 + $0x38] sm:$0xf]
        %v583 = vld [vmem:[%s2 + $0x3c] sm:$0xff]
        %v584 = vld [vmem:[%s2 + $0x44] sm:$0xf]
        %v585 = vld [vmem:[%s2 + $0x48] sm:$0xff]
        %v586 = vld [vmem:[%s2 + $0x50] sm:$0xf]
        %v587 = vld [vmem:[%s2 + $0x54] sm:$0xff]
        %v588 = vld [vmem:[%s2 + $0x5c] sm:$0xf]
        %v589 = vld [vmem:[%s2 + $0x60] sm:$0xff]
        %v590 = vld [vmem:[%s2 + $0x68] sm:$0xf]
        %v591 = vld [vmem:[%s2 + $0x6c] sm:$0xff]
        %v592 = vld [vmem:[%s2 + $0x74] sm:$0xf]
        %v593 = vld [vmem:[%s2 + $0x78] sm:$0xff]
        %v594 = vld [vmem:[%s2 + $0x80] sm:$0xf]
        %v595 = vld [vmem:[%s2 + $0x84] sm:$0xff]
        %v596 = vld [vmem:[%s2 + $0x8c] sm:$0xf]
        %v597 = vld [vmem:[%s2 + $0x90] sm:$0xff]
        %v598 = vld [vmem:[%s2 + $0x98] sm:$0xf]
        %v599 = vld [vmem:[%s2 + $0x9c] sm:$0xff]
        %v600 = vld [vmem:[%s2 + $0xa4] sm:$0xf]
        %v601 = vld [vmem:[%s2 + $0xa8] sm:$0xff]
        %v602 = vld [vmem:[%s2 + $0xb0] sm:$0xf]
        %v603 = vld [vmem:[%s2 + $0xb4] sm:$0xff]
        %v604 = vld [vmem:[%s2 + $0xbc] sm:$0xf]
        %v605 = vpack.c.bf16 %v565, %v564
        %v606 = vpack.c.bf16 %v567, %v566
        %v607 = vpack.c.bf16 %v569, %v568
        %v608 = vpack.c.bf16 %v571, %v570
        %v609 = vld [vmem:[%s3] sm:$0x7]
        %v611 = vlaneseq
        %v612 = vshrl.u32 %v611, 7
        %v613 = vsub.s32 0, %v612
        %v614 = vrot.slane %v609, %v613
        %v615 = vlaneseq
        %v616 = vshrl.u32 %v615, 7
        %v617 = vsub.s32 1, %v616
        %v618 = vrot.slane %v609, %v617
        %v619 = vlaneseq
        %v620 = vshrl.u32 %v619, 7
        %v621 = vsub.s32 2, %v620
        %v622 = vrot.slane %v609, %v621
        %v658 = vunpack.c.l.b16 %v573
        %v659 = vunpack.c.h.b16 %v573
        %v660 = vunpack.c.l.b16 %v574
        %v661 = vunpack.c.l.b16 %v575
        %v662 = vunpack.c.h.b16 %v575
        %v663 = vunpack.c.l.b16 %v576
        %v664 = vunpack.c.l.b16 %v577
        %v665 = vunpack.c.h.b16 %v577
        %v666 = vunpack.c.l.b16 %v578
        %v667 = vunpack.c.l.b16 %v579
        %v668 = vunpack.c.h.b16 %v579
        %v669 = vunpack.c.l.b16 %v580
        %v670 = vunpack.c.l.b16 %v581
        %v671 = vunpack.c.h.b16 %v581
        %v672 = vunpack.c.l.b16 %v582
        %v673 = vunpack.c.l.b16 %v583
        %v674 = vunpack.c.h.b16 %v583
        %v675 = vunpack.c.l.b16 %v584
        %v676 = vunpack.c.l.b16 %v585
        %v677 = vunpack.c.h.b16 %v585
        %v678 = vunpack.c.l.b16 %v586
        %v679 = vunpack.c.l.b16 %v587
        %v680 = vunpack.c.h.b16 %v587
        %v681 = vunpack.c.l.b16 %v588
        %v682 = vunpack.c.l.b16 %v589
        %v683 = vunpack.c.h.b16 %v589
        %v684 = vunpack.c.l.b16 %v590
        %v685 = vunpack.c.l.b16 %v591
        %v686 = vunpack.c.h.b16 %v591
        %v687 = vunpack.c.l.b16 %v592
        %v688 = vunpack.c.l.b16 %v593
        %v689 = vunpack.c.h.b16 %v593
        %v690 = vunpack.c.l.b16 %v594
        %v691 = vunpack.c.l.b16 %v595
        %v692 = vunpack.c.h.b16 %v595
        %v693 = vunpack.c.l.b16 %v596
        %v694 = vunpack.c.l.b16 %v597
        %v695 = vunpack.c.h.b16 %v597
        %v696 = vunpack.c.l.b16 %v598
        %v697 = vunpack.c.l.b16 %v599
        %v698 = vunpack.c.h.b16 %v599
        %v699 = vunpack.c.l.b16 %v600
        %v700 = vunpack.c.l.b16 %v601
        %v701 = vunpack.c.h.b16 %v601
        %v702 = vunpack.c.l.b16 %v602
        %v703 = vunpack.c.l.b16 %v603
        %v704 = vunpack.c.h.b16 %v603
        %v705 = vunpack.c.l.b16 %v604
        %v706 = vpack.c.b16 %v661, %v658
        %v707 = vpack.c.b16 %v662, %v659
        %v708 = vpack.c.b16 %v663, %v660
        %v709 = vpack.c.b16 %v667, %v664
        %v710 = vpack.c.b16 %v668, %v665
        %v711 = vpack.c.b16 %v669, %v666
        %v712 = vpack.c.b16 %v673, %v670
        %v713 = vpack.c.b16 %v674, %v671
        %v714 = vpack.c.b16 %v675, %v672
        %v715 = vpack.c.b16 %v679, %v676
        %v716 = vpack.c.b16 %v680, %v677
        %v717 = vpack.c.b16 %v681, %v678
        %v718 = vpack.c.b16 %v685, %v682
        %v719 = vpack.c.b16 %v686, %v683
        %v720 = vpack.c.b16 %v687, %v684
        %v721 = vpack.c.b16 %v691, %v688
        %v722 = vpack.c.b16 %v692, %v689
        %v723 = vpack.c.b16 %v693, %v690
        %v724 = vpack.c.b16 %v697, %v694
        %v725 = vpack.c.b16 %v698, %v695
        %v726 = vpack.c.b16 %v699, %v696
        %v727 = vpack.c.b16 %v703, %v700
        %v728 = vpack.c.b16 %v704, %v701
        %v729 = vpack.c.b16 %v705, %v702
        %754 = vmatprep.subr.bf16.mxu0 %v707
        %755 = vmatpush1.bf16.msra.mxu0 %v706
        %756 = vmatprep.subr.bf16.mxu0 %v710
        %757 = vmatpush1.bf16.msra.mxu0 %v709
        %758 = vmatprep.subr.bf16.mxu0 %v713
        %759 = vmatpush1.bf16.msra.mxu0 %v712
        %760 = vmatprep.subr.bf16.mxu0 %v716
        %761 = vmatpush1.bf16.msra.mxu0 %v715
        %762 = vmatprep.subr.bf16.mxu0 %v719
        %763 = vmatpush1.bf16.msra.mxu0 %v718
        %764 = vmatprep.subr.bf16.mxu0 %v722
        %765 = vmatpush1.bf16.msra.mxu0 %v721
        %766 = vmatprep.subr.bf16.mxu0 %v725
        %767 = vmatpush1.bf16.msra.mxu0 %v724
        %768 = vmatprep.subr.bf16.mxu0 %v728
        %769 = vmatpush1.bf16.msra.mxu0 %v727
        %770 = vmatprep.subr.bf16.mxu0 0
        %771 = vmatpush1.bf16.msra.mxu0 0
        %772 = vmatprep.subr.bf16.mxu0 0
        %773 = vmatpush1.bf16.msra.mxu0 0
        %774 = vmatprep.subr.bf16.mxu0 0
        %775 = vmatpush1.bf16.msra.mxu0 0
        %776 = vmatprep.subr.bf16.mxu0 0
        %777 = vmatpush1.bf16.msra.mxu0 0
        %778 = vmatprep.subr.bf16.mxu0 0
        %779 = vmatpush1.bf16.msra.mxu0 0
        %780 = vmatprep.subr.bf16.mxu0 0
        %781 = vmatpush1.bf16.msra.mxu0 0
        %782 = vmatprep.subr.bf16.mxu0 0
        %783 = vmatpush1.bf16.msra.mxu0 0
        %784 = vmatprep.subr.bf16.mxu0 0
        %785 = vmatpush1.bf16.msra.mxu0 0
        %786 = vmatprep.mubr.bf16.mxu0 0
        %787 = vmatmul.mubr.bf16.gmra.mrb[0].mxu0 %v605
        %v788 = vpop.f32.mrb[0].mxu0
        %v789 = vadd.f32 %v614, %v788
        %v790 = vpop.f32.mrb[0].mxu0
        %v791 = vadd.f32 %v618, %v790
        %v792 = vpop.f32.mrb[0].mxu0
        %v793 = vadd.f32 %v614, %v792
        %v794 = vpop.f32.mrb[0].mxu0
        %v795 = vadd.f32 %v618, %v794
        %796 = vmatprep.mubr.bf16.mxu0 0
        %797 = vmatmul.mubr.bf16.gmra.mrb[0].mxu0 %v606
        %v798 = vpop.f32.mrb[0].mxu0
        %v799 = vadd.f32 %v614, %v798
        %v800 = vpop.f32.mrb[0].mxu0
        %v801 = vadd.f32 %v618, %v800
        %v802 = vpop.f32.mrb[0].mxu0
        %v803 = vadd.f32 %v614, %v802
        %v804 = vpop.f32.mrb[0].mxu0
        %v805 = vadd.f32 %v618, %v804
        %806 = vmatprep.mubr.bf16.mxu0 0
        %807 = vmatmul.mubr.bf16.gmra.mrb[0].mxu0 %v607
        %v808 = vpop.f32.mrb[0].mxu0
        %v809 = vadd.f32 %v614, %v808
        %v810 = vpop.f32.mrb[0].mxu0
        %v811 = vadd.f32 %v618, %v810
        %v812 = vpop.f32.mrb[0].mxu0
        %v813 = vadd.f32 %v614, %v812
        %v814 = vpop.f32.mrb[0].mxu0
        %v815 = vadd.f32 %v618, %v814
        %816 = vmatprep.mubr.bf16.mxu0 0
        %817 = vmatmul.mubr.bf16.gmra.mrb[0].mxu0 %v608
        %v818 = vpop.f32.mrb[0].mxu0
        %v819 = vadd.f32 %v614, %v818
        %v820 = vpop.f32.mrb[0].mxu0
        %v821 = vadd.f32 %v618, %v820
        %v822 = vpop.f32.mrb[0].mxu0
        %v823 = vadd.f32 %v614, %v822
        %v824 = vpop.f32.mrb[0].mxu0
        %v825 = vadd.f32 %v618, %v824
        %826 = vdwg.mxu0
        %827 = vmatprep.subr.bf16.mxu0 0
        %828 = vmatpush1.bf16.msra.mxu0 %v708
        %829 = vmatprep.subr.bf16.mxu0 0
        %830 = vmatpush1.bf16.msra.mxu0 %v711
        %831 = vmatprep.subr.bf16.mxu0 0
        %832 = vmatpush1.bf16.msra.mxu0 %v714
        %833 = vmatprep.subr.bf16.mxu0 0
        %834 = vmatpush1.bf16.msra.mxu0 %v717
        %835 = vmatprep.subr.bf16.mxu0 0
        %836 = vmatpush1.bf16.msra.mxu0 %v720
        %837 = vmatprep.subr.bf16.mxu0 0
        %838 = vmatpush1.bf16.msra.mxu0 %v723
        %839 = vmatprep.subr.bf16.mxu0 0
        %840 = vmatpush1.bf16.msra.mxu0 %v726
        %841 = vmatprep.subr.bf16.mxu0 0
        %842 = vmatpush1.bf16.msra.mxu0 %v729
        %843 = vmatprep.subr.bf16.mxu0 0
        %844 = vmatpush1.bf16.msra.mxu0 0
        %845 = vmatprep.subr.bf16.mxu0 0
        %846 = vmatpush1.bf16.msra.mxu0 0
        %847 = vmatprep.subr.bf16.mxu0 0
        %848 = vmatpush1.bf16.msra.mxu0 0
        %849 = vmatprep.subr.bf16.mxu0 0
        %850 = vmatpush1.bf16.msra.mxu0 0
        %851 = vmatprep.subr.bf16.mxu0 0
        %852 = vmatpush1.bf16.msra.mxu0 0
        %853 = vmatprep.subr.bf16.mxu0 0
        %854 = vmatpush1.bf16.msra.mxu0 0
        %855 = vmatprep.subr.bf16.mxu0 0
        %856 = vmatpush1.bf16.msra.mxu0 0
        %857 = vmatprep.subr.bf16.mxu0 0
        %858 = vmatpush1.bf16.msra.mxu0 0
        %859 = vmatprep.mubr.bf16.mxu0 0
        %860 = vmatmul.mubr.bf16.gmra.mrb[0].mxu0 %v605
        %v861 = vpop.f32.mrb[0].mxu0
        %v862 = vadd.f32 %v622, %v861
        %v863 = vpop.f32.mrb[0].mxu0
        %v864 = vpop.f32.mrb[0].mxu0
        %v865 = vadd.f32 %v622, %v864
        %v866 = vpop.f32.mrb[0].mxu0
        %867 = vmatprep.mubr.bf16.mxu0 0
        %868 = vmatmul.mubr.bf16.gmra.mrb[0].mxu0 %v606
        %v869 = vpop.f32.mrb[0].mxu0
        %v870 = vadd.f32 %v622, %v869
        %v871 = vpop.f32.mrb[0].mxu0
        %v872 = vpop.f32.mrb[0].mxu0
        %v873 = vadd.f32 %v622, %v872
        %v874 = vpop.f32.mrb[0].mxu0
        %875 = vmatprep.mubr.bf16.mxu0 0
        %876 = vmatmul.mubr.bf16.gmra.mrb[0].mxu0 %v607
        %v877 = vpop.f32.mrb[0].mxu0
        %v878 = vadd.f32 %v622, %v877
        %v879 = vpop.f32.mrb[0].mxu0
        %v880 = vpop.f32.mrb[0].mxu0
        %v881 = vadd.f32 %v622, %v880
        %v882 = vpop.f32.mrb[0].mxu0
        %883 = vmatprep.mubr.bf16.mxu0 0
        %884 = vmatmul.mubr.bf16.gmra.mrb[0].mxu0 %v608
        %v885 = vpop.f32.mrb[0].mxu0
        %v886 = vadd.f32 %v622, %v885
        %v887 = vpop.f32.mrb[0].mxu0
        %v888 = vpop.f32.mrb[0].mxu0
        %v889 = vadd.f32 %v622, %v888
        %v890 = vpop.f32.mrb[0].mxu0
        %891 = vdwg.mxu0
        %v892 = vmul.f32 %v789, 0.17677669
        %v893 = vmul.f32 %v793, 0.17677669
        %v894 = vmul.f32 %v799, 0.17677669
        %v895 = vmul.f32 %v803, 0.17677669
        %v896 = vmul.f32 %v809, 0.17677669
        %v897 = vmul.f32 %v813, 0.17677669
        %v898 = vmul.f32 %v819, 0.17677669
        %v899 = vmul.f32 %v823, 0.17677669
        %v900 = vpack.c.bf16 %v893, %v892
        %v901 = vpack.c.bf16 %v895, %v894
        %v902 = vpack.c.bf16 %v897, %v896
        %v903 = vpack.c.bf16 %v899, %v898
        %v904 = vpack.c.bf16 %v795, %v791
        %v905 = vpack.c.bf16 %v805, %v801
        %v906 = vpack.c.bf16 %v815, %v811
        %v907 = vpack.c.bf16 %v825, %v821
        %v908 = vpack.c.bf16 %v865, %v862
        %v909 = vpack.c.bf16 %v873, %v870
        %v910 = vpack.c.bf16 %v881, %v878
        %v911 = vpack.c.bf16 %v889, %v886
        %v913 = vlaneseq
        %v914 = vshrl.u32 %v913, 7
        %v915 = vsub.s32 0, %v914
        %v916 = vrot.slane %v572, %v915
        %vm918 = vcmask 261120
        %v920 = vsel %vm918, %v900, 0
        %v923 = vsel %vm918, %v901, 0
        %v926 = vsel %vm918, %v902, 0
        %v929 = vsel %vm918, %v903, 0
        %v932 = vsel %vm918, %v904, 0
        %v935 = vsel %vm918, %v905, 0
        %v938 = vsel %vm918, %v906, 0
        %v941 = vsel %vm918, %v907, 0
        %943 = vmatprep.subr.bf16.mxu0 0
        %944 = vmatpush1.bf16.xpose.msra.mxu0 %v932
        %945 = vmatprep.subr.bf16.mxu0 0
        %946 = vmatpush1.bf16.xpose.msra.mxu0 %v935
        %947 = vmatprep.subr.bf16.mxu0 0
        %948 = vmatpush1.bf16.xpose.msra.mxu0 %v938
        %949 = vmatprep.subr.bf16.mxu0 0
        %950 = vmatpush1.bf16.xpose.msra.mxu0 %v941
        %951 = vmatprep.subr.bf16.mxu0 0
        %952 = vmatpush1.bf16.xpose.msra.mxu0 0
        %953 = vmatprep.subr.bf16.mxu0 0
        %954 = vmatpush1.bf16.xpose.msra.mxu0 0
        %955 = vmatprep.subr.bf16.mxu0 0
        %956 = vmatpush1.bf16.xpose.msra.mxu0 0
        %957 = vmatprep.subr.bf16.mxu0 0
        %958 = vmatpush1.bf16.xpose.msra.mxu0 0
        %959 = vmatprep.subr.bf16.mxu0 0
        %960 = vmatpush1.bf16.xpose.msra.mxu0 0
        %961 = vmatprep.subr.bf16.mxu0 0
        %962 = vmatpush1.bf16.xpose.msra.mxu0 0
        %963 = vmatprep.subr.bf16.mxu0 0
        %964 = vmatpush1.bf16.xpose.msra.mxu0 0
        %965 = vmatprep.subr.bf16.mxu0 0
        %966 = vmatpush1.bf16.xpose.msra.mxu0 0
        %967 = vmatprep.subr.bf16.mxu0 0
        %968 = vmatpush1.bf16.xpose.msra.mxu0 0
        %969 = vmatprep.subr.bf16.mxu0 0
        %970 = vmatpush1.bf16.xpose.msra.mxu0 0
        %971 = vmatprep.subr.bf16.mxu0 0
        %972 = vmatpush1.bf16.xpose.msra.mxu0 0
        %973 = vmatprep.subr.bf16.mxu0 0
        %974 = vmatpush1.bf16.xpose.msra.mxu0 0
        %975 = vmatprep.mubr.bf16.mxu0 0
        %976 = vmatmul.mubr.bf16.gmra.mrb[0].mxu0 %v920
        %v977 = vpop.f32.mrb[0].mxu0
        %v978 = vadd.f32 %v916, %v977
        %v979 = vpop.f32.mrb[0].mxu0
        %v980 = vpop.f32.mrb[0].mxu0
        %v981 = vadd.f32 %v916, %v980
        %v982 = vpop.f32.mrb[0].mxu0
        %983 = vmatprep.mubr.bf16.mxu0 0
        %984 = vmatmul.mubr.bf16.gmra.mrb[0].mxu0 %v923
        %v985 = vpop.f32.mrb[0].mxu0
        %v986 = vadd.f32 %v916, %v985
        %v987 = vpop.f32.mrb[0].mxu0
        %v988 = vpop.f32.mrb[0].mxu0
        %v989 = vadd.f32 %v916, %v988
        %v990 = vpop.f32.mrb[0].mxu0
        %991 = vmatprep.mubr.bf16.mxu0 0
        %992 = vmatmul.mubr.bf16.gmra.mrb[0].mxu0 %v926
        %v993 = vpop.f32.mrb[0].mxu0
        %v994 = vadd.f32 %v916, %v993
        %v995 = vpop.f32.mrb[0].mxu0
        %v996 = vpop.f32.mrb[0].mxu0
        %v997 = vadd.f32 %v916, %v996
        %v998 = vpop.f32.mrb[0].mxu0
        %999 = vmatprep.mubr.bf16.mxu0 0
        %1000 = vmatmul.mubr.bf16.gmra.mrb[0].mxu0 %v929
        %v1001 = vpop.f32.mrb[0].mxu0
        %v1002 = vadd.f32 %v916, %v1001
        %v1003 = vpop.f32.mrb[0].mxu0
        %v1004 = vpop.f32.mrb[0].mxu0
        %v1005 = vadd.f32 %v916, %v1004
        %v1006 = vpop.f32.mrb[0].mxu0
        %1007 = vdwg.mxu0
        %vm1008 = vcmask 523264
        %v1009 = vsel %vm1008, %v978, -inf
        %1010 = vmax.xlane.f32.xlu0 %v1009
        %v1011 = vpop.xlane.xlu0 %1010
        %v1012 = vsel %vm1008, %v981, -inf
        %1013 = vmax.xlane.f32.xlu0 %v1012
        %v1014 = vpop.xlane.xlu0 %1013
        %v1015 = vsel %vm1008, %v986, -inf
        %1016 = vmax.xlane.f32.xlu0 %v1015
        %v1017 = vpop.xlane.xlu0 %1016
        %v1018 = vsel %vm1008, %v989, -inf
        %1019 = vmax.xlane.f32.xlu0 %v1018
        %v1020 = vpop.xlane.xlu0 %1019
        %v1021 = vsel %vm1008, %v994, -inf
        %1022 = vmax.xlane.f32.xlu0 %v1021
        %v1023 = vpop.xlane.xlu0 %1022
        %v1024 = vsel %vm1008, %v997, -inf
        %1025 = vmax.xlane.f32.xlu0 %v1024
        %v1026 = vpop.xlane.xlu0 %1025
        %v1027 = vsel %vm1008, %v1002, -inf
        %1028 = vmax.xlane.f32.xlu0 %v1027
        %v1029 = vpop.xlane.xlu0 %1028
        %v1030 = vsel %vm1008, %v1005, -inf
        %1031 = vmax.xlane.f32.xlu0 %v1030
        %v1032 = vpop.xlane.xlu0 %1031
        %v1033 = vsub.f32 %v978, %v1011
        %v1034 = vsub.f32 %v981, %v1014
        %v1035 = vsub.f32 %v986, %v1017
        %v1036 = vsub.f32 %v989, %v1020
        %v1037 = vsub.f32 %v994, %v1023
        %v1038 = vsub.f32 %v997, %v1026
        %v1039 = vsub.f32 %v1002, %v1029
        %v1040 = vsub.f32 %v1005, %v1032
        %v1041 = vmul.f32 %v1033, 1.442695
        %v1042 = vpow.pop %v1041
        %v1043 = vmul.f32 %v1034, 1.442695
        %v1044 = vpow.pop %v1043
        %v1045 = vmul.f32 %v1035, 1.442695
        %v1046 = vpow.pop %v1045
        %v1047 = vmul.f32 %v1036, 1.442695
        %v1048 = vpow.pop %v1047
        %v1049 = vmul.f32 %v1037, 1.442695
        %v1050 = vpow.pop %v1049
        %v1051 = vmul.f32 %v1038, 1.442695
        %v1052 = vpow.pop %v1051
        %v1053 = vmul.f32 %v1039, 1.442695
        %v1054 = vpow.pop %v1053
        %v1055 = vmul.f32 %v1040, 1.442695
        %v1056 = vpow.pop %v1055
        %v1057 = vsel %vm1008, %v1042, 0.0
        %1058 = vadd.xlane.f32.xlu0 %v1057
        %v1059 = vpop.xlane.xlu0 %1058
        %v1060 = vsel %vm1008, %v1044, 0.0
        %1061 = vadd.xlane.f32.xlu0 %v1060
        %v1062 = vpop.xlane.xlu0 %1061
        %v1063 = vsel %vm1008, %v1046, 0.0
        %1064 = vadd.xlane.f32.xlu0 %v1063
        %v1065 = vpop.xlane.xlu0 %1064
        %v1066 = vsel %vm1008, %v1048, 0.0
        %1067 = vadd.xlane.f32.xlu0 %v1066
        %v1068 = vpop.xlane.xlu0 %1067
        %v1069 = vsel %vm1008, %v1050, 0.0
        %1070 = vadd.xlane.f32.xlu0 %v1069
        %v1071 = vpop.xlane.xlu0 %1070
        %v1072 = vsel %vm1008, %v1052, 0.0
        %1073 = vadd.xlane.f32.xlu0 %v1072
        %v1074 = vpop.xlane.xlu0 %1073
        %v1075 = vsel %vm1008, %v1054, 0.0
        %1076 = vadd.xlane.f32.xlu0 %v1075
        %v1077 = vpop.xlane.xlu0 %1076
        %v1078 = vsel %vm1008, %v1056, 0.0
        %1079 = vadd.xlane.f32.xlu0 %v1078
        %v1080 = vpop.xlane.xlu0 %1079
        %v1081 = vrcp.pop %v1059
        %v1082 = vrcp.pop %v1062
        %v1083 = vrcp.pop %v1065
        %v1084 = vrcp.pop %v1068
        %v1085 = vrcp.pop %v1071
        %v1086 = vrcp.pop %v1074
        %v1087 = vrcp.pop %v1077
        %v1088 = vrcp.pop %v1080
        %v1089 = vmul.f32 %v1042, %v1081
        %v1090 = vmul.f32 %v1044, %v1082
        %v1091 = vmul.f32 %v1046, %v1083
        %v1092 = vmul.f32 %v1048, %v1084
        %v1093 = vmul.f32 %v1050, %v1085
        %v1094 = vmul.f32 %v1052, %v1086
        %v1095 = vmul.f32 %v1054, %v1087
        %v1096 = vmul.f32 %v1056, %v1088
        %v1097 = vpack.c.bf16 %v1090, %v1089
        %v1098 = vpack.c.bf16 %v1092, %v1091
        %v1099 = vpack.c.bf16 %v1094, %v1093
        %v1100 = vpack.c.bf16 %v1096, %v1095
        %v1102 = vsel %vm1008, %v1097, 0
        %v1105 = vsel %vm1008, %v1098, 0
        %v1108 = vsel %vm1008, %v1099, 0
        %v1111 = vsel %vm1008, %v1100, 0
        %1113 = vmatprep.subr.bf16.mxu0 0
        %1114 = vmatpush1.bf16.msra.mxu0 %v908
        %1115 = vmatprep.subr.bf16.mxu0 0
        %1116 = vmatpush1.bf16.msra.mxu0 %v909
        %1117 = vmatprep.subr.bf16.mxu0 0
        %1118 = vmatpush1.bf16.msra.mxu0 %v910
        %1119 = vmatprep.subr.bf16.mxu0 0
        %1120 = vmatpush1.bf16.msra.mxu0 %v911
        %1121 = vmatprep.subr.bf16.mxu0 0
        %1122 = vmatpush1.bf16.msra.mxu0 0
        %1123 = vmatprep.subr.bf16.mxu0 0
        %1124 = vmatpush1.bf16.msra.mxu0 0
        %1125 = vmatprep.subr.bf16.mxu0 0
        %1126 = vmatpush1.bf16.msra.mxu0 0
        %1127 = vmatprep.subr.bf16.mxu0 0
        %1128 = vmatpush1.bf16.msra.mxu0 0
        %1129 = vmatprep.subr.bf16.mxu0 0
        %1130 = vmatpush1.bf16.msra.mxu0 0
        %1131 = vmatprep.subr.bf16.mxu0 0
        %1132 = vmatpush1.bf16.msra.mxu0 0
        %1133 = vmatprep.subr.bf16.mxu0 0
        %1134 = vmatpush1.bf16.msra.mxu0 0
        %1135 = vmatprep.subr.bf16.mxu0 0
        %1136 = vmatpush1.bf16.msra.mxu0 0
        %1137 = vmatprep.subr.bf16.mxu0 0
        %1138 = vmatpush1.bf16.msra.mxu0 0
        %1139 = vmatprep.subr.bf16.mxu0 0
        %1140 = vmatpush1.bf16.msra.mxu0 0
        %1141 = vmatprep.subr.bf16.mxu0 0
        %1142 = vmatpush1.bf16.msra.mxu0 0
        %1143 = vmatprep.subr.bf16.mxu0 0
        %1144 = vmatpush1.bf16.msra.mxu0 0
        %1145 = vmatprep.mubr.bf16.mxu0 0
        %1146 = vmatmul.mubr.bf16.gmra.mrb[0].mxu0 %v1102
        %v1147 = vpop.f32.mrb[0].mxu0
        %v1148 = vadd.f32 0.0, %v1147
        %v1149 = vpop.f32.mrb[0].mxu0
        %v1150 = vpop.f32.mrb[0].mxu0
        %v1151 = vadd.f32 0.0, %v1150
        %v1152 = vpop.f32.mrb[0].mxu0
        %1153 = vmatprep.mubr.bf16.mxu0 0
        %1154 = vmatmul.mubr.bf16.gmra.mrb[0].mxu0 %v1105
        %v1155 = vpop.f32.mrb[0].mxu0
        %v1156 = vadd.f32 0.0, %v1155
        %v1157 = vpop.f32.mrb[0].mxu0
        %v1158 = vpop.f32.mrb[0].mxu0
        %v1159 = vadd.f32 0.0, %v1158
        %v1160 = vpop.f32.mrb[0].mxu0
        %1161 = vmatprep.mubr.bf16.mxu0 0
        %1162 = vmatmul.mubr.bf16.gmra.mrb[0].mxu0 %v1108
        %v1163 = vpop.f32.mrb[0].mxu0
        %v1164 = vadd.f32 0.0, %v1163
        %v1165 = vpop.f32.mrb[0].mxu0
        %v1166 = vpop.f32.mrb[0].mxu0
        %v1167 = vadd.f32 0.0, %v1166
        %v1168 = vpop.f32.mrb[0].mxu0
        %1169 = vmatprep.mubr.bf16.mxu0 0
        %1170 = vmatmul.mubr.bf16.gmra.mrb[0].mxu0 %v1111
        %v1171 = vpop.f32.mrb[0].mxu0
        %v1172 = vadd.f32 0.0, %v1171
        %v1173 = vpop.f32.mrb[0].mxu0
        %v1174 = vpop.f32.mrb[0].mxu0
        %v1175 = vadd.f32 0.0, %v1174
        %v1176 = vpop.f32.mrb[0].mxu0
        %1177 = vdwg.mxu0
        %1182 = vrot.lane.b32.xlu0 %v900, 96
        %v1183 = vpop.permute.xlu0 %1182
        %1184 = vrot.lane.b32.xlu0 %v901, 96
        %v1185 = vpop.permute.xlu0 %1184
        %1186 = vrot.lane.b32.xlu0 %v902, 96
        %v1187 = vpop.permute.xlu0 %1186
        %1188 = vrot.lane.b32.xlu0 %v903, 96
        %v1189 = vpop.permute.xlu0 %1188
        %1194 = vrot.lane.b32.xlu0 %v904, 96
        %v1195 = vpop.permute.xlu0 %1194
        %1196 = vrot.lane.b32.xlu0 %v905, 96
        %v1197 = vpop.permute.xlu0 %1196
        %1198 = vrot.lane.b32.xlu0 %v906, 96
        %v1199 = vpop.permute.xlu0 %1198
        %1200 = vrot.lane.b32.xlu0 %v907, 96
        %v1201 = vpop.permute.xlu0 %1200
        %v1203 = vsel %vm918, %v1183, 0
        %v1206 = vsel %vm918, %v1185, 0
        %v1209 = vsel %vm918, %v1187, 0
        %v1212 = vsel %vm918, %v1189, 0
        %v1215 = vsel %vm918, %v1195, 0
        %v1218 = vsel %vm918, %v1197, 0
        %v1221 = vsel %vm918, %v1199, 0
        %v1224 = vsel %vm918, %v1201, 0
        %1226 = vmatprep.subr.bf16.mxu0 0
        %1227 = vmatpush1.bf16.xpose.msra.mxu0 %v1215
        %1228 = vmatprep.subr.bf16.mxu0 0
        %1229 = vmatpush1.bf16.xpose.msra.mxu0 %v1218
        %1230 = vmatprep.subr.bf16.mxu0 0
        %1231 = vmatpush1.bf16.xpose.msra.mxu0 %v1221
        %1232 = vmatprep.subr.bf16.mxu0 0
        %1233 = vmatpush1.bf16.xpose.msra.mxu0 %v1224
        %1234 = vmatprep.subr.bf16.mxu0 0
        %1235 = vmatpush1.bf16.xpose.msra.mxu0 0
        %1236 = vmatprep.subr.bf16.mxu0 0
        %1237 = vmatpush1.bf16.xpose.msra.mxu0 0
        %1238 = vmatprep.subr.bf16.mxu0 0
        %1239 = vmatpush1.bf16.xpose.msra.mxu0 0
        %1240 = vmatprep.subr.bf16.mxu0 0
        %1241 = vmatpush1.bf16.xpose.msra.mxu0 0
        %1242 = vmatprep.subr.bf16.mxu0 0
        %1243 = vmatpush1.bf16.xpose.msra.mxu0 0
        %1244 = vmatprep.subr.bf16.mxu0 0
        %1245 = vmatpush1.bf16.xpose.msra.mxu0 0
        %1246 = vmatprep.subr.bf16.mxu0 0
        %1247 = vmatpush1.bf16.xpose.msra.mxu0 0
        %1248 = vmatprep.subr.bf16.mxu0 0
        %1249 = vmatpush1.bf16.xpose.msra.mxu0 0
        %1250 = vmatprep.subr.bf16.mxu0 0
        %1251 = vmatpush1.bf16.xpose.msra.mxu0 0
        %1252 = vmatprep.subr.bf16.mxu0 0
        %1253 = vmatpush1.bf16.xpose.msra.mxu0 0
        %1254 = vmatprep.subr.bf16.mxu0 0
        %1255 = vmatpush1.bf16.xpose.msra.mxu0 0
        %1256 = vmatprep.subr.bf16.mxu0 0
        %1257 = vmatpush1.bf16.xpose.msra.mxu0 0
        %1258 = vmatprep.mubr.bf16.mxu0 0
        %1259 = vmatmul.mubr.bf16.gmra.mrb[0].mxu0 %v1203
        %v1260 = vpop.f32.mrb[0].mxu0
        %v1261 = vadd.f32 %v916, %v1260
        %v1262 = vpop.f32.mrb[0].mxu0
        %v1263 = vpop.f32.mrb[0].mxu0
        %v1264 = vadd.f32 %v916, %v1263
        %v1265 = vpop.f32.mrb[0].mxu0
        %1266 = vmatprep.mubr.bf16.mxu0 0
        %1267 = vmatmul.mubr.bf16.gmra.mrb[0].mxu0 %v1206
        %v1268 = vpop.f32.mrb[0].mxu0
        %v1269 = vadd.f32 %v916, %v1268
        %v1270 = vpop.f32.mrb[0].mxu0
        %v1271 = vpop.f32.mrb[0].mxu0
        %v1272 = vadd.f32 %v916, %v1271
        %v1273 = vpop.f32.mrb[0].mxu0
        %1274 = vmatprep.mubr.bf16.mxu0 0
        %1275 = vmatmul.mubr.bf16.gmra.mrb[0].mxu0 %v1209
        %v1276 = vpop.f32.mrb[0].mxu0
        %v1277 = vadd.f32 %v916, %v1276
        %v1278 = vpop.f32.mrb[0].mxu0
        %v1279 = vpop.f32.mrb[0].mxu0
        %v1280 = vadd.f32 %v916, %v1279
        %v1281 = vpop.f32.mrb[0].mxu0
        %1282 = vmatprep.mubr.bf16.mxu0 0
        %1283 = vmatmul.mubr.bf16.gmra.mrb[0].mxu0 %v1212
        %v1284 = vpop.f32.mrb[0].mxu0
        %v1285 = vadd.f32 %v916, %v1284
        %v1286 = vpop.f32.mrb[0].mxu0
        %v1287 = vpop.f32.mrb[0].mxu0
        %v1288 = vadd.f32 %v916, %v1287
        %v1289 = vpop.f32.mrb[0].mxu0
        %1290 = vdwg.mxu0
        %v1291 = vsel %vm1008, %v1261, -inf
        %1292 = vmax.xlane.f32.xlu0 %v1291
        %v1293 = vpop.xlane.xlu0 %1292
        %v1294 = vsel %vm1008, %v1264, -inf
        %1295 = vmax.xlane.f32.xlu0 %v1294
        %v1296 = vpop.xlane.xlu0 %1295
        %v1297 = vsel %vm1008, %v1269, -inf
        %1298 = vmax.xlane.f32.xlu0 %v1297
        %v1299 = vpop.xlane.xlu0 %1298
        %v1300 = vsel %vm1008, %v1272, -inf
        %1301 = vmax.xlane.f32.xlu0 %v1300
        %v1302 = vpop.xlane.xlu0 %1301
        %v1303 = vsel %vm1008, %v1277, -inf
        %1304 = vmax.xlane.f32.xlu0 %v1303
        %v1305 = vpop.xlane.xlu0 %1304
        %v1306 = vsel %vm1008, %v1280, -inf
        %1307 = vmax.xlane.f32.xlu0 %v1306
        %v1308 = vpop.xlane.xlu0 %1307
        %v1309 = vsel %vm1008, %v1285, -inf
        %1310 = vmax.xlane.f32.xlu0 %v1309
        %v1311 = vpop.xlane.xlu0 %1310
        %v1312 = vsel %vm1008, %v1288, -inf
        %1313 = vmax.xlane.f32.xlu0 %v1312
        %v1314 = vpop.xlane.xlu0 %1313
        %v1315 = vsub.f32 %v1261, %v1293
        %v1316 = vsub.f32 %v1264, %v1296
        %v1317 = vsub.f32 %v1269, %v1299
        %v1318 = vsub.f32 %v1272, %v1302
        %v1319 = vsub.f32 %v1277, %v1305
        %v1320 = vsub.f32 %v1280, %v1308
        %v1321 = vsub.f32 %v1285, %v1311
        %v1322 = vsub.f32 %v1288, %v1314
        %v1323 = vmul.f32 %v1315, 1.442695
        %v1324 = vpow.pop %v1323
        %v1325 = vmul.f32 %v1316, 1.442695
        %v1326 = vpow.pop %v1325
        %v1327 = vmul.f32 %v1317, 1.442695
        %v1328 = vpow.pop %v1327
        %v1329 = vmul.f32 %v1318, 1.442695
        %v1330 = vpow.pop %v1329
        %v1331 = vmul.f32 %v1319, 1.442695
        %v1332 = vpow.pop %v1331
        %v1333 = vmul.f32 %v1320, 1.442695
        %v1334 = vpow.pop %v1333
        %v1335 = vmul.f32 %v1321, 1.442695
        %v1336 = vpow.pop %v1335
        %v1337 = vmul.f32 %v1322, 1.442695
        %v1338 = vpow.pop %v1337
        %v1339 = vsel %vm1008, %v1324, 0.0
        %1340 = vadd.xlane.f32.xlu0 %v1339
        %v1341 = vpop.xlane.xlu0 %1340
        %v1342 = vsel %vm1008, %v1326, 0.0
        %1343 = vadd.xlane.f32.xlu0 %v1342
        %v1344 = vpop.xlane.xlu0 %1343
        %v1345 = vsel %vm1008, %v1328, 0.0
        %1346 = vadd.xlane.f32.xlu0 %v1345
        %v1347 = vpop.xlane.xlu0 %1346
        %v1348 = vsel %vm1008, %v1330, 0.0
        %1349 = vadd.xlane.f32.xlu0 %v1348
        %v1350 = vpop.xlane.xlu0 %1349
        %v1351 = vsel %vm1008, %v1332, 0.0
        %1352 = vadd.xlane.f32.xlu0 %v1351
        %v1353 = vpop.xlane.xlu0 %1352
        %v1354 = vsel %vm1008, %v1334, 0.0
        %1355 = vadd.xlane.f32.xlu0 %v1354
        %v1356 = vpop.xlane.xlu0 %1355
        %v1357 = vsel %vm1008, %v1336, 0.0
        %1358 = vadd.xlane.f32.xlu0 %v1357
        %v1359 = vpop.xlane.xlu0 %1358
        %v1360 = vsel %vm1008, %v1338, 0.0
        %1361 = vadd.xlane.f32.xlu0 %v1360
        %v1362 = vpop.xlane.xlu0 %1361
        %v1363 = vrcp.pop %v1341
        %v1364 = vrcp.pop %v1344
        %v1365 = vrcp.pop %v1347
        %v1366 = vrcp.pop %v1350
        %v1367 = vrcp.pop %v1353
        %v1368 = vrcp.pop %v1356
        %v1369 = vrcp.pop %v1359
        %v1370 = vrcp.pop %v1362
        %v1371 = vmul.f32 %v1324, %v1363
        %v1372 = vmul.f32 %v1326, %v1364
        %v1373 = vmul.f32 %v1328, %v1365
        %v1374 = vmul.f32 %v1330, %v1366
        %v1375 = vmul.f32 %v1332, %v1367
        %v1376 = vmul.f32 %v1334, %v1368
        %v1377 = vmul.f32 %v1336, %v1369
        %v1378 = vmul.f32 %v1338, %v1370
        %v1379 = vpack.c.bf16 %v1372, %v1371
        %v1380 = vpack.c.bf16 %v1374, %v1373
        %v1381 = vpack.c.bf16 %v1376, %v1375
        %v1382 = vpack.c.bf16 %v1378, %v1377
        %1387 = vrot.lane.b32.xlu0 %v908, 96
        %v1388 = vpop.permute.xlu0 %1387
        %1389 = vrot.lane.b32.xlu0 %v909, 96
        %v1390 = vpop.permute.xlu0 %1389
        %1391 = vrot.lane.b32.xlu0 %v910, 96
        %v1392 = vpop.permute.xlu0 %1391
        %1393 = vrot.lane.b32.xlu0 %v911, 96
        %v1394 = vpop.permute.xlu0 %1393
        %v1400 = vsel %vm1008, %v1379, 0
        %v1403 = vsel %vm1008, %v1380, 0
        %v1406 = vsel %vm1008, %v1381, 0
        %v1409 = vsel %vm1008, %v1382, 0
        %1411 = vmatprep.subr.bf16.mxu0 0
        %1412 = vmatpush1.bf16.msra.mxu0 %v1388
        %1413 = vmatprep.subr.bf16.mxu0 0
        %1414 = vmatpush1.bf16.msra.mxu0 %v1390
        %1415 = vmatprep.subr.bf16.mxu0 0
        %1416 = vmatpush1.bf16.msra.mxu0 %v1392
        %1417 = vmatprep.subr.bf16.mxu0 0
        %1418 = vmatpush1.bf16.msra.mxu0 %v1394
        %1419 = vmatprep.subr.bf16.mxu0 0
        %1420 = vmatpush1.bf16.msra.mxu0 0
        %1421 = vmatprep.subr.bf16.mxu0 0
        %1422 = vmatpush1.bf16.msra.mxu0 0
        %1423 = vmatprep.subr.bf16.mxu0 0
        %1424 = vmatpush1.bf16.msra.mxu0 0
        %1425 = vmatprep.subr.bf16.mxu0 0
        %1426 = vmatpush1.bf16.msra.mxu0 0
        %1427 = vmatprep.subr.bf16.mxu0 0
        %1428 = vmatpush1.bf16.msra.mxu0 0
        %1429 = vmatprep.subr.bf16.mxu0 0
        %1430 = vmatpush1.bf16.msra.mxu0 0
        %1431 = vmatprep.subr.bf16.mxu0 0
        %1432 = vmatpush1.bf16.msra.mxu0 0
        %1433 = vmatprep.subr.bf16.mxu0 0
        %1434 = vmatpush1.bf16.msra.mxu0 0
        %1435 = vmatprep.subr.bf16.mxu0 0
        %1436 = vmatpush1.bf16.msra.mxu0 0
        %1437 = vmatprep.subr.bf16.mxu0 0
        %1438 = vmatpush1.bf16.msra.mxu0 0
        %1439 = vmatprep.subr.bf16.mxu0 0
        %1440 = vmatpush1.bf16.msra.mxu0 0
        %1441 = vmatprep.subr.bf16.mxu0 0
        %1442 = vmatpush1.bf16.msra.mxu0 0
        %1443 = vmatprep.mubr.bf16.mxu0 0
        %1444 = vmatmul.mubr.bf16.gmra.mrb[0].mxu0 %v1400
        %v1445 = vpop.f32.mrb[0].mxu0
        %v1446 = vadd.f32 0.0, %v1445
        %v1447 = vpop.f32.mrb[0].mxu0
        %v1448 = vpop.f32.mrb[0].mxu0
        %v1449 = vadd.f32 0.0, %v1448
        %v1450 = vpop.f32.mrb[0].mxu0
        %1451 = vmatprep.mubr.bf16.mxu0 0
        %1452 = vmatmul.mubr.bf16.gmra.mrb[0].mxu0 %v1403
        %v1453 = vpop.f32.mrb[0].mxu0
        %v1454 = vadd.f32 0.0, %v1453
        %v1455 = vpop.f32.mrb[0].mxu0
        %v1456 = vpop.f32.mrb[0].mxu0
        %v1457 = vadd.f32 0.0, %v1456
        %v1458 = vpop.f32.mrb[0].mxu0
        %1459 = vmatprep.mubr.bf16.mxu0 0
        %1460 = vmatmul.mubr.bf16.gmra.mrb[0].mxu0 %v1406
        %v1461 = vpop.f32.mrb[0].mxu0
        %v1462 = vadd.f32 0.0, %v1461
        %v1463 = vpop.f32.mrb[0].mxu0
        %v1464 = vpop.f32.mrb[0].mxu0
        %v1465 = vadd.f32 0.0, %v1464
        %v1466 = vpop.f32.mrb[0].mxu0
        %1467 = vmatprep.mubr.bf16.mxu0 0
        %1468 = vmatmul.mubr.bf16.gmra.mrb[0].mxu0 %v1409
        %v1469 = vpop.f32.mrb[0].mxu0
        %v1470 = vadd.f32 0.0, %v1469
        %v1471 = vpop.f32.mrb[0].mxu0
        %v1472 = vpop.f32.mrb[0].mxu0
        %v1473 = vadd.f32 0.0, %v1472
        %v1474 = vpop.f32.mrb[0].mxu0
        %1475 = vdwg.mxu0
        %1476 = vrot.lane.b32.xlu0 %v900, 64
        %v1477 = vpop.permute.xlu0 %1476
        %1478 = vrot.lane.b32.xlu0 %v901, 64
        %v1479 = vpop.permute.xlu0 %1478
        %1480 = vrot.lane.b32.xlu0 %v902, 64
        %v1481 = vpop.permute.xlu0 %1480
        %1482 = vrot.lane.b32.xlu0 %v903, 64
        %v1483 = vpop.permute.xlu0 %1482
        %1484 = vrot.lane.b32.xlu0 %v904, 64
        %v1485 = vpop.permute.xlu0 %1484
        %1486 = vrot.lane.b32.xlu0 %v905, 64
        %v1487 = vpop.permute.xlu0 %1486
        %1488 = vrot.lane.b32.xlu0 %v906, 64
        %v1489 = vpop.permute.xlu0 %1488
        %1490 = vrot.lane.b32.xlu0 %v907, 64
        %v1491 = vpop.permute.xlu0 %1490
        %v1493 = vsel %vm918, %v1477, 0
        %v1496 = vsel %vm918, %v1479, 0
        %v1499 = vsel %vm918, %v1481, 0
        %v1502 = vsel %vm918, %v1483, 0
        %v1505 = vsel %vm918, %v1485, 0
        %v1508 = vsel %vm918, %v1487, 0
        %v1511 = vsel %vm918, %v1489, 0
        %v1514 = vsel %vm918, %v1491, 0
        %1516 = vmatprep.subr.bf16.mxu0 0
        %1517 = vmatpush1.bf16.xpose.msra.mxu0 %v1505
        %1518 = vmatprep.subr.bf16.mxu0 0
        %1519 = vmatpush1.bf16.xpose.msra.mxu0 %v1508
        %1520 = vmatprep.subr.bf16.mxu0 0
        %1521 = vmatpush1.bf16.xpose.msra.mxu0 %v1511
        %1522 = vmatprep.subr.bf16.mxu0 0
        %1523 = vmatpush1.bf16.xpose.msra.mxu0 %v1514
        %1524 = vmatprep.subr.bf16.mxu0 0
        %1525 = vmatpush1.bf16.xpose.msra.mxu0 0
        %1526 = vmatprep.subr.bf16.mxu0 0
        %1527 = vmatpush1.bf16.xpose.msra.mxu0 0
        %1528 = vmatprep.subr.bf16.mxu0 0
        %1529 = vmatpush1.bf16.xpose.msra.mxu0 0
        %1530 = vmatprep.subr.bf16.mxu0 0
        %1531 = vmatpush1.bf16.xpose.msra.mxu0 0
        %1532 = vmatprep.subr.bf16.mxu0 0
        %1533 = vmatpush1.bf16.xpose.msra.mxu0 0
        %1534 = vmatprep.subr.bf16.mxu0 0
        %1535 = vmatpush1.bf16.xpose.msra.mxu0 0
        %1536 = vmatprep.subr.bf16.mxu0 0
        %1537 = vmatpush1.bf16.xpose.msra.mxu0 0
        %1538 = vmatprep.subr.bf16.mxu0 0
        %1539 = vmatpush1.bf16.xpose.msra.mxu0 0
        %1540 = vmatprep.subr.bf16.mxu0 0
        %1541 = vmatpush1.bf16.xpose.msra.mxu0 0
        %1542 = vmatprep.subr.bf16.mxu0 0
        %1543 = vmatpush1.bf16.xpose.msra.mxu0 0
        %1544 = vmatprep.subr.bf16.mxu0 0
        %1545 = vmatpush1.bf16.xpose.msra.mxu0 0
        %1546 = vmatprep.subr.bf16.mxu0 0
        %1547 = vmatpush1.bf16.xpose.msra.mxu0 0
        %1548 = vmatprep.mubr.bf16.mxu0 0
        %1549 = vmatmul.mubr.bf16.gmra.mrb[0].mxu0 %v1493
        %v1550 = vpop.f32.mrb[0].mxu0
        %v1551 = vadd.f32 %v916, %v1550
        %v1552 = vpop.f32.mrb[0].mxu0
        %v1553 = vpop.f32.mrb[0].mxu0
        %v1554 = vadd.f32 %v916, %v1553
        %v1555 = vpop.f32.mrb[0].mxu0
        %1556 = vmatprep.mubr.bf16.mxu0 0
        %1557 = vmatmul.mubr.bf16.gmra.mrb[0].mxu0 %v1496
        %v1558 = vpop.f32.mrb[0].mxu0
        %v1559 = vadd.f32 %v916, %v1558
        %v1560 = vpop.f32.mrb[0].mxu0
        %v1561 = vpop.f32.mrb[0].mxu0
        %v1562 = vadd.f32 %v916, %v1561
        %v1563 = vpop.f32.mrb[0].mxu0
        %1564 = vmatprep.mubr.bf16.mxu0 0
        %1565 = vmatmul.mubr.bf16.gmra.mrb[0].mxu0 %v1499
        %v1566 = vpop.f32.mrb[0].mxu0
        %v1567 = vadd.f32 %v916, %v1566
        %v1568 = vpop.f32.mrb[0].mxu0
        %v1569 = vpop.f32.mrb[0].mxu0
        %v1570 = vadd.f32 %v916, %v1569
        %v1571 = vpop.f32.mrb[0].mxu0
        %1572 = vmatprep.mubr.bf16.mxu0 0
        %1573 = vmatmul.mubr.bf16.gmra.mrb[0].mxu0 %v1502
        %v1574 = vpop.f32.mrb[0].mxu0
        %v1575 = vadd.f32 %v916, %v1574
        %v1576 = vpop.f32.mrb[0].mxu0
        %v1577 = vpop.f32.mrb[0].mxu0
        %v1578 = vadd.f32 %v916, %v1577
        %v1579 = vpop.f32.mrb[0].mxu0
        %1580 = vdwg.mxu0
        %v1581 = vsel %vm1008, %v1551, -inf
        %1582 = vmax.xlane.f32.xlu0 %v1581
        %v1583 = vpop.xlane.xlu0 %1582
        %v1584 = vsel %vm1008, %v1554, -inf
        %1585 = vmax.xlane.f32.xlu0 %v1584
        %v1586 = vpop.xlane.xlu0 %1585
        %v1587 = vsel %vm1008, %v1559, -inf
        %1588 = vmax.xlane.f32.xlu0 %v1587
        %v1589 = vpop.xlane.xlu0 %1588
        %v1590 = vsel %vm1008, %v1562, -inf
        %1591 = vmax.xlane.f32.xlu0 %v1590
        %v1592 = vpop.xlane.xlu0 %1591
        %v1593 = vsel %vm1008, %v1567, -inf
        %1594 = vmax.xlane.f32.xlu0 %v1593
        %v1595 = vpop.xlane.xlu0 %1594
        %v1596 = vsel %vm1008, %v1570, -inf
        %1597 = vmax.xlane.f32.xlu0 %v1596
        %v1598 = vpop.xlane.xlu0 %1597
        %v1599 = vsel %vm1008, %v1575, -inf
        %1600 = vmax.xlane.f32.xlu0 %v1599
        %v1601 = vpop.xlane.xlu0 %1600
        %v1602 = vsel %vm1008, %v1578, -inf
        %1603 = vmax.xlane.f32.xlu0 %v1602
        %v1604 = vpop.xlane.xlu0 %1603
        %v1605 = vsub.f32 %v1551, %v1583
        %v1606 = vsub.f32 %v1554, %v1586
        %v1607 = vsub.f32 %v1559, %v1589
        %v1608 = vsub.f32 %v1562, %v1592
        %v1609 = vsub.f32 %v1567, %v1595
        %v1610 = vsub.f32 %v1570, %v1598
        %v1611 = vsub.f32 %v1575, %v1601
        %v1612 = vsub.f32 %v1578, %v1604
        %v1613 = vmul.f32 %v1605, 1.442695
        %v1614 = vpow.pop %v1613
        %v1615 = vmul.f32 %v1606, 1.442695
        %v1616 = vpow.pop %v1615
        %v1617 = vmul.f32 %v1607, 1.442695
        %v1618 = vpow.pop %v1617
        %v1619 = vmul.f32 %v1608, 1.442695
        %v1620 = vpow.pop %v1619
        %v1621 = vmul.f32 %v1609, 1.442695
        %v1622 = vpow.pop %v1621
        %v1623 = vmul.f32 %v1610, 1.442695
        %v1624 = vpow.pop %v1623
        %v1625 = vmul.f32 %v1611, 1.442695
        %v1626 = vpow.pop %v1625
        %v1627 = vmul.f32 %v1612, 1.442695
        %v1628 = vpow.pop %v1627
        %v1629 = vsel %vm1008, %v1614, 0.0
        %1630 = vadd.xlane.f32.xlu0 %v1629
        %v1631 = vpop.xlane.xlu0 %1630
        %v1632 = vsel %vm1008, %v1616, 0.0
        %1633 = vadd.xlane.f32.xlu0 %v1632
        %v1634 = vpop.xlane.xlu0 %1633
        %v1635 = vsel %vm1008, %v1618, 0.0
        %1636 = vadd.xlane.f32.xlu0 %v1635
        %v1637 = vpop.xlane.xlu0 %1636
        %v1638 = vsel %vm1008, %v1620, 0.0
        %1639 = vadd.xlane.f32.xlu0 %v1638
        %v1640 = vpop.xlane.xlu0 %1639
        %v1641 = vsel %vm1008, %v1622, 0.0
        %1642 = vadd.xlane.f32.xlu0 %v1641
        %v1643 = vpop.xlane.xlu0 %1642
        %v1644 = vsel %vm1008, %v1624, 0.0
        %1645 = vadd.xlane.f32.xlu0 %v1644
        %v1646 = vpop.xlane.xlu0 %1645
        %v1647 = vsel %vm1008, %v1626, 0.0
        %1648 = vadd.xlane.f32.xlu0 %v1647
        %v1649 = vpop.xlane.xlu0 %1648
        %v1650 = vsel %vm1008, %v1628, 0.0
        %1651 = vadd.xlane.f32.xlu0 %v1650
        %v1652 = vpop.xlane.xlu0 %1651
        %v1653 = vrcp.pop %v1631
        %v1654 = vrcp.pop %v1634
        %v1655 = vrcp.pop %v1637
        %v1656 = vrcp.pop %v1640
        %v1657 = vrcp.pop %v1643
        %v1658 = vrcp.pop %v1646
        %v1659 = vrcp.pop %v1649
        %v1660 = vrcp.pop %v1652
        %v1661 = vmul.f32 %v1614, %v1653
        %v1662 = vmul.f32 %v1616, %v1654
        %v1663 = vmul.f32 %v1618, %v1655
        %v1664 = vmul.f32 %v1620, %v1656
        %v1665 = vmul.f32 %v1622, %v1657
        %v1666 = vmul.f32 %v1624, %v1658
        %v1667 = vmul.f32 %v1626, %v1659
        %v1668 = vmul.f32 %v1628, %v1660
        %v1669 = vpack.c.bf16 %v1662, %v1661
        %v1670 = vpack.c.bf16 %v1664, %v1663
        %v1671 = vpack.c.bf16 %v1666, %v1665
        %v1672 = vpack.c.bf16 %v1668, %v1667
        %1673 = vrot.lane.b32.xlu0 %v908, 64
        %v1674 = vpop.permute.xlu0 %1673
        %1675 = vrot.lane.b32.xlu0 %v909, 64
        %v1676 = vpop.permute.xlu0 %1675
        %1677 = vrot.lane.b32.xlu0 %v910, 64
        %v1678 = vpop.permute.xlu0 %1677
        %1679 = vrot.lane.b32.xlu0 %v911, 64
        %v1680 = vpop.permute.xlu0 %1679
        %v1686 = vsel %vm1008, %v1669, 0
        %v1689 = vsel %vm1008, %v1670, 0
        %v1692 = vsel %vm1008, %v1671, 0
        %v1695 = vsel %vm1008, %v1672, 0
        %1697 = vmatprep.subr.bf16.mxu0 0
        %1698 = vmatpush1.bf16.msra.mxu0 %v1674
        %1699 = vmatprep.subr.bf16.mxu0 0
        %1700 = vmatpush1.bf16.msra.mxu0 %v1676
        %1701 = vmatprep.subr.bf16.mxu0 0
        %1702 = vmatpush1.bf16.msra.mxu0 %v1678
        %1703 = vmatprep.subr.bf16.mxu0 0
        %1704 = vmatpush1.bf16.msra.mxu0 %v1680
        %1705 = vmatprep.subr.bf16.mxu0 0
        %1706 = vmatpush1.bf16.msra.mxu0 0
        %1707 = vmatprep.subr.bf16.mxu0 0
        %1708 = vmatpush1.bf16.msra.mxu0 0
        %1709 = vmatprep.subr.bf16.mxu0 0
        %1710 = vmatpush1.bf16.msra.mxu0 0
        %1711 = vmatprep.subr.bf16.mxu0 0
        %1712 = vmatpush1.bf16.msra.mxu0 0
        %1713 = vmatprep.subr.bf16.mxu0 0
        %1714 = vmatpush1.bf16.msra.mxu0 0
        %1715 = vmatprep.subr.bf16.mxu0 0
        %1716 = vmatpush1.bf16.msra.mxu0 0
        %1717 = vmatprep.subr.bf16.mxu0 0
        %1718 = vmatpush1.bf16.msra.mxu0 0
        %1719 = vmatprep.subr.bf16.mxu0 0
        %1720 = vmatpush1.bf16.msra.mxu0 0
        %1721 = vmatprep.subr.bf16.mxu0 0
        %1722 = vmatpush1.bf16.msra.mxu0 0
        %1723 = vmatprep.subr.bf16.mxu0 0
        %1724 = vmatpush1.bf16.msra.mxu0 0
        %1725 = vmatprep.subr.bf16.mxu0 0
        %1726 = vmatpush1.bf16.msra.mxu0 0
        %1727 = vmatprep.subr.bf16.mxu0 0
        %1728 = vmatpush1.bf16.msra.mxu0 0
        %1729 = vmatprep.mubr.bf16.mxu0 0
        %1730 = vmatmul.mubr.bf16.gmra.mrb[0].mxu0 %v1686
        %v1731 = vpop.f32.mrb[0].mxu0
        %v1732 = vadd.f32 0.0, %v1731
        %v1733 = vpop.f32.mrb[0].mxu0
        %v1734 = vpop.f32.mrb[0].mxu0
        %v1735 = vadd.f32 0.0, %v1734
        %v1736 = vpop.f32.mrb[0].mxu0
        %1737 = vmatprep.mubr.bf16.mxu0 0
        %1738 = vmatmul.mubr.bf16.gmra.mrb[0].mxu0 %v1689
        %v1739 = vpop.f32.mrb[0].mxu0
        %v1740 = vadd.f32 0.0, %v1739
        %v1741 = vpop.f32.mrb[0].mxu0
        %v1742 = vpop.f32.mrb[0].mxu0
        %v1743 = vadd.f32 0.0, %v1742
        %v1744 = vpop.f32.mrb[0].mxu0
        %1745 = vmatprep.mubr.bf16.mxu0 0
        %1746 = vmatmul.mubr.bf16.gmra.mrb[0].mxu0 %v1692
        %v1747 = vpop.f32.mrb[0].mxu0
        %v1748 = vadd.f32 0.0, %v1747
        %v1749 = vpop.f32.mrb[0].mxu0
        %v1750 = vpop.f32.mrb[0].mxu0
        %v1751 = vadd.f32 0.0, %v1750
        %v1752 = vpop.f32.mrb[0].mxu0
        %1753 = vmatprep.mubr.bf16.mxu0 0
        %1754 = vmatmul.mubr.bf16.gmra.mrb[0].mxu0 %v1695
        %v1755 = vpop.f32.mrb[0].mxu0
        %v1756 = vadd.f32 0.0, %v1755
        %v1757 = vpop.f32.mrb[0].mxu0
        %v1758 = vpop.f32.mrb[0].mxu0
        %v1759 = vadd.f32 0.0, %v1758
        %v1760 = vpop.f32.mrb[0].mxu0
        %1761 = vdwg.mxu0
        %1762 = vrot.lane.b32.xlu0 %v900, 32
        %v1763 = vpop.permute.xlu0 %1762
        %1764 = vrot.lane.b32.xlu0 %v901, 32
        %v1765 = vpop.permute.xlu0 %1764
        %1766 = vrot.lane.b32.xlu0 %v902, 32
        %v1767 = vpop.permute.xlu0 %1766
        %1768 = vrot.lane.b32.xlu0 %v903, 32
        %v1769 = vpop.permute.xlu0 %1768
        %1770 = vrot.lane.b32.xlu0 %v904, 32
        %v1771 = vpop.permute.xlu0 %1770
        %1772 = vrot.lane.b32.xlu0 %v905, 32
        %v1773 = vpop.permute.xlu0 %1772
        %1774 = vrot.lane.b32.xlu0 %v906, 32
        %v1775 = vpop.permute.xlu0 %1774
        %1776 = vrot.lane.b32.xlu0 %v907, 32
        %v1777 = vpop.permute.xlu0 %1776
        %v1779 = vsel %vm918, %v1763, 0
        %v1782 = vsel %vm918, %v1765, 0
        %v1785 = vsel %vm918, %v1767, 0
        %v1788 = vsel %vm918, %v1769, 0
        %v1791 = vsel %vm918, %v1771, 0
        %v1794 = vsel %vm918, %v1773, 0
        %v1797 = vsel %vm918, %v1775, 0
        %v1800 = vsel %vm918, %v1777, 0
        %1802 = vmatprep.subr.bf16.mxu0 0
        %1803 = vmatpush1.bf16.xpose.msra.mxu0 %v1791
        %1804 = vmatprep.subr.bf16.mxu0 0
        %1805 = vmatpush1.bf16.xpose.msra.mxu0 %v1794
        %1806 = vmatprep.subr.bf16.mxu0 0
        %1807 = vmatpush1.bf16.xpose.msra.mxu0 %v1797
        %1808 = vmatprep.subr.bf16.mxu0 0
        %1809 = vmatpush1.bf16.xpose.msra.mxu0 %v1800
        %1810 = vmatprep.subr.bf16.mxu0 0
        %1811 = vmatpush1.bf16.xpose.msra.mxu0 0
        %1812 = vmatprep.subr.bf16.mxu0 0
        %1813 = vmatpush1.bf16.xpose.msra.mxu0 0
        %1814 = vmatprep.subr.bf16.mxu0 0
        %1815 = vmatpush1.bf16.xpose.msra.mxu0 0
        %1816 = vmatprep.subr.bf16.mxu0 0
        %1817 = vmatpush1.bf16.xpose.msra.mxu0 0
        %1818 = vmatprep.subr.bf16.mxu0 0
        %1819 = vmatpush1.bf16.xpose.msra.mxu0 0
        %1820 = vmatprep.subr.bf16.mxu0 0
        %1821 = vmatpush1.bf16.xpose.msra.mxu0 0
        %1822 = vmatprep.subr.bf16.mxu0 0
        %1823 = vmatpush1.bf16.xpose.msra.mxu0 0
        %1824 = vmatprep.subr.bf16.mxu0 0
        %1825 = vmatpush1.bf16.xpose.msra.mxu0 0
        %1826 = vmatprep.subr.bf16.mxu0 0
        %1827 = vmatpush1.bf16.xpose.msra.mxu0 0
        %1828 = vmatprep.subr.bf16.mxu0 0
        %1829 = vmatpush1.bf16.xpose.msra.mxu0 0
        %1830 = vmatprep.subr.bf16.mxu0 0
        %1831 = vmatpush1.bf16.xpose.msra.mxu0 0
        %1832 = vmatprep.subr.bf16.mxu0 0
        %1833 = vmatpush1.bf16.xpose.msra.mxu0 0
        %1834 = vmatprep.mubr.bf16.mxu0 0
        %1835 = vmatmul.mubr.bf16.gmra.mrb[0].mxu0 %v1779
        %v1836 = vpop.f32.mrb[0].mxu0
        %v1837 = vadd.f32 %v916, %v1836
        %v1838 = vpop.f32.mrb[0].mxu0
        %v1839 = vpop.f32.mrb[0].mxu0
        %v1840 = vadd.f32 %v916, %v1839
        %v1841 = vpop.f32.mrb[0].mxu0
        %1842 = vmatprep.mubr.bf16.mxu0 0
        %1843 = vmatmul.mubr.bf16.gmra.mrb[0].mxu0 %v1782
        %v1844 = vpop.f32.mrb[0].mxu0
        %v1845 = vadd.f32 %v916, %v1844
        %v1846 = vpop.f32.mrb[0].mxu0
        %v1847 = vpop.f32.mrb[0].mxu0
        %v1848 = vadd.f32 %v916, %v1847
        %v1849 = vpop.f32.mrb[0].mxu0
        %1850 = vmatprep.mubr.bf16.mxu0 0
        %1851 = vmatmul.mubr.bf16.gmra.mrb[0].mxu0 %v1785
        %v1852 = vpop.f32.mrb[0].mxu0
        %v1853 = vadd.f32 %v916, %v1852
        %v1854 = vpop.f32.mrb[0].mxu0
        %v1855 = vpop.f32.mrb[0].mxu0
        %v1856 = vadd.f32 %v916, %v1855
        %v1857 = vpop.f32.mrb[0].mxu0
        %1858 = vmatprep.mubr.bf16.mxu0 0
        %1859 = vmatmul.mubr.bf16.gmra.mrb[0].mxu0 %v1788
        %v1860 = vpop.f32.mrb[0].mxu0
        %v1861 = vadd.f32 %v916, %v1860
        %v1862 = vpop.f32.mrb[0].mxu0
        %v1863 = vpop.f32.mrb[0].mxu0
        %v1864 = vadd.f32 %v916, %v1863
        %v1865 = vpop.f32.mrb[0].mxu0
        %1866 = vdwg.mxu0
        %v1867 = vsel %vm1008, %v1837, -inf
        %1868 = vmax.xlane.f32.xlu0 %v1867
        %v1869 = vpop.xlane.xlu0 %1868
        %v1870 = vsel %vm1008, %v1840, -inf
        %1871 = vmax.xlane.f32.xlu0 %v1870
        %v1872 = vpop.xlane.xlu0 %1871
        %v1873 = vsel %vm1008, %v1845, -inf
        %1874 = vmax.xlane.f32.xlu0 %v1873
        %v1875 = vpop.xlane.xlu0 %1874
        %v1876 = vsel %vm1008, %v1848, -inf
        %1877 = vmax.xlane.f32.xlu0 %v1876
        %v1878 = vpop.xlane.xlu0 %1877
        %v1879 = vsel %vm1008, %v1853, -inf
        %1880 = vmax.xlane.f32.xlu0 %v1879
        %v1881 = vpop.xlane.xlu0 %1880
        %v1882 = vsel %vm1008, %v1856, -inf
        %1883 = vmax.xlane.f32.xlu0 %v1882
        %v1884 = vpop.xlane.xlu0 %1883
        %v1885 = vsel %vm1008, %v1861, -inf
        %1886 = vmax.xlane.f32.xlu0 %v1885
        %v1887 = vpop.xlane.xlu0 %1886
        %v1888 = vsel %vm1008, %v1864, -inf
        %1889 = vmax.xlane.f32.xlu0 %v1888
        %v1890 = vpop.xlane.xlu0 %1889
        %v1891 = vsub.f32 %v1837, %v1869
        %v1892 = vsub.f32 %v1840, %v1872
        %v1893 = vsub.f32 %v1845, %v1875
        %v1894 = vsub.f32 %v1848, %v1878
        %v1895 = vsub.f32 %v1853, %v1881
        %v1896 = vsub.f32 %v1856, %v1884
        %v1897 = vsub.f32 %v1861, %v1887
        %v1898 = vsub.f32 %v1864, %v1890
        %v1899 = vmul.f32 %v1891, 1.442695
        %v1900 = vpow.pop %v1899
        %v1901 = vmul.f32 %v1892, 1.442695
        %v1902 = vpow.pop %v1901
        %v1903 = vmul.f32 %v1893, 1.442695
        %v1904 = vpow.pop %v1903
        %v1905 = vmul.f32 %v1894, 1.442695
        %v1906 = vpow.pop %v1905
        %v1907 = vmul.f32 %v1895, 1.442695
        %v1908 = vpow.pop %v1907
        %v1909 = vmul.f32 %v1896, 1.442695
        %v1910 = vpow.pop %v1909
        %v1911 = vmul.f32 %v1897, 1.442695
        %v1912 = vpow.pop %v1911
        %v1913 = vmul.f32 %v1898, 1.442695
        %v1914 = vpow.pop %v1913
        %v1915 = vsel %vm1008, %v1900, 0.0
        %1916 = vadd.xlane.f32.xlu0 %v1915
        %v1917 = vpop.xlane.xlu0 %1916
        %v1918 = vsel %vm1008, %v1902, 0.0
        %1919 = vadd.xlane.f32.xlu0 %v1918
        %v1920 = vpop.xlane.xlu0 %1919
        %v1921 = vsel %vm1008, %v1904, 0.0
        %1922 = vadd.xlane.f32.xlu0 %v1921
        %v1923 = vpop.xlane.xlu0 %1922
        %v1924 = vsel %vm1008, %v1906, 0.0
        %1925 = vadd.xlane.f32.xlu0 %v1924
        %v1926 = vpop.xlane.xlu0 %1925
        %v1927 = vsel %vm1008, %v1908, 0.0
        %1928 = vadd.xlane.f32.xlu0 %v1927
        %v1929 = vpop.xlane.xlu0 %1928
        %v1930 = vsel %vm1008, %v1910, 0.0
        %1931 = vadd.xlane.f32.xlu0 %v1930
        %v1932 = vpop.xlane.xlu0 %1931
        %v1933 = vsel %vm1008, %v1912, 0.0
        %1934 = vadd.xlane.f32.xlu0 %v1933
        %v1935 = vpop.xlane.xlu0 %1934
        %v1936 = vsel %vm1008, %v1914, 0.0
        %1937 = vadd.xlane.f32.xlu0 %v1936
        %v1938 = vpop.xlane.xlu0 %1937
        %v1939 = vrcp.pop %v1917
        %v1940 = vrcp.pop %v1920
        %v1941 = vrcp.pop %v1923
        %v1942 = vrcp.pop %v1926
        %v1943 = vrcp.pop %v1929
        %v1944 = vrcp.pop %v1932
        %v1945 = vrcp.pop %v1935
        %v1946 = vrcp.pop %v1938
        %v1947 = vmul.f32 %v1900, %v1939
        %v1948 = vmul.f32 %v1902, %v1940
        %v1949 = vmul.f32 %v1904, %v1941
        %v1950 = vmul.f32 %v1906, %v1942
        %v1951 = vmul.f32 %v1908, %v1943
        %v1952 = vmul.f32 %v1910, %v1944
        %v1953 = vmul.f32 %v1912, %v1945
        %v1954 = vmul.f32 %v1914, %v1946
        %v1955 = vpack.c.bf16 %v1948, %v1947
        %v1956 = vpack.c.bf16 %v1950, %v1949
        %v1957 = vpack.c.bf16 %v1952, %v1951
        %v1958 = vpack.c.bf16 %v1954, %v1953
        %1959 = vrot.lane.b32.xlu0 %v908, 32
        %v1960 = vpop.permute.xlu0 %1959
        %1961 = vrot.lane.b32.xlu0 %v909, 32
        %v1962 = vpop.permute.xlu0 %1961
        %1963 = vrot.lane.b32.xlu0 %v910, 32
        %v1964 = vpop.permute.xlu0 %1963
        %1965 = vrot.lane.b32.xlu0 %v911, 32
        %v1966 = vpop.permute.xlu0 %1965
        %v1972 = vsel %vm1008, %v1955, 0
        %v1975 = vsel %vm1008, %v1956, 0
        %v1978 = vsel %vm1008, %v1957, 0
        %v1981 = vsel %vm1008, %v1958, 0
        %1983 = vmatprep.subr.bf16.mxu0 0
        %1984 = vmatpush1.bf16.msra.mxu0 %v1960
        %1985 = vmatprep.subr.bf16.mxu0 0
        %1986 = vmatpush1.bf16.msra.mxu0 %v1962
        %1987 = vmatprep.subr.bf16.mxu0 0
        %1988 = vmatpush1.bf16.msra.mxu0 %v1964
        %1989 = vmatprep.subr.bf16.mxu0 0
        %1990 = vmatpush1.bf16.msra.mxu0 %v1966
        %1991 = vmatprep.subr.bf16.mxu0 0
        %1992 = vmatpush1.bf16.msra.mxu0 0
        %1993 = vmatprep.subr.bf16.mxu0 0
        %1994 = vmatpush1.bf16.msra.mxu0 0
        %1995 = vmatprep.subr.bf16.mxu0 0
        %1996 = vmatpush1.bf16.msra.mxu0 0
        %1997 = vmatprep.subr.bf16.mxu0 0
        %1998 = vmatpush1.bf16.msra.mxu0 0
        %1999 = vmatprep.subr.bf16.mxu0 0
        %2000 = vmatpush1.bf16.msra.mxu0 0
        %2001 = vmatprep.subr.bf16.mxu0 0
        %2002 = vmatpush1.bf16.msra.mxu0 0
        %2003 = vmatprep.subr.bf16.mxu0 0
        %2004 = vmatpush1.bf16.msra.mxu0 0
        %2005 = vmatprep.subr.bf16.mxu0 0
        %2006 = vmatpush1.bf16.msra.mxu0 0
        %2007 = vmatprep.subr.bf16.mxu0 0
        %2008 = vmatpush1.bf16.msra.mxu0 0
        %2009 = vmatprep.subr.bf16.mxu0 0
        %2010 = vmatpush1.bf16.msra.mxu0 0
        %2011 = vmatprep.subr.bf16.mxu0 0
        %2012 = vmatpush1.bf16.msra.mxu0 0
        %2013 = vmatprep.subr.bf16.mxu0 0
        %2014 = vmatpush1.bf16.msra.mxu0 0
        %2015 = vmatprep.mubr.bf16.mxu0 0
        %2016 = vmatmul.mubr.bf16.gmra.mrb[0].mxu0 %v1972
        %v2017 = vpop.f32.mrb[0].mxu0
        %v2018 = vadd.f32 0.0, %v2017
        %v2019 = vpop.f32.mrb[0].mxu0
        %v2020 = vpop.f32.mrb[0].mxu0
        %v2021 = vadd.f32 0.0, %v2020
        %v2022 = vpop.f32.mrb[0].mxu0
        %2023 = vmatprep.mubr.bf16.mxu0 0
        %2024 = vmatmul.mubr.bf16.gmra.mrb[0].mxu0 %v1975
        %v2025 = vpop.f32.mrb[0].mxu0
        %v2026 = vadd.f32 0.0, %v2025
        %v2027 = vpop.f32.mrb[0].mxu0
        %v2028 = vpop.f32.mrb[0].mxu0
        %v2029 = vadd.f32 0.0, %v2028
        %v2030 = vpop.f32.mrb[0].mxu0
        %2031 = vmatprep.mubr.bf16.mxu0 0
        %2032 = vmatmul.mubr.bf16.gmra.mrb[0].mxu0 %v1978
        %v2033 = vpop.f32.mrb[0].mxu0
        %v2034 = vadd.f32 0.0, %v2033
        %v2035 = vpop.f32.mrb[0].mxu0
        %v2036 = vpop.f32.mrb[0].mxu0
        %v2037 = vadd.f32 0.0, %v2036
        %v2038 = vpop.f32.mrb[0].mxu0
        %2039 = vmatprep.mubr.bf16.mxu0 0
        %2040 = vmatmul.mubr.bf16.gmra.mrb[0].mxu0 %v1981
        %v2041 = vpop.f32.mrb[0].mxu0
        %v2042 = vadd.f32 0.0, %v2041
        %v2043 = vpop.f32.mrb[0].mxu0
        %v2044 = vpop.f32.mrb[0].mxu0
        %v2045 = vadd.f32 0.0, %v2044
        %v2046 = vpop.f32.mrb[0].mxu0
        %2047 = vdwg.mxu0
        %2056 = vrot.lane.b32.xlu0 %v1446, 32
        %v2057 = vpop.permute.xlu0 %2056
        %2058 = vrot.lane.b32.xlu0 %v1449, 32
        %v2059 = vpop.permute.xlu0 %2058
        %2060 = vrot.lane.b32.xlu0 %v1454, 32
        %v2061 = vpop.permute.xlu0 %2060
        %2062 = vrot.lane.b32.xlu0 %v1457, 32
        %v2063 = vpop.permute.xlu0 %2062
        %2064 = vrot.lane.b32.xlu0 %v1462, 32
        %v2065 = vpop.permute.xlu0 %2064
        %2066 = vrot.lane.b32.xlu0 %v1465, 32
        %v2067 = vpop.permute.xlu0 %2066
        %2068 = vrot.lane.b32.xlu0 %v1470, 32
        %v2069 = vpop.permute.xlu0 %2068
        %2070 = vrot.lane.b32.xlu0 %v1473, 32
        %v2071 = vpop.permute.xlu0 %2070
        %2088 = vrot.lane.b32.xlu0 %v1732, 64
        %v2089 = vpop.permute.xlu0 %2088
        %2090 = vrot.lane.b32.xlu0 %v1735, 64
        %v2091 = vpop.permute.xlu0 %2090
        %2092 = vrot.lane.b32.xlu0 %v1740, 64
        %v2093 = vpop.permute.xlu0 %2092
        %2094 = vrot.lane.b32.xlu0 %v1743, 64
        %v2095 = vpop.permute.xlu0 %2094
        %2096 = vrot.lane.b32.xlu0 %v1748, 64
        %v2097 = vpop.permute.xlu0 %2096
        %2098 = vrot.lane.b32.xlu0 %v1751, 64
        %v2099 = vpop.permute.xlu0 %2098
        %2100 = vrot.lane.b32.xlu0 %v1756, 64
        %v2101 = vpop.permute.xlu0 %2100
        %2102 = vrot.lane.b32.xlu0 %v1759, 64
        %v2103 = vpop.permute.xlu0 %2102
        %2120 = vrot.lane.b32.xlu0 %v2018, 96
        %v2121 = vpop.permute.xlu0 %2120
        %2122 = vrot.lane.b32.xlu0 %v2021, 96
        %v2123 = vpop.permute.xlu0 %2122
        %2124 = vrot.lane.b32.xlu0 %v2026, 96
        %v2125 = vpop.permute.xlu0 %2124
        %2126 = vrot.lane.b32.xlu0 %v2029, 96
        %v2127 = vpop.permute.xlu0 %2126
        %2128 = vrot.lane.b32.xlu0 %v2034, 96
        %v2129 = vpop.permute.xlu0 %2128
        %2130 = vrot.lane.b32.xlu0 %v2037, 96
        %v2131 = vpop.permute.xlu0 %2130
        %2132 = vrot.lane.b32.xlu0 %v2042, 96
        %v2133 = vpop.permute.xlu0 %2132
        %2134 = vrot.lane.b32.xlu0 %v2045, 96
        %v2135 = vpop.permute.xlu0 %2134
        %v2144 = vsel %vm918, %v1148, %v2057
        %v2145 = vsel %vm918, %v1151, %v2059
        %v2146 = vsel %vm918, %v1156, %v2061
        %v2147 = vsel %vm918, %v1159, %v2063
        %v2148 = vsel %vm918, %v1164, %v2065
        %v2149 = vsel %vm918, %v1167, %v2067
        %v2150 = vsel %vm918, %v1172, %v2069
        %v2151 = vsel %vm918, %v1175, %v2071
        %v2152 = vsel %vm1008, %v2144, %v2089
        %v2153 = vsel %vm1008, %v2145, %v2091
        %v2154 = vsel %vm1008, %v2146, %v2093
        %v2155 = vsel %vm1008, %v2147, %v2095
        %v2156 = vsel %vm1008, %v2148, %v2097
        %v2157 = vsel %vm1008, %v2149, %v2099
        %v2158 = vsel %vm1008, %v2150, %v2101
        %v2159 = vsel %vm1008, %v2151, %v2103
        %vm2160 = vcmask 785408
        %v2161 = vsel %vm2160, %v2152, %v2121
        %v2162 = vsel %vm2160, %v2153, %v2123
        %v2163 = vsel %vm2160, %v2154, %v2125
        %v2164 = vsel %vm2160, %v2155, %v2127
        %v2165 = vsel %vm2160, %v2156, %v2129
        %v2166 = vsel %vm2160, %v2157, %v2131
        %v2167 = vsel %vm2160, %v2158, %v2133
        %v2168 = vsel %vm2160, %v2159, %v2135
        %v2169 = vld [vmem:[%s4] sm:$0xf]
        %v2170 = vld [vmem:[%s4 + $0x4] sm:$0xf]
        %v2171 = vld [vmem:[%s4 + $0x8] sm:$0xf]
        %v2172 = vld [vmem:[%s4 + $0xc] sm:$0xf]
        %v2173 = vld [vmem:[%s4 + $0x10] sm:$0xf]
        %v2174 = vld [vmem:[%s4 + $0x14] sm:$0xf]
        %v2175 = vld [vmem:[%s4 + $0x18] sm:$0xf]
        %v2176 = vld [vmem:[%s4 + $0x1c] sm:$0xf]
        %v2177 = vld [vmem:[%s4 + $0x20] sm:$0xf]
        %v2178 = vld [vmem:[%s4 + $0x24] sm:$0xf]
        %v2179 = vld [vmem:[%s4 + $0x28] sm:$0xf]
        %v2180 = vld [vmem:[%s4 + $0x2c] sm:$0xf]
        %v2181 = vld [vmem:[%s4 + $0x30] sm:$0xf]
        %v2182 = vld [vmem:[%s4 + $0x34] sm:$0xf]
        %v2183 = vld [vmem:[%s4 + $0x38] sm:$0xf]
        %v2184 = vld [vmem:[%s4 + $0x3c] sm:$0xf]
        %v2185 = vpack.c.bf16 %v2162, %v2161
        %v2186 = vpack.c.bf16 %v2164, %v2163
        %v2187 = vpack.c.bf16 %v2166, %v2165
        %v2188 = vpack.c.bf16 %v2168, %v2167
        %v2189 = vld [vmem:[%s5] sm:$0x1]
        %v2191 = vlaneseq
        %v2192 = vshrl.u32 %v2191, 7
        %v2193 = vsub.s32 0, %v2192
        %v2194 = vrot.slane %v2189, %v2193
        %v2212 = vunpack.c.l.b16 %v2169
        %v2213 = vunpack.c.l.b16 %v2170
        %v2214 = vunpack.c.l.b16 %v2171
        %v2215 = vunpack.c.l.b16 %v2172
        %v2216 = vunpack.c.l.b16 %v2173
        %v2217 = vunpack.c.l.b16 %v2174
        %v2218 = vunpack.c.l.b16 %v2175
        %v2219 = vunpack.c.l.b16 %v2176
        %v2220 = vunpack.c.l.b16 %v2177
        %v2221 = vunpack.c.l.b16 %v2178
        %v2222 = vunpack.c.l.b16 %v2179
        %v2223 = vunpack.c.l.b16 %v2180
        %v2224 = vunpack.c.l.b16 %v2181
        %v2225 = vunpack.c.l.b16 %v2182
        %v2226 = vunpack.c.l.b16 %v2183
        %v2227 = vunpack.c.l.b16 %v2184
        %v2228 = vpack.c.b16 %v2213, %v2212
        %v2229 = vpack.c.b16 %v2215, %v2214
        %v2230 = vpack.c.b16 %v2217, %v2216
        %v2231 = vpack.c.b16 %v2219, %v2218
        %v2232 = vpack.c.b16 %v2221, %v2220
        %v2233 = vpack.c.b16 %v2223, %v2222
        %v2234 = vpack.c.b16 %v2225, %v2224
        %v2235 = vpack.c.b16 %v2227, %v2226
        %2244 = vmatprep.subr.bf16.mxu0 0
        %2245 = vmatpush1.bf16.msra.mxu0 %v2228
        %2246 = vmatprep.subr.bf16.mxu0 0
        %2247 = vmatpush1.bf16.msra.mxu0 %v2229
        %2248 = vmatprep.subr.bf16.mxu0 0
        %2249 = vmatpush1.bf16.msra.mxu0 %v2230
        %2250 = vmatprep.subr.bf16.mxu0 0
        %2251 = vmatpush1.bf16.msra.mxu0 %v2231
        %2252 = vmatprep.subr.bf16.mxu0 0
        %2253 = vmatpush1.bf16.msra.mxu0 %v2232
        %2254 = vmatprep.subr.bf16.mxu0 0
        %2255 = vmatpush1.bf16.msra.mxu0 %v2233
        %2256 = vmatprep.subr.bf16.mxu0 0
        %2257 = vmatpush1.bf16.msra.mxu0 %v2234
        %2258 = vmatprep.subr.bf16.mxu0 0
        %2259 = vmatpush1.bf16.msra.mxu0 %v2235
        %2260 = vmatprep.subr.bf16.mxu0 0
        %2261 = vmatpush1.bf16.msra.mxu0 0
        %2262 = vmatprep.subr.bf16.mxu0 0
        %2263 = vmatpush1.bf16.msra.mxu0 0
        %2264 = vmatprep.subr.bf16.mxu0 0
        %2265 = vmatpush1.bf16.msra.mxu0 0
        %2266 = vmatprep.subr.bf16.mxu0 0
        %2267 = vmatpush1.bf16.msra.mxu0 0
        %2268 = vmatprep.subr.bf16.mxu0 0
        %2269 = vmatpush1.bf16.msra.mxu0 0
        %2270 = vmatprep.subr.bf16.mxu0 0
        %2271 = vmatpush1.bf16.msra.mxu0 0
        %2272 = vmatprep.subr.bf16.mxu0 0
        %2273 = vmatpush1.bf16.msra.mxu0 0
        %2274 = vmatprep.subr.bf16.mxu0 0
        %2275 = vmatpush1.bf16.msra.mxu0 0
        %2276 = vmatprep.mubr.bf16.mxu0 0
        %2277 = vmatmul.mubr.bf16.gmra.mrb[0].mxu0 %v2185
        %v2278 = vpop.f32.mrb[0].mxu0
        %v2279 = vadd.f32 %v2194, %v2278
        %v2280 = vpop.f32.mrb[0].mxu0
        %v2281 = vpop.f32.mrb[0].mxu0
        %v2282 = vadd.f32 %v2194, %v2281
        %v2283 = vpop.f32.mrb[0].mxu0
        %2284 = vmatprep.mubr.bf16.mxu0 0
        %2285 = vmatmul.mubr.bf16.gmra.mrb[0].mxu0 %v2186
        %v2286 = vpop.f32.mrb[0].mxu0
        %v2287 = vadd.f32 %v2194, %v2286
        %v2288 = vpop.f32.mrb[0].mxu0
        %v2289 = vpop.f32.mrb[0].mxu0
        %v2290 = vadd.f32 %v2194, %v2289
        %v2291 = vpop.f32.mrb[0].mxu0
        %2292 = vmatprep.mubr.bf16.mxu0 0
        %2293 = vmatmul.mubr.bf16.gmra.mrb[0].mxu0 %v2187
        %v2294 = vpop.f32.mrb[0].mxu0
        %v2295 = vadd.f32 %v2194, %v2294
        %v2296 = vpop.f32.mrb[0].mxu0
        %v2297 = vpop.f32.mrb[0].mxu0
        %v2298 = vadd.f32 %v2194, %v2297
        %v2299 = vpop.f32.mrb[0].mxu0
        %2300 = vmatprep.mubr.bf16.mxu0 0
        %2301 = vmatmul.mubr.bf16.gmra.mrb[0].mxu0 %v2188
        %v2302 = vpop.f32.mrb[0].mxu0
        %v2303 = vadd.f32 %v2194, %v2302
        %v2304 = vpop.f32.mrb[0].mxu0
        %v2305 = vpop.f32.mrb[0].mxu0
        %v2306 = vadd.f32 %v2194, %v2305
        %v2307 = vpop.f32.mrb[0].mxu0
        %2308 = vdwg.mxu0
        %v2309 = vadd.f32 %v564, %v2279
        %v2310 = vadd.f32 %v565, %v2282
        %v2311 = vadd.f32 %v566, %v2287
        %v2312 = vadd.f32 %v567, %v2290
        %v2313 = vadd.f32 %v568, %v2295
        %v2314 = vadd.f32 %v569, %v2298
        %v2315 = vadd.f32 %v570, %v2303
        %v2316 = vadd.f32 %v571, %v2306
        %v2317 = vld [vmem:[%s10] sm:$0x1]
        %v2318 = vld [vmem:[%s11] sm:$0x1]
        %2319 = vadd.xlane.f32.xlu0 %v2309
        %v2320 = vpop.xlane.xlu0 %2319
        %2321 = vadd.xlane.f32.xlu0 %v2310
        %v2322 = vpop.xlane.xlu0 %2321
        %2323 = vadd.xlane.f32.xlu0 %v2311
        %v2324 = vpop.xlane.xlu0 %2323
        %2325 = vadd.xlane.f32.xlu0 %v2312
        %v2326 = vpop.xlane.xlu0 %2325
        %2327 = vadd.xlane.f32.xlu0 %v2313
        %v2328 = vpop.xlane.xlu0 %2327
        %2329 = vadd.xlane.f32.xlu0 %v2314
        %v2330 = vpop.xlane.xlu0 %2329
        %2331 = vadd.xlane.f32.xlu0 %v2315
        %v2332 = vpop.xlane.xlu0 %2331
        %2333 = vadd.xlane.f32.xlu0 %v2316
        %v2334 = vpop.xlane.xlu0 %2333
        %v2335 = vrcp.pop 128.0
        %v2336 = vmul.f32 %v2320, %v2335
        %v2337 = vmul.f32 %v2322, %v2335
        %v2338 = vmul.f32 %v2324, %v2335
        %v2339 = vmul.f32 %v2326, %v2335
        %v2340 = vmul.f32 %v2328, %v2335
        %v2341 = vmul.f32 %v2330, %v2335
        %v2342 = vmul.f32 %v2332, %v2335
        %v2343 = vmul.f32 %v2334, %v2335
        %v2344 = vsub.f32 %v2309, %v2336
        %v2345 = vsub.f32 %v2310, %v2337
        %v2346 = vsub.f32 %v2311, %v2338
        %v2347 = vsub.f32 %v2312, %v2339
        %v2348 = vsub.f32 %v2313, %v2340
        %v2349 = vsub.f32 %v2314, %v2341
        %v2350 = vsub.f32 %v2315, %v2342
        %v2351 = vsub.f32 %v2316, %v2343
        %v2352 = vmul.f32 %v2344, %v2344
        %v2353 = vmul.f32 %v2345, %v2345
        %v2354 = vmul.f32 %v2346, %v2346
        %v2355 = vmul.f32 %v2347, %v2347
        %v2356 = vmul.f32 %v2348, %v2348
        %v2357 = vmul.f32 %v2349, %v2349
        %v2358 = vmul.f32 %v2350, %v2350
        %v2359 = vmul.f32 %v2351, %v2351
        %2360 = vadd.xlane.f32.xlu0 %v2352
        %v2361 = vpop.xlane.xlu0 %2360
        %2362 = vadd.xlane.f32.xlu0 %v2353
        %v2363 = vpop.xlane.xlu0 %2362
        %2364 = vadd.xlane.f32.xlu0 %v2354
        %v2365 = vpop.xlane.xlu0 %2364
        %2366 = vadd.xlane.f32.xlu0 %v2355
        %v2367 = vpop.xlane.xlu0 %2366
        %2368 = vadd.xlane.f32.xlu0 %v2356
        %v2369 = vpop.xlane.xlu0 %2368
        %2370 = vadd.xlane.f32.xlu0 %v2357
        %v2371 = vpop.xlane.xlu0 %2370
        %2372 = vadd.xlane.f32.xlu0 %v2358
        %v2373 = vpop.xlane.xlu0 %2372
        %2374 = vadd.xlane.f32.xlu0 %v2359
        %v2375 = vpop.xlane.xlu0 %2374
        %v2376 = vmul.f32 %v2361, %v2335
        %v2377 = vmul.f32 %v2363, %v2335
        %v2378 = vmul.f32 %v2365, %v2335
        %v2379 = vmul.f32 %v2367, %v2335
        %v2380 = vmul.f32 %v2369, %v2335
        %v2381 = vmul.f32 %v2371, %v2335
        %v2382 = vmul.f32 %v2373, %v2335
        %v2383 = vmul.f32 %v2375, %v2335
        %v2384 = vadd.f32 %v2376, 1e-05
        %v2385 = vadd.f32 %v2377, 1e-05
        %v2386 = vadd.f32 %v2378, 1e-05
        %v2387 = vadd.f32 %v2379, 1e-05
        %v2388 = vadd.f32 %v2380, 1e-05
        %v2389 = vadd.f32 %v2381, 1e-05
        %v2390 = vadd.f32 %v2382, 1e-05
        %v2391 = vadd.f32 %v2383, 1e-05
        %v2392 = vrsqrt.pop %v2384
        %v2393 = vrsqrt.pop %v2385
        %v2394 = vrsqrt.pop %v2386
        %v2395 = vrsqrt.pop %v2387
        %v2396 = vrsqrt.pop %v2388
        %v2397 = vrsqrt.pop %v2389
        %v2398 = vrsqrt.pop %v2390
        %v2399 = vrsqrt.pop %v2391
        %v2400 = vmul.f32 %v2344, %v2392
        %v2401 = vmul.f32 %v2345, %v2393
        %v2402 = vmul.f32 %v2346, %v2394
        %v2403 = vmul.f32 %v2347, %v2395
        %v2404 = vmul.f32 %v2348, %v2396
        %v2405 = vmul.f32 %v2349, %v2397
        %v2406 = vmul.f32 %v2350, %v2398
        %v2407 = vmul.f32 %v2351, %v2399
        %v2409 = vlaneseq
        %v2410 = vshrl.u32 %v2409, 7
        %v2411 = vsub.s32 0, %v2410
        %v2412 = vrot.slane %v2317, %v2411
        %v2414 = vmul.f32 %v2400, %v2412
        %v2415 = vmul.f32 %v2401, %v2412
        %v2416 = vmul.f32 %v2402, %v2412
        %v2417 = vmul.f32 %v2403, %v2412
        %v2418 = vmul.f32 %v2404, %v2412
        %v2419 = vmul.f32 %v2405, %v2412
        %v2420 = vmul.f32 %v2406, %v2412
        %v2421 = vmul.f32 %v2407, %v2412
        %v2423 = vlaneseq
        %v2424 = vshrl.u32 %v2423, 7
        %v2425 = vsub.s32 0, %v2424
        %v2426 = vrot.slane %v2318, %v2425
        %v2428 = vadd.f32 %v2414, %v2426
        %v2429 = vadd.f32 %v2415, %v2426
        %v2430 = vadd.f32 %v2416, %v2426
        %v2431 = vadd.f32 %v2417, %v2426
        %v2432 = vadd.f32 %v2418, %v2426
        %v2433 = vadd.f32 %v2419, %v2426
        %v2434 = vadd.f32 %v2420, %v2426
        %v2435 = vadd.f32 %v2421, %v2426
        %v2436 = vld [vmem:[#allocation2] sm:$0xff]
        %v2437 = vld [vmem:[#allocation2 + $0x8] sm:$0xff]
        %v2438 = vld [vmem:[#allocation2 + $0x10] sm:$0xff]
        %v2439 = vld [vmem:[#allocation2 + $0x18] sm:$0xff]
        %v2440 = vld [vmem:[#allocation2 + $0x20] sm:$0xff]
        %v2441 = vld [vmem:[#allocation2 + $0x28] sm:$0xff]
        %v2442 = vld [vmem:[#allocation2 + $0x30] sm:$0xff]
        %v2443 = vld [vmem:[#allocation2 + $0x38] sm:$0xff]
        %v2444 = vld [vmem:[#allocation2 + $0x40] sm:$0xff]
        %v2445 = vld [vmem:[#allocation2 + $0x48] sm:$0xff]
        %v2446 = vld [vmem:[#allocation2 + $0x50] sm:$0xff]
        %v2447 = vld [vmem:[#allocation2 + $0x58] sm:$0xff]
        %v2448 = vld [vmem:[#allocation2 + $0x60] sm:$0xff]
        %v2449 = vld [vmem:[#allocation2 + $0x68] sm:$0xff]
        %v2450 = vld [vmem:[#allocation2 + $0x70] sm:$0xff]
        %v2451 = vld [vmem:[#allocation2 + $0x78] sm:$0xff]
        %v2452 = vld [vmem:[#allocation2 + $0x80] sm:$0xff]
        %v2453 = vld [vmem:[#allocation2 + $0x88] sm:$0xff]
        %v2454 = vld [vmem:[#allocation2 + $0x90] sm:$0xff]
        %v2455 = vld [vmem:[#allocation2 + $0x98] sm:$0xff]
        %v2456 = vld [vmem:[#allocation2 + $0xa0] sm:$0xff]
        %v2457 = vld [vmem:[#allocation2 + $0xa8] sm:$0xff]
        %v2458 = vld [vmem:[#allocation2 + $0xb0] sm:$0xff]
        %v2459 = vld [vmem:[#allocation2 + $0xb8] sm:$0xff]
        %v2460 = vld [vmem:[#allocation2 + $0xc0] sm:$0xff]
        %v2461 = vld [vmem:[#allocation2 + $0xc8] sm:$0xff]
        %v2462 = vld [vmem:[#allocation2 + $0xd0] sm:$0xff]
        %v2463 = vld [vmem:[#allocation2 + $0xd8] sm:$0xff]
        %v2464 = vld [vmem:[#allocation2 + $0xe0] sm:$0xff]
        %v2465 = vld [vmem:[#allocation2 + $0xe8] sm:$0xff]
        %v2466 = vld [vmem:[#allocation2 + $0xf0] sm:$0xff]
        %v2467 = vld [vmem:[#allocation2 + $0xf8] sm:$0xff]
        %v2468 = vld [vmem:[#allocation2 + $0x100] sm:$0xff]
        %v2469 = vld [vmem:[#allocation2 + $0x108] sm:$0xff]
        %v2470 = vld [vmem:[#allocation2 + $0x110] sm:$0xff]
        %v2471 = vld [vmem:[#allocation2 + $0x118] sm:$0xff]
        %v2472 = vld [vmem:[#allocation2 + $0x120] sm:$0xff]
        %v2473 = vld [vmem:[#allocation2 + $0x128] sm:$0xff]
        %v2474 = vld [vmem:[#allocation2 + $0x130] sm:$0xff]
        %v2475 = vld [vmem:[#allocation2 + $0x138] sm:$0xff]
        %v2476 = vld [vmem:[#allocation2 + $0x140] sm:$0xff]
        %v2477 = vld [vmem:[#allocation2 + $0x148] sm:$0xff]
        %v2478 = vld [vmem:[#allocation2 + $0x150] sm:$0xff]
        %v2479 = vld [vmem:[#allocation2 + $0x158] sm:$0xff]
        %v2480 = vld [vmem:[#allocation2 + $0x160] sm:$0xff]
        %v2481 = vld [vmem:[#allocation2 + $0x168] sm:$0xff]
        %v2482 = vld [vmem:[#allocation2 + $0x170] sm:$0xff]
        %v2483 = vld [vmem:[#allocation2 + $0x178] sm:$0xff]
        %v2484 = vld [vmem:[#allocation2 + $0x180] sm:$0xff]
        %v2485 = vld [vmem:[#allocation2 + $0x188] sm:$0xff]
        %v2486 = vld [vmem:[#allocation2 + $0x190] sm:$0xff]
        %v2487 = vld [vmem:[#allocation2 + $0x198] sm:$0xff]
        %v2488 = vld [vmem:[#allocation2 + $0x1a0] sm:$0xff]
        %v2489 = vld [vmem:[#allocation2 + $0x1a8] sm:$0xff]
        %v2490 = vld [vmem:[#allocation2 + $0x1b0] sm:$0xff]
        %v2491 = vld [vmem:[#allocation2 + $0x1b8] sm:$0xff]
        %v2492 = vld [vmem:[#allocation2 + $0x1c0] sm:$0xff]
        %v2493 = vld [vmem:[#allocation2 + $0x1c8] sm:$0xff]
        %v2494 = vld [vmem:[#allocation2 + $0x1d0] sm:$0xff]
        %v2495 = vld [vmem:[#allocation2 + $0x1d8] sm:$0xff]
        %v2496 = vld [vmem:[#allocation2 + $0x1e0] sm:$0xff]
        %v2497 = vld [vmem:[#allocation2 + $0x1e8] sm:$0xff]
        %v2498 = vld [vmem:[#allocation2 + $0x1f0] sm:$0xff]
        %v2499 = vld [vmem:[#allocation2 + $0x1f8] sm:$0xff]
        %v2500 = vld [vmem:[#allocation2 + $0x200] sm:$0xff]
        %v2501 = vld [vmem:[#allocation2 + $0x208] sm:$0xff]
        %v2502 = vld [vmem:[#allocation2 + $0x210] sm:$0xff]
        %v2503 = vld [vmem:[#allocation2 + $0x218] sm:$0xff]
        %v2504 = vld [vmem:[#allocation2 + $0x220] sm:$0xff]
        %v2505 = vld [vmem:[#allocation2 + $0x228] sm:$0xff]
        %v2506 = vld [vmem:[#allocation2 + $0x230] sm:$0xff]
        %v2507 = vld [vmem:[#allocation2 + $0x238] sm:$0xff]
        %v2508 = vld [vmem:[#allocation2 + $0x240] sm:$0xff]
        %v2509 = vld [vmem:[#allocation2 + $0x248] sm:$0xff]
        %v2510 = vld [vmem:[#allocation2 + $0x250] sm:$0xff]
        %v2511 = vld [vmem:[#allocation2 + $0x258] sm:$0xff]
        %v2512 = vld [vmem:[#allocation2 + $0x260] sm:$0xff]
        %v2513 = vld [vmem:[#allocation2 + $0x268] sm:$0xff]
        %v2514 = vld [vmem:[#allocation2 + $0x270] sm:$0xff]
        %v2515 = vld [vmem:[#allocation2 + $0x278] sm:$0xff]
        %v2516 = vld [vmem:[#allocation2 + $0x280] sm:$0xff]
        %v2517 = vld [vmem:[#allocation2 + $0x288] sm:$0xff]
        %v2518 = vld [vmem:[#allocation2 + $0x290] sm:$0xff]
        %v2519 = vld [vmem:[#allocation2 + $0x298] sm:$0xff]
        %v2520 = vld [vmem:[#allocation2 + $0x2a0] sm:$0xff]
        %v2521 = vld [vmem:[#allocation2 + $0x2a8] sm:$0xff]
        %v2522 = vld [vmem:[#allocation2 + $0x2b0] sm:$0xff]
        %v2523 = vld [vmem:[#allocation2 + $0x2b8] sm:$0xff]
        %v2524 = vld [vmem:[#allocation2 + $0x2c0] sm:$0xff]
        %v2525 = vld [vmem:[#allocation2 + $0x2c8] sm:$0xff]
        %v2526 = vld [vmem:[#allocation2 + $0x2d0] sm:$0xff]
        %v2527 = vld [vmem:[#allocation2 + $0x2d8] sm:$0xff]
        %v2528 = vld [vmem:[#allocation2 + $0x2e0] sm:$0xff]
        %v2529 = vld [vmem:[#allocation2 + $0x2e8] sm:$0xff]
        %v2530 = vld [vmem:[#allocation2 + $0x2f0] sm:$0xff]
        %v2531 = vld [vmem:[#allocation2 + $0x2f8] sm:$0xff]
        %v2532 = vld [vmem:[#allocation2 + $0x300] sm:$0xff]
        %v2533 = vld [vmem:[#allocation2 + $0x308] sm:$0xff]
        %v2534 = vld [vmem:[#allocation2 + $0x310] sm:$0xff]
        %v2535 = vld [vmem:[#allocation2 + $0x318] sm:$0xff]
        %v2536 = vld [vmem:[#allocation2 + $0x320] sm:$0xff]
        %v2537 = vld [vmem:[#allocation2 + $0x328] sm:$0xff]
        %v2538 = vld [vmem:[#allocation2 + $0x330] sm:$0xff]
        %v2539 = vld [vmem:[#allocation2 + $0x338] sm:$0xff]
        %v2540 = vld [vmem:[#allocation2 + $0x340] sm:$0xff]
        %v2541 = vld [vmem:[#allocation2 + $0x348] sm:$0xff]
        %v2542 = vld [vmem:[#allocation2 + $0x350] sm:$0xff]
        %v2543 = vld [vmem:[#allocation2 + $0x358] sm:$0xff]
        %v2544 = vld [vmem:[#allocation2 + $0x360] sm:$0xff]
        %v2545 = vld [vmem:[#allocation2 + $0x368] sm:$0xff]
        %v2546 = vld [vmem:[#allocation2 + $0x370] sm:$0xff]
        %v2547 = vld [vmem:[#allocation2 + $0x378] sm:$0xff]
        %v2548 = vld [vmem:[#allocation2 + $0x380] sm:$0xff]
        %v2549 = vld [vmem:[#allocation2 + $0x388] sm:$0xff]
        %v2550 = vld [vmem:[#allocation2 + $0x390] sm:$0xff]
        %v2551 = vld [vmem:[#allocation2 + $0x398] sm:$0xff]
        %v2552 = vld [vmem:[#allocation2 + $0x3a0] sm:$0xff]
        %v2553 = vld [vmem:[#allocation2 + $0x3a8] sm:$0xff]
        %v2554 = vld [vmem:[#allocation2 + $0x3b0] sm:$0xff]
        %v2555 = vld [vmem:[#allocation2 + $0x3b8] sm:$0xff]
        %v2556 = vld [vmem:[#allocation2 + $0x3c0] sm:$0xff]
        %v2557 = vld [vmem:[#allocation2 + $0x3c8] sm:$0xff]
        %v2558 = vld [vmem:[#allocation2 + $0x3d0] sm:$0xff]
        %v2559 = vld [vmem:[#allocation2 + $0x3d8] sm:$0xff]
        %v2560 = vld [vmem:[#allocation2 + $0x3e0] sm:$0xff]
        %v2561 = vld [vmem:[#allocation2 + $0x3e8] sm:$0xff]
        %v2562 = vld [vmem:[#allocation2 + $0x3f0] sm:$0xff]
        %v2563 = vld [vmem:[#allocation2 + $0x3f8] sm:$0xff]
        %v2564 = vpack.c.bf16 %v2429, %v2428
        %v2565 = vpack.c.bf16 %v2431, %v2430
        %v2566 = vpack.c.bf16 %v2433, %v2432
        %v2567 = vpack.c.bf16 %v2435, %v2434
        %v2568 = vld [vmem:[%s7] sm:$0xff]
        %v2569 = vld [vmem:[%s7 + $0x8] sm:$0xff]
        %v2572 = vlaneseq
        %v2573 = vshrl.u32 %v2572, 7
        %v2574 = vsub.s32 0, %v2573
        %v2575 = vrot.slane %v2568, %v2574
        %v2576 = vlaneseq
        %v2577 = vshrl.u32 %v2576, 7
        %v2578 = vsub.s32 1, %v2577
        %v2579 = vrot.slane %v2568, %v2578
        %v2580 = vlaneseq
        %v2581 = vshrl.u32 %v2580, 7
        %v2582 = vsub.s32 2, %v2581
        %v2583 = vrot.slane %v2568, %v2582
        %v2584 = vlaneseq
        %v2585 = vshrl.u32 %v2584, 7
        %v2586 = vsub.s32 3, %v2585
        %v2587 = vrot.slane %v2568, %v2586
        %v2588 = vlaneseq
        %v2589 = vshrl.u32 %v2588, 7
        %v2590 = vsub.s32 4, %v2589
        %v2591 = vrot.slane %v2568, %v2590
        %v2592 = vlaneseq
        %v2593 = vshrl.u32 %v2592, 7
        %v2594 = vsub.s32 5, %v2593
        %v2595 = vrot.slane %v2568, %v2594
        %v2596 = vlaneseq
        %v2597 = vshrl.u32 %v2596, 7
        %v2598 = vsub.s32 6, %v2597
        %v2599 = vrot.slane %v2568, %v2598
        %v2600 = vlaneseq
        %v2601 = vshrl.u32 %v2600, 7
        %v2602 = vsub.s32 7, %v2601
        %v2603 = vrot.slane %v2568, %v2602
        %v2604 = vlaneseq
        %v2605 = vshrl.u32 %v2604, 7
        %v2606 = vsub.s32 0, %v2605
        %v2607 = vrot.slane %v2569, %v2606
        %v2608 = vlaneseq
        %v2609 = vshrl.u32 %v2608, 7
        %v2610 = vsub.s32 1, %v2609
        %v2611 = vrot.slane %v2569, %v2610
        %v2612 = vlaneseq
        %v2613 = vshrl.u32 %v2612, 7
        %v2614 = vsub.s32 2, %v2613
        %v2615 = vrot.slane %v2569, %v2614
        %v2616 = vlaneseq
        %v2617 = vshrl.u32 %v2616, 7
        %v2618 = vsub.s32 3, %v2617
        %v2619 = vrot.slane %v2569, %v2618
        %v2620 = vlaneseq
        %v2621 = vshrl.u32 %v2620, 7
        %v2622 = vsub.s32 4, %v2621
        %v2623 = vrot.slane %v2569, %v2622
        %v2624 = vlaneseq
        %v2625 = vshrl.u32 %v2624, 7
        %v2626 = vsub.s32 5, %v2625
        %v2627 = vrot.slane %v2569, %v2626
        %v2628 = vlaneseq
        %v2629 = vshrl.u32 %v2628, 7
        %v2630 = vsub.s32 6, %v2629
        %v2631 = vrot.slane %v2569, %v2630
        %v2632 = vlaneseq
        %v2633 = vshrl.u32 %v2632, 7
        %v2634 = vsub.s32 7, %v2633
        %v2635 = vrot.slane %v2569, %v2634
        %v2780 = vunpack.c.l.b16 %v2436
        %v2781 = vunpack.c.h.b16 %v2436
        %v2782 = vunpack.c.l.b16 %v2437
        %v2783 = vunpack.c.h.b16 %v2437
        %v2784 = vunpack.c.l.b16 %v2438
        %v2785 = vunpack.c.h.b16 %v2438
        %v2786 = vunpack.c.l.b16 %v2439
        %v2787 = vunpack.c.h.b16 %v2439
        %v2788 = vunpack.c.l.b16 %v2440
        %v2789 = vunpack.c.h.b16 %v2440
        %v2790 = vunpack.c.l.b16 %v2441
        %v2791 = vunpack.c.h.b16 %v2441
        %v2792 = vunpack.c.l.b16 %v2442
        %v2793 = vunpack.c.h.b16 %v2442
        %v2794 = vunpack.c.l.b16 %v2443
        %v2795 = vunpack.c.h.b16 %v2443
        %v2796 = vunpack.c.l.b16 %v2444
        %v2797 = vunpack.c.h.b16 %v2444
        %v2798 = vunpack.c.l.b16 %v2445
        %v2799 = vunpack.c.h.b16 %v2445
        %v2800 = vunpack.c.l.b16 %v2446
        %v2801 = vunpack.c.h.b16 %v2446
        %v2802 = vunpack.c.l.b16 %v2447
        %v2803 = vunpack.c.h.b16 %v2447
        %v2804 = vunpack.c.l.b16 %v2448
        %v2805 = vunpack.c.h.b16 %v2448
        %v2806 = vunpack.c.l.b16 %v2449
        %v2807 = vunpack.c.h.b16 %v2449
        %v2808 = vunpack.c.l.b16 %v2450
        %v2809 = vunpack.c.h.b16 %v2450
        %v2810 = vunpack.c.l.b16 %v2451
        %v2811 = vunpack.c.h.b16 %v2451
        %v2812 = vunpack.c.l.b16 %v2452
        %v2813 = vunpack.c.h.b16 %v2452
        %v2814 = vunpack.c.l.b16 %v2453
        %v2815 = vunpack.c.h.b16 %v2453
        %v2816 = vunpack.c.l.b16 %v2454
        %v2817 = vunpack.c.h.b16 %v2454
        %v2818 = vunpack.c.l.b16 %v2455
        %v2819 = vunpack.c.h.b16 %v2455
        %v2820 = vunpack.c.l.b16 %v2456
        %v2821 = vunpack.c.h.b16 %v2456
        %v2822 = vunpack.c.l.b16 %v2457
        %v2823 = vunpack.c.h.b16 %v2457
        %v2824 = vunpack.c.l.b16 %v2458
        %v2825 = vunpack.c.h.b16 %v2458
        %v2826 = vunpack.c.l.b16 %v2459
        %v2827 = vunpack.c.h.b16 %v2459
        %v2828 = vunpack.c.l.b16 %v2460
        %v2829 = vunpack.c.h.b16 %v2460
        %v2830 = vunpack.c.l.b16 %v2461
        %v2831 = vunpack.c.h.b16 %v2461
        %v2832 = vunpack.c.l.b16 %v2462
        %v2833 = vunpack.c.h.b16 %v2462
        %v2834 = vunpack.c.l.b16 %v2463
        %v2835 = vunpack.c.h.b16 %v2463
        %v2836 = vunpack.c.l.b16 %v2464
        %v2837 = vunpack.c.h.b16 %v2464
        %v2838 = vunpack.c.l.b16 %v2465
        %v2839 = vunpack.c.h.b16 %v2465
        %v2840 = vunpack.c.l.b16 %v2466
        %v2841 = vunpack.c.h.b16 %v2466
        %v2842 = vunpack.c.l.b16 %v2467
        %v2843 = vunpack.c.h.b16 %v2467
        %v2844 = vunpack.c.l.b16 %v2468
        %v2845 = vunpack.c.h.b16 %v2468
        %v2846 = vunpack.c.l.b16 %v2469
        %v2847 = vunpack.c.h.b16 %v2469
        %v2848 = vunpack.c.l.b16 %v2470
        %v2849 = vunpack.c.h.b16 %v2470
        %v2850 = vunpack.c.l.b16 %v2471
        %v2851 = vunpack.c.h.b16 %v2471
        %v2852 = vunpack.c.l.b16 %v2472
        %v2853 = vunpack.c.h.b16 %v2472
        %v2854 = vunpack.c.l.b16 %v2473
        %v2855 = vunpack.c.h.b16 %v2473
        %v2856 = vunpack.c.l.b16 %v2474
        %v2857 = vunpack.c.h.b16 %v2474
        %v2858 = vunpack.c.l.b16 %v2475
        %v2859 = vunpack.c.h.b16 %v2475
        %v2860 = vunpack.c.l.b16 %v2476
        %v2861 = vunpack.c.h.b16 %v2476
        %v2862 = vunpack.c.l.b16 %v2477
        %v2863 = vunpack.c.h.b16 %v2477
        %v2864 = vunpack.c.l.b16 %v2478
        %v2865 = vunpack.c.h.b16 %v2478
        %v2866 = vunpack.c.l.b16 %v2479
        %v2867 = vunpack.c.h.b16 %v2479
        %v2868 = vunpack.c.l.b16 %v2480
        %v2869 = vunpack.c.h.b16 %v2480
        %v2870 = vunpack.c.l.b16 %v2481
        %v2871 = vunpack.c.h.b16 %v2481
        %v2872 = vunpack.c.l.b16 %v2482
        %v2873 = vunpack.c.h.b16 %v2482
        %v2874 = vunpack.c.l.b16 %v2483
        %v2875 = vunpack.c.h.b16 %v2483
        %v2876 = vunpack.c.l.b16 %v2484
        %v2877 = vunpack.c.h.b16 %v2484
        %v2878 = vunpack.c.l.b16 %v2485
        %v2879 = vunpack.c.h.b16 %v2485
        %v2880 = vunpack.c.l.b16 %v2486
        %v2881 = vunpack.c.h.b16 %v2486
        %v2882 = vunpack.c.l.b16 %v2487
        %v2883 = vunpack.c.h.b16 %v2487
        %v2884 = vunpack.c.l.b16 %v2488
        %v2885 = vunpack.c.h.b16 %v2488
        %v2886 = vunpack.c.l.b16 %v2489
        %v2887 = vunpack.c.h.b16 %v2489
        %v2888 = vunpack.c.l.b16 %v2490
        %v2889 = vunpack.c.h.b16 %v2490
        %v2890 = vunpack.c.l.b16 %v2491
        %v2891 = vunpack.c.h.b16 %v2491
        %v2892 = vunpack.c.l.b16 %v2492
        %v2893 = vunpack.c.h.b16 %v2492
        %v2894 = vunpack.c.l.b16 %v2493
        %v2895 = vunpack.c.h.b16 %v2493
        %v2896 = vunpack.c.l.b16 %v2494
        %v2897 = vunpack.c.h.b16 %v2494
        %v2898 = vunpack.c.l.b16 %v2495
        %v2899 = vunpack.c.h.b16 %v2495
        %v2900 = vunpack.c.l.b16 %v2496
        %v2901 = vunpack.c.h.b16 %v2496
        %v2902 = vunpack.c.l.b16 %v2497
        %v2903 = vunpack.c.h.b16 %v2497
        %v2904 = vunpack.c.l.b16 %v2498
        %v2905 = vunpack.c.h.b16 %v2498
        %v2906 = vunpack.c.l.b16 %v2499
        %v2907 = vunpack.c.h.b16 %v2499
        %v2908 = vunpack.c.l.b16 %v2500
        %v2909 = vunpack.c.h.b16 %v2500
        %v2910 = vunpack.c.l.b16 %v2501
        %v2911 = vunpack.c.h.b16 %v2501
        %v2912 = vunpack.c.l.b16 %v2502
        %v2913 = vunpack.c.h.b16 %v2502
        %v2914 = vunpack.c.l.b16 %v2503
        %v2915 = vunpack.c.h.b16 %v2503
        %v2916 = vunpack.c.l.b16 %v2504
        %v2917 = vunpack.c.h.b16 %v2504
        %v2918 = vunpack.c.l.b16 %v2505
        %v2919 = vunpack.c.h.b16 %v2505
        %v2920 = vunpack.c.l.b16 %v2506
        %v2921 = vunpack.c.h.b16 %v2506
        %v2922 = vunpack.c.l.b16 %v2507
        %v2923 = vunpack.c.h.b16 %v2507
        %v2924 = vunpack.c.l.b16 %v2508
        %v2925 = vunpack.c.h.b16 %v2508
        %v2926 = vunpack.c.l.b16 %v2509
        %v2927 = vunpack.c.h.b16 %v2509
        %v2928 = vunpack.c.l.b16 %v2510
        %v2929 = vunpack.c.h.b16 %v2510
        %v2930 = vunpack.c.l.b16 %v2511
        %v2931 = vunpack.c.h.b16 %v2511
        %v2932 = vunpack.c.l.b16 %v2512
        %v2933 = vunpack.c.h.b16 %v2512
        %v2934 = vunpack.c.l.b16 %v2513
        %v2935 = vunpack.c.h.b16 %v2513
        %v2936 = vunpack.c.l.b16 %v2514
        %v2937 = vunpack.c.h.b16 %v2514
        %v2938 = vunpack.c.l.b16 %v2515
        %v2939 = vunpack.c.h.b16 %v2515
        %v2940 = vunpack.c.l.b16 %v2516
        %v2941 = vunpack.c.h.b16 %v2516
        %v2942 = vunpack.c.l.b16 %v2517
        %v2943 = vunpack.c.h.b16 %v2517
        %v2944 = vunpack.c.l.b16 %v2518
        %v2945 = vunpack.c.h.b16 %v2518
        %v2946 = vunpack.c.l.b16 %v2519
        %v2947 = vunpack.c.h.b16 %v2519
        %v2948 = vunpack.c.l.b16 %v2520
        %v2949 = vunpack.c.h.b16 %v2520
        %v2950 = vunpack.c.l.b16 %v2521
        %v2951 = vunpack.c.h.b16 %v2521
        %v2952 = vunpack.c.l.b16 %v2522
        %v2953 = vunpack.c.h.b16 %v2522
        %v2954 = vunpack.c.l.b16 %v2523
        %v2955 = vunpack.c.h.b16 %v2523
        %v2956 = vunpack.c.l.b16 %v2524
        %v2957 = vunpack.c.h.b16 %v2524
        %v2958 = vunpack.c.l.b16 %v2525
        %v2959 = vunpack.c.h.b16 %v2525
        %v2960 = vunpack.c.l.b16 %v2526
        %v2961 = vunpack.c.h.b16 %v2526
        %v2962 = vunpack.c.l.b16 %v2527
        %v2963 = vunpack.c.h.b16 %v2527
        %v2964 = vunpack.c.l.b16 %v2528
        %v2965 = vunpack.c.h.b16 %v2528
        %v2966 = vunpack.c.l.b16 %v2529
        %v2967 = vunpack.c.h.b16 %v2529
        %v2968 = vunpack.c.l.b16 %v2530
        %v2969 = vunpack.c.h.b16 %v2530
        %v2970 = vunpack.c.l.b16 %v2531
        %v2971 = vunpack.c.h.b16 %v2531
        %v2972 = vunpack.c.l.b16 %v2532
        %v2973 = vunpack.c.h.b16 %v2532
        %v2974 = vunpack.c.l.b16 %v2533
        %v2975 = vunpack.c.h.b16 %v2533
        %v2976 = vunpack.c.l.b16 %v2534
        %v2977 = vunpack.c.h.b16 %v2534
        %v2978 = vunpack.c.l.b16 %v2535
        %v2979 = vunpack.c.h.b16 %v2535
        %v2980 = vunpack.c.l.b16 %v2536
        %v2981 = vunpack.c.h.b16 %v2536
        %v2982 = vunpack.c.l.b16 %v2537
        %v2983 = vunpack.c.h.b16 %v2537
        %v2984 = vunpack.c.l.b16 %v2538
        %v2985 = vunpack.c.h.b16 %v2538
        %v2986 = vunpack.c.l.b16 %v2539
        %v2987 = vunpack.c.h.b16 %v2539
        %v2988 = vunpack.c.l.b16 %v2540
        %v2989 = vunpack.c.h.b16 %v2540
        %v2990 = vunpack.c.l.b16 %v2541
        %v2991 = vunpack.c.h.b16 %v2541
        %v2992 = vunpack.c.l.b16 %v2542
        %v2993 = vunpack.c.h.b16 %v2542
        %v2994 = vunpack.c.l.b16 %v2543
        %v2995 = vunpack.c.h.b16 %v2543
        %v2996 = vunpack.c.l.b16 %v2544
        %v2997 = vunpack.c.h.b16 %v2544
        %v2998 = vunpack.c.l.b16 %v2545
        %v2999 = vunpack.c.h.b16 %v2545
        %v3000 = vunpack.c.l.b16 %v2546
        %v3001 = vunpack.c.h.b16 %v2546
        %v3002 = vunpack.c.l.b16 %v2547
        %v3003 = vunpack.c.h.b16 %v2547
        %v3004 = vunpack.c.l.b16 %v2548
        %v3005 = vunpack.c.h.b16 %v2548
        %v3006 = vunpack.c.l.b16 %v2549
        %v3007 = vunpack.c.h.b16 %v2549
        %v3008 = vunpack.c.l.b16 %v2550
        %v3009 = vunpack.c.h.b16 %v2550
        %v3010 = vunpack.c.l.b16 %v2551
        %v3011 = vunpack.c.h.b16 %v2551
        %v3012 = vunpack.c.l.b16 %v2552
        %v3013 = vunpack.c.h.b16 %v2552
        %v3014 = vunpack.c.l.b16 %v2553
        %v3015 = vunpack.c.h.b16 %v2553
        %v3016 = vunpack.c.l.b16 %v2554
        %v3017 = vunpack.c.h.b16 %v2554
        %v3018 = vunpack.c.l.b16 %v2555
        %v3019 = vunpack.c.h.b16 %v2555
        %v3020 = vunpack.c.l.b16 %v2556
        %v3021 = vunpack.c.h.b16 %v2556
        %v3022 = vunpack.c.l.b16 %v2557
        %v3023 = vunpack.c.h.b16 %v2557
        %v3024 = vunpack.c.l.b16 %v2558
        %v3025 = vunpack.c.h.b16 %v2558
        %v3026 = vunpack.c.l.b16 %v2559
        %v3027 = vunpack.c.h.b16 %v2559
        %v3028 = vunpack.c.l.b16 %v2560
        %v3029 = vunpack.c.h.b16 %v2560
        %v3030 = vunpack.c.l.b16 %v2561
        %v3031 = vunpack.c.h.b16 %v2561
        %v3032 = vunpack.c.l.b16 %v2562
        %v3033 = vunpack.c.h.b16 %v2562
        %v3034 = vunpack.c.l.b16 %v2563
        %v3035 = vunpack.c.h.b16 %v2563
        %v3036 = vpack.c.b16 %v2796, %v2780
        %v3037 = vpack.c.b16 %v2797, %v2781
        %v3038 = vpack.c.b16 %v2798, %v2782
        %v3039 = vpack.c.b16 %v2799, %v2783
        %v3040 = vpack.c.b16 %v2800, %v2784
        %v3041 = vpack.c.b16 %v2801, %v2785
        %v3042 = vpack.c.b16 %v2802, %v2786
        %v3043 = vpack.c.b16 %v2803, %v2787
        %v3044 = vpack.c.b16 %v2804, %v2788
        %v3045 = vpack.c.b16 %v2805, %v2789
        %v3046 = vpack.c.b16 %v2806, %v2790
        %v3047 = vpack.c.b16 %v2807, %v2791
        %v3048 = vpack.c.b16 %v2808, %v2792
        %v3049 = vpack.c.b16 %v2809, %v2793
        %v3050 = vpack.c.b16 %v2810, %v2794
        %v3051 = vpack.c.b16 %v2811, %v2795
        %v3052 = vpack.c.b16 %v2828, %v2812
        %v3053 = vpack.c.b16 %v2829, %v2813
        %v3054 = vpack.c.b16 %v2830, %v2814
        %v3055 = vpack.c.b16 %v2831, %v2815
        %v3056 = vpack.c.b16 %v2832, %v2816
        %v3057 = vpack.c.b16 %v2833, %v2817
        %v3058 = vpack.c.b16 %v2834, %v2818
        %v3059 = vpack.c.b16 %v2835, %v2819
        %v3060 = vpack.c.b16 %v2836, %v2820
        %v3061 = vpack.c.b16 %v2837, %v2821
        %v3062 = vpack.c.b16 %v2838, %v2822
        %v3063 = vpack.c.b16 %v2839, %v2823
        %v3064 = vpack.c.b16 %v2840, %v2824
        %v3065 = vpack.c.b16 %v2841, %v2825
        %v3066 = vpack.c.b16 %v2842, %v2826
        %v3067 = vpack.c.b16 %v2843, %v2827
        %v3068 = vpack.c.b16 %v2860, %v2844
        %v3069 = vpack.c.b16 %v2861, %v2845
        %v3070 = vpack.c.b16 %v2862, %v2846
        %v3071 = vpack.c.b16 %v2863, %v2847
        %v3072 = vpack.c.b16 %v2864, %v2848
        %v3073 = vpack.c.b16 %v2865, %v2849
        %v3074 = vpack.c.b16 %v2866, %v2850
        %v3075 = vpack.c.b16 %v2867, %v2851
        %v3076 = vpack.c.b16 %v2868, %v2852
        %v3077 = vpack.c.b16 %v2869, %v2853
        %v3078 = vpack.c.b16 %v2870, %v2854
        %v3079 = vpack.c.b16 %v2871, %v2855
        %v3080 = vpack.c.b16 %v2872, %v2856
        %v3081 = vpack.c.b16 %v2873, %v2857
        %v3082 = vpack.c.b16 %v2874, %v2858
        %v3083 = vpack.c.b16 %v2875, %v2859
        %v3084 = vpack.c.b16 %v2892, %v2876
        %v3085 = vpack.c.b16 %v2893, %v2877
        %v3086 = vpack.c.b16 %v2894, %v2878
        %v3087 = vpack.c.b16 %v2895, %v2879
        %v3088 = vpack.c.b16 %v2896, %v2880
        %v3089 = vpack.c.b16 %v2897, %v2881
        %v3090 = vpack.c.b16 %v2898, %v2882
        %v3091 = vpack.c.b16 %v2899, %v2883
        %v3092 = vpack.c.b16 %v2900, %v2884
        %v3093 = vpack.c.b16 %v2901, %v2885
        %v3094 = vpack.c.b16 %v2902, %v2886
        %v3095 = vpack.c.b16 %v2903, %v2887
        %v3096 = vpack.c.b16 %v2904, %v2888
        %v3097 = vpack.c.b16 %v2905, %v2889
        %v3098 = vpack.c.b16 %v2906, %v2890
        %v3099 = vpack.c.b16 %v2907, %v2891
        %v3100 = vpack.c.b16 %v2924, %v2908
        %v3101 = vpack.c.b16 %v2925, %v2909
        %v3102 = vpack.c.b16 %v2926, %v2910
        %v3103 = vpack.c.b16 %v2927, %v2911
        %v3104 = vpack.c.b16 %v2928, %v2912
        %v3105 = vpack.c.b16 %v2929, %v2913
        %v3106 = vpack.c.b16 %v2930, %v2914
        %v3107 = vpack.c.b16 %v2931, %v2915
        %v3108 = vpack.c.b16 %v2932, %v2916
        %v3109 = vpack.c.b16 %v2933, %v2917
        %v3110 = vpack.c.b16 %v2934, %v2918
        %v3111 = vpack.c.b16 %v2935, %v2919
        %v3112 = vpack.c.b16 %v2936, %v2920
        %v3113 = vpack.c.b16 %v2937, %v2921
        %v3114 = vpack.c.b16 %v2938, %v2922
        %v3115 = vpack.c.b16 %v2939, %v2923
        %v3116 = vpack.c.b16 %v2956, %v2940
        %v3117 = vpack.c.b16 %v2957, %v2941
        %v3118 = vpack.c.b16 %v2958, %v2942
        %v3119 = vpack.c.b16 %v2959, %v2943
        %v3120 = vpack.c.b16 %v2960, %v2944
        %v3121 = vpack.c.b16 %v2961, %v2945
        %v3122 = vpack.c.b16 %v2962, %v2946
        %v3123 = vpack.c.b16 %v2963, %v2947
        %v3124 = vpack.c.b16 %v2964, %v2948
        %v3125 = vpack.c.b16 %v2965, %v2949
        %v3126 = vpack.c.b16 %v2966, %v2950
        %v3127 = vpack.c.b16 %v2967, %v2951
        %v3128 = vpack.c.b16 %v2968, %v2952
        %v3129 = vpack.c.b16 %v2969, %v2953
        %v3130 = vpack.c.b16 %v2970, %v2954
        %v3131 = vpack.c.b16 %v2971, %v2955
        %v3132 = vpack.c.b16 %v2988, %v2972
        %v3133 = vpack.c.b16 %v2989, %v2973
        %v3134 = vpack.c.b16 %v2990, %v2974
        %v3135 = vpack.c.b16 %v2991, %v2975
        %v3136 = vpack.c.b16 %v2992, %v2976
        %v3137 = vpack.c.b16 %v2993, %v2977
        %v3138 = vpack.c.b16 %v2994, %v2978
        %v3139 = vpack.c.b16 %v2995, %v2979
        %v3140 = vpack.c.b16 %v2996, %v2980
        %v3141 = vpack.c.b16 %v2997, %v2981
        %v3142 = vpack.c.b16 %v2998, %v2982
        %v3143 = vpack.c.b16 %v2999, %v2983
        %v3144 = vpack.c.b16 %v3000, %v2984
        %v3145 = vpack.c.b16 %v3001, %v2985
        %v3146 = vpack.c.b16 %v3002, %v2986
        %v3147 = vpack.c.b16 %v3003, %v2987
        %v3148 = vpack.c.b16 %v3020, %v3004
        %v3149 = vpack.c.b16 %v3021, %v3005
        %v3150 = vpack.c.b16 %v3022, %v3006
        %v3151 = vpack.c.b16 %v3023, %v3007
        %v3152 = vpack.c.b16 %v3024, %v3008
        %v3153 = vpack.c.b16 %v3025, %v3009
        %v3154 = vpack.c.b16 %v3026, %v3010
        %v3155 = vpack.c.b16 %v3027, %v3011
        %v3156 = vpack.c.b16 %v3028, %v3012
        %v3157 = vpack.c.b16 %v3029, %v3013
        %v3158 = vpack.c.b16 %v3030, %v3014
        %v3159 = vpack.c.b16 %v3031, %v3015
        %v3160 = vpack.c.b16 %v3032, %v3016
        %v3161 = vpack.c.b16 %v3033, %v3017
        %v3162 = vpack.c.b16 %v3034, %v3018
        %v3163 = vpack.c.b16 %v3035, %v3019
        %3292 = vmatprep.subr.bf16.mxu0 %v3037
        %3293 = vmatpush1.bf16.msra.mxu0 %v3036
        %3294 = vmatprep.subr.bf16.mxu0 %v3053
        %3295 = vmatpush1.bf16.msra.mxu0 %v3052
        %3296 = vmatprep.subr.bf16.mxu0 %v3069
        %3297 = vmatpush1.bf16.msra.mxu0 %v3068
        %3298 = vmatprep.subr.bf16.mxu0 %v3085
        %3299 = vmatpush1.bf16.msra.mxu0 %v3084
        %3300 = vmatprep.subr.bf16.mxu0 %v3101
        %3301 = vmatpush1.bf16.msra.mxu0 %v3100
        %3302 = vmatprep.subr.bf16.mxu0 %v3117
        %3303 = vmatpush1.bf16.msra.mxu0 %v3116
        %3304 = vmatprep.subr.bf16.mxu0 %v3133
        %3305 = vmatpush1.bf16.msra.mxu0 %v3132
        %3306 = vmatprep.subr.bf16.mxu0 %v3149
        %3307 = vmatpush1.bf16.msra.mxu0 %v3148
        %3308 = vmatprep.subr.bf16.mxu0 0
        %3309 = vmatpush1.bf16.msra.mxu0 0
        %3310 = vmatprep.subr.bf16.mxu0 0
        %3311 = vmatpush1.bf16.msra.mxu0 0
        %3312 = vmatprep.subr.bf16.mxu0 0
        %3313 = vmatpush1.bf16.msra.mxu0 0
        %3314 = vmatprep.subr.bf16.mxu0 0
        %3315 = vmatpush1.bf16.msra.mxu0 0
        %3316 = vmatprep.subr.bf16.mxu0 0
        %3317 = vmatpush1.bf16.msra.mxu0 0
        %3318 = vmatprep.subr.bf16.mxu0 0
        %3319 = vmatpush1.bf16.msra.mxu0 0
        %3320 = vmatprep.subr.bf16.mxu0 0
        %3321 = vmatpush1.bf16.msra.mxu0 0
        %3322 = vmatprep.subr.bf16.mxu0 0
        %3323 = vmatpush1.bf16.msra.mxu0 0
        %3324 = vmatprep.mubr.bf16.mxu0 0
        %3325 = vmatmul.mubr.bf16.gmra.mrb[0].mxu0 %v2564
        %v3326 = vpop.f32.mrb[0].mxu0
        %v3327 = vadd.f32 %v2575, %v3326
        %v3328 = vpop.f32.mrb[0].mxu0
        %v3329 = vadd.f32 %v2579, %v3328
        %v3330 = vpop.f32.mrb[0].mxu0
        %v3331 = vadd.f32 %v2575, %v3330
        %v3332 = vpop.f32.mrb[0].mxu0
        %v3333 = vadd.f32 %v2579, %v3332
        %3334 = vmatprep.mubr.bf16.mxu0 0
        %3335 = vmatmul.mubr.bf16.gmra.mrb[0].mxu0 %v2565
        %v3336 = vpop.f32.mrb[0].mxu0
        %v3337 = vadd.f32 %v2575, %v3336
        %v3338 = vpop.f32.mrb[0].mxu0
        %v3339 = vadd.f32 %v2579, %v3338
        %v3340 = vpop.f32.mrb[0].mxu0
        %v3341 = vadd.f32 %v2575, %v3340
        %v3342 = vpop.f32.mrb[0].mxu0
        %v3343 = vadd.f32 %v2579, %v3342
        %3344 = vmatprep.mubr.bf16.mxu0 0
        %3345 = vmatmul.mubr.bf16.gmra.mrb[0].mxu0 %v2566
        %v3346 = vpop.f32.mrb[0].mxu0
        %v3347 = vadd.f32 %v2575, %v3346
        %v3348 = vpop.f32.mrb[0].mxu0
        %v3349 = vadd.f32 %v2579, %v3348
        %v3350 = vpop.f32.mrb[0].mxu0
        %v3351 = vadd.f32 %v2575, %v3350
        %v3352 = vpop.f32.mrb[0].mxu0
        %v3353 = vadd.f32 %v2579, %v3352
        %3354 = vmatprep.mubr.bf16.mxu0 0
        %3355 = vmatmul.mubr.bf16.gmra.mrb[0].mxu0 %v2567
        %v3356 = vpop.f32.mrb[0].mxu0
        %v3357 = vadd.f32 %v2575, %v3356
        %v3358 = vpop.f32.mrb[0].mxu0
        %v3359 = vadd.f32 %v2579, %v3358
        %v3360 = vpop.f32.mrb[0].mxu0
        %v3361 = vadd.f32 %v2575, %v3360
        %v3362 = vpop.f32.mrb[0].mxu0
        %v3363 = vadd.f32 %v2579, %v3362
        %3364 = vdwg.mxu0
        %3365 = vmatprep.subr.bf16.mxu0 %v3039
        %3366 = vmatpush1.bf16.msra.mxu0 %v3038
        %3367 = vmatprep.subr.bf16.mxu0 %v3055
        %3368 = vmatpush1.bf16.msra.mxu0 %v3054
        %3369 = vmatprep.subr.bf16.mxu0 %v3071
        %3370 = vmatpush1.bf16.msra.mxu0 %v3070
        %3371 = vmatprep.subr.bf16.mxu0 %v3087
        %3372 = vmatpush1.bf16.msra.mxu0 %v3086
        %3373 = vmatprep.subr.bf16.mxu0 %v3103
        %3374 = vmatpush1.bf16.msra.mxu0 %v3102
        %3375 = vmatprep.subr.bf16.mxu0 %v3119
        %3376 = vmatpush1.bf16.msra.mxu0 %v3118
        %3377 = vmatprep.subr.bf16.mxu0 %v3135
        %3378 = vmatpush1.bf16.msra.mxu0 %v3134
        %3379 = vmatprep.subr.bf16.mxu0 %v3151
        %3380 = vmatpush1.bf16.msra.mxu0 %v3150
        %3381 = vmatprep.subr.bf16.mxu0 0
        %3382 = vmatpush1.bf16.msra.mxu0 0
        %3383 = vmatprep.subr.bf16.mxu0 0
        %3384 = vmatpush1.bf16.msra.mxu0 0
        %3385 = vmatprep.subr.bf16.mxu0 0
        %3386 = vmatpush1.bf16.msra.mxu0 0
        %3387 = vmatprep.subr.bf16.mxu0 0
        %3388 = vmatpush1.bf16.msra.mxu0 0
        %3389 = vmatprep.subr.bf16.mxu0 0
        %3390 = vmatpush1.bf16.msra.mxu0 0
        %3391 = vmatprep.subr.bf16.mxu0 0
        %3392 = vmatpush1.bf16.msra.mxu0 0
        %3393 = vmatprep.subr.bf16.mxu0 0
        %3394 = vmatpush1.bf16.msra.mxu0 0
        %3395 = vmatprep.subr.bf16.mxu0 0
        %3396 = vmatpush1.bf16.msra.mxu0 0
        %3397 = vmatprep.mubr.bf16.mxu0 0
        %3398 = vmatmul.mubr.bf16.gmra.mrb[0].mxu0 %v2564
        %v3399 = vpop.f32.mrb[0].mxu0
        %v3400 = vadd.f32 %v2583, %v3399
        %v3401 = vpop.f32.mrb[0].mxu0
        %v3402 = vadd.f32 %v2587, %v3401
        %v3403 = vpop.f32.mrb[0].mxu0
        %v3404 = vadd.f32 %v2583, %v3403
        %v3405 = vpop.f32.mrb[0].mxu0
        %v3406 = vadd.f32 %v2587, %v3405
        %3407 = vmatprep.mubr.bf16.mxu0 0
        %3408 = vmatmul.mubr.bf16.gmra.mrb[0].mxu0 %v2565
        %v3409 = vpop.f32.mrb[0].mxu0
        %v3410 = vadd.f32 %v2583, %v3409
        %v3411 = vpop.f32.mrb[0].mxu0
        %v3412 = vadd.f32 %v2587, %v3411
        %v3413 = vpop.f32.mrb[0].mxu0
        %v3414 = vadd.f32 %v2583, %v3413
        %v3415 = vpop.f32.mrb[0].mxu0
        %v3416 = vadd.f32 %v2587, %v3415
        %3417 = vmatprep.mubr.bf16.mxu0 0
        %3418 = vmatmul.mubr.bf16.gmra.mrb[0].mxu0 %v2566
        %v3419 = vpop.f32.mrb[0].mxu0
        %v3420 = vadd.f32 %v2583, %v3419
        %v3421 = vpop.f32.mrb[0].mxu0
        %v3422 = vadd.f32 %v2587, %v3421
        %v3423 = vpop.f32.mrb[0].mxu0
        %v3424 = vadd.f32 %v2583, %v3423
        %v3425 = vpop.f32.mrb[0].mxu0
        %v3426 = vadd.f32 %v2587, %v3425
        %3427 = vmatprep.mubr.bf16.mxu0 0
        %3428 = vmatmul.mubr.bf16.gmra.mrb[0].mxu0 %v2567
        %v3429 = vpop.f32.mrb[0].mxu0
        %v3430 = vadd.f32 %v2583, %v3429
        %v3431 = vpop.f32.mrb[0].mxu0
        %v3432 = vadd.f32 %v2587, %v3431
        %v3433 = vpop.f32.mrb[0].mxu0
        %v3434 = vadd.f32 %v2583, %v3433
        %v3435 = vpop.f32.mrb[0].mxu0
        %v3436 = vadd.f32 %v2587, %v3435
        %3437 = vdwg.mxu0
        %3438 = vmatprep.subr.bf16.mxu0 %v3041
        %3439 = vmatpush1.bf16.msra.mxu0 %v3040
        %3440 = vmatprep.subr.bf16.mxu0 %v3057
        %3441 = vmatpush1.bf16.msra.mxu0 %v3056
        %3442 = vmatprep.subr.bf16.mxu0 %v3073
        %3443 = vmatpush1.bf16.msra.mxu0 %v3072
        %3444 = vmatprep.subr.bf16.mxu0 %v3089
        %3445 = vmatpush1.bf16.msra.mxu0 %v3088
        %3446 = vmatprep.subr.bf16.mxu0 %v3105
        %3447 = vmatpush1.bf16.msra.mxu0 %v3104
        %3448 = vmatprep.subr.bf16.mxu0 %v3121
        %3449 = vmatpush1.bf16.msra.mxu0 %v3120
        %3450 = vmatprep.subr.bf16.mxu0 %v3137
        %3451 = vmatpush1.bf16.msra.mxu0 %v3136
        %3452 = vmatprep.subr.bf16.mxu0 %v3153
        %3453 = vmatpush1.bf16.msra.mxu0 %v3152
        %3454 = vmatprep.subr.bf16.mxu0 0
        %3455 = vmatpush1.bf16.msra.mxu0 0
        %3456 = vmatprep.subr.bf16.mxu0 0
        %3457 = vmatpush1.bf16.msra.mxu0 0
        %3458 = vmatprep.subr.bf16.mxu0 0
        %3459 = vmatpush1.bf16.msra.mxu0 0
        %3460 = vmatprep.subr.bf16.mxu0 0
        %3461 = vmatpush1.bf16.msra.mxu0 0
        %3462 = vmatprep.subr.bf16.mxu0 0
        %3463 = vmatpush1.bf16.msra.mxu0 0
        %3464 = vmatprep.subr.bf16.mxu0 0
        %3465 = vmatpush1.bf16.msra.mxu0 0
        %3466 = vmatprep.subr.bf16.mxu0 0
        %3467 = vmatpush1.bf16.msra.mxu0 0
        %3468 = vmatprep.subr.bf16.mxu0 0
        %3469 = vmatpush1.bf16.msra.mxu0 0
        %3470 = vmatprep.mubr.bf16.mxu0 0
        %3471 = vmatmul.mubr.bf16.gmra.mrb[0].mxu0 %v2564
        %v3472 = vpop.f32.mrb[0].mxu0
        %v3473 = vadd.f32 %v2591, %v3472
        %v3474 = vpop.f32.mrb[0].mxu0
        %v3475 = vadd.f32 %v2595, %v3474
        %v3476 = vpop.f32.mrb[0].mxu0
        %v3477 = vadd.f32 %v2591, %v3476
        %v3478 = vpop.f32.mrb[0].mxu0
        %v3479 = vadd.f32 %v2595, %v3478
        %3480 = vmatprep.mubr.bf16.mxu0 0
        %3481 = vmatmul.mubr.bf16.gmra.mrb[0].mxu0 %v2565
        %v3482 = vpop.f32.mrb[0].mxu0
        %v3483 = vadd.f32 %v2591, %v3482
        %v3484 = vpop.f32.mrb[0].mxu0
        %v3485 = vadd.f32 %v2595, %v3484
        %v3486 = vpop.f32.mrb[0].mxu0
        %v3487 = vadd.f32 %v2591, %v3486
        %v3488 = vpop.f32.mrb[0].mxu0
        %v3489 = vadd.f32 %v2595, %v3488
        %3490 = vmatprep.mubr.bf16.mxu0 0
        %3491 = vmatmul.mubr.bf16.gmra.mrb[0].mxu0 %v2566
        %v3492 = vpop.f32.mrb[0].mxu0
        %v3493 = vadd.f32 %v2591, %v3492
        %v3494 = vpop.f32.mrb[0].mxu0
        %v3495 = vadd.f32 %v2595, %v3494
        %v3496 = vpop.f32.mrb[0].mxu0
        %v3497 = vadd.f32 %v2591, %v3496
        %v3498 = vpop.f32.mrb[0].mxu0
        %v3499 = vadd.f32 %v2595, %v3498
        %3500 = vmatprep.mubr.bf16.mxu0 0
        %3501 = vmatmul.mubr.bf16.gmra.mrb[0].mxu0 %v2567
        %v3502 = vpop.f32.mrb[0].mxu0
        %v3503 = vadd.f32 %v2591, %v3502
        %v3504 = vpop.f32.mrb[0].mxu0
        %v3505 = vadd.f32 %v2595, %v3504
        %v3506 = vpop.f32.mrb[0].mxu0
        %v3507 = vadd.f32 %v2591, %v3506
        %v3508 = vpop.f32.mrb[0].mxu0
        %v3509 = vadd.f32 %v2595, %v3508
        %3510 = vdwg.mxu0
        %3511 = vmatprep.subr.bf16.mxu0 %v3043
        %3512 = vmatpush1.bf16.msra.mxu0 %v3042
        %3513 = vmatprep.subr.bf16.mxu0 %v3059
        %3514 = vmatpush1.bf16.msra.mxu0 %v3058
        %3515 = vmatprep.subr.bf16.mxu0 %v3075
        %3516 = vmatpush1.bf16.msra.mxu0 %v3074
        %3517 = vmatprep.subr.bf16.mxu0 %v3091
        %3518 = vmatpush1.bf16.msra.mxu0 %v3090
        %3519 = vmatprep.subr.bf16.mxu0 %v3107
        %3520 = vmatpush1.bf16.msra.mxu0 %v3106
        %3521 = vmatprep.subr.bf16.mxu0 %v3123
        %3522 = vmatpush1.bf16.msra.mxu0 %v3122
        %3523 = vmatprep.subr.bf16.mxu0 %v3139
        %3524 = vmatpush1.bf16.msra.mxu0 %v3138
        %3525 = vmatprep.subr.bf16.mxu0 %v3155
        %3526 = vmatpush1.bf16.msra.mxu0 %v3154
        %3527 = vmatprep.subr.bf16.mxu0 0
        %3528 = vmatpush1.bf16.msra.mxu0 0
        %3529 = vmatprep.subr.bf16.mxu0 0
        %3530 = vmatpush1.bf16.msra.mxu0 0
        %3531 = vmatprep.subr.bf16.mxu0 0
        %3532 = vmatpush1.bf16.msra.mxu0 0
        %3533 = vmatprep.subr.bf16.mxu0 0
        %3534 = vmatpush1.bf16.msra.mxu0 0
        %3535 = vmatprep.subr.bf16.mxu0 0
        %3536 = vmatpush1.bf16.msra.mxu0 0
        %3537 = vmatprep.subr.bf16.mxu0 0
        %3538 = vmatpush1.bf16.msra.mxu0 0
        %3539 = vmatprep.subr.bf16.mxu0 0
        %3540 = vmatpush1.bf16.msra.mxu0 0
        %3541 = vmatprep.subr.bf16.mxu0 0
        %3542 = vmatpush1.bf16.msra.mxu0 0
        %3543 = vmatprep.mubr.bf16.mxu0 0
        %3544 = vmatmul.mubr.bf16.gmra.mrb[0].mxu0 %v2564
        %v3545 = vpop.f32.mrb[0].mxu0
        %v3546 = vadd.f32 %v2599, %v3545
        %v3547 = vpop.f32.mrb[0].mxu0
        %v3548 = vadd.f32 %v2603, %v3547
        %v3549 = vpop.f32.mrb[0].mxu0
        %v3550 = vadd.f32 %v2599, %v3549
        %v3551 = vpop.f32.mrb[0].mxu0
        %v3552 = vadd.f32 %v2603, %v3551
        %3553 = vmatprep.mubr.bf16.mxu0 0
        %3554 = vmatmul.mubr.bf16.gmra.mrb[0].mxu0 %v2565
        %v3555 = vpop.f32.mrb[0].mxu0
        %v3556 = vadd.f32 %v2599, %v3555
        %v3557 = vpop.f32.mrb[0].mxu0
        %v3558 = vadd.f32 %v2603, %v3557
        %v3559 = vpop.f32.mrb[0].mxu0
        %v3560 = vadd.f32 %v2599, %v3559
        %v3561 = vpop.f32.mrb[0].mxu0
        %v3562 = vadd.f32 %v2603, %v3561
        %3563 = vmatprep.mubr.bf16.mxu0 0
        %3564 = vmatmul.mubr.bf16.gmra.mrb[0].mxu0 %v2566
        %v3565 = vpop.f32.mrb[0].mxu0
        %v3566 = vadd.f32 %v2599, %v3565
        %v3567 = vpop.f32.mrb[0].mxu0
        %v3568 = vadd.f32 %v2603, %v3567
        %v3569 = vpop.f32.mrb[0].mxu0
        %v3570 = vadd.f32 %v2599, %v3569
        %v3571 = vpop.f32.mrb[0].mxu0
        %v3572 = vadd.f32 %v2603, %v3571
        %3573 = vmatprep.mubr.bf16.mxu0 0
        %3574 = vmatmul.mubr.bf16.gmra.mrb[0].mxu0 %v2567
        %v3575 = vpop.f32.mrb[0].mxu0
        %v3576 = vadd.f32 %v2599, %v3575
        %v3577 = vpop.f32.mrb[0].mxu0
        %v3578 = vadd.f32 %v2603, %v3577
        %v3579 = vpop.f32.mrb[0].mxu0
        %v3580 = vadd.f32 %v2599, %v3579
        %v3581 = vpop.f32.mrb[0].mxu0
        %v3582 = vadd.f32 %v2603, %v3581
        %3583 = vdwg.mxu0
        %3584 = vmatprep.subr.bf16.mxu0 %v3045
        %3585 = vmatpush1.bf16.msra.mxu0 %v3044
        %3586 = vmatprep.subr.bf16.mxu0 %v3061
        %3587 = vmatpush1.bf16.msra.mxu0 %v3060
        %3588 = vmatprep.subr.bf16.mxu0 %v3077
        %3589 = vmatpush1.bf16.msra.mxu0 %v3076
        %3590 = vmatprep.subr.bf16.mxu0 %v3093
        %3591 = vmatpush1.bf16.msra.mxu0 %v3092
        %3592 = vmatprep.subr.bf16.mxu0 %v3109
        %3593 = vmatpush1.bf16.msra.mxu0 %v3108
        %3594 = vmatprep.subr.bf16.mxu0 %v3125
        %3595 = vmatpush1.bf16.msra.mxu0 %v3124
        %3596 = vmatprep.subr.bf16.mxu0 %v3141
        %3597 = vmatpush1.bf16.msra.mxu0 %v3140
        %3598 = vmatprep.subr.bf16.mxu0 %v3157
        %3599 = vmatpush1.bf16.msra.mxu0 %v3156
        %3600 = vmatprep.subr.bf16.mxu0 0
        %3601 = vmatpush1.bf16.msra.mxu0 0
        %3602 = vmatprep.subr.bf16.mxu0 0
        %3603 = vmatpush1.bf16.msra.mxu0 0
        %3604 = vmatprep.subr.bf16.mxu0 0
        %3605 = vmatpush1.bf16.msra.mxu0 0
        %3606 = vmatprep.subr.bf16.mxu0 0
        %3607 = vmatpush1.bf16.msra.mxu0 0
        %3608 = vmatprep.subr.bf16.mxu0 0
        %3609 = vmatpush1.bf16.msra.mxu0 0
        %3610 = vmatprep.subr.bf16.mxu0 0
        %3611 = vmatpush1.bf16.msra.mxu0 0
        %3612 = vmatprep.subr.bf16.mxu0 0
        %3613 = vmatpush1.bf16.msra.mxu0 0
        %3614 = vmatprep.subr.bf16.mxu0 0
        %3615 = vmatpush1.bf16.msra.mxu0 0
        %3616 = vmatprep.mubr.bf16.mxu0 0
        %3617 = vmatmul.mubr.bf16.gmra.mrb[0].mxu0 %v2564
        %v3618 = vpop.f32.mrb[0].mxu0
        %v3619 = vadd.f32 %v2607, %v3618
        %v3620 = vpop.f32.mrb[0].mxu0
        %v3621 = vadd.f32 %v2611, %v3620
        %v3622 = vpop.f32.mrb[0].mxu0
        %v3623 = vadd.f32 %v2607, %v3622
        %v3624 = vpop.f32.mrb[0].mxu0
        %v3625 = vadd.f32 %v2611, %v3624
        %3626 = vmatprep.mubr.bf16.mxu0 0
        %3627 = vmatmul.mubr.bf16.gmra.mrb[0].mxu0 %v2565
        %v3628 = vpop.f32.mrb[0].mxu0
        %v3629 = vadd.f32 %v2607, %v3628
        %v3630 = vpop.f32.mrb[0].mxu0
        %v3631 = vadd.f32 %v2611, %v3630
        %v3632 = vpop.f32.mrb[0].mxu0
        %v3633 = vadd.f32 %v2607, %v3632
        %v3634 = vpop.f32.mrb[0].mxu0
        %v3635 = vadd.f32 %v2611, %v3634
        %3636 = vmatprep.mubr.bf16.mxu0 0
        %3637 = vmatmul.mubr.bf16.gmra.mrb[0].mxu0 %v2566
        %v3638 = vpop.f32.mrb[0].mxu0
        %v3639 = vadd.f32 %v2607, %v3638
        %v3640 = vpop.f32.mrb[0].mxu0
        %v3641 = vadd.f32 %v2611, %v3640
        %v3642 = vpop.f32.mrb[0].mxu0
        %v3643 = vadd.f32 %v2607, %v3642
        %v3644 = vpop.f32.mrb[0].mxu0
        %v3645 = vadd.f32 %v2611, %v3644
        %3646 = vmatprep.mubr.bf16.mxu0 0
        %3647 = vmatmul.mubr.bf16.gmra.mrb[0].mxu0 %v2567
        %v3648 = vpop.f32.mrb[0].mxu0
        %v3649 = vadd.f32 %v2607, %v3648
        %v3650 = vpop.f32.mrb[0].mxu0
        %v3651 = vadd.f32 %v2611, %v3650
        %v3652 = vpop.f32.mrb[0].mxu0
        %v3653 = vadd.f32 %v2607, %v3652
        %v3654 = vpop.f32.mrb[0].mxu0
        %v3655 = vadd.f32 %v2611, %v3654
        %3656 = vdwg.mxu0
        %3657 = vmatprep.subr.bf16.mxu0 %v3047
        %3658 = vmatpush1.bf16.msra.mxu0 %v3046
        %3659 = vmatprep.subr.bf16.mxu0 %v3063
        %3660 = vmatpush1.bf16.msra.mxu0 %v3062
        %3661 = vmatprep.subr.bf16.mxu0 %v3079
        %3662 = vmatpush1.bf16.msra.mxu0 %v3078
        %3663 = vmatprep.subr.bf16.mxu0 %v3095
        %3664 = vmatpush1.bf16.msra.mxu0 %v3094
        %3665 = vmatprep.subr.bf16.mxu0 %v3111
        %3666 = vmatpush1.bf16.msra.mxu0 %v3110
        %3667 = vmatprep.subr.bf16.mxu0 %v3127
        %3668 = vmatpush1.bf16.msra.mxu0 %v3126
        %3669 = vmatprep.subr.bf16.mxu0 %v3143
        %3670 = vmatpush1.bf16.msra.mxu0 %v3142
        %3671 = vmatprep.subr.bf16.mxu0 %v3159
        %3672 = vmatpush1.bf16.msra.mxu0 %v3158
        %3673 = vmatprep.subr.bf16.mxu0 0
        %3674 = vmatpush1.bf16.msra.mxu0 0
        %3675 = vmatprep.subr.bf16.mxu0 0
        %3676 = vmatpush1.bf16.msra.mxu0 0
        %3677 = vmatprep.subr.bf16.mxu0 0
        %3678 = vmatpush1.bf16.msra.mxu0 0
        %3679 = vmatprep.subr.bf16.mxu0 0
        %3680 = vmatpush1.bf16.msra.mxu0 0
        %3681 = vmatprep.subr.bf16.mxu0 0
        %3682 = vmatpush1.bf16.msra.mxu0 0
        %3683 = vmatprep.subr.bf16.mxu0 0
        %3684 = vmatpush1.bf16.msra.mxu0 0
        %3685 = vmatprep.subr.bf16.mxu0 0
        %3686 = vmatpush1.bf16.msra.mxu0 0
        %3687 = vmatprep.subr.bf16.mxu0 0
        %3688 = vmatpush1.bf16.msra.mxu0 0
        %3689 = vmatprep.mubr.bf16.mxu0 0
        %3690 = vmatmul.mubr.bf16.gmra.mrb[0].mxu0 %v2564
        %v3691 = vpop.f32.mrb[0].mxu0
        %v3692 = vadd.f32 %v2615, %v3691
        %v3693 = vpop.f32.mrb[0].mxu0
        %v3694 = vadd.f32 %v2619, %v3693
        %v3695 = vpop.f32.mrb[0].mxu0
        %v3696 = vadd.f32 %v2615, %v3695
        %v3697 = vpop.f32.mrb[0].mxu0
        %v3698 = vadd.f32 %v2619, %v3697
        %3699 = vmatprep.mubr.bf16.mxu0 0
        %3700 = vmatmul.mubr.bf16.gmra.mrb[0].mxu0 %v2565
        %v3701 = vpop.f32.mrb[0].mxu0
        %v3702 = vadd.f32 %v2615, %v3701
        %v3703 = vpop.f32.mrb[0].mxu0
        %v3704 = vadd.f32 %v2619, %v3703
        %v3705 = vpop.f32.mrb[0].mxu0
        %v3706 = vadd.f32 %v2615, %v3705
        %v3707 = vpop.f32.mrb[0].mxu0
        %v3708 = vadd.f32 %v2619, %v3707
        %3709 = vmatprep.mubr.bf16.mxu0 0
        %3710 = vmatmul.mubr.bf16.gmra.mrb[0].mxu0 %v2566
        %v3711 = vpop.f32.mrb[0].mxu0
        %v3712 = vadd.f32 %v2615, %v3711
        %v3713 = vpop.f32.mrb[0].mxu0
        %v3714 = vadd.f32 %v2619, %v3713
        %v3715 = vpop.f32.mrb[0].mxu0
        %v3716 = vadd.f32 %v2615, %v3715
        %v3717 = vpop.f32.mrb[0].mxu0
        %v3718 = vadd.f32 %v2619, %v3717
        %3719 = vmatprep.mubr.bf16.mxu0 0
        %3720 = vmatmul.mubr.bf16.gmra.mrb[0].mxu0 %v2567
        %v3721 = vpop.f32.mrb[0].mxu0
        %v3722 = vadd.f32 %v2615, %v3721
        %v3723 = vpop.f32.mrb[0].mxu0
        %v3724 = vadd.f32 %v2619, %v3723
        %v3725 = vpop.f32.mrb[0].mxu0
        %v3726 = vadd.f32 %v2615, %v3725
        %v3727 = vpop.f32.mrb[0].mxu0
        %v3728 = vadd.f32 %v2619, %v3727
        %3729 = vdwg.mxu0
        %3730 = vmatprep.subr.bf16.mxu0 %v3049
        %3731 = vmatpush1.bf16.msra.mxu0 %v3048
        %3732 = vmatprep.subr.bf16.mxu0 %v3065
        %3733 = vmatpush1.bf16.msra.mxu0 %v3064
        %3734 = vmatprep.subr.bf16.mxu0 %v3081
        %3735 = vmatpush1.bf16.msra.mxu0 %v3080
        %3736 = vmatprep.subr.bf16.mxu0 %v3097
        %3737 = vmatpush1.bf16.msra.mxu0 %v3096
        %3738 = vmatprep.subr.bf16.mxu0 %v3113
        %3739 = vmatpush1.bf16.msra.mxu0 %v3112
        %3740 = vmatprep.subr.bf16.mxu0 %v3129
        %3741 = vmatpush1.bf16.msra.mxu0 %v3128
        %3742 = vmatprep.subr.bf16.mxu0 %v3145
        %3743 = vmatpush1.bf16.msra.mxu0 %v3144
        %3744 = vmatprep.subr.bf16.mxu0 %v3161
        %3745 = vmatpush1.bf16.msra.mxu0 %v3160
        %3746 = vmatprep.subr.bf16.mxu0 0
        %3747 = vmatpush1.bf16.msra.mxu0 0
        %3748 = vmatprep.subr.bf16.mxu0 0
        %3749 = vmatpush1.bf16.msra.mxu0 0
        %3750 = vmatprep.subr.bf16.mxu0 0
        %3751 = vmatpush1.bf16.msra.mxu0 0
        %3752 = vmatprep.subr.bf16.mxu0 0
        %3753 = vmatpush1.bf16.msra.mxu0 0
        %3754 = vmatprep.subr.bf16.mxu0 0
        %3755 = vmatpush1.bf16.msra.mxu0 0
        %3756 = vmatprep.subr.bf16.mxu0 0
        %3757 = vmatpush1.bf16.msra.mxu0 0
        %3758 = vmatprep.subr.bf16.mxu0 0
        %3759 = vmatpush1.bf16.msra.mxu0 0
        %3760 = vmatprep.subr.bf16.mxu0 0
        %3761 = vmatpush1.bf16.msra.mxu0 0
        %3762 = vmatprep.mubr.bf16.mxu0 0
        %3763 = vmatmul.mubr.bf16.gmra.mrb[0].mxu0 %v2564
        %v3764 = vpop.f32.mrb[0].mxu0
        %v3765 = vadd.f32 %v2623, %v3764
        %v3766 = vpop.f32.mrb[0].mxu0
        %v3767 = vadd.f32 %v2627, %v3766
        %v3768 = vpop.f32.mrb[0].mxu0
        %v3769 = vadd.f32 %v2623, %v3768
        %v3770 = vpop.f32.mrb[0].mxu0
        %v3771 = vadd.f32 %v2627, %v3770
        %3772 = vmatprep.mubr.bf16.mxu0 0
        %3773 = vmatmul.mubr.bf16.gmra.mrb[0].mxu0 %v2565
        %v3774 = vpop.f32.mrb[0].mxu0
        %v3775 = vadd.f32 %v2623, %v3774
        %v3776 = vpop.f32.mrb[0].mxu0
        %v3777 = vadd.f32 %v2627, %v3776
        %v3778 = vpop.f32.mrb[0].mxu0
        %v3779 = vadd.f32 %v2623, %v3778
        %v3780 = vpop.f32.mrb[0].mxu0
        %v3781 = vadd.f32 %v2627, %v3780
        %3782 = vmatprep.mubr.bf16.mxu0 0
        %3783 = vmatmul.mubr.bf16.gmra.mrb[0].mxu0 %v2566
        %v3784 = vpop.f32.mrb[0].mxu0
        %v3785 = vadd.f32 %v2623, %v3784
        %v3786 = vpop.f32.mrb[0].mxu0
        %v3787 = vadd.f32 %v2627, %v3786
        %v3788 = vpop.f32.mrb[0].mxu0
        %v3789 = vadd.f32 %v2623, %v3788
        %v3790 = vpop.f32.mrb[0].mxu0
        %v3791 = vadd.f32 %v2627, %v3790
        %3792 = vmatprep.mubr.bf16.mxu0 0
        %3793 = vmatmul.mubr.bf16.gmra.mrb[0].mxu0 %v2567
        %v3794 = vpop.f32.mrb[0].mxu0
        %v3795 = vadd.f32 %v2623, %v3794
        %v3796 = vpop.f32.mrb[0].mxu0
        %v3797 = vadd.f32 %v2627, %v3796
        %v3798 = vpop.f32.mrb[0].mxu0
        %v3799 = vadd.f32 %v2623, %v3798
        %v3800 = vpop.f32.mrb[0].mxu0
        %v3801 = vadd.f32 %v2627, %v3800
        %3802 = vdwg.mxu0
        %3803 = vmatprep.subr.bf16.mxu0 %v3051
        %3804 = vmatpush1.bf16.msra.mxu0 %v3050
        %3805 = vmatprep.subr.bf16.mxu0 %v3067
        %3806 = vmatpush1.bf16.msra.mxu0 %v3066
        %3807 = vmatprep.subr.bf16.mxu0 %v3083
        %3808 = vmatpush1.bf16.msra.mxu0 %v3082
        %3809 = vmatprep.subr.bf16.mxu0 %v3099
        %3810 = vmatpush1.bf16.msra.mxu0 %v3098
        %3811 = vmatprep.subr.bf16.mxu0 %v3115
        %3812 = vmatpush1.bf16.msra.mxu0 %v3114
        %3813 = vmatprep.subr.bf16.mxu0 %v3131
        %3814 = vmatpush1.bf16.msra.mxu0 %v3130
        %3815 = vmatprep.subr.bf16.mxu0 %v3147
        %3816 = vmatpush1.bf16.msra.mxu0 %v3146
        %3817 = vmatprep.subr.bf16.mxu0 %v3163
        %3818 = vmatpush1.bf16.msra.mxu0 %v3162
        %3819 = vmatprep.subr.bf16.mxu0 0
        %3820 = vmatpush1.bf16.msra.mxu0 0
        %3821 = vmatprep.subr.bf16.mxu0 0
        %3822 = vmatpush1.bf16.msra.mxu0 0
        %3823 = vmatprep.subr.bf16.mxu0 0
        %3824 = vmatpush1.bf16.msra.mxu0 0
        %3825 = vmatprep.subr.bf16.mxu0 0
        %3826 = vmatpush1.bf16.msra.mxu0 0
        %3827 = vmatprep.subr.bf16.mxu0 0
        %3828 = vmatpush1.bf16.msra.mxu0 0
        %3829 = vmatprep.subr.bf16.mxu0 0
        %3830 = vmatpush1.bf16.msra.mxu0 0
        %3831 = vmatprep.subr.bf16.mxu0 0
        %3832 = vmatpush1.bf16.msra.mxu0 0
        %3833 = vmatprep.subr.bf16.mxu0 0
        %3834 = vmatpush1.bf16.msra.mxu0 0
        %3835 = vmatprep.mubr.bf16.mxu0 0
        %3836 = vmatmul.mubr.bf16.gmra.mrb[0].mxu0 %v2564
        %v3837 = vpop.f32.mrb[0].mxu0
        %v3838 = vadd.f32 %v2631, %v3837
        %v3839 = vpop.f32.mrb[0].mxu0
        %v3840 = vadd.f32 %v2635, %v3839
        %v3841 = vpop.f32.mrb[0].mxu0
        %v3842 = vadd.f32 %v2631, %v3841
        %v3843 = vpop.f32.mrb[0].mxu0
        %v3844 = vadd.f32 %v2635, %v3843
        %3845 = vmatprep.mubr.bf16.mxu0 0
        %3846 = vmatmul.mubr.bf16.gmra.mrb[0].mxu0 %v2565
        %v3847 = vpop.f32.mrb[0].mxu0
        %v3848 = vadd.f32 %v2631, %v3847
        %v3849 = vpop.f32.mrb[0].mxu0
        %v3850 = vadd.f32 %v2635, %v3849
        %v3851 = vpop.f32.mrb[0].mxu0
        %v3852 = vadd.f32 %v2631, %v3851
        %v3853 = vpop.f32.mrb[0].mxu0
        %v3854 = vadd.f32 %v2635, %v3853
        %3855 = vmatprep.mubr.bf16.mxu0 0
        %3856 = vmatmul.mubr.bf16.gmra.mrb[0].mxu0 %v2566
        %v3857 = vpop.f32.mrb[0].mxu0
        %v3858 = vadd.f32 %v2631, %v3857
        %v3859 = vpop.f32.mrb[0].mxu0
        %v3860 = vadd.f32 %v2635, %v3859
        %v3861 = vpop.f32.mrb[0].mxu0
        %v3862 = vadd.f32 %v2631, %v3861
        %v3863 = vpop.f32.mrb[0].mxu0
        %v3864 = vadd.f32 %v2635, %v3863
        %3865 = vmatprep.mubr.bf16.mxu0 0
        %3866 = vmatmul.mubr.bf16.gmra.mrb[0].mxu0 %v2567
        %v3867 = vpop.f32.mrb[0].mxu0
        %v3868 = vadd.f32 %v2631, %v3867
        %v3869 = vpop.f32.mrb[0].mxu0
        %v3870 = vadd.f32 %v2635, %v3869
        %v3871 = vpop.f32.mrb[0].mxu0
        %v3872 = vadd.f32 %v2631, %v3871
        %v3873 = vpop.f32.mrb[0].mxu0
        %v3874 = vadd.f32 %v2635, %v3873
        %3875 = vdwg.mxu0
        %v3876 = vmax.f32 %v3327, 0.0
        %v3877 = vmax.f32 %v3329, 0.0
        %v3878 = vmax.f32 %v3400, 0.0
        %v3879 = vmax.f32 %v3402, 0.0
        %v3880 = vmax.f32 %v3473, 0.0
        %v3881 = vmax.f32 %v3475, 0.0
        %v3882 = vmax.f32 %v3546, 0.0
        %v3883 = vmax.f32 %v3548, 0.0
        %v3884 = vmax.f32 %v3619, 0.0
        %v3885 = vmax.f32 %v3621, 0.0
        %v3886 = vmax.f32 %v3692, 0.0
        %v3887 = vmax.f32 %v3694, 0.0
        %v3888 = vmax.f32 %v3765, 0.0
        %v3889 = vmax.f32 %v3767, 0.0
        %v3890 = vmax.f32 %v3838, 0.0
        %v3891 = vmax.f32 %v3840, 0.0
        %v3892 = vmax.f32 %v3331, 0.0
        %v3893 = vmax.f32 %v3333, 0.0
        %v3894 = vmax.f32 %v3404, 0.0
        %v3895 = vmax.f32 %v3406, 0.0
        %v3896 = vmax.f32 %v3477, 0.0
        %v3897 = vmax.f32 %v3479, 0.0
        %v3898 = vmax.f32 %v3550, 0.0
        %v3899 = vmax.f32 %v3552, 0.0
        %v3900 = vmax.f32 %v3623, 0.0
        %v3901 = vmax.f32 %v3625, 0.0
        %v3902 = vmax.f32 %v3696, 0.0
        %v3903 = vmax.f32 %v3698, 0.0
        %v3904 = vmax.f32 %v3769, 0.0
        %v3905 = vmax.f32 %v3771, 0.0
        %v3906 = vmax.f32 %v3842, 0.0
        %v3907 = vmax.f32 %v3844, 0.0
        %v3908 = vmax.f32 %v3337, 0.0
        %v3909 = vmax.f32 %v3339, 0.0
        %v3910 = vmax.f32 %v3410, 0.0
        %v3911 = vmax.f32 %v3412, 0.0
        %v3912 = vmax.f32 %v3483, 0.0
        %v3913 = vmax.f32 %v3485, 0.0
        %v3914 = vmax.f32 %v3556, 0.0
        %v3915 = vmax.f32 %v3558, 0.0
        %v3916 = vmax.f32 %v3629, 0.0
        %v3917 = vmax.f32 %v3631, 0.0
        %v3918 = vmax.f32 %v3702, 0.0
        %v3919 = vmax.f32 %v3704, 0.0
        %v3920 = vmax.f32 %v3775, 0.0
        %v3921 = vmax.f32 %v3777, 0.0
        %v3922 = vmax.f32 %v3848, 0.0
        %v3923 = vmax.f32 %v3850, 0.0
        %v3924 = vmax.f32 %v3341, 0.0
        %v3925 = vmax.f32 %v3343, 0.0
        %v3926 = vmax.f32 %v3414, 0.0
        %v3927 = vmax.f32 %v3416, 0.0
        %v3928 = vmax.f32 %v3487, 0.0
        %v3929 = vmax.f32 %v3489, 0.0
        %v3930 = vmax.f32 %v3560, 0.0
        %v3931 = vmax.f32 %v3562, 0.0
        %v3932 = vmax.f32 %v3633, 0.0
        %v3933 = vmax.f32 %v3635, 0.0
        %v3934 = vmax.f32 %v3706, 0.0
        %v3935 = vmax.f32 %v3708, 0.0
        %v3936 = vmax.f32 %v3779, 0.0
        %v3937 = vmax.f32 %v3781, 0.0
        %v3938 = vmax.f32 %v3852, 0.0
        %v3939 = vmax.f32 %v3854, 0.0
        %v3940 = vmax.f32 %v3347, 0.0
        %v3941 = vmax.f32 %v3349, 0.0
        %v3942 = vmax.f32 %v3420, 0.0
        %v3943 = vmax.f32 %v3422, 0.0
        %v3944 = vmax.f32 %v3493, 0.0
        %v3945 = vmax.f32 %v3495, 0.0
        %v3946 = vmax.f32 %v3566, 0.0
        %v3947 = vmax.f32 %v3568, 0.0
        %v3948 = vmax.f32 %v3639, 0.0
        %v3949 = vmax.f32 %v3641, 0.0
        %v3950 = vmax.f32 %v3712, 0.0
        %v3951 = vmax.f32 %v3714, 0.0
        %v3952 = vmax.f32 %v3785, 0.0
        %v3953 = vmax.f32 %v3787, 0.0
        %v3954 = vmax.f32 %v3858, 0.0
        %v3955 = vmax.f32 %v3860, 0.0
        %v3956 = vmax.f32 %v3351, 0.0
        %v3957 = vmax.f32 %v3353, 0.0
        %v3958 = vmax.f32 %v3424, 0.0
        %v3959 = vmax.f32 %v3426, 0.0
        %v3960 = vmax.f32 %v3497, 0.0
        %v3961 = vmax.f32 %v3499, 0.0
        %v3962 = vmax.f32 %v3570, 0.0
        %v3963 = vmax.f32 %v3572, 0.0
        %v3964 = vmax.f32 %v3643, 0.0
        %v3965 = vmax.f32 %v3645, 0.0
        %v3966 = vmax.f32 %v3716, 0.0
        %v3967 = vmax.f32 %v3718, 0.0
        %v3968 = vmax.f32 %v3789, 0.0
        %v3969 = vmax.f32 %v3791, 0.0
        %v3970 = vmax.f32 %v3862, 0.0
        %v3971 = vmax.f32 %v3864, 0.0
        %v3972 = vmax.f32 %v3357, 0.0
        %v3973 = vmax.f32 %v3359, 0.0
        %v3974 = vmax.f32 %v3430, 0.0
        %v3975 = vmax.f32 %v3432, 0.0
        %v3976 = vmax.f32 %v3503, 0.0
        %v3977 = vmax.f32 %v3505, 0.0
        %v3978 = vmax.f32 %v3576, 0.0
        %v3979 = vmax.f32 %v3578, 0.0
        %v3980 = vmax.f32 %v3649, 0.0
        %v3981 = vmax.f32 %v3651, 0.0
        %v3982 = vmax.f32 %v3722, 0.0
        %v3983 = vmax.f32 %v3724, 0.0
        %v3984 = vmax.f32 %v3795, 0.0
        %v3985 = vmax.f32 %v3797, 0.0
        %v3986 = vmax.f32 %v3868, 0.0
        %v3987 = vmax.f32 %v3870, 0.0
        %v3988 = vmax.f32 %v3361, 0.0
        %v3989 = vmax.f32 %v3363, 0.0
        %v3990 = vmax.f32 %v3434, 0.0
        %v3991 = vmax.f32 %v3436, 0.0
        %v3992 = vmax.f32 %v3507, 0.0
        %v3993 = vmax.f32 %v3509, 0.0
        %v3994 = vmax.f32 %v3580, 0.0
        %v3995 = vmax.f32 %v3582, 0.0
        %v3996 = vmax.f32 %v3653, 0.0
        %v3997 = vmax.f32 %v3655, 0.0
        %v3998 = vmax.f32 %v3726, 0.0
        %v3999 = vmax.f32 %v3728, 0.0
        %v4000 = vmax.f32 %v3799, 0.0
        %v4001 = vmax.f32 %v3801, 0.0
        %v4002 = vmax.f32 %v3872, 0.0
        %v4003 = vmax.f32 %v3874, 0.0
        %v4004 = vld [vmem:[#allocation5] sm:$0xf]
        %v4005 = vld [vmem:[#allocation5 + $0x4] sm:$0xf]
        %v4006 = vld [vmem:[#allocation5 + $0x8] sm:$0xf]
        %v4007 = vld [vmem:[#allocation5 + $0xc] sm:$0xf]
        %v4008 = vld [vmem:[#allocation5 + $0x10] sm:$0xf]
        %v4009 = vld [vmem:[#allocation5 + $0x14] sm:$0xf]
        %v4010 = vld [vmem:[#allocation5 + $0x18] sm:$0xf]
        %v4011 = vld [vmem:[#allocation5 + $0x1c] sm:$0xf]
        %v4012 = vld [vmem:[#allocation5 + $0x20] sm:$0xf]
        %v4013 = vld [vmem:[#allocation5 + $0x24] sm:$0xf]
        %v4014 = vld [vmem:[#allocation5 + $0x28] sm:$0xf]
        %v4015 = vld [vmem:[#allocation5 + $0x2c] sm:$0xf]
        %v4016 = vld [vmem:[#allocation5 + $0x30] sm:$0xf]
        %v4017 = vld [vmem:[#allocation5 + $0x34] sm:$0xf]
        %v4018 = vld [vmem:[#allocation5 + $0x38] sm:$0xf]
        %v4019 = vld [vmem:[#allocation5 + $0x3c] sm:$0xf]
        %v4020 = vld [vmem:[#allocation5 + $0x40] sm:$0xf]
        %v4021 = vld [vmem:[#allocation5 + $0x44] sm:$0xf]
        %v4022 = vld [vmem:[#allocation5 + $0x48] sm:$0xf]
        %v4023 = vld [vmem:[#allocation5 + $0x4c] sm:$0xf]
        %v4024 = vld [vmem:[#allocation5 + $0x50] sm:$0xf]
        %v4025 = vld [vmem:[#allocation5 + $0x54] sm:$0xf]
        %v4026 = vld [vmem:[#allocation5 + $0x58] sm:$0xf]
        %v4027 = vld [vmem:[#allocation5 + $0x5c] sm:$0xf]
        %v4028 = vld [vmem:[#allocation5 + $0x60] sm:$0xf]
        %v4029 = vld [vmem:[#allocation5 + $0x64] sm:$0xf]
        %v4030 = vld [vmem:[#allocation5 + $0x68] sm:$0xf]
        %v4031 = vld [vmem:[#allocation5 + $0x6c] sm:$0xf]
        %v4032 = vld [vmem:[#allocation5 + $0x70] sm:$0xf]
        %v4033 = vld [vmem:[#allocation5 + $0x74] sm:$0xf]
        %v4034 = vld [vmem:[#allocation5 + $0x78] sm:$0xf]
        %v4035 = vld [vmem:[#allocation5 + $0x7c] sm:$0xf]
        %v4036 = vld [vmem:[#allocation5 + $0x80] sm:$0xf]
        %v4037 = vld [vmem:[#allocation5 + $0x84] sm:$0xf]
        %v4038 = vld [vmem:[#allocation5 + $0x88] sm:$0xf]
        %v4039 = vld [vmem:[#allocation5 + $0x8c] sm:$0xf]
        %v4040 = vld [vmem:[#allocation5 + $0x90] sm:$0xf]
        %v4041 = vld [vmem:[#allocation5 + $0x94] sm:$0xf]
        %v4042 = vld [vmem:[#allocation5 + $0x98] sm:$0xf]
        %v4043 = vld [vmem:[#allocation5 + $0x9c] sm:$0xf]
        %v4044 = vld [vmem:[#allocation5 + $0xa0] sm:$0xf]
        %v4045 = vld [vmem:[#allocation5 + $0xa4] sm:$0xf]
        %v4046 = vld [vmem:[#allocation5 + $0xa8] sm:$0xf]
        %v4047 = vld [vmem:[#allocation5 + $0xac] sm:$0xf]
        %v4048 = vld [vmem:[#allocation5 + $0xb0] sm:$0xf]
        %v4049 = vld [vmem:[#allocation5 + $0xb4] sm:$0xf]
        %v4050 = vld [vmem:[#allocation5 + $0xb8] sm:$0xf]
        %v4051 = vld [vmem:[#allocation5 + $0xbc] sm:$0xf]
        %v4052 = vld [vmem:[#allocation5 + $0xc0] sm:$0xf]
        %v4053 = vld [vmem:[#allocation5 + $0xc4] sm:$0xf]
        %v4054 = vld [vmem:[#allocation5 + $0xc8] sm:$0xf]
        %v4055 = vld [vmem:[#allocation5 + $0xcc] sm:$0xf]
        %v4056 = vld [vmem:[#allocation5 + $0xd0] sm:$0xf]
        %v4057 = vld [vmem:[#allocation5 + $0xd4] sm:$0xf]
        %v4058 = vld [vmem:[#allocation5 + $0xd8] sm:$0xf]
        %v4059 = vld [vmem:[#allocation5 + $0xdc] sm:$0xf]
        %v4060 = vld [vmem:[#allocation5 + $0xe0] sm:$0xf]
        %v4061 = vld [vmem:[#allocation5 + $0xe4] sm:$0xf]
        %v4062 = vld [vmem:[#allocation5 + $0xe8] sm:$0xf]
        %v4063 = vld [vmem:[#allocation5 + $0xec] sm:$0xf]
        %v4064 = vld [vmem:[#allocation5 + $0xf0] sm:$0xf]
        %v4065 = vld [vmem:[#allocation5 + $0xf4] sm:$0xf]
        %v4066 = vld [vmem:[#allocation5 + $0xf8] sm:$0xf]
        %v4067 = vld [vmem:[#allocation5 + $0xfc] sm:$0xf]
        %v4068 = vld [vmem:[#allocation5 + $0x100] sm:$0xf]
        %v4069 = vld [vmem:[#allocation5 + $0x104] sm:$0xf]
        %v4070 = vld [vmem:[#allocation5 + $0x108] sm:$0xf]
        %v4071 = vld [vmem:[#allocation5 + $0x10c] sm:$0xf]
        %v4072 = vld [vmem:[#allocation5 + $0x110] sm:$0xf]
        %v4073 = vld [vmem:[#allocation5 + $0x114] sm:$0xf]
        %v4074 = vld [vmem:[#allocation5 + $0x118] sm:$0xf]
        %v4075 = vld [vmem:[#allocation5 + $0x11c] sm:$0xf]
        %v4076 = vld [vmem:[#allocation5 + $0x120] sm:$0xf]
        %v4077 = vld [vmem:[#allocation5 + $0x124] sm:$0xf]
        %v4078 = vld [vmem:[#allocation5 + $0x128] sm:$0xf]
        %v4079 = vld [vmem:[#allocation5 + $0x12c] sm:$0xf]
        %v4080 = vld [vmem:[#allocation5 + $0x130] sm:$0xf]
        %v4081 = vld [vmem:[#allocation5 + $0x134] sm:$0xf]
        %v4082 = vld [vmem:[#allocation5 + $0x138] sm:$0xf]
        %v4083 = vld [vmem:[#allocation5 + $0x13c] sm:$0xf]
        %v4084 = vld [vmem:[#allocation5 + $0x140] sm:$0xf]
        %v4085 = vld [vmem:[#allocation5 + $0x144] sm:$0xf]
        %v4086 = vld [vmem:[#allocation5 + $0x148] sm:$0xf]
        %v4087 = vld [vmem:[#allocation5 + $0x14c] sm:$0xf]
        %v4088 = vld [vmem:[#allocation5 + $0x150] sm:$0xf]
        %v4089 = vld [vmem:[#allocation5 + $0x154] sm:$0xf]
        %v4090 = vld [vmem:[#allocation5 + $0x158] sm:$0xf]
        %v4091 = vld [vmem:[#allocation5 + $0x15c] sm:$0xf]
        %v4092 = vld [vmem:[#allocation5 + $0x160] sm:$0xf]
        %v4093 = vld [vmem:[#allocation5 + $0x164] sm:$0xf]
        %v4094 = vld [vmem:[#allocation5 + $0x168] sm:$0xf]
        %v4095 = vld [vmem:[#allocation5 + $0x16c] sm:$0xf]
        %v4096 = vld [vmem:[#allocation5 + $0x170] sm:$0xf]
        %v4097 = vld [vmem:[#allocation5 + $0x174] sm:$0xf]
        %v4098 = vld [vmem:[#allocation5 + $0x178] sm:$0xf]
        %v4099 = vld [vmem:[#allocation5 + $0x17c] sm:$0xf]
        %v4100 = vld [vmem:[#allocation5 + $0x180] sm:$0xf]
        %v4101 = vld [vmem:[#allocation5 + $0x184] sm:$0xf]
        %v4102 = vld [vmem:[#allocation5 + $0x188] sm:$0xf]
        %v4103 = vld [vmem:[#allocation5 + $0x18c] sm:$0xf]
        %v4104 = vld [vmem:[#allocation5 + $0x190] sm:$0xf]
        %v4105 = vld [vmem:[#allocation5 + $0x194] sm:$0xf]
        %v4106 = vld [vmem:[#allocation5 + $0x198] sm:$0xf]
        %v4107 = vld [vmem:[#allocation5 + $0x19c] sm:$0xf]
        %v4108 = vld [vmem:[#allocation5 + $0x1a0] sm:$0xf]
        %v4109 = vld [vmem:[#allocation5 + $0x1a4] sm:$0xf]
        %v4110 = vld [vmem:[#allocation5 + $0x1a8] sm:$0xf]
        %v4111 = vld [vmem:[#allocation5 + $0x1ac] sm:$0xf]
        %v4112 = vld [vmem:[#allocation5 + $0x1b0] sm:$0xf]
        %v4113 = vld [vmem:[#allocation5 + $0x1b4] sm:$0xf]
        %v4114 = vld [vmem:[#allocation5 + $0x1b8] sm:$0xf]
        %v4115 = vld [vmem:[#allocation5 + $0x1bc] sm:$0xf]
        %v4116 = vld [vmem:[#allocation5 + $0x1c0] sm:$0xf]
        %v4117 = vld [vmem:[#allocation5 + $0x1c4] sm:$0xf]
        %v4118 = vld [vmem:[#allocation5 + $0x1c8] sm:$0xf]
        %v4119 = vld [vmem:[#allocation5 + $0x1cc] sm:$0xf]
        %v4120 = vld [vmem:[#allocation5 + $0x1d0] sm:$0xf]
        %v4121 = vld [vmem:[#allocation5 + $0x1d4] sm:$0xf]
        %v4122 = vld [vmem:[#allocation5 + $0x1d8] sm:$0xf]
        %v4123 = vld [vmem:[#allocation5 + $0x1dc] sm:$0xf]
        %v4124 = vld [vmem:[#allocation5 + $0x1e0] sm:$0xf]
        %v4125 = vld [vmem:[#allocation5 + $0x1e4] sm:$0xf]
        %v4126 = vld [vmem:[#allocation5 + $0x1e8] sm:$0xf]
        %v4127 = vld [vmem:[#allocation5 + $0x1ec] sm:$0xf]
        %v4128 = vld [vmem:[#allocation5 + $0x1f0] sm:$0xf]
        %v4129 = vld [vmem:[#allocation5 + $0x1f4] sm:$0xf]
        %v4130 = vld [vmem:[#allocation5 + $0x1f8] sm:$0xf]
        %v4131 = vld [vmem:[#allocation5 + $0x1fc] sm:$0xf]
        %v4132 = vld [vmem:[#allocation5 + $0x200] sm:$0xf]
        %v4133 = vld [vmem:[#allocation5 + $0x204] sm:$0xf]
        %v4134 = vld [vmem:[#allocation5 + $0x208] sm:$0xf]
        %v4135 = vld [vmem:[#allocation5 + $0x20c] sm:$0xf]
        %v4136 = vld [vmem:[#allocation5 + $0x210] sm:$0xf]
        %v4137 = vld [vmem:[#allocation5 + $0x214] sm:$0xf]
        %v4138 = vld [vmem:[#allocation5 + $0x218] sm:$0xf]
        %v4139 = vld [vmem:[#allocation5 + $0x21c] sm:$0xf]
        %v4140 = vld [vmem:[#allocation5 + $0x220] sm:$0xf]
        %v4141 = vld [vmem:[#allocation5 + $0x224] sm:$0xf]
        %v4142 = vld [vmem:[#allocation5 + $0x228] sm:$0xf]
        %v4143 = vld [vmem:[#allocation5 + $0x22c] sm:$0xf]
        %v4144 = vld [vmem:[#allocation5 + $0x230] sm:$0xf]
        %v4145 = vld [vmem:[#allocation5 + $0x234] sm:$0xf]
        %v4146 = vld [vmem:[#allocation5 + $0x238] sm:$0xf]
        %v4147 = vld [vmem:[#allocation5 + $0x23c] sm:$0xf]
        %v4148 = vld [vmem:[#allocation5 + $0x240] sm:$0xf]
        %v4149 = vld [vmem:[#allocation5 + $0x244] sm:$0xf]
        %v4150 = vld [vmem:[#allocation5 + $0x248] sm:$0xf]
        %v4151 = vld [vmem:[#allocation5 + $0x24c] sm:$0xf]
        %v4152 = vld [vmem:[#allocation5 + $0x250] sm:$0xf]
        %v4153 = vld [vmem:[#allocation5 + $0x254] sm:$0xf]
        %v4154 = vld [vmem:[#allocation5 + $0x258] sm:$0xf]
        %v4155 = vld [vmem:[#allocation5 + $0x25c] sm:$0xf]
        %v4156 = vld [vmem:[#allocation5 + $0x260] sm:$0xf]
        %v4157 = vld [vmem:[#allocation5 + $0x264] sm:$0xf]
        %v4158 = vld [vmem:[#allocation5 + $0x268] sm:$0xf]
        %v4159 = vld [vmem:[#allocation5 + $0x26c] sm:$0xf]
        %v4160 = vld [vmem:[#allocation5 + $0x270] sm:$0xf]
        %v4161 = vld [vmem:[#allocation5 + $0x274] sm:$0xf]
        %v4162 = vld [vmem:[#allocation5 + $0x278] sm:$0xf]
        %v4163 = vld [vmem:[#allocation5 + $0x27c] sm:$0xf]
        %v4164 = vld [vmem:[#allocation5 + $0x280] sm:$0xf]
        %v4165 = vld [vmem:[#allocation5 + $0x284] sm:$0xf]
        %v4166 = vld [vmem:[#allocation5 + $0x288] sm:$0xf]
        %v4167 = vld [vmem:[#allocation5 + $0x28c] sm:$0xf]
        %v4168 = vld [vmem:[#allocation5 + $0x290] sm:$0xf]
        %v4169 = vld [vmem:[#allocation5 + $0x294] sm:$0xf]
        %v4170 = vld [vmem:[#allocation5 + $0x298] sm:$0xf]
        %v4171 = vld [vmem:[#allocation5 + $0x29c] sm:$0xf]
        %v4172 = vld [vmem:[#allocation5 + $0x2a0] sm:$0xf]
        %v4173 = vld [vmem:[#allocation5 + $0x2a4] sm:$0xf]
        %v4174 = vld [vmem:[#allocation5 + $0x2a8] sm:$0xf]
        %v4175 = vld [vmem:[#allocation5 + $0x2ac] sm:$0xf]
        %v4176 = vld [vmem:[#allocation5 + $0x2b0] sm:$0xf]
        %v4177 = vld [vmem:[#allocation5 + $0x2b4] sm:$0xf]
        %v4178 = vld [vmem:[#allocation5 + $0x2b8] sm:$0xf]
        %v4179 = vld [vmem:[#allocation5 + $0x2bc] sm:$0xf]
        %v4180 = vld [vmem:[#allocation5 + $0x2c0] sm:$0xf]
        %v4181 = vld [vmem:[#allocation5 + $0x2c4] sm:$0xf]
        %v4182 = vld [vmem:[#allocation5 + $0x2c8] sm:$0xf]
        %v4183 = vld [vmem:[#allocation5 + $0x2cc] sm:$0xf]
        %v4184 = vld [vmem:[#allocation5 + $0x2d0] sm:$0xf]
        %v4185 = vld [vmem:[#allocation5 + $0x2d4] sm:$0xf]
        %v4186 = vld [vmem:[#allocation5 + $0x2d8] sm:$0xf]
        %v4187 = vld [vmem:[#allocation5 + $0x2dc] sm:$0xf]
        %v4188 = vld [vmem:[#allocation5 + $0x2e0] sm:$0xf]
        %v4189 = vld [vmem:[#allocation5 + $0x2e4] sm:$0xf]
        %v4190 = vld [vmem:[#allocation5 + $0x2e8] sm:$0xf]
        %v4191 = vld [vmem:[#allocation5 + $0x2ec] sm:$0xf]
        %v4192 = vld [vmem:[#allocation5 + $0x2f0] sm:$0xf]
        %v4193 = vld [vmem:[#allocation5 + $0x2f4] sm:$0xf]
        %v4194 = vld [vmem:[#allocation5 + $0x2f8] sm:$0xf]
        %v4195 = vld [vmem:[#allocation5 + $0x2fc] sm:$0xf]
        %v4196 = vld [vmem:[#allocation5 + $0x300] sm:$0xf]
        %v4197 = vld [vmem:[#allocation5 + $0x304] sm:$0xf]
        %v4198 = vld [vmem:[#allocation5 + $0x308] sm:$0xf]
        %v4199 = vld [vmem:[#allocation5 + $0x30c] sm:$0xf]
        %v4200 = vld [vmem:[#allocation5 + $0x310] sm:$0xf]
        %v4201 = vld [vmem:[#allocation5 + $0x314] sm:$0xf]
        %v4202 = vld [vmem:[#allocation5 + $0x318] sm:$0xf]
        %v4203 = vld [vmem:[#allocation5 + $0x31c] sm:$0xf]
        %v4204 = vld [vmem:[#allocation5 + $0x320] sm:$0xf]
        %v4205 = vld [vmem:[#allocation5 + $0x324] sm:$0xf]
        %v4206 = vld [vmem:[#allocation5 + $0x328] sm:$0xf]
        %v4207 = vld [vmem:[#allocation5 + $0x32c] sm:$0xf]
        %v4208 = vld [vmem:[#allocation5 + $0x330] sm:$0xf]
        %v4209 = vld [vmem:[#allocation5 + $0x334] sm:$0xf]
        %v4210 = vld [vmem:[#allocation5 + $0x338] sm:$0xf]
        %v4211 = vld [vmem:[#allocation5 + $0x33c] sm:$0xf]
        %v4212 = vld [vmem:[#allocation5 + $0x340] sm:$0xf]
        %v4213 = vld [vmem:[#allocation5 + $0x344] sm:$0xf]
        %v4214 = vld [vmem:[#allocation5 + $0x348] sm:$0xf]
        %v4215 = vld [vmem:[#allocation5 + $0x34c] sm:$0xf]
        %v4216 = vld [vmem:[#allocation5 + $0x350] sm:$0xf]
        %v4217 = vld [vmem:[#allocation5 + $0x354] sm:$0xf]
        %v4218 = vld [vmem:[#allocation5 + $0x358] sm:$0xf]
        %v4219 = vld [vmem:[#allocation5 + $0x35c] sm:$0xf]
        %v4220 = vld [vmem:[#allocation5 + $0x360] sm:$0xf]
        %v4221 = vld [vmem:[#allocation5 + $0x364] sm:$0xf]
        %v4222 = vld [vmem:[#allocation5 + $0x368] sm:$0xf]
        %v4223 = vld [vmem:[#allocation5 + $0x36c] sm:$0xf]
        %v4224 = vld [vmem:[#allocation5 + $0x370] sm:$0xf]
        %v4225 = vld [vmem:[#allocation5 + $0x374] sm:$0xf]
        %v4226 = vld [vmem:[#allocation5 + $0x378] sm:$0xf]
        %v4227 = vld [vmem:[#allocation5 + $0x37c] sm:$0xf]
        %v4228 = vld [vmem:[#allocation5 + $0x380] sm:$0xf]
        %v4229 = vld [vmem:[#allocation5 + $0x384] sm:$0xf]
        %v4230 = vld [vmem:[#allocation5 + $0x388] sm:$0xf]
        %v4231 = vld [vmem:[#allocation5 + $0x38c] sm:$0xf]
        %v4232 = vld [vmem:[#allocation5 + $0x390] sm:$0xf]
        %v4233 = vld [vmem:[#allocation5 + $0x394] sm:$0xf]
        %v4234 = vld [vmem:[#allocation5 + $0x398] sm:$0xf]
        %v4235 = vld [vmem:[#allocation5 + $0x39c] sm:$0xf]
        %v4236 = vld [vmem:[#allocation5 + $0x3a0] sm:$0xf]
        %v4237 = vld [vmem:[#allocation5 + $0x3a4] sm:$0xf]
        %v4238 = vld [vmem:[#allocation5 + $0x3a8] sm:$0xf]
        %v4239 = vld [vmem:[#allocation5 + $0x3ac] sm:$0xf]
        %v4240 = vld [vmem:[#allocation5 + $0x3b0] sm:$0xf]
        %v4241 = vld [vmem:[#allocation5 + $0x3b4] sm:$0xf]
        %v4242 = vld [vmem:[#allocation5 + $0x3b8] sm:$0xf]
        %v4243 = vld [vmem:[#allocation5 + $0x3bc] sm:$0xf]
        %v4244 = vld [vmem:[#allocation5 + $0x3c0] sm:$0xf]
        %v4245 = vld [vmem:[#allocation5 + $0x3c4] sm:$0xf]
        %v4246 = vld [vmem:[#allocation5 + $0x3c8] sm:$0xf]
        %v4247 = vld [vmem:[#allocation5 + $0x3cc] sm:$0xf]
        %v4248 = vld [vmem:[#allocation5 + $0x3d0] sm:$0xf]
        %v4249 = vld [vmem:[#allocation5 + $0x3d4] sm:$0xf]
        %v4250 = vld [vmem:[#allocation5 + $0x3d8] sm:$0xf]
        %v4251 = vld [vmem:[#allocation5 + $0x3dc] sm:$0xf]
        %v4252 = vld [vmem:[#allocation5 + $0x3e0] sm:$0xf]
        %v4253 = vld [vmem:[#allocation5 + $0x3e4] sm:$0xf]
        %v4254 = vld [vmem:[#allocation5 + $0x3e8] sm:$0xf]
        %v4255 = vld [vmem:[#allocation5 + $0x3ec] sm:$0xf]
        %v4256 = vld [vmem:[#allocation5 + $0x3f0] sm:$0xf]
        %v4257 = vld [vmem:[#allocation5 + $0x3f4] sm:$0xf]
        %v4258 = vld [vmem:[#allocation5 + $0x3f8] sm:$0xf]
        %v4259 = vld [vmem:[#allocation5 + $0x3fc] sm:$0xf]
        %v4260 = vpack.c.bf16 %v3892, %v3876
        %v4261 = vpack.c.bf16 %v3893, %v3877
        %v4262 = vpack.c.bf16 %v3894, %v3878
        %v4263 = vpack.c.bf16 %v3895, %v3879
        %v4264 = vpack.c.bf16 %v3896, %v3880
        %v4265 = vpack.c.bf16 %v3897, %v3881
        %v4266 = vpack.c.bf16 %v3898, %v3882
        %v4267 = vpack.c.bf16 %v3899, %v3883
        %v4268 = vpack.c.bf16 %v3900, %v3884
        %v4269 = vpack.c.bf16 %v3901, %v3885
        %v4270 = vpack.c.bf16 %v3902, %v3886
        %v4271 = vpack.c.bf16 %v3903, %v3887
        %v4272 = vpack.c.bf16 %v3904, %v3888
        %v4273 = vpack.c.bf16 %v3905, %v3889
        %v4274 = vpack.c.bf16 %v3906, %v3890
        %v4275 = vpack.c.bf16 %v3907, %v3891
        %v4276 = vpack.c.bf16 %v3924, %v3908
        %v4277 = vpack.c.bf16 %v3925, %v3909
        %v4278 = vpack.c.bf16 %v3926, %v3910
        %v4279 = vpack.c.bf16 %v3927, %v3911
        %v4280 = vpack.c.bf16 %v3928, %v3912
        %v4281 = vpack.c.bf16 %v3929, %v3913
        %v4282 = vpack.c.bf16 %v3930, %v3914
        %v4283 = vpack.c.bf16 %v3931, %v3915
        %v4284 = vpack.c.bf16 %v3932, %v3916
        %v4285 = vpack.c.bf16 %v3933, %v3917
        %v4286 = vpack.c.bf16 %v3934, %v3918
        %v4287 = vpack.c.bf16 %v3935, %v3919
        %v4288 = vpack.c.bf16 %v3936, %v3920
        %v4289 = vpack.c.bf16 %v3937, %v3921
        %v4290 = vpack.c.bf16 %v3938, %v3922
        %v4291 = vpack.c.bf16 %v3939, %v3923
        %v4292 = vpack.c.bf16 %v3956, %v3940
        %v4293 = vpack.c.bf16 %v3957, %v3941
        %v4294 = vpack.c.bf16 %v3958, %v3942
        %v4295 = vpack.c.bf16 %v3959, %v3943
        %v4296 = vpack.c.bf16 %v3960, %v3944
        %v4297 = vpack.c.bf16 %v3961, %v3945
        %v4298 = vpack.c.bf16 %v3962, %v3946
        %v4299 = vpack.c.bf16 %v3963, %v3947
        %v4300 = vpack.c.bf16 %v3964, %v3948
        %v4301 = vpack.c.bf16 %v3965, %v3949
        %v4302 = vpack.c.bf16 %v3966, %v3950
        %v4303 = vpack.c.bf16 %v3967, %v3951
        %v4304 = vpack.c.bf16 %v3968, %v3952
        %v4305 = vpack.c.bf16 %v3969, %v3953
        %v4306 = vpack.c.bf16 %v3970, %v3954
        %v4307 = vpack.c.bf16 %v3971, %v3955
        %v4308 = vpack.c.bf16 %v3988, %v3972
        %v4309 = vpack.c.bf16 %v3989, %v3973
        %v4310 = vpack.c.bf16 %v3990, %v3974
        %v4311 = vpack.c.bf16 %v3991, %v3975
        %v4312 = vpack.c.bf16 %v3992, %v3976
        %v4313 = vpack.c.bf16 %v3993, %v3977
        %v4314 = vpack.c.bf16 %v3994, %v3978
        %v4315 = vpack.c.bf16 %v3995, %v3979
        %v4316 = vpack.c.bf16 %v3996, %v3980
        %v4317 = vpack.c.bf16 %v3997, %v3981
        %v4318 = vpack.c.bf16 %v3998, %v3982
        %v4319 = vpack.c.bf16 %v3999, %v3983
        %v4320 = vpack.c.bf16 %v4000, %v3984
        %v4321 = vpack.c.bf16 %v4001, %v3985
        %v4322 = vpack.c.bf16 %v4002, %v3986
        %v4323 = vpack.c.bf16 %v4003, %v3987
        %v4324 = vld [vmem:[%s9] sm:$0x1]
        %v4326 = vlaneseq
        %v4327 = vshrl.u32 %v4326, 7
        %v4328 = vsub.s32 0, %v4327
        %v4329 = vrot.slane %v4324, %v4328
        %v4587 = vunpack.c.l.b16 %v4004
        %v4588 = vunpack.c.l.b16 %v4005
        %v4589 = vunpack.c.l.b16 %v4006
        %v4590 = vunpack.c.l.b16 %v4007
        %v4591 = vunpack.c.l.b16 %v4008
        %v4592 = vunpack.c.l.b16 %v4009
        %v4593 = vunpack.c.l.b16 %v4010
        %v4594 = vunpack.c.l.b16 %v4011
        %v4595 = vunpack.c.l.b16 %v4012
        %v4596 = vunpack.c.l.b16 %v4013
        %v4597 = vunpack.c.l.b16 %v4014
        %v4598 = vunpack.c.l.b16 %v4015
        %v4599 = vunpack.c.l.b16 %v4016
        %v4600 = vunpack.c.l.b16 %v4017
        %v4601 = vunpack.c.l.b16 %v4018
        %v4602 = vunpack.c.l.b16 %v4019
        %v4603 = vunpack.c.l.b16 %v4020
        %v4604 = vunpack.c.l.b16 %v4021
        %v4605 = vunpack.c.l.b16 %v4022
        %v4606 = vunpack.c.l.b16 %v4023
        %v4607 = vunpack.c.l.b16 %v4024
        %v4608 = vunpack.c.l.b16 %v4025
        %v4609 = vunpack.c.l.b16 %v4026
        %v4610 = vunpack.c.l.b16 %v4027
        %v4611 = vunpack.c.l.b16 %v4028
        %v4612 = vunpack.c.l.b16 %v4029
        %v4613 = vunpack.c.l.b16 %v4030
        %v4614 = vunpack.c.l.b16 %v4031
        %v4615 = vunpack.c.l.b16 %v4032
        %v4616 = vunpack.c.l.b16 %v4033
        %v4617 = vunpack.c.l.b16 %v4034
        %v4618 = vunpack.c.l.b16 %v4035
        %v4619 = vunpack.c.l.b16 %v4036
        %v4620 = vunpack.c.l.b16 %v4037
        %v4621 = vunpack.c.l.b16 %v4038
        %v4622 = vunpack.c.l.b16 %v4039
        %v4623 = vunpack.c.l.b16 %v4040
        %v4624 = vunpack.c.l.b16 %v4041
        %v4625 = vunpack.c.l.b16 %v4042
        %v4626 = vunpack.c.l.b16 %v4043
        %v4627 = vunpack.c.l.b16 %v4044
        %v4628 = vunpack.c.l.b16 %v4045
        %v4629 = vunpack.c.l.b16 %v4046
        %v4630 = vunpack.c.l.b16 %v4047
        %v4631 = vunpack.c.l.b16 %v4048
        %v4632 = vunpack.c.l.b16 %v4049
        %v4633 = vunpack.c.l.b16 %v4050
        %v4634 = vunpack.c.l.b16 %v4051
        %v4635 = vunpack.c.l.b16 %v4052
        %v4636 = vunpack.c.l.b16 %v4053
        %v4637 = vunpack.c.l.b16 %v4054
        %v4638 = vunpack.c.l.b16 %v4055
        %v4639 = vunpack.c.l.b16 %v4056
        %v4640 = vunpack.c.l.b16 %v4057
        %v4641 = vunpack.c.l.b16 %v4058
        %v4642 = vunpack.c.l.b16 %v4059
        %v4643 = vunpack.c.l.b16 %v4060
        %v4644 = vunpack.c.l.b16 %v4061
        %v4645 = vunpack.c.l.b16 %v4062
        %v4646 = vunpack.c.l.b16 %v4063
        %v4647 = vunpack.c.l.b16 %v4064
        %v4648 = vunpack.c.l.b16 %v4065
        %v4649 = vunpack.c.l.b16 %v4066
        %v4650 = vunpack.c.l.b16 %v4067
        %v4651 = vunpack.c.l.b16 %v4068
        %v4652 = vunpack.c.l.b16 %v4069
        %v4653 = vunpack.c.l.b16 %v4070
        %v4654 = vunpack.c.l.b16 %v4071
        %v4655 = vunpack.c.l.b16 %v4072
        %v4656 = vunpack.c.l.b16 %v4073
        %v4657 = vunpack.c.l.b16 %v4074
        %v4658 = vunpack.c.l.b16 %v4075
        %v4659 = vunpack.c.l.b16 %v4076
        %v4660 = vunpack.c.l.b16 %v4077
        %v4661 = vunpack.c.l.b16 %v4078
        %v4662 = vunpack.c.l.b16 %v4079
        %v4663 = vunpack.c.l.b16 %v4080
        %v4664 = vunpack.c.l.b16 %v4081
        %v4665 = vunpack.c.l.b16 %v4082
        %v4666 = vunpack.c.l.b16 %v4083
        %v4667 = vunpack.c.l.b16 %v4084
        %v4668 = vunpack.c.l.b16 %v4085
        %v4669 = vunpack.c.l.b16 %v4086
        %v4670 = vunpack.c.l.b16 %v4087
        %v4671 = vunpack.c.l.b16 %v4088
        %v4672 = vunpack.c.l.b16 %v4089
        %v4673 = vunpack.c.l.b16 %v4090
        %v4674 = vunpack.c.l.b16 %v4091
        %v4675 = vunpack.c.l.b16 %v4092
        %v4676 = vunpack.c.l.b16 %v4093
        %v4677 = vunpack.c.l.b16 %v4094
        %v4678 = vunpack.c.l.b16 %v4095
        %v4679 = vunpack.c.l.b16 %v4096
        %v4680 = vunpack.c.l.b16 %v4097
        %v4681 = vunpack.c.l.b16 %v4098
        %v4682 = vunpack.c.l.b16 %v4099
        %v4683 = vunpack.c.l.b16 %v4100
        %v4684 = vunpack.c.l.b16 %v4101
        %v4685 = vunpack.c.l.b16 %v4102
        %v4686 = vunpack.c.l.b16 %v4103
        %v4687 = vunpack.c.l.b16 %v4104
        %v4688 = vunpack.c.l.b16 %v4105
        %v4689 = vunpack.c.l.b16 %v4106
        %v4690 = vunpack.c.l.b16 %v4107
        %v4691 = vunpack.c.l.b16 %v4108
        %v4692 = vunpack.c.l.b16 %v4109
        %v4693 = vunpack.c.l.b16 %v4110
        %v4694 = vunpack.c.l.b16 %v4111
        %v4695 = vunpack.c.l.b16 %v4112
        %v4696 = vunpack.c.l.b16 %v4113
        %v4697 = vunpack.c.l.b16 %v4114
        %v4698 = vunpack.c.l.b16 %v4115
        %v4699 = vunpack.c.l.b16 %v4116
        %v4700 = vunpack.c.l.b16 %v4117
        %v4701 = vunpack.c.l.b16 %v4118
        %v4702 = vunpack.c.l.b16 %v4119
        %v4703 = vunpack.c.l.b16 %v4120
        %v4704 = vunpack.c.l.b16 %v4121
        %v4705 = vunpack.c.l.b16 %v4122
        %v4706 = vunpack.c.l.b16 %v4123
        %v4707 = vunpack.c.l.b16 %v4124
        %v4708 = vunpack.c.l.b16 %v4125
        %v4709 = vunpack.c.l.b16 %v4126
        %v4710 = vunpack.c.l.b16 %v4127
        %v4711 = vunpack.c.l.b16 %v4128
        %v4712 = vunpack.c.l.b16 %v4129
        %v4713 = vunpack.c.l.b16 %v4130
        %v4714 = vunpack.c.l.b16 %v4131
        %v4715 = vunpack.c.l.b16 %v4132
        %v4716 = vunpack.c.l.b16 %v4133
        %v4717 = vunpack.c.l.b16 %v4134
        %v4718 = vunpack.c.l.b16 %v4135
        %v4719 = vunpack.c.l.b16 %v4136
        %v4720 = vunpack.c.l.b16 %v4137
        %v4721 = vunpack.c.l.b16 %v4138
        %v4722 = vunpack.c.l.b16 %v4139
        %v4723 = vunpack.c.l.b16 %v4140
        %v4724 = vunpack.c.l.b16 %v4141
        %v4725 = vunpack.c.l.b16 %v4142
        %v4726 = vunpack.c.l.b16 %v4143
        %v4727 = vunpack.c.l.b16 %v4144
        %v4728 = vunpack.c.l.b16 %v4145
        %v4729 = vunpack.c.l.b16 %v4146
        %v4730 = vunpack.c.l.b16 %v4147
        %v4731 = vunpack.c.l.b16 %v4148
        %v4732 = vunpack.c.l.b16 %v4149
        %v4733 = vunpack.c.l.b16 %v4150
        %v4734 = vunpack.c.l.b16 %v4151
        %v4735 = vunpack.c.l.b16 %v4152
        %v4736 = vunpack.c.l.b16 %v4153
        %v4737 = vunpack.c.l.b16 %v4154
        %v4738 = vunpack.c.l.b16 %v4155
        %v4739 = vunpack.c.l.b16 %v4156
        %v4740 = vunpack.c.l.b16 %v4157
        %v4741 = vunpack.c.l.b16 %v4158
        %v4742 = vunpack.c.l.b16 %v4159
        %v4743 = vunpack.c.l.b16 %v4160
        %v4744 = vunpack.c.l.b16 %v4161
        %v4745 = vunpack.c.l.b16 %v4162
        %v4746 = vunpack.c.l.b16 %v4163
        %v4747 = vunpack.c.l.b16 %v4164
        %v4748 = vunpack.c.l.b16 %v4165
        %v4749 = vunpack.c.l.b16 %v4166
        %v4750 = vunpack.c.l.b16 %v4167
        %v4751 = vunpack.c.l.b16 %v4168
        %v4752 = vunpack.c.l.b16 %v4169
        %v4753 = vunpack.c.l.b16 %v4170
        %v4754 = vunpack.c.l.b16 %v4171
        %v4755 = vunpack.c.l.b16 %v4172
        %v4756 = vunpack.c.l.b16 %v4173
        %v4757 = vunpack.c.l.b16 %v4174
        %v4758 = vunpack.c.l.b16 %v4175
        %v4759 = vunpack.c.l.b16 %v4176
        %v4760 = vunpack.c.l.b16 %v4177
        %v4761 = vunpack.c.l.b16 %v4178
        %v4762 = vunpack.c.l.b16 %v4179
        %v4763 = vunpack.c.l.b16 %v4180
        %v4764 = vunpack.c.l.b16 %v4181
        %v4765 = vunpack.c.l.b16 %v4182
        %v4766 = vunpack.c.l.b16 %v4183
        %v4767 = vunpack.c.l.b16 %v4184
        %v4768 = vunpack.c.l.b16 %v4185
        %v4769 = vunpack.c.l.b16 %v4186
        %v4770 = vunpack.c.l.b16 %v4187
        %v4771 = vunpack.c.l.b16 %v4188
        %v4772 = vunpack.c.l.b16 %v4189
        %v4773 = vunpack.c.l.b16 %v4190
        %v4774 = vunpack.c.l.b16 %v4191
        %v4775 = vunpack.c.l.b16 %v4192
        %v4776 = vunpack.c.l.b16 %v4193
        %v4777 = vunpack.c.l.b16 %v4194
        %v4778 = vunpack.c.l.b16 %v4195
        %v4779 = vunpack.c.l.b16 %v4196
        %v4780 = vunpack.c.l.b16 %v4197
        %v4781 = vunpack.c.l.b16 %v4198
        %v4782 = vunpack.c.l.b16 %v4199
        %v4783 = vunpack.c.l.b16 %v4200
        %v4784 = vunpack.c.l.b16 %v4201
        %v4785 = vunpack.c.l.b16 %v4202
        %v4786 = vunpack.c.l.b16 %v4203
        %v4787 = vunpack.c.l.b16 %v4204
        %v4788 = vunpack.c.l.b16 %v4205
        %v4789 = vunpack.c.l.b16 %v4206
        %v4790 = vunpack.c.l.b16 %v4207
        %v4791 = vunpack.c.l.b16 %v4208
        %v4792 = vunpack.c.l.b16 %v4209
        %v4793 = vunpack.c.l.b16 %v4210
        %v4794 = vunpack.c.l.b16 %v4211
        %v4795 = vunpack.c.l.b16 %v4212
        %v4796 = vunpack.c.l.b16 %v4213
        %v4797 = vunpack.c.l.b16 %v4214
        %v4798 = vunpack.c.l.b16 %v4215
        %v4799 = vunpack.c.l.b16 %v4216
        %v4800 = vunpack.c.l.b16 %v4217
        %v4801 = vunpack.c.l.b16 %v4218
        %v4802 = vunpack.c.l.b16 %v4219
        %v4803 = vunpack.c.l.b16 %v4220
        %v4804 = vunpack.c.l.b16 %v4221
        %v4805 = vunpack.c.l.b16 %v4222
        %v4806 = vunpack.c.l.b16 %v4223
        %v4807 = vunpack.c.l.b16 %v4224
        %v4808 = vunpack.c.l.b16 %v4225
        %v4809 = vunpack.c.l.b16 %v4226
        %v4810 = vunpack.c.l.b16 %v4227
        %v4811 = vunpack.c.l.b16 %v4228
        %v4812 = vunpack.c.l.b16 %v4229
        %v4813 = vunpack.c.l.b16 %v4230
        %v4814 = vunpack.c.l.b16 %v4231
        %v4815 = vunpack.c.l.b16 %v4232
        %v4816 = vunpack.c.l.b16 %v4233
        %v4817 = vunpack.c.l.b16 %v4234
        %v4818 = vunpack.c.l.b16 %v4235
        %v4819 = vunpack.c.l.b16 %v4236
        %v4820 = vunpack.c.l.b16 %v4237
        %v4821 = vunpack.c.l.b16 %v4238
        %v4822 = vunpack.c.l.b16 %v4239
        %v4823 = vunpack.c.l.b16 %v4240
        %v4824 = vunpack.c.l.b16 %v4241
        %v4825 = vunpack.c.l.b16 %v4242
        %v4826 = vunpack.c.l.b16 %v4243
        %v4827 = vunpack.c.l.b16 %v4244
        %v4828 = vunpack.c.l.b16 %v4245
        %v4829 = vunpack.c.l.b16 %v4246
        %v4830 = vunpack.c.l.b16 %v4247
        %v4831 = vunpack.c.l.b16 %v4248
        %v4832 = vunpack.c.l.b16 %v4249
        %v4833 = vunpack.c.l.b16 %v4250
        %v4834 = vunpack.c.l.b16 %v4251
        %v4835 = vunpack.c.l.b16 %v4252
        %v4836 = vunpack.c.l.b16 %v4253
        %v4837 = vunpack.c.l.b16 %v4254
        %v4838 = vunpack.c.l.b16 %v4255
        %v4839 = vunpack.c.l.b16 %v4256
        %v4840 = vunpack.c.l.b16 %v4257
        %v4841 = vunpack.c.l.b16 %v4258
        %v4842 = vunpack.c.l.b16 %v4259
        %v4843 = vpack.c.b16 %v4588, %v4587
        %v4844 = vpack.c.b16 %v4590, %v4589
        %v4845 = vpack.c.b16 %v4592, %v4591
        %v4846 = vpack.c.b16 %v4594, %v4593
        %v4847 = vpack.c.b16 %v4596, %v4595
        %v4848 = vpack.c.b16 %v4598, %v4597
        %v4849 = vpack.c.b16 %v4600, %v4599
        %v4850 = vpack.c.b16 %v4602, %v4601
        %v4851 = vpack.c.b16 %v4604, %v4603
        %v4852 = vpack.c.b16 %v4606, %v4605
        %v4853 = vpack.c.b16 %v4608, %v4607
        %v4854 = vpack.c.b16 %v4610, %v4609
        %v4855 = vpack.c.b16 %v4612, %v4611
        %v4856 = vpack.c.b16 %v4614, %v4613
        %v4857 = vpack.c.b16 %v4616, %v4615
        %v4858 = vpack.c.b16 %v4618, %v4617
        %v4859 = vpack.c.b16 %v4620, %v4619
        %v4860 = vpack.c.b16 %v4622, %v4621
        %v4861 = vpack.c.b16 %v4624, %v4623
        %v4862 = vpack.c.b16 %v4626, %v4625
        %v4863 = vpack.c.b16 %v4628, %v4627
        %v4864 = vpack.c.b16 %v4630, %v4629
        %v4865 = vpack.c.b16 %v4632, %v4631
        %v4866 = vpack.c.b16 %v4634, %v4633
        %v4867 = vpack.c.b16 %v4636, %v4635
        %v4868 = vpack.c.b16 %v4638, %v4637
        %v4869 = vpack.c.b16 %v4640, %v4639
        %v4870 = vpack.c.b16 %v4642, %v4641
        %v4871 = vpack.c.b16 %v4644, %v4643
        %v4872 = vpack.c.b16 %v4646, %v4645
        %v4873 = vpack.c.b16 %v4648, %v4647
        %v4874 = vpack.c.b16 %v4650, %v4649
        %v4875 = vpack.c.b16 %v4652, %v4651
        %v4876 = vpack.c.b16 %v4654, %v4653
        %v4877 = vpack.c.b16 %v4656, %v4655
        %v4878 = vpack.c.b16 %v4658, %v4657
        %v4879 = vpack.c.b16 %v4660, %v4659
        %v4880 = vpack.c.b16 %v4662, %v4661
        %v4881 = vpack.c.b16 %v4664, %v4663
        %v4882 = vpack.c.b16 %v4666, %v4665
        %v4883 = vpack.c.b16 %v4668, %v4667
        %v4884 = vpack.c.b16 %v4670, %v4669
        %v4885 = vpack.c.b16 %v4672, %v4671
        %v4886 = vpack.c.b16 %v4674, %v4673
        %v4887 = vpack.c.b16 %v4676, %v4675
        %v4888 = vpack.c.b16 %v4678, %v4677
        %v4889 = vpack.c.b16 %v4680, %v4679
        %v4890 = vpack.c.b16 %v4682, %v4681
        %v4891 = vpack.c.b16 %v4684, %v4683
        %v4892 = vpack.c.b16 %v4686, %v4685
        %v4893 = vpack.c.b16 %v4688, %v4687
        %v4894 = vpack.c.b16 %v4690, %v4689
        %v4895 = vpack.c.b16 %v4692, %v4691
        %v4896 = vpack.c.b16 %v4694, %v4693
        %v4897 = vpack.c.b16 %v4696, %v4695
        %v4898 = vpack.c.b16 %v4698, %v4697
        %v4899 = vpack.c.b16 %v4700, %v4699
        %v4900 = vpack.c.b16 %v4702, %v4701
        %v4901 = vpack.c.b16 %v4704, %v4703
        %v4902 = vpack.c.b16 %v4706, %v4705
        %v4903 = vpack.c.b16 %v4708, %v4707
        %v4904 = vpack.c.b16 %v4710, %v4709
        %v4905 = vpack.c.b16 %v4712, %v4711
        %v4906 = vpack.c.b16 %v4714, %v4713
        %v4907 = vpack.c.b16 %v4716, %v4715
        %v4908 = vpack.c.b16 %v4718, %v4717
        %v4909 = vpack.c.b16 %v4720, %v4719
        %v4910 = vpack.c.b16 %v4722, %v4721
        %v4911 = vpack.c.b16 %v4724, %v4723
        %v4912 = vpack.c.b16 %v4726, %v4725
        %v4913 = vpack.c.b16 %v4728, %v4727
        %v4914 = vpack.c.b16 %v4730, %v4729
        %v4915 = vpack.c.b16 %v4732, %v4731
        %v4916 = vpack.c.b16 %v4734, %v4733
        %v4917 = vpack.c.b16 %v4736, %v4735
        %v4918 = vpack.c.b16 %v4738, %v4737
        %v4919 = vpack.c.b16 %v4740, %v4739
        %v4920 = vpack.c.b16 %v4742, %v4741
        %v4921 = vpack.c.b16 %v4744, %v4743
        %v4922 = vpack.c.b16 %v4746, %v4745
        %v4923 = vpack.c.b16 %v4748, %v4747
        %v4924 = vpack.c.b16 %v4750, %v4749
        %v4925 = vpack.c.b16 %v4752, %v4751
        %v4926 = vpack.c.b16 %v4754, %v4753
        %v4927 = vpack.c.b16 %v4756, %v4755
        %v4928 = vpack.c.b16 %v4758, %v4757
        %v4929 = vpack.c.b16 %v4760, %v4759
        %v4930 = vpack.c.b16 %v4762, %v4761
        %v4931 = vpack.c.b16 %v4764, %v4763
        %v4932 = vpack.c.b16 %v4766, %v4765
        %v4933 = vpack.c.b16 %v4768, %v4767
        %v4934 = vpack.c.b16 %v4770, %v4769
        %v4935 = vpack.c.b16 %v4772, %v4771
        %v4936 = vpack.c.b16 %v4774, %v4773
        %v4937 = vpack.c.b16 %v4776, %v4775
        %v4938 = vpack.c.b16 %v4778, %v4777
        %v4939 = vpack.c.b16 %v4780, %v4779
        %v4940 = vpack.c.b16 %v4782, %v4781
        %v4941 = vpack.c.b16 %v4784, %v4783
        %v4942 = vpack.c.b16 %v4786, %v4785
        %v4943 = vpack.c.b16 %v4788, %v4787
        %v4944 = vpack.c.b16 %v4790, %v4789
        %v4945 = vpack.c.b16 %v4792, %v4791
        %v4946 = vpack.c.b16 %v4794, %v4793
        %v4947 = vpack.c.b16 %v4796, %v4795
        %v4948 = vpack.c.b16 %v4798, %v4797
        %v4949 = vpack.c.b16 %v4800, %v4799
        %v4950 = vpack.c.b16 %v4802, %v4801
        %v4951 = vpack.c.b16 %v4804, %v4803
        %v4952 = vpack.c.b16 %v4806, %v4805
        %v4953 = vpack.c.b16 %v4808, %v4807
        %v4954 = vpack.c.b16 %v4810, %v4809
        %v4955 = vpack.c.b16 %v4812, %v4811
        %v4956 = vpack.c.b16 %v4814, %v4813
        %v4957 = vpack.c.b16 %v4816, %v4815
        %v4958 = vpack.c.b16 %v4818, %v4817
        %v4959 = vpack.c.b16 %v4820, %v4819
        %v4960 = vpack.c.b16 %v4822, %v4821
        %v4961 = vpack.c.b16 %v4824, %v4823
        %v4962 = vpack.c.b16 %v4826, %v4825
        %v4963 = vpack.c.b16 %v4828, %v4827
        %v4964 = vpack.c.b16 %v4830, %v4829
        %v4965 = vpack.c.b16 %v4832, %v4831
        %v4966 = vpack.c.b16 %v4834, %v4833
        %v4967 = vpack.c.b16 %v4836, %v4835
        %v4968 = vpack.c.b16 %v4838, %v4837
        %v4969 = vpack.c.b16 %v4840, %v4839
        %v4970 = vpack.c.b16 %v4842, %v4841
        %5099 = vmatprep.subr.bf16.mxu0 0
        %5100 = vmatpush1.bf16.msra.mxu0 %v4843
        %5101 = vmatprep.subr.bf16.mxu0 0
        %5102 = vmatpush1.bf16.msra.mxu0 %v4844
        %5103 = vmatprep.subr.bf16.mxu0 0
        %5104 = vmatpush1.bf16.msra.mxu0 %v4845
        %5105 = vmatprep.subr.bf16.mxu0 0
        %5106 = vmatpush1.bf16.msra.mxu0 %v4846
        %5107 = vmatprep.subr.bf16.mxu0 0
        %5108 = vmatpush1.bf16.msra.mxu0 %v4847
        %5109 = vmatprep.subr.bf16.mxu0 0
        %5110 = vmatpush1.bf16.msra.mxu0 %v4848
        %5111 = vmatprep.subr.bf16.mxu0 0
        %5112 = vmatpush1.bf16.msra.mxu0 %v4849
        %5113 = vmatprep.subr.bf16.mxu0 0
        %5114 = vmatpush1.bf16.msra.mxu0 %v4850
        %5115 = vmatprep.subr.bf16.mxu0 0
        %5116 = vmatpush1.bf16.msra.mxu0 %v4851
        %5117 = vmatprep.subr.bf16.mxu0 0
        %5118 = vmatpush1.bf16.msra.mxu0 %v4852
        %5119 = vmatprep.subr.bf16.mxu0 0
        %5120 = vmatpush1.bf16.msra.mxu0 %v4853
        %5121 = vmatprep.subr.bf16.mxu0 0
        %5122 = vmatpush1.bf16.msra.mxu0 %v4854
        %5123 = vmatprep.subr.bf16.mxu0 0
        %5124 = vmatpush1.bf16.msra.mxu0 %v4855
        %5125 = vmatprep.subr.bf16.mxu0 0
        %5126 = vmatpush1.bf16.msra.mxu0 %v4856
        %5127 = vmatprep.subr.bf16.mxu0 0
        %5128 = vmatpush1.bf16.msra.mxu0 %v4857
        %5129 = vmatprep.subr.bf16.mxu0 0
        %5130 = vmatpush1.bf16.msra.mxu0 %v4858
        %5131 = vmatprep.mubr.bf16.mxu0 %v4261
        %5132 = vmatmul.mubr.bf16.gmra.mrb[0].mxu0 %v4260
        %v5133 = vpop.f32.mrb[0].mxu0
        %v5134 = vadd.f32 %v4329, %v5133
        %v5135 = vpop.f32.mrb[0].mxu0
        %v5136 = vpop.f32.mrb[0].mxu0
        %v5137 = vadd.f32 %v4329, %v5136
        %v5138 = vpop.f32.mrb[0].mxu0
        %5139 = vmatprep.mubr.bf16.mxu0 %v4277
        %5140 = vmatmul.mubr.bf16.gmra.mrb[0].mxu0 %v4276
        %v5141 = vpop.f32.mrb[0].mxu0
        %v5142 = vadd.f32 %v4329, %v5141
        %v5143 = vpop.f32.mrb[0].mxu0
        %v5144 = vpop.f32.mrb[0].mxu0
        %v5145 = vadd.f32 %v4329, %v5144
        %v5146 = vpop.f32.mrb[0].mxu0
        %5147 = vmatprep.mubr.bf16.mxu0 %v4293
        %5148 = vmatmul.mubr.bf16.gmra.mrb[0].mxu0 %v4292
        %v5149 = vpop.f32.mrb[0].mxu0
        %v5150 = vadd.f32 %v4329, %v5149
        %v5151 = vpop.f32.mrb[0].mxu0
        %v5152 = vpop.f32.mrb[0].mxu0
        %v5153 = vadd.f32 %v4329, %v5152
        %v5154 = vpop.f32.mrb[0].mxu0
        %5155 = vmatprep.mubr.bf16.mxu0 %v4309
        %5156 = vmatmul.mubr.bf16.gmra.mrb[0].mxu0 %v4308
        %v5157 = vpop.f32.mrb[0].mxu0
        %v5158 = vadd.f32 %v4329, %v5157
        %v5159 = vpop.f32.mrb[0].mxu0
        %v5160 = vpop.f32.mrb[0].mxu0
        %v5161 = vadd.f32 %v4329, %v5160
        %v5162 = vpop.f32.mrb[0].mxu0
        %5163 = vdwg.mxu0
        %5164 = vmatprep.subr.bf16.mxu0 0
        %5165 = vmatpush1.bf16.msra.mxu0 %v4859
        %5166 = vmatprep.subr.bf16.mxu0 0
        %5167 = vmatpush1.bf16.msra.mxu0 %v4860
        %5168 = vmatprep.subr.bf16.mxu0 0
        %5169 = vmatpush1.bf16.msra.mxu0 %v4861
        %5170 = vmatprep.subr.bf16.mxu0 0
        %5171 = vmatpush1.bf16.msra.mxu0 %v4862
        %5172 = vmatprep.subr.bf16.mxu0 0
        %5173 = vmatpush1.bf16.msra.mxu0 %v4863
        %5174 = vmatprep.subr.bf16.mxu0 0
        %5175 = vmatpush1.bf16.msra.mxu0 %v4864
        %5176 = vmatprep.subr.bf16.mxu0 0
        %5177 = vmatpush1.bf16.msra.mxu0 %v4865
        %5178 = vmatprep.subr.bf16.mxu0 0
        %5179 = vmatpush1.bf16.msra.mxu0 %v4866
        %5180 = vmatprep.subr.bf16.mxu0 0
        %5181 = vmatpush1.bf16.msra.mxu0 %v4867
        %5182 = vmatprep.subr.bf16.mxu0 0
        %5183 = vmatpush1.bf16.msra.mxu0 %v4868
        %5184 = vmatprep.subr.bf16.mxu0 0
        %5185 = vmatpush1.bf16.msra.mxu0 %v4869
        %5186 = vmatprep.subr.bf16.mxu0 0
        %5187 = vmatpush1.bf16.msra.mxu0 %v4870
        %5188 = vmatprep.subr.bf16.mxu0 0
        %5189 = vmatpush1.bf16.msra.mxu0 %v4871
        %5190 = vmatprep.subr.bf16.mxu0 0
        %5191 = vmatpush1.bf16.msra.mxu0 %v4872
        %5192 = vmatprep.subr.bf16.mxu0 0
        %5193 = vmatpush1.bf16.msra.mxu0 %v4873
        %5194 = vmatprep.subr.bf16.mxu0 0
        %5195 = vmatpush1.bf16.msra.mxu0 %v4874
        %5196 = vmatprep.mubr.bf16.mxu0 %v4263
        %5197 = vmatmul.mubr.bf16.gmra.mrb[0].mxu0 %v4262
        %v5198 = vpop.f32.mrb[0].mxu0
        %v5199 = vadd.f32 %v5134, %v5198
        %v5200 = vpop.f32.mrb[0].mxu0
        %v5201 = vpop.f32.mrb[0].mxu0
        %v5202 = vadd.f32 %v5137, %v5201
        %v5203 = vpop.f32.mrb[0].mxu0
        %5204 = vmatprep.mubr.bf16.mxu0 %v4279
        %5205 = vmatmul.mubr.bf16.gmra.mrb[0].mxu0 %v4278
        %v5206 = vpop.f32.mrb[0].mxu0
        %v5207 = vadd.f32 %v5142, %v5206
        %v5208 = vpop.f32.mrb[0].mxu0
        %v5209 = vpop.f32.mrb[0].mxu0
        %v5210 = vadd.f32 %v5145, %v5209
        %v5211 = vpop.f32.mrb[0].mxu0
        %5212 = vmatprep.mubr.bf16.mxu0 %v4295
        %5213 = vmatmul.mubr.bf16.gmra.mrb[0].mxu0 %v4294
        %v5214 = vpop.f32.mrb[0].mxu0
        %v5215 = vadd.f32 %v5150, %v5214
        %v5216 = vpop.f32.mrb[0].mxu0
        %v5217 = vpop.f32.mrb[0].mxu0
        %v5218 = vadd.f32 %v5153, %v5217
        %v5219 = vpop.f32.mrb[0].mxu0
        %5220 = vmatprep.mubr.bf16.mxu0 %v4311
        %5221 = vmatmul.mubr.bf16.gmra.mrb[0].mxu0 %v4310
        %v5222 = vpop.f32.mrb[0].mxu0
        %v5223 = vadd.f32 %v5158, %v5222
        %v5224 = vpop.f32.mrb[0].mxu0
        %v5225 = vpop.f32.mrb[0].mxu0
        %v5226 = vadd.f32 %v5161, %v5225
        %v5227 = vpop.f32.mrb[0].mxu0
        %5228 = vdwg.mxu0
        %5229 = vmatprep.subr.bf16.mxu0 0
        %5230 = vmatpush1.bf16.msra.mxu0 %v4875
        %5231 = vmatprep.subr.bf16.mxu0 0
        %5232 = vmatpush1.bf16.msra.mxu0 %v4876
        %5233 = vmatprep.subr.bf16.mxu0 0
        %5234 = vmatpush1.bf16.msra.mxu0 %v4877
        %5235 = vmatprep.subr.bf16.mxu0 0
        %5236 = vmatpush1.bf16.msra.mxu0 %v4878
        %5237 = vmatprep.subr.bf16.mxu0 0
        %5238 = vmatpush1.bf16.msra.mxu0 %v4879
        %5239 = vmatprep.subr.bf16.mxu0 0
        %5240 = vmatpush1.bf16.msra.mxu0 %v4880
        %5241 = vmatprep.subr.bf16.mxu0 0
        %5242 = vmatpush1.bf16.msra.mxu0 %v4881
        %5243 = vmatprep.subr.bf16.mxu0 0
        %5244 = vmatpush1.bf16.msra.mxu0 %v4882
        %5245 = vmatprep.subr.bf16.mxu0 0
        %5246 = vmatpush1.bf16.msra.mxu0 %v4883
        %5247 = vmatprep.subr.bf16.mxu0 0
        %5248 = vmatpush1.bf16.msra.mxu0 %v4884
        %5249 = vmatprep.subr.bf16.mxu0 0
        %5250 = vmatpush1.bf16.msra.mxu0 %v4885
        %5251 = vmatprep.subr.bf16.mxu0 0
        %5252 = vmatpush1.bf16.msra.mxu0 %v4886
        %5253 = vmatprep.subr.bf16.mxu0 0
        %5254 = vmatpush1.bf16.msra.mxu0 %v4887
        %5255 = vmatprep.subr.bf16.mxu0 0
        %5256 = vmatpush1.bf16.msra.mxu0 %v4888
        %5257 = vmatprep.subr.bf16.mxu0 0
        %5258 = vmatpush1.bf16.msra.mxu0 %v4889
        %5259 = vmatprep.subr.bf16.mxu0 0
        %5260 = vmatpush1.bf16.msra.mxu0 %v4890
        %5261 = vmatprep.mubr.bf16.mxu0 %v4265
        %5262 = vmatmul.mubr.bf16.gmra.mrb[0].mxu0 %v4264
        %v5263 = vpop.f32.mrb[0].mxu0
        %v5264 = vadd.f32 %v5199, %v5263
        %v5265 = vpop.f32.mrb[0].mxu0
        %v5266 = vpop.f32.mrb[0].mxu0
        %v5267 = vadd.f32 %v5202, %v5266
        %v5268 = vpop.f32.mrb[0].mxu0
        %5269 = vmatprep.mubr.bf16.mxu0 %v4281
        %5270 = vmatmul.mubr.bf16.gmra.mrb[0].mxu0 %v4280
        %v5271 = vpop.f32.mrb[0].mxu0
        %v5272 = vadd.f32 %v5207, %v5271
        %v5273 = vpop.f32.mrb[0].mxu0
        %v5274 = vpop.f32.mrb[0].mxu0
        %v5275 = vadd.f32 %v5210, %v5274
        %v5276 = vpop.f32.mrb[0].mxu0
        %5277 = vmatprep.mubr.bf16.mxu0 %v4297
        %5278 = vmatmul.mubr.bf16.gmra.mrb[0].mxu0 %v4296
        %v5279 = vpop.f32.mrb[0].mxu0
        %v5280 = vadd.f32 %v5215, %v5279
        %v5281 = vpop.f32.mrb[0].mxu0
        %v5282 = vpop.f32.mrb[0].mxu0
        %v5283 = vadd.f32 %v5218, %v5282
        %v5284 = vpop.f32.mrb[0].mxu0
        %5285 = vmatprep.mubr.bf16.mxu0 %v4313
        %5286 = vmatmul.mubr.bf16.gmra.mrb[0].mxu0 %v4312
        %v5287 = vpop.f32.mrb[0].mxu0
        %v5288 = vadd.f32 %v5223, %v5287
        %v5289 = vpop.f32.mrb[0].mxu0
        %v5290 = vpop.f32.mrb[0].mxu0
        %v5291 = vadd.f32 %v5226, %v5290
        %v5292 = vpop.f32.mrb[0].mxu0
        %5293 = vdwg.mxu0
        %5294 = vmatprep.subr.bf16.mxu0 0
        %5295 = vmatpush1.bf16.msra.mxu0 %v4891
        %5296 = vmatprep.subr.bf16.mxu0 0
        %5297 = vmatpush1.bf16.msra.mxu0 %v4892
        %5298 = vmatprep.subr.bf16.mxu0 0
        %5299 = vmatpush1.bf16.msra.mxu0 %v4893
        %5300 = vmatprep.subr.bf16.mxu0 0
        %5301 = vmatpush1.bf16.msra.mxu0 %v4894
        %5302 = vmatprep.subr.bf16.mxu0 0
        %5303 = vmatpush1.bf16.msra.mxu0 %v4895
        %5304 = vmatprep.subr.bf16.mxu0 0
        %5305 = vmatpush1.bf16.msra.mxu0 %v4896
        %5306 = vmatprep.subr.bf16.mxu0 0
        %5307 = vmatpush1.bf16.msra.mxu0 %v4897
        %5308 = vmatprep.subr.bf16.mxu0 0
        %5309 = vmatpush1.bf16.msra.mxu0 %v4898
        %5310 = vmatprep.subr.bf16.mxu0 0
        %5311 = vmatpush1.bf16.msra.mxu0 %v4899
        %5312 = vmatprep.subr.bf16.mxu0 0
        %5313 = vmatpush1.bf16.msra.mxu0 %v4900
        %5314 = vmatprep.subr.bf16.mxu0 0
        %5315 = vmatpush1.bf16.msra.mxu0 %v4901
        %5316 = vmatprep.subr.bf16.mxu0 0
        %5317 = vmatpush1.bf16.msra.mxu0 %v4902
        %5318 = vmatprep.subr.bf16.mxu0 0
        %5319 = vmatpush1.bf16.msra.mxu0 %v4903
        %5320 = vmatprep.subr.bf16.mxu0 0
        %5321 = vmatpush1.bf16.msra.mxu0 %v4904
        %5322 = vmatprep.subr.bf16.mxu0 0
        %5323 = vmatpush1.bf16.msra.mxu0 %v4905
        %5324 = vmatprep.subr.bf16.mxu0 0
        %5325 = vmatpush1.bf16.msra.mxu0 %v4906
        %5326 = vmatprep.mubr.bf16.mxu0 %v4267
        %5327 = vmatmul.mubr.bf16.gmra.mrb[0].mxu0 %v4266
        %v5328 = vpop.f32.mrb[0].mxu0
        %v5329 = vadd.f32 %v5264, %v5328
        %v5330 = vpop.f32.mrb[0].mxu0
        %v5331 = vpop.f32.mrb[0].mxu0
        %v5332 = vadd.f32 %v5267, %v5331
        %v5333 = vpop.f32.mrb[0].mxu0
        %5334 = vmatprep.mubr.bf16.mxu0 %v4283
        %5335 = vmatmul.mubr.bf16.gmra.mrb[0].mxu0 %v4282
        %v5336 = vpop.f32.mrb[0].mxu0
        %v5337 = vadd.f32 %v5272, %v5336
        %v5338 = vpop.f32.mrb[0].mxu0
        %v5339 = vpop.f32.mrb[0].mxu0
        %v5340 = vadd.f32 %v5275, %v5339
        %v5341 = vpop.f32.mrb[0].mxu0
        %5342 = vmatprep.mubr.bf16.mxu0 %v4299
        %5343 = vmatmul.mubr.bf16.gmra.mrb[0].mxu0 %v4298
        %v5344 = vpop.f32.mrb[0].mxu0
        %v5345 = vadd.f32 %v5280, %v5344
        %v5346 = vpop.f32.mrb[0].mxu0
        %v5347 = vpop.f32.mrb[0].mxu0
        %v5348 = vadd.f32 %v5283, %v5347
        %v5349 = vpop.f32.mrb[0].mxu0
        %5350 = vmatprep.mubr.bf16.mxu0 %v4315
        %5351 = vmatmul.mubr.bf16.gmra.mrb[0].mxu0 %v4314
        %v5352 = vpop.f32.mrb[0].mxu0
        %v5353 = vadd.f32 %v5288, %v5352
        %v5354 = vpop.f32.mrb[0].mxu0
        %v5355 = vpop.f32.mrb[0].mxu0
        %v5356 = vadd.f32 %v5291, %v5355
        %v5357 = vpop.f32.mrb[0].mxu0
        %5358 = vdwg.mxu0
        %5359 = vmatprep.subr.bf16.mxu0 0
        %5360 = vmatpush1.bf16.msra.mxu0 %v4907
        %5361 = vmatprep.subr.bf16.mxu0 0
        %5362 = vmatpush1.bf16.msra.mxu0 %v4908
        %5363 = vmatprep.subr.bf16.mxu0 0
        %5364 = vmatpush1.bf16.msra.mxu0 %v4909
        %5365 = vmatprep.subr.bf16.mxu0 0
        %5366 = vmatpush1.bf16.msra.mxu0 %v4910
        %5367 = vmatprep.subr.bf16.mxu0 0
        %5368 = vmatpush1.bf16.msra.mxu0 %v4911
        %5369 = vmatprep.subr.bf16.mxu0 0
        %5370 = vmatpush1.bf16.msra.mxu0 %v4912
        %5371 = vmatprep.subr.bf16.mxu0 0
        %5372 = vmatpush1.bf16.msra.mxu0 %v4913
        %5373 = vmatprep.subr.bf16.mxu0 0
        %5374 = vmatpush1.bf16.msra.mxu0 %v4914
        %5375 = vmatprep.subr.bf16.mxu0 0
        %5376 = vmatpush1.bf16.msra.mxu0 %v4915
        %5377 = vmatprep.subr.bf16.mxu0 0
        %5378 = vmatpush1.bf16.msra.mxu0 %v4916
        %5379 = vmatprep.subr.bf16.mxu0 0
        %5380 = vmatpush1.bf16.msra.mxu0 %v4917
        %5381 = vmatprep.subr.bf16.mxu0 0
        %5382 = vmatpush1.bf16.msra.mxu0 %v4918
        %5383 = vmatprep.subr.bf16.mxu0 0
        %5384 = vmatpush1.bf16.msra.mxu0 %v4919
        %5385 = vmatprep.subr.bf16.mxu0 0
        %5386 = vmatpush1.bf16.msra.mxu0 %v4920
        %5387 = vmatprep.subr.bf16.mxu0 0
        %5388 = vmatpush1.bf16.msra.mxu0 %v4921
        %5389 = vmatprep.subr.bf16.mxu0 0
        %5390 = vmatpush1.bf16.msra.mxu0 %v4922
        %5391 = vmatprep.mubr.bf16.mxu0 %v4269
        %5392 = vmatmul.mubr.bf16.gmra.mrb[0].mxu0 %v4268
        %v5393 = vpop.f32.mrb[0].mxu0
        %v5394 = vadd.f32 %v5329, %v5393
        %v5395 = vpop.f32.mrb[0].mxu0
        %v5396 = vpop.f32.mrb[0].mxu0
        %v5397 = vadd.f32 %v5332, %v5396
        %v5398 = vpop.f32.mrb[0].mxu0
        %5399 = vmatprep.mubr.bf16.mxu0 %v4285
        %5400 = vmatmul.mubr.bf16.gmra.mrb[0].mxu0 %v4284
        %v5401 = vpop.f32.mrb[0].mxu0
        %v5402 = vadd.f32 %v5337, %v5401
        %v5403 = vpop.f32.mrb[0].mxu0
        %v5404 = vpop.f32.mrb[0].mxu0
        %v5405 = vadd.f32 %v5340, %v5404
        %v5406 = vpop.f32.mrb[0].mxu0
        %5407 = vmatprep.mubr.bf16.mxu0 %v4301
        %5408 = vmatmul.mubr.bf16.gmra.mrb[0].mxu0 %v4300
        %v5409 = vpop.f32.mrb[0].mxu0
        %v5410 = vadd.f32 %v5345, %v5409
        %v5411 = vpop.f32.mrb[0].mxu0
        %v5412 = vpop.f32.mrb[0].mxu0
        %v5413 = vadd.f32 %v5348, %v5412
        %v5414 = vpop.f32.mrb[0].mxu0
        %5415 = vmatprep.mubr.bf16.mxu0 %v4317
        %5416 = vmatmul.mubr.bf16.gmra.mrb[0].mxu0 %v4316
        %v5417 = vpop.f32.mrb[0].mxu0
        %v5418 = vadd.f32 %v5353, %v5417
        %v5419 = vpop.f32.mrb[0].mxu0
        %v5420 = vpop.f32.mrb[0].mxu0
        %v5421 = vadd.f32 %v5356, %v5420
        %v5422 = vpop.f32.mrb[0].mxu0
        %5423 = vdwg.mxu0
        %5424 = vmatprep.subr.bf16.mxu0 0
        %5425 = vmatpush1.bf16.msra.mxu0 %v4923
        %5426 = vmatprep.subr.bf16.mxu0 0
        %5427 = vmatpush1.bf16.msra.mxu0 %v4924
        %5428 = vmatprep.subr.bf16.mxu0 0
        %5429 = vmatpush1.bf16.msra.mxu0 %v4925
        %5430 = vmatprep.subr.bf16.mxu0 0
        %5431 = vmatpush1.bf16.msra.mxu0 %v4926
        %5432 = vmatprep.subr.bf16.mxu0 0
        %5433 = vmatpush1.bf16.msra.mxu0 %v4927
        %5434 = vmatprep.subr.bf16.mxu0 0
        %5435 = vmatpush1.bf16.msra.mxu0 %v4928
        %5436 = vmatprep.subr.bf16.mxu0 0
        %5437 = vmatpush1.bf16.msra.mxu0 %v4929
        %5438 = vmatprep.subr.bf16.mxu0 0
        %5439 = vmatpush1.bf16.msra.mxu0 %v4930
        %5440 = vmatprep.subr.bf16.mxu0 0
        %5441 = vmatpush1.bf16.msra.mxu0 %v4931
        %5442 = vmatprep.subr.bf16.mxu0 0
        %5443 = vmatpush1.bf16.msra.mxu0 %v4932
        %5444 = vmatprep.subr.bf16.mxu0 0
        %5445 = vmatpush1.bf16.msra.mxu0 %v4933
        %5446 = vmatprep.subr.bf16.mxu0 0
        %5447 = vmatpush1.bf16.msra.mxu0 %v4934
        %5448 = vmatprep.subr.bf16.mxu0 0
        %5449 = vmatpush1.bf16.msra.mxu0 %v4935
        %5450 = vmatprep.subr.bf16.mxu0 0
        %5451 = vmatpush1.bf16.msra.mxu0 %v4936
        %5452 = vmatprep.subr.bf16.mxu0 0
        %5453 = vmatpush1.bf16.msra.mxu0 %v4937
        %5454 = vmatprep.subr.bf16.mxu0 0
        %5455 = vmatpush1.bf16.msra.mxu0 %v4938
        %5456 = vmatprep.mubr.bf16.mxu0 %v4271
        %5457 = vmatmul.mubr.bf16.gmra.mrb[0].mxu0 %v4270
        %v5458 = vpop.f32.mrb[0].mxu0
        %v5459 = vadd.f32 %v5394, %v5458
        %v5460 = vpop.f32.mrb[0].mxu0
        %v5461 = vpop.f32.mrb[0].mxu0
        %v5462 = vadd.f32 %v5397, %v5461
        %v5463 = vpop.f32.mrb[0].mxu0
        %5464 = vmatprep.mubr.bf16.mxu0 %v4287
        %5465 = vmatmul.mubr.bf16.gmra.mrb[0].mxu0 %v4286
        %v5466 = vpop.f32.mrb[0].mxu0
        %v5467 = vadd.f32 %v5402, %v5466
        %v5468 = vpop.f32.mrb[0].mxu0
        %v5469 = vpop.f32.mrb[0].mxu0
        %v5470 = vadd.f32 %v5405, %v5469
        %v5471 = vpop.f32.mrb[0].mxu0
        %5472 = vmatprep.mubr.bf16.mxu0 %v4303
        %5473 = vmatmul.mubr.bf16.gmra.mrb[0].mxu0 %v4302
        %v5474 = vpop.f32.mrb[0].mxu0
        %v5475 = vadd.f32 %v5410, %v5474
        %v5476 = vpop.f32.mrb[0].mxu0
        %v5477 = vpop.f32.mrb[0].mxu0
        %v5478 = vadd.f32 %v5413, %v5477
        %v5479 = vpop.f32.mrb[0].mxu0
        %5480 = vmatprep.mubr.bf16.mxu0 %v4319
        %5481 = vmatmul.mubr.bf16.gmra.mrb[0].mxu0 %v4318
        %v5482 = vpop.f32.mrb[0].mxu0
        %v5483 = vadd.f32 %v5418, %v5482
        %v5484 = vpop.f32.mrb[0].mxu0
        %v5485 = vpop.f32.mrb[0].mxu0
        %v5486 = vadd.f32 %v5421, %v5485
        %v5487 = vpop.f32.mrb[0].mxu0
        %5488 = vdwg.mxu0
        %5489 = vmatprep.subr.bf16.mxu0 0
        %5490 = vmatpush1.bf16.msra.mxu0 %v4939
        %5491 = vmatprep.subr.bf16.mxu0 0
        %5492 = vmatpush1.bf16.msra.mxu0 %v4940
        %5493 = vmatprep.subr.bf16.mxu0 0
        %5494 = vmatpush1.bf16.msra.mxu0 %v4941
        %5495 = vmatprep.subr.bf16.mxu0 0
        %5496 = vmatpush1.bf16.msra.mxu0 %v4942
        %5497 = vmatprep.subr.bf16.mxu0 0
        %5498 = vmatpush1.bf16.msra.mxu0 %v4943
        %5499 = vmatprep.subr.bf16.mxu0 0
        %5500 = vmatpush1.bf16.msra.mxu0 %v4944
        %5501 = vmatprep.subr.bf16.mxu0 0
        %5502 = vmatpush1.bf16.msra.mxu0 %v4945
        %5503 = vmatprep.subr.bf16.mxu0 0
        %5504 = vmatpush1.bf16.msra.mxu0 %v4946
        %5505 = vmatprep.subr.bf16.mxu0 0
        %5506 = vmatpush1.bf16.msra.mxu0 %v4947
        %5507 = vmatprep.subr.bf16.mxu0 0
        %5508 = vmatpush1.bf16.msra.mxu0 %v4948
        %5509 = vmatprep.subr.bf16.mxu0 0
        %5510 = vmatpush1.bf16.msra.mxu0 %v4949
        %5511 = vmatprep.subr.bf16.mxu0 0
        %5512 = vmatpush1.bf16.msra.mxu0 %v4950
        %5513 = vmatprep.subr.bf16.mxu0 0
        %5514 = vmatpush1.bf16.msra.mxu0 %v4951
        %5515 = vmatprep.subr.bf16.mxu0 0
        %5516 = vmatpush1.bf16.msra.mxu0 %v4952
        %5517 = vmatprep.subr.bf16.mxu0 0
        %5518 = vmatpush1.bf16.msra.mxu0 %v4953
        %5519 = vmatprep.subr.bf16.mxu0 0
        %5520 = vmatpush1.bf16.msra.mxu0 %v4954
        %5521 = vmatprep.mubr.bf16.mxu0 %v4273
        %5522 = vmatmul.mubr.bf16.gmra.mrb[0].mxu0 %v4272
        %v5523 = vpop.f32.mrb[0].mxu0
        %v5524 = vadd.f32 %v5459, %v5523
        %v5525 = vpop.f32.mrb[0].mxu0
        %v5526 = vpop.f32.mrb[0].mxu0
        %v5527 = vadd.f32 %v5462, %v5526
        %v5528 = vpop.f32.mrb[0].mxu0
        %5529 = vmatprep.mubr.bf16.mxu0 %v4289
        %5530 = vmatmul.mubr.bf16.gmra.mrb[0].mxu0 %v4288
        %v5531 = vpop.f32.mrb[0].mxu0
        %v5532 = vadd.f32 %v5467, %v5531
        %v5533 = vpop.f32.mrb[0].mxu0
        %v5534 = vpop.f32.mrb[0].mxu0
        %v5535 = vadd.f32 %v5470, %v5534
        %v5536 = vpop.f32.mrb[0].mxu0
        %5537 = vmatprep.mubr.bf16.mxu0 %v4305
        %5538 = vmatmul.mubr.bf16.gmra.mrb[0].mxu0 %v4304
        %v5539 = vpop.f32.mrb[0].mxu0
        %v5540 = vadd.f32 %v5475, %v5539
        %v5541 = vpop.f32.mrb[0].mxu0
        %v5542 = vpop.f32.mrb[0].mxu0
        %v5543 = vadd.f32 %v5478, %v5542
        %v5544 = vpop.f32.mrb[0].mxu0
        %5545 = vmatprep.mubr.bf16.mxu0 %v4321
        %5546 = vmatmul.mubr.bf16.gmra.mrb[0].mxu0 %v4320
        %v5547 = vpop.f32.mrb[0].mxu0
        %v5548 = vadd.f32 %v5483, %v5547
        %v5549 = vpop.f32.mrb[0].mxu0
        %v5550 = vpop.f32.mrb[0].mxu0
        %v5551 = vadd.f32 %v5486, %v5550
        %v5552 = vpop.f32.mrb[0].mxu0
        %5553 = vdwg.mxu0
        %5554 = vmatprep.subr.bf16.mxu0 0
        %5555 = vmatpush1.bf16.msra.mxu0 %v4955
        %5556 = vmatprep.subr.bf16.mxu0 0
        %5557 = vmatpush1.bf16.msra.mxu0 %v4956
        %5558 = vmatprep.subr.bf16.mxu0 0
        %5559 = vmatpush1.bf16.msra.mxu0 %v4957
        %5560 = vmatprep.subr.bf16.mxu0 0
        %5561 = vmatpush1.bf16.msra.mxu0 %v4958
        %5562 = vmatprep.subr.bf16.mxu0 0
        %5563 = vmatpush1.bf16.msra.mxu0 %v4959
        %5564 = vmatprep.subr.bf16.mxu0 0
        %5565 = vmatpush1.bf16.msra.mxu0 %v4960
        %5566 = vmatprep.subr.bf16.mxu0 0
        %5567 = vmatpush1.bf16.msra.mxu0 %v4961
        %5568 = vmatprep.subr.bf16.mxu0 0
        %5569 = vmatpush1.bf16.msra.mxu0 %v4962
        %5570 = vmatprep.subr.bf16.mxu0 0
        %5571 = vmatpush1.bf16.msra.mxu0 %v4963
        %5572 = vmatprep.subr.bf16.mxu0 0
        %5573 = vmatpush1.bf16.msra.mxu0 %v4964
        %5574 = vmatprep.subr.bf16.mxu0 0
        %5575 = vmatpush1.bf16.msra.mxu0 %v4965
        %5576 = vmatprep.subr.bf16.mxu0 0
        %5577 = vmatpush1.bf16.msra.mxu0 %v4966
        %5578 = vmatprep.subr.bf16.mxu0 0
        %5579 = vmatpush1.bf16.msra.mxu0 %v4967
        %5580 = vmatprep.subr.bf16.mxu0 0
        %5581 = vmatpush1.bf16.msra.mxu0 %v4968
        %5582 = vmatprep.subr.bf16.mxu0 0
        %5583 = vmatpush1.bf16.msra.mxu0 %v4969
        %5584 = vmatprep.subr.bf16.mxu0 0
        %5585 = vmatpush1.bf16.msra.mxu0 %v4970
        %5586 = vmatprep.mubr.bf16.mxu0 %v4275
        %5587 = vmatmul.mubr.bf16.gmra.mrb[0].mxu0 %v4274
        %v5588 = vpop.f32.mrb[0].mxu0
        %v5589 = vadd.f32 %v5524, %v5588
        %v5590 = vpop.f32.mrb[0].mxu0
        %v5591 = vpop.f32.mrb[0].mxu0
        %v5592 = vadd.f32 %v5527, %v5591
        %v5593 = vpop.f32.mrb[0].mxu0
        %5594 = vmatprep.mubr.bf16.mxu0 %v4291
        %5595 = vmatmul.mubr.bf16.gmra.mrb[0].mxu0 %v4290
        %v5596 = vpop.f32.mrb[0].mxu0
        %v5597 = vadd.f32 %v5532, %v5596
        %v5598 = vpop.f32.mrb[0].mxu0
        %v5599 = vpop.f32.mrb[0].mxu0
        %v5600 = vadd.f32 %v5535, %v5599
        %v5601 = vpop.f32.mrb[0].mxu0
        %5602 = vmatprep.mubr.bf16.mxu0 %v4307
        %5603 = vmatmul.mubr.bf16.gmra.mrb[0].mxu0 %v4306
        %v5604 = vpop.f32.mrb[0].mxu0
        %v5605 = vadd.f32 %v5540, %v5604
        %v5606 = vpop.f32.mrb[0].mxu0
        %v5607 = vpop.f32.mrb[0].mxu0
        %v5608 = vadd.f32 %v5543, %v5607
        %v5609 = vpop.f32.mrb[0].mxu0
        %5610 = vmatprep.mubr.bf16.mxu0 %v4323
        %5611 = vmatmul.mubr.bf16.gmra.mrb[0].mxu0 %v4322
        %v5612 = vpop.f32.mrb[0].mxu0
        %v5613 = vadd.f32 %v5548, %v5612
        %v5614 = vpop.f32.mrb[0].mxu0
        %v5615 = vpop.f32.mrb[0].mxu0
        %v5616 = vadd.f32 %v5551, %v5615
        %v5617 = vpop.f32.mrb[0].mxu0
        %5618 = vdwg.mxu0
        %v5619 = vadd.f32 %v2428, %v5589
        %v5620 = vadd.f32 %v2429, %v5592
        %v5621 = vadd.f32 %v2430, %v5597
        %v5622 = vadd.f32 %v2431, %v5600
        %v5623 = vadd.f32 %v2432, %v5605
        %v5624 = vadd.f32 %v2433, %v5608
        %v5625 = vadd.f32 %v2434, %v5613
        %v5626 = vadd.f32 %v2435, %v5616
        %v5627 = vld [vmem:[%s12] sm:$0x1]
        %v5628 = vld [vmem:[%s13] sm:$0x1]
        %5629 = vadd.xlane.f32.xlu0 %v5619
        %v5630 = vpop.xlane.xlu0 %5629
        %5631 = vadd.xlane.f32.xlu0 %v5620
        %v5632 = vpop.xlane.xlu0 %5631
        %5633 = vadd.xlane.f32.xlu0 %v5621
        %v5634 = vpop.xlane.xlu0 %5633
        %5635 = vadd.xlane.f32.xlu0 %v5622
        %v5636 = vpop.xlane.xlu0 %5635
        %5637 = vadd.xlane.f32.xlu0 %v5623
        %v5638 = vpop.xlane.xlu0 %5637
        %5639 = vadd.xlane.f32.xlu0 %v5624
        %v5640 = vpop.xlane.xlu0 %5639
        %5641 = vadd.xlane.f32.xlu0 %v5625
        %v5642 = vpop.xlane.xlu0 %5641
        %5643 = vadd.xlane.f32.xlu0 %v5626
        %v5644 = vpop.xlane.xlu0 %5643
        %v5645 = vmul.f32 %v5630, %v2335
        %v5646 = vmul.f32 %v5632, %v2335
        %v5647 = vmul.f32 %v5634, %v2335
        %v5648 = vmul.f32 %v5636, %v2335
        %v5649 = vmul.f32 %v5638, %v2335
        %v5650 = vmul.f32 %v5640, %v2335
        %v5651 = vmul.f32 %v5642, %v2335
        %v5652 = vmul.f32 %v5644, %v2335
        %v5653 = vsub.f32 %v5619, %v5645
        %v5654 = vsub.f32 %v5620, %v5646
        %v5655 = vsub.f32 %v5621, %v5647
        %v5656 = vsub.f32 %v5622, %v5648
        %v5657 = vsub.f32 %v5623, %v5649
        %v5658 = vsub.f32 %v5624, %v5650
        %v5659 = vsub.f32 %v5625, %v5651
        %v5660 = vsub.f32 %v5626, %v5652
        %v5661 = vmul.f32 %v5653, %v5653
        %v5662 = vmul.f32 %v5654, %v5654
        %v5663 = vmul.f32 %v5655, %v5655
        %v5664 = vmul.f32 %v5656, %v5656
        %v5665 = vmul.f32 %v5657, %v5657
        %v5666 = vmul.f32 %v5658, %v5658
        %v5667 = vmul.f32 %v5659, %v5659
        %v5668 = vmul.f32 %v5660, %v5660
        %5669 = vadd.xlane.f32.xlu0 %v5661
        %v5670 = vpop.xlane.xlu0 %5669
        %5671 = vadd.xlane.f32.xlu0 %v5662
        %v5672 = vpop.xlane.xlu0 %5671
        %5673 = vadd.xlane.f32.xlu0 %v5663
        %v5674 = vpop.xlane.xlu0 %5673
        %5675 = vadd.xlane.f32.xlu0 %v5664
        %v5676 = vpop.xlane.xlu0 %5675
        %5677 = vadd.xlane.f32.xlu0 %v5665
        %v5678 = vpop.xlane.xlu0 %5677
        %5679 = vadd.xlane.f32.xlu0 %v5666
        %v5680 = vpop.xlane.xlu0 %5679
        %5681 = vadd.xlane.f32.xlu0 %v5667
        %v5682 = vpop.xlane.xlu0 %5681
        %5683 = vadd.xlane.f32.xlu0 %v5668
        %v5684 = vpop.xlane.xlu0 %5683
        %v5685 = vmul.f32 %v5670, %v2335
        %v5686 = vmul.f32 %v5672, %v2335
        %v5687 = vmul.f32 %v5674, %v2335
        %v5688 = vmul.f32 %v5676, %v2335
        %v5689 = vmul.f32 %v5678, %v2335
        %v5690 = vmul.f32 %v5680, %v2335
        %v5691 = vmul.f32 %v5682, %v2335
        %v5692 = vmul.f32 %v5684, %v2335
        %v5693 = vadd.f32 %v5685, 1e-05
        %v5694 = vadd.f32 %v5686, 1e-05
        %v5695 = vadd.f32 %v5687, 1e-05
        %v5696 = vadd.f32 %v5688, 1e-05
        %v5697 = vadd.f32 %v5689, 1e-05
        %v5698 = vadd.f32 %v5690, 1e-05
        %v5699 = vadd.f32 %v5691, 1e-05
        %v5700 = vadd.f32 %v5692, 1e-05
        %v5701 = vrsqrt.pop %v5693
        %v5702 = vrsqrt.pop %v5694
        %v5703 = vrsqrt.pop %v5695
        %v5704 = vrsqrt.pop %v5696
        %v5705 = vrsqrt.pop %v5697
        %v5706 = vrsqrt.pop %v5698
        %v5707 = vrsqrt.pop %v5699
        %v5708 = vrsqrt.pop %v5700
        %v5709 = vmul.f32 %v5653, %v5701
        %v5710 = vmul.f32 %v5654, %v5702
        %v5711 = vmul.f32 %v5655, %v5703
        %v5712 = vmul.f32 %v5656, %v5704
        %v5713 = vmul.f32 %v5657, %v5705
        %v5714 = vmul.f32 %v5658, %v5706
        %v5715 = vmul.f32 %v5659, %v5707
        %v5716 = vmul.f32 %v5660, %v5708
        %v5718 = vlaneseq
        %v5719 = vshrl.u32 %v5718, 7
        %v5720 = vsub.s32 0, %v5719
        %v5721 = vrot.slane %v5627, %v5720
        %v5723 = vmul.f32 %v5709, %v5721
        %v5724 = vmul.f32 %v5710, %v5721
        %v5725 = vmul.f32 %v5711, %v5721
        %v5726 = vmul.f32 %v5712, %v5721
        %v5727 = vmul.f32 %v5713, %v5721
        %v5728 = vmul.f32 %v5714, %v5721
        %v5729 = vmul.f32 %v5715, %v5721
        %v5730 = vmul.f32 %v5716, %v5721
        %v5732 = vlaneseq
        %v5733 = vshrl.u32 %v5732, 7
        %v5734 = vsub.s32 0, %v5733
        %v5735 = vrot.slane %v5628, %v5734
        %v5737 = vadd.f32 %v5723, %v5735
        %v5738 = vadd.f32 %v5724, %v5735
        %v5739 = vadd.f32 %v5725, %v5735
        %v5740 = vadd.f32 %v5726, %v5735
        %v5741 = vadd.f32 %v5727, %v5735
        %v5742 = vadd.f32 %v5728, %v5735
        %v5743 = vadd.f32 %v5729, %v5735
        %v5744 = vadd.f32 %v5730, %v5735
        %s5745 = scalar_lea.vmem %s2, 192
        %v5746 = vld [vmem:[%s5745] sm:$0xff]
        %v5747 = vld [vmem:[%s5745 + $0x8] sm:$0xf]
        %v5748 = vld [vmem:[%s5745 + $0xc] sm:$0xff]
        %v5749 = vld [vmem:[%s5745 + $0x14] sm:$0xf]
        %v5750 = vld [vmem:[%s5745 + $0x18] sm:$0xff]
        %v5751 = vld [vmem:[%s5745 + $0x20] sm:$0xf]
        %v5752 = vld [vmem:[%s5745 + $0x24] sm:$0xff]
        %v5753 = vld [vmem:[%s5745 + $0x2c] sm:$0xf]
        %v5754 = vld [vmem:[%s5745 + $0x30] sm:$0xff]
        %v5755 = vld [vmem:[%s5745 + $0x38] sm:$0xf]
        %v5756 = vld [vmem:[%s5745 + $0x3c] sm:$0xff]
        %v5757 = vld [vmem:[%s5745 + $0x44] sm:$0xf]
        %v5758 = vld [vmem:[%s5745 + $0x48] sm:$0xff]
        %v5759 = vld [vmem:[%s5745 + $0x50] sm:$0xf]
        %v5760 = vld [vmem:[%s5745 + $0x54] sm:$0xff]
        %v5761 = vld [vmem:[%s5745 + $0x5c] sm:$0xf]
        %v5762 = vld [vmem:[%s5745 + $0x60] sm:$0xff]
        %v5763 = vld [vmem:[%s5745 + $0x68] sm:$0xf]
        %v5764 = vld [vmem:[%s5745 + $0x6c] sm:$0xff]
        %v5765 = vld [vmem:[%s5745 + $0x74] sm:$0xf]
        %v5766 = vld [vmem:[%s5745 + $0x78] sm:$0xff]
        %v5767 = vld [vmem:[%s5745 + $0x80] sm:$0xf]
        %v5768 = vld [vmem:[%s5745 + $0x84] sm:$0xff]
        %v5769 = vld [vmem:[%s5745 + $0x8c] sm:$0xf]
        %v5770 = vld [vmem:[%s5745 + $0x90] sm:$0xff]
        %v5771 = vld [vmem:[%s5745 + $0x98] sm:$0xf]
        %v5772 = vld [vmem:[%s5745 + $0x9c] sm:$0xff]
        %v5773 = vld [vmem:[%s5745 + $0xa4] sm:$0xf]
        %v5774 = vld [vmem:[%s5745 + $0xa8] sm:$0xff]
        %v5775 = vld [vmem:[%s5745 + $0xb0] sm:$0xf]
        %v5776 = vld [vmem:[%s5745 + $0xb4] sm:$0xff]
        %v5777 = vld [vmem:[%s5745 + $0xbc] sm:$0xf]
        %v5778 = vpack.c.bf16 %v5738, %v5737
        %v5779 = vpack.c.bf16 %v5740, %v5739
        %v5780 = vpack.c.bf16 %v5742, %v5741
        %v5781 = vpack.c.bf16 %v5744, %v5743
        %s5782 = scalar_lea.vmem %s3, 3
        %v5783 = vld [vmem:[%s5782] sm:$0x7]
        %v5785 = vlaneseq
        %v5786 = vshrl.u32 %v5785, 7
        %v5787 = vsub.s32 0, %v5786
        %v5788 = vrot.slane %v5783, %v5787
        %v5789 = vlaneseq
        %v5790 = vshrl.u32 %v5789, 7
        %v5791 = vsub.s32 1, %v5790
        %v5792 = vrot.slane %v5783, %v5791
        %v5793 = vlaneseq
        %v5794 = vshrl.u32 %v5793, 7
        %v5795 = vsub.s32 2, %v5794
        %v5796 = vrot.slane %v5783, %v5795
        %v5832 = vunpack.c.l.b16 %v5746
        %v5833 = vunpack.c.h.b16 %v5746
        %v5834 = vunpack.c.l.b16 %v5747
        %v5835 = vunpack.c.l.b16 %v5748
        %v5836 = vunpack.c.h.b16 %v5748
        %v5837 = vunpack.c.l.b16 %v5749
        %v5838 = vunpack.c.l.b16 %v5750
        %v5839 = vunpack.c.h.b16 %v5750
        %v5840 = vunpack.c.l.b16 %v5751
        %v5841 = vunpack.c.l.b16 %v5752
        %v5842 = vunpack.c.h.b16 %v5752
        %v5843 = vunpack.c.l.b16 %v5753
        %v5844 = vunpack.c.l.b16 %v5754
        %v5845 = vunpack.c.h.b16 %v5754
        %v5846 = vunpack.c.l.b16 %v5755
        %v5847 = vunpack.c.l.b16 %v5756
        %v5848 = vunpack.c.h.b16 %v5756
        %v5849 = vunpack.c.l.b16 %v5757
        %v5850 = vunpack.c.l.b16 %v5758
        %v5851 = vunpack.c.h.b16 %v5758
        %v5852 = vunpack.c.l.b16 %v5759
        %v5853 = vunpack.c.l.b16 %v5760
        %v5854 = vunpack.c.h.b16 %v5760
        %v5855 = vunpack.c.l.b16 %v5761
        %v5856 = vunpack.c.l.b16 %v5762
        %v5857 = vunpack.c.h.b16 %v5762
        %v5858 = vunpack.c.l.b16 %v5763
        %v5859 = vunpack.c.l.b16 %v5764
        %v5860 = vunpack.c.h.b16 %v5764
        %v5861 = vunpack.c.l.b16 %v5765
        %v5862 = vunpack.c.l.b16 %v5766
        %v5863 = vunpack.c.h.b16 %v5766
        %v5864 = vunpack.c.l.b16 %v5767
        %v5865 = vunpack.c.l.b16 %v5768
        %v5866 = vunpack.c.h.b16 %v5768
        %v5867 = vunpack.c.l.b16 %v5769
        %v5868 = vunpack.c.l.b16 %v5770
        %v5869 = vunpack.c.h.b16 %v5770
        %v5870 = vunpack.c.l.b16 %v5771
        %v5871 = vunpack.c.l.b16 %v5772
        %v5872 = vunpack.c.h.b16 %v5772
        %v5873 = vunpack.c.l.b16 %v5773
        %v5874 = vunpack.c.l.b16 %v5774
        %v5875 = vunpack.c.h.b16 %v5774
        %v5876 = vunpack.c.l.b16 %v5775
        %v5877 = vunpack.c.l.b16 %v5776
        %v5878 = vunpack.c.h.b16 %v5776
        %v5879 = vunpack.c.l.b16 %v5777
        %v5880 = vpack.c.b16 %v5835, %v5832
        %v5881 = vpack.c.b16 %v5836, %v5833
        %v5882 = vpack.c.b16 %v5837, %v5834
        %v5883 = vpack.c.b16 %v5841, %v5838
        %v5884 = vpack.c.b16 %v5842, %v5839
        %v5885 = vpack.c.b16 %v5843, %v5840
        %v5886 = vpack.c.b16 %v5847, %v5844
        %v5887 = vpack.c.b16 %v5848, %v5845
        %v5888 = vpack.c.b16 %v5849, %v5846
        %v5889 = vpack.c.b16 %v5853, %v5850
        %v5890 = vpack.c.b16 %v5854, %v5851
        %v5891 = vpack.c.b16 %v5855, %v5852
        %v5892 = vpack.c.b16 %v5859, %v5856
        %v5893 = vpack.c.b16 %v5860, %v5857
        %v5894 = vpack.c.b16 %v5861, %v5858
        %v5895 = vpack.c.b16 %v5865, %v5862
        %v5896 = vpack.c.b16 %v5866, %v5863
        %v5897 = vpack.c.b16 %v5867, %v5864
        %v5898 = vpack.c.b16 %v5871, %v5868
        %v5899 = vpack.c.b16 %v5872, %v5869
        %v5900 = vpack.c.b16 %v5873, %v5870
        %v5901 = vpack.c.b16 %v5877, %v5874
        %v5902 = vpack.c.b16 %v5878, %v5875
        %v5903 = vpack.c.b16 %v5879, %v5876
        %5928 = vmatprep.subr.bf16.mxu0 %v5881
        %5929 = vmatpush1.bf16.msra.mxu0 %v5880
        %5930 = vmatprep.subr.bf16.mxu0 %v5884
        %5931 = vmatpush1.bf16.msra.mxu0 %v5883
        %5932 = vmatprep.subr.bf16.mxu0 %v5887
        %5933 = vmatpush1.bf16.msra.mxu0 %v5886
        %5934 = vmatprep.subr.bf16.mxu0 %v5890
        %5935 = vmatpush1.bf16.msra.mxu0 %v5889
        %5936 = vmatprep.subr.bf16.mxu0 %v5893
        %5937 = vmatpush1.bf16.msra.mxu0 %v5892
        %5938 = vmatprep.subr.bf16.mxu0 %v5896
        %5939 = vmatpush1.bf16.msra.mxu0 %v5895
        %5940 = vmatprep.subr.bf16.mxu0 %v5899
        %5941 = vmatpush1.bf16.msra.mxu0 %v5898
        %5942 = vmatprep.subr.bf16.mxu0 %v5902
        %5943 = vmatpush1.bf16.msra.mxu0 %v5901
        %5944 = vmatprep.subr.bf16.mxu0 0
        %5945 = vmatpush1.bf16.msra.mxu0 0
        %5946 = vmatprep.subr.bf16.mxu0 0
        %5947 = vmatpush1.bf16.msra.mxu0 0
        %5948 = vmatprep.subr.bf16.mxu0 0
        %5949 = vmatpush1.bf16.msra.mxu0 0
        %5950 = vmatprep.subr.bf16.mxu0 0
        %5951 = vmatpush1.bf16.msra.mxu0 0
        %5952 = vmatprep.subr.bf16.mxu0 0
        %5953 = vmatpush1.bf16.msra.mxu0 0
        %5954 = vmatprep.subr.bf16.mxu0 0
        %5955 = vmatpush1.bf16.msra.mxu0 0
        %5956 = vmatprep.subr.bf16.mxu0 0
        %5957 = vmatpush1.bf16.msra.mxu0 0
        %5958 = vmatprep.subr.bf16.mxu0 0
        %5959 = vmatpush1.bf16.msra.mxu0 0
        %5960 = vmatprep.mubr.bf16.mxu0 0
        %5961 = vmatmul.mubr.bf16.gmra.mrb[0].mxu0 %v5778
        %v5962 = vpop.f32.mrb[0].mxu0
        %v5963 = vadd.f32 %v5788, %v5962
        %v5964 = vpop.f32.mrb[0].mxu0
        %v5965 = vadd.f32 %v5792, %v5964
        %v5966 = vpop.f32.mrb[0].mxu0
        %v5967 = vadd.f32 %v5788, %v5966
        %v5968 = vpop.f32.mrb[0].mxu0
        %v5969 = vadd.f32 %v5792, %v5968
        %5970 = vmatprep.mubr.bf16.mxu0 0
        %5971 = vmatmul.mubr.bf16.gmra.mrb[0].mxu0 %v5779
        %v5972 = vpop.f32.mrb[0].mxu0
        %v5973 = vadd.f32 %v5788, %v5972
        %v5974 = vpop.f32.mrb[0].mxu0
        %v5975 = vadd.f32 %v5792, %v5974
        %v5976 = vpop.f32.mrb[0].mxu0
        %v5977 = vadd.f32 %v5788, %v5976
        %v5978 = vpop.f32.mrb[0].mxu0
        %v5979 = vadd.f32 %v5792, %v5978
        %5980 = vmatprep.mubr.bf16.mxu0 0
        %5981 = vmatmul.mubr.bf16.gmra.mrb[0].mxu0 %v5780
        %v5982 = vpop.f32.mrb[0].mxu0
        %v5983 = vadd.f32 %v5788, %v5982
        %v5984 = vpop.f32.mrb[0].mxu0
        %v5985 = vadd.f32 %v5792, %v5984
        %v5986 = vpop.f32.mrb[0].mxu0
        %v5987 = vadd.f32 %v5788, %v5986
        %v5988 = vpop.f32.mrb[0].mxu0
        %v5989 = vadd.f32 %v5792, %v5988
        %5990 = vmatprep.mubr.bf16.mxu0 0
        %5991 = vmatmul.mubr.bf16.gmra.mrb[0].mxu0 %v5781
        %v5992 = vpop.f32.mrb[0].mxu0
        %v5993 = vadd.f32 %v5788, %v5992
        %v5994 = vpop.f32.mrb[0].mxu0
        %v5995 = vadd.f32 %v5792, %v5994
        %v5996 = vpop.f32.mrb[0].mxu0
        %v5997 = vadd.f32 %v5788, %v5996
        %v5998 = vpop.f32.mrb[0].mxu0
        %v5999 = vadd.f32 %v5792, %v5998
        %6000 = vdwg.mxu0
        %6001 = vmatprep.subr.bf16.mxu0 0
        %6002 = vmatpush1.bf16.msra.mxu0 %v5882
        %6003 = vmatprep.subr.bf16.mxu0 0
        %6004 = vmatpush1.bf16.msra.mxu0 %v5885
        %6005 = vmatprep.subr.bf16.mxu0 0
        %6006 = vmatpush1.bf16.msra.mxu0 %v5888
        %6007 = vmatprep.subr.bf16.mxu0 0
        %6008 = vmatpush1.bf16.msra.mxu0 %v5891
        %6009 = vmatprep.subr.bf16.mxu0 0
        %6010 = vmatpush1.bf16.msra.mxu0 %v5894
        %6011 = vmatprep.subr.bf16.mxu0 0
        %6012 = vmatpush1.bf16.msra.mxu0 %v5897
        %6013 = vmatprep.subr.bf16.mxu0 0
        %6014 = vmatpush1.bf16.msra.mxu0 %v5900
        %6015 = vmatprep.subr.bf16.mxu0 0
        %6016 = vmatpush1.bf16.msra.mxu0 %v5903
        %6017 = vmatprep.subr.bf16.mxu0 0
        %6018 = vmatpush1.bf16.msra.mxu0 0
        %6019 = vmatprep.subr.bf16.mxu0 0
        %6020 = vmatpush1.bf16.msra.mxu0 0
        %6021 = vmatprep.subr.bf16.mxu0 0
        %6022 = vmatpush1.bf16.msra.mxu0 0
        %6023 = vmatprep.subr.bf16.mxu0 0
        %6024 = vmatpush1.bf16.msra.mxu0 0
        %6025 = vmatprep.subr.bf16.mxu0 0
        %6026 = vmatpush1.bf16.msra.mxu0 0
        %6027 = vmatprep.subr.bf16.mxu0 0
        %6028 = vmatpush1.bf16.msra.mxu0 0
        %6029 = vmatprep.subr.bf16.mxu0 0
        %6030 = vmatpush1.bf16.msra.mxu0 0
        %6031 = vmatprep.subr.bf16.mxu0 0
        %6032 = vmatpush1.bf16.msra.mxu0 0
        %6033 = vmatprep.mubr.bf16.mxu0 0
        %6034 = vmatmul.mubr.bf16.gmra.mrb[0].mxu0 %v5778
        %v6035 = vpop.f32.mrb[0].mxu0
        %v6036 = vadd.f32 %v5796, %v6035
        %v6037 = vpop.f32.mrb[0].mxu0
        %v6038 = vpop.f32.mrb[0].mxu0
        %v6039 = vadd.f32 %v5796, %v6038
        %v6040 = vpop.f32.mrb[0].mxu0
        %6041 = vmatprep.mubr.bf16.mxu0 0
        %6042 = vmatmul.mubr.bf16.gmra.mrb[0].mxu0 %v5779
        %v6043 = vpop.f32.mrb[0].mxu0
        %v6044 = vadd.f32 %v5796, %v6043
        %v6045 = vpop.f32.mrb[0].mxu0
        %v6046 = vpop.f32.mrb[0].mxu0
        %v6047 = vadd.f32 %v5796, %v6046
        %v6048 = vpop.f32.mrb[0].mxu0
        %6049 = vmatprep.mubr.bf16.mxu0 0
        %6050 = vmatmul.mubr.bf16.gmra.mrb[0].mxu0 %v5780
        %v6051 = vpop.f32.mrb[0].mxu0
        %v6052 = vadd.f32 %v5796, %v6051
        %v6053 = vpop.f32.mrb[0].mxu0
        %v6054 = vpop.f32.mrb[0].mxu0
        %v6055 = vadd.f32 %v5796, %v6054
        %v6056 = vpop.f32.mrb[0].mxu0
        %6057 = vmatprep.mubr.bf16.mxu0 0
        %6058 = vmatmul.mubr.bf16.gmra.mrb[0].mxu0 %v5781
        %v6059 = vpop.f32.mrb[0].mxu0
        %v6060 = vadd.f32 %v5796, %v6059
        %v6061 = vpop.f32.mrb[0].mxu0
        %v6062 = vpop.f32.mrb[0].mxu0
        %v6063 = vadd.f32 %v5796, %v6062
        %v6064 = vpop.f32.mrb[0].mxu0
        %6065 = vdwg.mxu0
        %v6066 = vmul.f32 %v5963, 0.17677669
        %v6067 = vmul.f32 %v5967, 0.17677669
        %v6068 = vmul.f32 %v5973, 0.17677669
        %v6069 = vmul.f32 %v5977, 0.17677669
        %v6070 = vmul.f32 %v5983, 0.17677669
        %v6071 = vmul.f32 %v5987, 0.17677669
        %v6072 = vmul.f32 %v5993, 0.17677669
        %v6073 = vmul.f32 %v5997, 0.17677669
        %v6074 = vpack.c.bf16 %v6067, %v6066
        %v6075 = vpack.c.bf16 %v6069, %v6068
        %v6076 = vpack.c.bf16 %v6071, %v6070
        %v6077 = vpack.c.bf16 %v6073, %v6072
        %v6078 = vpack.c.bf16 %v5969, %v5965
        %v6079 = vpack.c.bf16 %v5979, %v5975
        %v6080 = vpack.c.bf16 %v5989, %v5985
        %v6081 = vpack.c.bf16 %v5999, %v5995
        %v6082 = vpack.c.bf16 %v6039, %v6036
        %v6083 = vpack.c.bf16 %v6047, %v6044
        %v6084 = vpack.c.bf16 %v6055, %v6052
        %v6085 = vpack.c.bf16 %v6063, %v6060
        %v6087 = vsel %vm918, %v6074, 0
        %v6090 = vsel %vm918, %v6075, 0
        %v6093 = vsel %vm918, %v6076, 0
        %v6096 = vsel %vm918, %v6077, 0
        %v6099 = vsel %vm918, %v6078, 0
        %v6102 = vsel %vm918, %v6079, 0
        %v6105 = vsel %vm918, %v6080, 0
        %v6108 = vsel %vm918, %v6081, 0
        %6110 = vmatprep.subr.bf16.mxu0 0
        %6111 = vmatpush1.bf16.xpose.msra.mxu0 %v6099
        %6112 = vmatprep.subr.bf16.mxu0 0
        %6113 = vmatpush1.bf16.xpose.msra.mxu0 %v6102
        %6114 = vmatprep.subr.bf16.mxu0 0
        %6115 = vmatpush1.bf16.xpose.msra.mxu0 %v6105
        %6116 = vmatprep.subr.bf16.mxu0 0
        %6117 = vmatpush1.bf16.xpose.msra.mxu0 %v6108
        %6118 = vmatprep.subr.bf16.mxu0 0
        %6119 = vmatpush1.bf16.xpose.msra.mxu0 0
        %6120 = vmatprep.subr.bf16.mxu0 0
        %6121 = vmatpush1.bf16.xpose.msra.mxu0 0
        %6122 = vmatprep.subr.bf16.mxu0 0
        %6123 = vmatpush1.bf16.xpose.msra.mxu0 0
        %6124 = vmatprep.subr.bf16.mxu0 0
        %6125 = vmatpush1.bf16.xpose.msra.mxu0 0
        %6126 = vmatprep.subr.bf16.mxu0 0
        %6127 = vmatpush1.bf16.xpose.msra.mxu0 0
        %6128 = vmatprep.subr.bf16.mxu0 0
        %6129 = vmatpush1.bf16.xpose.msra.mxu0 0
        %6130 = vmatprep.subr.bf16.mxu0 0
        %6131 = vmatpush1.bf16.xpose.msra.mxu0 0
        %6132 = vmatprep.subr.bf16.mxu0 0
        %6133 = vmatpush1.bf16.xpose.msra.mxu0 0
        %6134 = vmatprep.subr.bf16.mxu0 0
        %6135 = vmatpush1.bf16.xpose.msra.mxu0 0
        %6136 = vmatprep.subr.bf16.mxu0 0
        %6137 = vmatpush1.bf16.xpose.msra.mxu0 0
        %6138 = vmatprep.subr.bf16.mxu0 0
        %6139 = vmatpush1.bf16.xpose.msra.mxu0 0
        %6140 = vmatprep.subr.bf16.mxu0 0
        %6141 = vmatpush1.bf16.xpose.msra.mxu0 0
        %6142 = vmatprep.mubr.bf16.mxu0 0
        %6143 = vmatmul.mubr.bf16.gmra.mrb[0].mxu0 %v6087
        %v6144 = vpop.f32.mrb[0].mxu0
        %v6145 = vadd.f32 %v916, %v6144
        %v6146 = vpop.f32.mrb[0].mxu0
        %v6147 = vpop.f32.mrb[0].mxu0
        %v6148 = vadd.f32 %v916, %v6147
        %v6149 = vpop.f32.mrb[0].mxu0
        %6150 = vmatprep.mubr.bf16.mxu0 0
        %6151 = vmatmul.mubr.bf16.gmra.mrb[0].mxu0 %v6090
        %v6152 = vpop.f32.mrb[0].mxu0
        %v6153 = vadd.f32 %v916, %v6152
        %v6154 = vpop.f32.mrb[0].mxu0
        %v6155 = vpop.f32.mrb[0].mxu0
        %v6156 = vadd.f32 %v916, %v6155
        %v6157 = vpop.f32.mrb[0].mxu0
        %6158 = vmatprep.mubr.bf16.mxu0 0
        %6159 = vmatmul.mubr.bf16.gmra.mrb[0].mxu0 %v6093
        %v6160 = vpop.f32.mrb[0].mxu0
        %v6161 = vadd.f32 %v916, %v6160
        %v6162 = vpop.f32.mrb[0].mxu0
        %v6163 = vpop.f32.mrb[0].mxu0
        %v6164 = vadd.f32 %v916, %v6163
        %v6165 = vpop.f32.mrb[0].mxu0
        %6166 = vmatprep.mubr.bf16.mxu0 0
        %6167 = vmatmul.mubr.bf16.gmra.mrb[0].mxu0 %v6096
        %v6168 = vpop.f32.mrb[0].mxu0
        %v6169 = vadd.f32 %v916, %v6168
        %v6170 = vpop.f32.mrb[0].mxu0
        %v6171 = vpop.f32.mrb[0].mxu0
        %v6172 = vadd.f32 %v916, %v6171
        %v6173 = vpop.f32.mrb[0].mxu0
        %6174 = vdwg.mxu0
        %v6175 = vsel %vm1008, %v6145, -inf
        %6176 = vmax.xlane.f32.xlu0 %v6175
        %v6177 = vpop.xlane.xlu0 %6176
        %v6178 = vsel %vm1008, %v6148, -inf
        %6179 = vmax.xlane.f32.xlu0 %v6178
        %v6180 = vpop.xlane.xlu0 %6179
        %v6181 = vsel %vm1008, %v6153, -inf
        %6182 = vmax.xlane.f32.xlu0 %v6181
        %v6183 = vpop.xlane.xlu0 %6182
        %v6184 = vsel %vm1008, %v6156, -inf
        %6185 = vmax.xlane.f32.xlu0 %v6184
        %v6186 = vpop.xlane.xlu0 %6185
        %v6187 = vsel %vm1008, %v6161, -inf
        %6188 = vmax.xlane.f32.xlu0 %v6187
        %v6189 = vpop.xlane.xlu0 %6188
        %v6190 = vsel %vm1008, %v6164, -inf
        %6191 = vmax.xlane.f32.xlu0 %v6190
        %v6192 = vpop.xlane.xlu0 %6191
        %v6193 = vsel %vm1008, %v6169, -inf
        %6194 = vmax.xlane.f32.xlu0 %v6193
        %v6195 = vpop.xlane.xlu0 %6194
        %v6196 = vsel %vm1008, %v6172, -inf
        %6197 = vmax.xlane.f32.xlu0 %v6196
        %v6198 = vpop.xlane.xlu0 %6197
        %v6199 = vsub.f32 %v6145, %v6177
        %v6200 = vsub.f32 %v6148, %v6180
        %v6201 = vsub.f32 %v6153, %v6183
        %v6202 = vsub.f32 %v6156, %v6186
        %v6203 = vsub.f32 %v6161, %v6189
        %v6204 = vsub.f32 %v6164, %v6192
        %v6205 = vsub.f32 %v6169, %v6195
        %v6206 = vsub.f32 %v6172, %v6198
        %v6207 = vmul.f32 %v6199, 1.442695
        %v6208 = vpow.pop %v6207
        %v6209 = vmul.f32 %v6200, 1.442695
        %v6210 = vpow.pop %v6209
        %v6211 = vmul.f32 %v6201, 1.442695
        %v6212 = vpow.pop %v6211
        %v6213 = vmul.f32 %v6202, 1.442695
        %v6214 = vpow.pop %v6213
        %v6215 = vmul.f32 %v6203, 1.442695
        %v6216 = vpow.pop %v6215
        %v6217 = vmul.f32 %v6204, 1.442695
        %v6218 = vpow.pop %v6217
        %v6219 = vmul.f32 %v6205, 1.442695
        %v6220 = vpow.pop %v6219
        %v6221 = vmul.f32 %v6206, 1.442695
        %v6222 = vpow.pop %v6221
        %v6223 = vsel %vm1008, %v6208, 0.0
        %6224 = vadd.xlane.f32.xlu0 %v6223
        %v6225 = vpop.xlane.xlu0 %6224
        %v6226 = vsel %vm1008, %v6210, 0.0
        %6227 = vadd.xlane.f32.xlu0 %v6226
        %v6228 = vpop.xlane.xlu0 %6227
        %v6229 = vsel %vm1008, %v6212, 0.0
        %6230 = vadd.xlane.f32.xlu0 %v6229
        %v6231 = vpop.xlane.xlu0 %6230
        %v6232 = vsel %vm1008, %v6214, 0.0
        %6233 = vadd.xlane.f32.xlu0 %v6232
        %v6234 = vpop.xlane.xlu0 %6233
        %v6235 = vsel %vm1008, %v6216, 0.0
        %6236 = vadd.xlane.f32.xlu0 %v6235
        %v6237 = vpop.xlane.xlu0 %6236
        %v6238 = vsel %vm1008, %v6218, 0.0
        %6239 = vadd.xlane.f32.xlu0 %v6238
        %v6240 = vpop.xlane.xlu0 %6239
        %v6241 = vsel %vm1008, %v6220, 0.0
        %6242 = vadd.xlane.f32.xlu0 %v6241
        %v6243 = vpop.xlane.xlu0 %6242
        %v6244 = vsel %vm1008, %v6222, 0.0
        %6245 = vadd.xlane.f32.xlu0 %v6244
        %v6246 = vpop.xlane.xlu0 %6245
        %v6247 = vrcp.pop %v6225
        %v6248 = vrcp.pop %v6228
        %v6249 = vrcp.pop %v6231
        %v6250 = vrcp.pop %v6234
        %v6251 = vrcp.pop %v6237
        %v6252 = vrcp.pop %v6240
        %v6253 = vrcp.pop %v6243
        %v6254 = vrcp.pop %v6246
        %v6255 = vmul.f32 %v6208, %v6247
        %v6256 = vmul.f32 %v6210, %v6248
        %v6257 = vmul.f32 %v6212, %v6249
        %v6258 = vmul.f32 %v6214, %v6250
        %v6259 = vmul.f32 %v6216, %v6251
        %v6260 = vmul.f32 %v6218, %v6252
        %v6261 = vmul.f32 %v6220, %v6253
        %v6262 = vmul.f32 %v6222, %v6254
        %v6263 = vpack.c.bf16 %v6256, %v6255
        %v6264 = vpack.c.bf16 %v6258, %v6257
        %v6265 = vpack.c.bf16 %v6260, %v6259
        %v6266 = vpack.c.bf16 %v6262, %v6261
        %v6268 = vsel %vm1008, %v6263, 0
        %v6271 = vsel %vm1008, %v6264, 0
        %v6274 = vsel %vm1008, %v6265, 0
        %v6277 = vsel %vm1008, %v6266, 0
        %6279 = vmatprep.subr.bf16.mxu0 0
        %6280 = vmatpush1.bf16.msra.mxu0 %v6082
        %6281 = vmatprep.subr.bf16.mxu0 0
        %6282 = vmatpush1.bf16.msra.mxu0 %v6083
        %6283 = vmatprep.subr.bf16.mxu0 0
        %6284 = vmatpush1.bf16.msra.mxu0 %v6084
        %6285 = vmatprep.subr.bf16.mxu0 0
        %6286 = vmatpush1.bf16.msra.mxu0 %v6085
        %6287 = vmatprep.subr.bf16.mxu0 0
        %6288 = vmatpush1.bf16.msra.mxu0 0
        %6289 = vmatprep.subr.bf16.mxu0 0
        %6290 = vmatpush1.bf16.msra.mxu0 0
        %6291 = vmatprep.subr.bf16.mxu0 0
        %6292 = vmatpush1.bf16.msra.mxu0 0
        %6293 = vmatprep.subr.bf16.mxu0 0
        %6294 = vmatpush1.bf16.msra.mxu0 0
        %6295 = vmatprep.subr.bf16.mxu0 0
        %6296 = vmatpush1.bf16.msra.mxu0 0
        %6297 = vmatprep.subr.bf16.mxu0 0
        %6298 = vmatpush1.bf16.msra.mxu0 0
        %6299 = vmatprep.subr.bf16.mxu0 0
        %6300 = vmatpush1.bf16.msra.mxu0 0
        %6301 = vmatprep.subr.bf16.mxu0 0
        %6302 = vmatpush1.bf16.msra.mxu0 0
        %6303 = vmatprep.subr.bf16.mxu0 0
        %6304 = vmatpush1.bf16.msra.mxu0 0
        %6305 = vmatprep.subr.bf16.mxu0 0
        %6306 = vmatpush1.bf16.msra.mxu0 0
        %6307 = vmatprep.subr.bf16.mxu0 0
        %6308 = vmatpush1.bf16.msra.mxu0 0
        %6309 = vmatprep.subr.bf16.mxu0 0
        %6310 = vmatpush1.bf16.msra.mxu0 0
        %6311 = vmatprep.mubr.bf16.mxu0 0
        %6312 = vmatmul.mubr.bf16.gmra.mrb[0].mxu0 %v6268
        %v6313 = vpop.f32.mrb[0].mxu0
        %v6314 = vadd.f32 0.0, %v6313
        %v6315 = vpop.f32.mrb[0].mxu0
        %v6316 = vpop.f32.mrb[0].mxu0
        %v6317 = vadd.f32 0.0, %v6316
        %v6318 = vpop.f32.mrb[0].mxu0
        %6319 = vmatprep.mubr.bf16.mxu0 0
        %6320 = vmatmul.mubr.bf16.gmra.mrb[0].mxu0 %v6271
        %v6321 = vpop.f32.mrb[0].mxu0
        %v6322 = vadd.f32 0.0, %v6321
        %v6323 = vpop.f32.mrb[0].mxu0
        %v6324 = vpop.f32.mrb[0].mxu0
        %v6325 = vadd.f32 0.0, %v6324
        %v6326 = vpop.f32.mrb[0].mxu0
        %6327 = vmatprep.mubr.bf16.mxu0 0
        %6328 = vmatmul.mubr.bf16.gmra.mrb[0].mxu0 %v6274
        %v6329 = vpop.f32.mrb[0].mxu0
        %v6330 = vadd.f32 0.0, %v6329
        %v6331 = vpop.f32.mrb[0].mxu0
        %v6332 = vpop.f32.mrb[0].mxu0
        %v6333 = vadd.f32 0.0, %v6332
        %v6334 = vpop.f32.mrb[0].mxu0
        %6335 = vmatprep.mubr.bf16.mxu0 0
        %6336 = vmatmul.mubr.bf16.gmra.mrb[0].mxu0 %v6277
        %v6337 = vpop.f32.mrb[0].mxu0
        %v6338 = vadd.f32 0.0, %v6337
        %v6339 = vpop.f32.mrb[0].mxu0
        %v6340 = vpop.f32.mrb[0].mxu0
        %v6341 = vadd.f32 0.0, %v6340
        %v6342 = vpop.f32.mrb[0].mxu0
        %6343 = vdwg.mxu0
        %6348 = vrot.lane.b32.xlu0 %v6074, 96
        %v6349 = vpop.permute.xlu0 %6348
        %6350 = vrot.lane.b32.xlu0 %v6075, 96
        %v6351 = vpop.permute.xlu0 %6350
        %6352 = vrot.lane.b32.xlu0 %v6076, 96
        %v6353 = vpop.permute.xlu0 %6352
        %6354 = vrot.lane.b32.xlu0 %v6077, 96
        %v6355 = vpop.permute.xlu0 %6354
        %6360 = vrot.lane.b32.xlu0 %v6078, 96
        %v6361 = vpop.permute.xlu0 %6360
        %6362 = vrot.lane.b32.xlu0 %v6079, 96
        %v6363 = vpop.permute.xlu0 %6362
        %6364 = vrot.lane.b32.xlu0 %v6080, 96
        %v6365 = vpop.permute.xlu0 %6364
        %6366 = vrot.lane.b32.xlu0 %v6081, 96
        %v6367 = vpop.permute.xlu0 %6366
        %v6369 = vsel %vm918, %v6349, 0
        %v6372 = vsel %vm918, %v6351, 0
        %v6375 = vsel %vm918, %v6353, 0
        %v6378 = vsel %vm918, %v6355, 0
        %v6381 = vsel %vm918, %v6361, 0
        %v6384 = vsel %vm918, %v6363, 0
        %v6387 = vsel %vm918, %v6365, 0
        %v6390 = vsel %vm918, %v6367, 0
        %6392 = vmatprep.subr.bf16.mxu0 0
        %6393 = vmatpush1.bf16.xpose.msra.mxu0 %v6381
        %6394 = vmatprep.subr.bf16.mxu0 0
        %6395 = vmatpush1.bf16.xpose.msra.mxu0 %v6384
        %6396 = vmatprep.subr.bf16.mxu0 0
        %6397 = vmatpush1.bf16.xpose.msra.mxu0 %v6387
        %6398 = vmatprep.subr.bf16.mxu0 0
        %6399 = vmatpush1.bf16.xpose.msra.mxu0 %v6390
        %6400 = vmatprep.subr.bf16.mxu0 0
        %6401 = vmatpush1.bf16.xpose.msra.mxu0 0
        %6402 = vmatprep.subr.bf16.mxu0 0
        %6403 = vmatpush1.bf16.xpose.msra.mxu0 0
        %6404 = vmatprep.subr.bf16.mxu0 0
        %6405 = vmatpush1.bf16.xpose.msra.mxu0 0
        %6406 = vmatprep.subr.bf16.mxu0 0
        %6407 = vmatpush1.bf16.xpose.msra.mxu0 0
        %6408 = vmatprep.subr.bf16.mxu0 0
        %6409 = vmatpush1.bf16.xpose.msra.mxu0 0
        %6410 = vmatprep.subr.bf16.mxu0 0
        %6411 = vmatpush1.bf16.xpose.msra.mxu0 0
        %6412 = vmatprep.subr.bf16.mxu0 0
        %6413 = vmatpush1.bf16.xpose.msra.mxu0 0
        %6414 = vmatprep.subr.bf16.mxu0 0
        %6415 = vmatpush1.bf16.xpose.msra.mxu0 0
        %6416 = vmatprep.subr.bf16.mxu0 0
        %6417 = vmatpush1.bf16.xpose.msra.mxu0 0
        %6418 = vmatprep.subr.bf16.mxu0 0
        %6419 = vmatpush1.bf16.xpose.msra.mxu0 0
        %6420 = vmatprep.subr.bf16.mxu0 0
        %6421 = vmatpush1.bf16.xpose.msra.mxu0 0
        %6422 = vmatprep.subr.bf16.mxu0 0
        %6423 = vmatpush1.bf16.xpose.msra.mxu0 0
        %6424 = vmatprep.mubr.bf16.mxu0 0
        %6425 = vmatmul.mubr.bf16.gmra.mrb[0].mxu0 %v6369
        %v6426 = vpop.f32.mrb[0].mxu0
        %v6427 = vadd.f32 %v916, %v6426
        %v6428 = vpop.f32.mrb[0].mxu0
        %v6429 = vpop.f32.mrb[0].mxu0
        %v6430 = vadd.f32 %v916, %v6429
        %v6431 = vpop.f32.mrb[0].mxu0
        %6432 = vmatprep.mubr.bf16.mxu0 0
        %6433 = vmatmul.mubr.bf16.gmra.mrb[0].mxu0 %v6372
        %v6434 = vpop.f32.mrb[0].mxu0
        %v6435 = vadd.f32 %v916, %v6434
        %v6436 = vpop.f32.mrb[0].mxu0
        %v6437 = vpop.f32.mrb[0].mxu0
        %v6438 = vadd.f32 %v916, %v6437
        %v6439 = vpop.f32.mrb[0].mxu0
        %6440 = vmatprep.mubr.bf16.mxu0 0
        %6441 = vmatmul.mubr.bf16.gmra.mrb[0].mxu0 %v6375
        %v6442 = vpop.f32.mrb[0].mxu0
        %v6443 = vadd.f32 %v916, %v6442
        %v6444 = vpop.f32.mrb[0].mxu0
        %v6445 = vpop.f32.mrb[0].mxu0
        %v6446 = vadd.f32 %v916, %v6445
        %v6447 = vpop.f32.mrb[0].mxu0
        %6448 = vmatprep.mubr.bf16.mxu0 0
        %6449 = vmatmul.mubr.bf16.gmra.mrb[0].mxu0 %v6378
        %v6450 = vpop.f32.mrb[0].mxu0
        %v6451 = vadd.f32 %v916, %v6450
        %v6452 = vpop.f32.mrb[0].mxu0
        %v6453 = vpop.f32.mrb[0].mxu0
        %v6454 = vadd.f32 %v916, %v6453
        %v6455 = vpop.f32.mrb[0].mxu0
        %6456 = vdwg.mxu0
        %v6457 = vsel %vm1008, %v6427, -inf
        %6458 = vmax.xlane.f32.xlu0 %v6457
        %v6459 = vpop.xlane.xlu0 %6458
        %v6460 = vsel %vm1008, %v6430, -inf
        %6461 = vmax.xlane.f32.xlu0 %v6460
        %v6462 = vpop.xlane.xlu0 %6461
        %v6463 = vsel %vm1008, %v6435, -inf
        %6464 = vmax.xlane.f32.xlu0 %v6463
        %v6465 = vpop.xlane.xlu0 %6464
        %v6466 = vsel %vm1008, %v6438, -inf
        %6467 = vmax.xlane.f32.xlu0 %v6466
        %v6468 = vpop.xlane.xlu0 %6467
        %v6469 = vsel %vm1008, %v6443, -inf
        %6470 = vmax.xlane.f32.xlu0 %v6469
        %v6471 = vpop.xlane.xlu0 %6470
        %v6472 = vsel %vm1008, %v6446, -inf
        %6473 = vmax.xlane.f32.xlu0 %v6472
        %v6474 = vpop.xlane.xlu0 %6473
        %v6475 = vsel %vm1008, %v6451, -inf
        %6476 = vmax.xlane.f32.xlu0 %v6475
        %v6477 = vpop.xlane.xlu0 %6476
        %v6478 = vsel %vm1008, %v6454, -inf
        %6479 = vmax.xlane.f32.xlu0 %v6478
        %v6480 = vpop.xlane.xlu0 %6479
        %v6481 = vsub.f32 %v6427, %v6459
        %v6482 = vsub.f32 %v6430, %v6462
        %v6483 = vsub.f32 %v6435, %v6465
        %v6484 = vsub.f32 %v6438, %v6468
        %v6485 = vsub.f32 %v6443, %v6471
        %v6486 = vsub.f32 %v6446, %v6474
        %v6487 = vsub.f32 %v6451, %v6477
        %v6488 = vsub.f32 %v6454, %v6480
        %v6489 = vmul.f32 %v6481, 1.442695
        %v6490 = vpow.pop %v6489
        %v6491 = vmul.f32 %v6482, 1.442695
        %v6492 = vpow.pop %v6491
        %v6493 = vmul.f32 %v6483, 1.442695
        %v6494 = vpow.pop %v6493
        %v6495 = vmul.f32 %v6484, 1.442695
        %v6496 = vpow.pop %v6495
        %v6497 = vmul.f32 %v6485, 1.442695
        %v6498 = vpow.pop %v6497
        %v6499 = vmul.f32 %v6486, 1.442695
        %v6500 = vpow.pop %v6499
        %v6501 = vmul.f32 %v6487, 1.442695
        %v6502 = vpow.pop %v6501
        %v6503 = vmul.f32 %v6488, 1.442695
        %v6504 = vpow.pop %v6503
        %v6505 = vsel %vm1008, %v6490, 0.0
        %6506 = vadd.xlane.f32.xlu0 %v6505
        %v6507 = vpop.xlane.xlu0 %6506
        %v6508 = vsel %vm1008, %v6492, 0.0
        %6509 = vadd.xlane.f32.xlu0 %v6508
        %v6510 = vpop.xlane.xlu0 %6509
        %v6511 = vsel %vm1008, %v6494, 0.0
        %6512 = vadd.xlane.f32.xlu0 %v6511
        %v6513 = vpop.xlane.xlu0 %6512
        %v6514 = vsel %vm1008, %v6496, 0.0
        %6515 = vadd.xlane.f32.xlu0 %v6514
        %v6516 = vpop.xlane.xlu0 %6515
        %v6517 = vsel %vm1008, %v6498, 0.0
        %6518 = vadd.xlane.f32.xlu0 %v6517
        %v6519 = vpop.xlane.xlu0 %6518
        %v6520 = vsel %vm1008, %v6500, 0.0
        %6521 = vadd.xlane.f32.xlu0 %v6520
        %v6522 = vpop.xlane.xlu0 %6521
        %v6523 = vsel %vm1008, %v6502, 0.0
        %6524 = vadd.xlane.f32.xlu0 %v6523
        %v6525 = vpop.xlane.xlu0 %6524
        %v6526 = vsel %vm1008, %v6504, 0.0
        %6527 = vadd.xlane.f32.xlu0 %v6526
        %v6528 = vpop.xlane.xlu0 %6527
        %v6529 = vrcp.pop %v6507
        %v6530 = vrcp.pop %v6510
        %v6531 = vrcp.pop %v6513
        %v6532 = vrcp.pop %v6516
        %v6533 = vrcp.pop %v6519
        %v6534 = vrcp.pop %v6522
        %v6535 = vrcp.pop %v6525
        %v6536 = vrcp.pop %v6528
        %v6537 = vmul.f32 %v6490, %v6529
        %v6538 = vmul.f32 %v6492, %v6530
        %v6539 = vmul.f32 %v6494, %v6531
        %v6540 = vmul.f32 %v6496, %v6532
        %v6541 = vmul.f32 %v6498, %v6533
        %v6542 = vmul.f32 %v6500, %v6534
        %v6543 = vmul.f32 %v6502, %v6535
        %v6544 = vmul.f32 %v6504, %v6536
        %v6545 = vpack.c.bf16 %v6538, %v6537
        %v6546 = vpack.c.bf16 %v6540, %v6539
        %v6547 = vpack.c.bf16 %v6542, %v6541
        %v6548 = vpack.c.bf16 %v6544, %v6543
        %6553 = vrot.lane.b32.xlu0 %v6082, 96
        %v6554 = vpop.permute.xlu0 %6553
        %6555 = vrot.lane.b32.xlu0 %v6083, 96
        %v6556 = vpop.permute.xlu0 %6555
        %6557 = vrot.lane.b32.xlu0 %v6084, 96
        %v6558 = vpop.permute.xlu0 %6557
        %6559 = vrot.lane.b32.xlu0 %v6085, 96
        %v6560 = vpop.permute.xlu0 %6559
        %v6566 = vsel %vm1008, %v6545, 0
        %v6569 = vsel %vm1008, %v6546, 0
        %v6572 = vsel %vm1008, %v6547, 0
        %v6575 = vsel %vm1008, %v6548, 0
        %6577 = vmatprep.subr.bf16.mxu0 0
        %6578 = vmatpush1.bf16.msra.mxu0 %v6554
        %6579 = vmatprep.subr.bf16.mxu0 0
        %6580 = vmatpush1.bf16.msra.mxu0 %v6556
        %6581 = vmatprep.subr.bf16.mxu0 0
        %6582 = vmatpush1.bf16.msra.mxu0 %v6558
        %6583 = vmatprep.subr.bf16.mxu0 0
        %6584 = vmatpush1.bf16.msra.mxu0 %v6560
        %6585 = vmatprep.subr.bf16.mxu0 0
        %6586 = vmatpush1.bf16.msra.mxu0 0
        %6587 = vmatprep.subr.bf16.mxu0 0
        %6588 = vmatpush1.bf16.msra.mxu0 0
        %6589 = vmatprep.subr.bf16.mxu0 0
        %6590 = vmatpush1.bf16.msra.mxu0 0
        %6591 = vmatprep.subr.bf16.mxu0 0
        %6592 = vmatpush1.bf16.msra.mxu0 0
        %6593 = vmatprep.subr.bf16.mxu0 0
        %6594 = vmatpush1.bf16.msra.mxu0 0
        %6595 = vmatprep.subr.bf16.mxu0 0
        %6596 = vmatpush1.bf16.msra.mxu0 0
        %6597 = vmatprep.subr.bf16.mxu0 0
        %6598 = vmatpush1.bf16.msra.mxu0 0
        %6599 = vmatprep.subr.bf16.mxu0 0
        %6600 = vmatpush1.bf16.msra.mxu0 0
        %6601 = vmatprep.subr.bf16.mxu0 0
        %6602 = vmatpush1.bf16.msra.mxu0 0
        %6603 = vmatprep.subr.bf16.mxu0 0
        %6604 = vmatpush1.bf16.msra.mxu0 0
        %6605 = vmatprep.subr.bf16.mxu0 0
        %6606 = vmatpush1.bf16.msra.mxu0 0
        %6607 = vmatprep.subr.bf16.mxu0 0
        %6608 = vmatpush1.bf16.msra.mxu0 0
        %6609 = vmatprep.mubr.bf16.mxu0 0
        %6610 = vmatmul.mubr.bf16.gmra.mrb[0].mxu0 %v6566
        %v6611 = vpop.f32.mrb[0].mxu0
        %v6612 = vadd.f32 0.0, %v6611
        %v6613 = vpop.f32.mrb[0].mxu0
        %v6614 = vpop.f32.mrb[0].mxu0
        %v6615 = vadd.f32 0.0, %v6614
        %v6616 = vpop.f32.mrb[0].mxu0
        %6617 = vmatprep.mubr.bf16.mxu0 0
        %6618 = vmatmul.mubr.bf16.gmra.mrb[0].mxu0 %v6569
        %v6619 = vpop.f32.mrb[0].mxu0
        %v6620 = vadd.f32 0.0, %v6619
        %v6621 = vpop.f32.mrb[0].mxu0
        %v6622 = vpop.f32.mrb[0].mxu0
        %v6623 = vadd.f32 0.0, %v6622
        %v6624 = vpop.f32.mrb[0].mxu0
        %6625 = vmatprep.mubr.bf16.mxu0 0
        %6626 = vmatmul.mubr.bf16.gmra.mrb[0].mxu0 %v6572
        %v6627 = vpop.f32.mrb[0].mxu0
        %v6628 = vadd.f32 0.0, %v6627
        %v6629 = vpop.f32.mrb[0].mxu0
        %v6630 = vpop.f32.mrb[0].mxu0
        %v6631 = vadd.f32 0.0, %v6630
        %v6632 = vpop.f32.mrb[0].mxu0
        %6633 = vmatprep.mubr.bf16.mxu0 0
        %6634 = vmatmul.mubr.bf16.gmra.mrb[0].mxu0 %v6575
        %v6635 = vpop.f32.mrb[0].mxu0
        %v6636 = vadd.f32 0.0, %v6635
        %v6637 = vpop.f32.mrb[0].mxu0
        %v6638 = vpop.f32.mrb[0].mxu0
        %v6639 = vadd.f32 0.0, %v6638
        %v6640 = vpop.f32.mrb[0].mxu0
        %6641 = vdwg.mxu0
        %6642 = vrot.lane.b32.xlu0 %v6074, 64
        %v6643 = vpop.permute.xlu0 %6642
        %6644 = vrot.lane.b32.xlu0 %v6075, 64
        %v6645 = vpop.permute.xlu0 %6644
        %6646 = vrot.lane.b32.xlu0 %v6076, 64
        %v6647 = vpop.permute.xlu0 %6646
        %6648 = vrot.lane.b32.xlu0 %v6077, 64
        %v6649 = vpop.permute.xlu0 %6648
        %6650 = vrot.lane.b32.xlu0 %v6078, 64
        %v6651 = vpop.permute.xlu0 %6650
        %6652 = vrot.lane.b32.xlu0 %v6079, 64
        %v6653 = vpop.permute.xlu0 %6652
        %6654 = vrot.lane.b32.xlu0 %v6080, 64
        %v6655 = vpop.permute.xlu0 %6654
        %6656 = vrot.lane.b32.xlu0 %v6081, 64
        %v6657 = vpop.permute.xlu0 %6656
        %v6659 = vsel %vm918, %v6643, 0
        %v6662 = vsel %vm918, %v6645, 0
        %v6665 = vsel %vm918, %v6647, 0
        %v6668 = vsel %vm918, %v6649, 0
        %v6671 = vsel %vm918, %v6651, 0
        %v6674 = vsel %vm918, %v6653, 0
        %v6677 = vsel %vm918, %v6655, 0
        %v6680 = vsel %vm918, %v6657, 0
        %6682 = vmatprep.subr.bf16.mxu0 0
        %6683 = vmatpush1.bf16.xpose.msra.mxu0 %v6671
        %6684 = vmatprep.subr.bf16.mxu0 0
        %6685 = vmatpush1.bf16.xpose.msra.mxu0 %v6674
        %6686 = vmatprep.subr.bf16.mxu0 0
        %6687 = vmatpush1.bf16.xpose.msra.mxu0 %v6677
        %6688 = vmatprep.subr.bf16.mxu0 0
        %6689 = vmatpush1.bf16.xpose.msra.mxu0 %v6680
        %6690 = vmatprep.subr.bf16.mxu0 0
        %6691 = vmatpush1.bf16.xpose.msra.mxu0 0
        %6692 = vmatprep.subr.bf16.mxu0 0
        %6693 = vmatpush1.bf16.xpose.msra.mxu0 0
        %6694 = vmatprep.subr.bf16.mxu0 0
        %6695 = vmatpush1.bf16.xpose.msra.mxu0 0
        %6696 = vmatprep.subr.bf16.mxu0 0
        %6697 = vmatpush1.bf16.xpose.msra.mxu0 0
        %6698 = vmatprep.subr.bf16.mxu0 0
        %6699 = vmatpush1.bf16.xpose.msra.mxu0 0
        %6700 = vmatprep.subr.bf16.mxu0 0
        %6701 = vmatpush1.bf16.xpose.msra.mxu0 0
        %6702 = vmatprep.subr.bf16.mxu0 0
        %6703 = vmatpush1.bf16.xpose.msra.mxu0 0
        %6704 = vmatprep.subr.bf16.mxu0 0
        %6705 = vmatpush1.bf16.xpose.msra.mxu0 0
        %6706 = vmatprep.subr.bf16.mxu0 0
        %6707 = vmatpush1.bf16.xpose.msra.mxu0 0
        %6708 = vmatprep.subr.bf16.mxu0 0
        %6709 = vmatpush1.bf16.xpose.msra.mxu0 0
        %6710 = vmatprep.subr.bf16.mxu0 0
        %6711 = vmatpush1.bf16.xpose.msra.mxu0 0
        %6712 = vmatprep.subr.bf16.mxu0 0
        %6713 = vmatpush1.bf16.xpose.msra.mxu0 0
        %6714 = vmatprep.mubr.bf16.mxu0 0
        %6715 = vmatmul.mubr.bf16.gmra.mrb[0].mxu0 %v6659
        %v6716 = vpop.f32.mrb[0].mxu0
        %v6717 = vadd.f32 %v916, %v6716
        %v6718 = vpop.f32.mrb[0].mxu0
        %v6719 = vpop.f32.mrb[0].mxu0
        %v6720 = vadd.f32 %v916, %v6719
        %v6721 = vpop.f32.mrb[0].mxu0
        %6722 = vmatprep.mubr.bf16.mxu0 0
        %6723 = vmatmul.mubr.bf16.gmra.mrb[0].mxu0 %v6662
        %v6724 = vpop.f32.mrb[0].mxu0
        %v6725 = vadd.f32 %v916, %v6724
        %v6726 = vpop.f32.mrb[0].mxu0
        %v6727 = vpop.f32.mrb[0].mxu0
        %v6728 = vadd.f32 %v916, %v6727
        %v6729 = vpop.f32.mrb[0].mxu0
        %6730 = vmatprep.mubr.bf16.mxu0 0
        %6731 = vmatmul.mubr.bf16.gmra.mrb[0].mxu0 %v6665
        %v6732 = vpop.f32.mrb[0].mxu0
        %v6733 = vadd.f32 %v916, %v6732
        %v6734 = vpop.f32.mrb[0].mxu0
        %v6735 = vpop.f32.mrb[0].mxu0
        %v6736 = vadd.f32 %v916, %v6735
        %v6737 = vpop.f32.mrb[0].mxu0
        %6738 = vmatprep.mubr.bf16.mxu0 0
        %6739 = vmatmul.mubr.bf16.gmra.mrb[0].mxu0 %v6668
        %v6740 = vpop.f32.mrb[0].mxu0
        %v6741 = vadd.f32 %v916, %v6740
        %v6742 = vpop.f32.mrb[0].mxu0
        %v6743 = vpop.f32.mrb[0].mxu0
        %v6744 = vadd.f32 %v916, %v6743
        %v6745 = vpop.f32.mrb[0].mxu0
        %6746 = vdwg.mxu0
        %v6747 = vsel %vm1008, %v6717, -inf
        %6748 = vmax.xlane.f32.xlu0 %v6747
        %v6749 = vpop.xlane.xlu0 %6748
        %v6750 = vsel %vm1008, %v6720, -inf
        %6751 = vmax.xlane.f32.xlu0 %v6750
        %v6752 = vpop.xlane.xlu0 %6751
        %v6753 = vsel %vm1008, %v6725, -inf
        %6754 = vmax.xlane.f32.xlu0 %v6753
        %v6755 = vpop.xlane.xlu0 %6754
        %v6756 = vsel %vm1008, %v6728, -inf
        %6757 = vmax.xlane.f32.xlu0 %v6756
        %v6758 = vpop.xlane.xlu0 %6757
        %v6759 = vsel %vm1008, %v6733, -inf
        %6760 = vmax.xlane.f32.xlu0 %v6759
        %v6761 = vpop.xlane.xlu0 %6760
        %v6762 = vsel %vm1008, %v6736, -inf
        %6763 = vmax.xlane.f32.xlu0 %v6762
        %v6764 = vpop.xlane.xlu0 %6763
        %v6765 = vsel %vm1008, %v6741, -inf
        %6766 = vmax.xlane.f32.xlu0 %v6765
        %v6767 = vpop.xlane.xlu0 %6766
        %v6768 = vsel %vm1008, %v6744, -inf
        %6769 = vmax.xlane.f32.xlu0 %v6768
        %v6770 = vpop.xlane.xlu0 %6769
        %v6771 = vsub.f32 %v6717, %v6749
        %v6772 = vsub.f32 %v6720, %v6752
        %v6773 = vsub.f32 %v6725, %v6755
        %v6774 = vsub.f32 %v6728, %v6758
        %v6775 = vsub.f32 %v6733, %v6761
        %v6776 = vsub.f32 %v6736, %v6764
        %v6777 = vsub.f32 %v6741, %v6767
        %v6778 = vsub.f32 %v6744, %v6770
        %v6779 = vmul.f32 %v6771, 1.442695
        %v6780 = vpow.pop %v6779
        %v6781 = vmul.f32 %v6772, 1.442695
        %v6782 = vpow.pop %v6781
        %v6783 = vmul.f32 %v6773, 1.442695
        %v6784 = vpow.pop %v6783
        %v6785 = vmul.f32 %v6774, 1.442695
        %v6786 = vpow.pop %v6785
        %v6787 = vmul.f32 %v6775, 1.442695
        %v6788 = vpow.pop %v6787
        %v6789 = vmul.f32 %v6776, 1.442695
        %v6790 = vpow.pop %v6789
        %v6791 = vmul.f32 %v6777, 1.442695
        %v6792 = vpow.pop %v6791
        %v6793 = vmul.f32 %v6778, 1.442695
        %v6794 = vpow.pop %v6793
        %v6795 = vsel %vm1008, %v6780, 0.0
        %6796 = vadd.xlane.f32.xlu0 %v6795
        %v6797 = vpop.xlane.xlu0 %6796
        %v6798 = vsel %vm1008, %v6782, 0.0
        %6799 = vadd.xlane.f32.xlu0 %v6798
        %v6800 = vpop.xlane.xlu0 %6799
        %v6801 = vsel %vm1008, %v6784, 0.0
        %6802 = vadd.xlane.f32.xlu0 %v6801
        %v6803 = vpop.xlane.xlu0 %6802
        %v6804 = vsel %vm1008, %v6786, 0.0
        %6805 = vadd.xlane.f32.xlu0 %v6804
        %v6806 = vpop.xlane.xlu0 %6805
        %v6807 = vsel %vm1008, %v6788, 0.0
        %6808 = vadd.xlane.f32.xlu0 %v6807
        %v6809 = vpop.xlane.xlu0 %6808
        %v6810 = vsel %vm1008, %v6790, 0.0
        %6811 = vadd.xlane.f32.xlu0 %v6810
        %v6812 = vpop.xlane.xlu0 %6811
        %v6813 = vsel %vm1008, %v6792, 0.0
        %6814 = vadd.xlane.f32.xlu0 %v6813
        %v6815 = vpop.xlane.xlu0 %6814
        %v6816 = vsel %vm1008, %v6794, 0.0
        %6817 = vadd.xlane.f32.xlu0 %v6816
        %v6818 = vpop.xlane.xlu0 %6817
        %v6819 = vrcp.pop %v6797
        %v6820 = vrcp.pop %v6800
        %v6821 = vrcp.pop %v6803
        %v6822 = vrcp.pop %v6806
        %v6823 = vrcp.pop %v6809
        %v6824 = vrcp.pop %v6812
        %v6825 = vrcp.pop %v6815
        %v6826 = vrcp.pop %v6818
        %v6827 = vmul.f32 %v6780, %v6819
        %v6828 = vmul.f32 %v6782, %v6820
        %v6829 = vmul.f32 %v6784, %v6821
        %v6830 = vmul.f32 %v6786, %v6822
        %v6831 = vmul.f32 %v6788, %v6823
        %v6832 = vmul.f32 %v6790, %v6824
        %v6833 = vmul.f32 %v6792, %v6825
        %v6834 = vmul.f32 %v6794, %v6826
        %v6835 = vpack.c.bf16 %v6828, %v6827
        %v6836 = vpack.c.bf16 %v6830, %v6829
        %v6837 = vpack.c.bf16 %v6832, %v6831
        %v6838 = vpack.c.bf16 %v6834, %v6833
        %6839 = vrot.lane.b32.xlu0 %v6082, 64
        %v6840 = vpop.permute.xlu0 %6839
        %6841 = vrot.lane.b32.xlu0 %v6083, 64
        %v6842 = vpop.permute.xlu0 %6841
        %6843 = vrot.lane.b32.xlu0 %v6084, 64
        %v6844 = vpop.permute.xlu0 %6843
        %6845 = vrot.lane.b32.xlu0 %v6085, 64
        %v6846 = vpop.permute.xlu0 %6845
        %v6852 = vsel %vm1008, %v6835, 0
        %v6855 = vsel %vm1008, %v6836, 0
        %v6858 = vsel %vm1008, %v6837, 0
        %v6861 = vsel %vm1008, %v6838, 0
        %6863 = vmatprep.subr.bf16.mxu0 0
        %6864 = vmatpush1.bf16.msra.mxu0 %v6840
        %6865 = vmatprep.subr.bf16.mxu0 0
        %6866 = vmatpush1.bf16.msra.mxu0 %v6842
        %6867 = vmatprep.subr.bf16.mxu0 0
        %6868 = vmatpush1.bf16.msra.mxu0 %v6844
        %6869 = vmatprep.subr.bf16.mxu0 0
        %6870 = vmatpush1.bf16.msra.mxu0 %v6846
        %6871 = vmatprep.subr.bf16.mxu0 0
        %6872 = vmatpush1.bf16.msra.mxu0 0
        %6873 = vmatprep.subr.bf16.mxu0 0
        %6874 = vmatpush1.bf16.msra.mxu0 0
        %6875 = vmatprep.subr.bf16.mxu0 0
        %6876 = vmatpush1.bf16.msra.mxu0 0
        %6877 = vmatprep.subr.bf16.mxu0 0
        %6878 = vmatpush1.bf16.msra.mxu0 0
        %6879 = vmatprep.subr.bf16.mxu0 0
        %6880 = vmatpush1.bf16.msra.mxu0 0
        %6881 = vmatprep.subr.bf16.mxu0 0
        %6882 = vmatpush1.bf16.msra.mxu0 0
        %6883 = vmatprep.subr.bf16.mxu0 0
        %6884 = vmatpush1.bf16.msra.mxu0 0
        %6885 = vmatprep.subr.bf16.mxu0 0
        %6886 = vmatpush1.bf16.msra.mxu0 0
        %6887 = vmatprep.subr.bf16.mxu0 0
        %6888 = vmatpush1.bf16.msra.mxu0 0
        %6889 = vmatprep.subr.bf16.mxu0 0
        %6890 = vmatpush1.bf16.msra.mxu0 0
        %6891 = vmatprep.subr.bf16.mxu0 0
        %6892 = vmatpush1.bf16.msra.mxu0 0
        %6893 = vmatprep.subr.bf16.mxu0 0
        %6894 = vmatpush1.bf16.msra.mxu0 0
        %6895 = vmatprep.mubr.bf16.mxu0 0
        %6896 = vmatmul.mubr.bf16.gmra.mrb[0].mxu0 %v6852
        %v6897 = vpop.f32.mrb[0].mxu0
        %v6898 = vadd.f32 0.0, %v6897
        %v6899 = vpop.f32.mrb[0].mxu0
        %v6900 = vpop.f32.mrb[0].mxu0
        %v6901 = vadd.f32 0.0, %v6900
        %v6902 = vpop.f32.mrb[0].mxu0
        %6903 = vmatprep.mubr.bf16.mxu0 0
        %6904 = vmatmul.mubr.bf16.gmra.mrb[0].mxu0 %v6855
        %v6905 = vpop.f32.mrb[0].mxu0
        %v6906 = vadd.f32 0.0, %v6905
        %v6907 = vpop.f32.mrb[0].mxu0
        %v6908 = vpop.f32.mrb[0].mxu0
        %v6909 = vadd.f32 0.0, %v6908
        %v6910 = vpop.f32.mrb[0].mxu0
        %6911 = vmatprep.mubr.bf16.mxu0 0
        %6912 = vmatmul.mubr.bf16.gmra.mrb[0].mxu0 %v6858
        %v6913 = vpop.f32.mrb[0].mxu0
        %v6914 = vadd.f32 0.0, %v6913
        %v6915 = vpop.f32.mrb[0].mxu0
        %v6916 = vpop.f32.mrb[0].mxu0
        %v6917 = vadd.f32 0.0, %v6916
        %v6918 = vpop.f32.mrb[0].mxu0
        %6919 = vmatprep.mubr.bf16.mxu0 0
        %6920 = vmatmul.mubr.bf16.gmra.mrb[0].mxu0 %v6861
        %v6921 = vpop.f32.mrb[0].mxu0
        %v6922 = vadd.f32 0.0, %v6921
        %v6923 = vpop.f32.mrb[0].mxu0
        %v6924 = vpop.f32.mrb[0].mxu0
        %v6925 = vadd.f32 0.0, %v6924
        %v6926 = vpop.f32.mrb[0].mxu0
        %6927 = vdwg.mxu0
        %6928 = vrot.lane.b32.xlu0 %v6074, 32
        %v6929 = vpop.permute.xlu0 %6928
        %6930 = vrot.lane.b32.xlu0 %v6075, 32
        %v6931 = vpop.permute.xlu0 %6930
        %6932 = vrot.lane.b32.xlu0 %v6076, 32
        %v6933 = vpop.permute.xlu0 %6932
        %6934 = vrot.lane.b32.xlu0 %v6077, 32
        %v6935 = vpop.permute.xlu0 %6934
        %6936 = vrot.lane.b32.xlu0 %v6078, 32
        %v6937 = vpop.permute.xlu0 %6936
        %6938 = vrot.lane.b32.xlu0 %v6079, 32
        %v6939 = vpop.permute.xlu0 %6938
        %6940 = vrot.lane.b32.xlu0 %v6080, 32
        %v6941 = vpop.permute.xlu0 %6940
        %6942 = vrot.lane.b32.xlu0 %v6081, 32
        %v6943 = vpop.permute.xlu0 %6942
        %v6945 = vsel %vm918, %v6929, 0
        %v6948 = vsel %vm918, %v6931, 0
        %v6951 = vsel %vm918, %v6933, 0
        %v6954 = vsel %vm918, %v6935, 0
        %v6957 = vsel %vm918, %v6937, 0
        %v6960 = vsel %vm918, %v6939, 0
        %v6963 = vsel %vm918, %v6941, 0
        %v6966 = vsel %vm918, %v6943, 0
        %6968 = vmatprep.subr.bf16.mxu0 0
        %6969 = vmatpush1.bf16.xpose.msra.mxu0 %v6957
        %6970 = vmatprep.subr.bf16.mxu0 0
        %6971 = vmatpush1.bf16.xpose.msra.mxu0 %v6960
        %6972 = vmatprep.subr.bf16.mxu0 0
        %6973 = vmatpush1.bf16.xpose.msra.mxu0 %v6963
        %6974 = vmatprep.subr.bf16.mxu0 0
        %6975 = vmatpush1.bf16.xpose.msra.mxu0 %v6966
        %6976 = vmatprep.subr.bf16.mxu0 0
        %6977 = vmatpush1.bf16.xpose.msra.mxu0 0
        %6978 = vmatprep.subr.bf16.mxu0 0
        %6979 = vmatpush1.bf16.xpose.msra.mxu0 0
        %6980 = vmatprep.subr.bf16.mxu0 0
        %6981 = vmatpush1.bf16.xpose.msra.mxu0 0
        %6982 = vmatprep.subr.bf16.mxu0 0
        %6983 = vmatpush1.bf16.xpose.msra.mxu0 0
        %6984 = vmatprep.subr.bf16.mxu0 0
        %6985 = vmatpush1.bf16.xpose.msra.mxu0 0
        %6986 = vmatprep.subr.bf16.mxu0 0
        %6987 = vmatpush1.bf16.xpose.msra.mxu0 0
        %6988 = vmatprep.subr.bf16.mxu0 0
        %6989 = vmatpush1.bf16.xpose.msra.mxu0 0
        %6990 = vmatprep.subr.bf16.mxu0 0
        %6991 = vmatpush1.bf16.xpose.msra.mxu0 0
        %6992 = vmatprep.subr.bf16.mxu0 0
        %6993 = vmatpush1.bf16.xpose.msra.mxu0 0
        %6994 = vmatprep.subr.bf16.mxu0 0
        %6995 = vmatpush1.bf16.xpose.msra.mxu0 0
        %6996 = vmatprep.subr.bf16.mxu0 0
        %6997 = vmatpush1.bf16.xpose.msra.mxu0 0
        %6998 = vmatprep.subr.bf16.mxu0 0
        %6999 = vmatpush1.bf16.xpose.msra.mxu0 0
        %7000 = vmatprep.mubr.bf16.mxu0 0
        %7001 = vmatmul.mubr.bf16.gmra.mrb[0].mxu0 %v6945
        %v7002 = vpop.f32.mrb[0].mxu0
        %v7003 = vadd.f32 %v916, %v7002
        %v7004 = vpop.f32.mrb[0].mxu0
        %v7005 = vpop.f32.mrb[0].mxu0
        %v7006 = vadd.f32 %v916, %v7005
        %v7007 = vpop.f32.mrb[0].mxu0
        %7008 = vmatprep.mubr.bf16.mxu0 0
        %7009 = vmatmul.mubr.bf16.gmra.mrb[0].mxu0 %v6948
        %v7010 = vpop.f32.mrb[0].mxu0
        %v7011 = vadd.f32 %v916, %v7010
        %v7012 = vpop.f32.mrb[0].mxu0
        %v7013 = vpop.f32.mrb[0].mxu0
        %v7014 = vadd.f32 %v916, %v7013
        %v7015 = vpop.f32.mrb[0].mxu0
        %7016 = vmatprep.mubr.bf16.mxu0 0
        %7017 = vmatmul.mubr.bf16.gmra.mrb[0].mxu0 %v6951
        %v7018 = vpop.f32.mrb[0].mxu0
        %v7019 = vadd.f32 %v916, %v7018
        %v7020 = vpop.f32.mrb[0].mxu0
        %v7021 = vpop.f32.mrb[0].mxu0
        %v7022 = vadd.f32 %v916, %v7021
        %v7023 = vpop.f32.mrb[0].mxu0
        %7024 = vmatprep.mubr.bf16.mxu0 0
        %7025 = vmatmul.mubr.bf16.gmra.mrb[0].mxu0 %v6954
        %v7026 = vpop.f32.mrb[0].mxu0
        %v7027 = vadd.f32 %v916, %v7026
        %v7028 = vpop.f32.mrb[0].mxu0
        %v7029 = vpop.f32.mrb[0].mxu0
        %v7030 = vadd.f32 %v916, %v7029
        %v7031 = vpop.f32.mrb[0].mxu0
        %7032 = vdwg.mxu0
        %v7033 = vsel %vm1008, %v7003, -inf
        %7034 = vmax.xlane.f32.xlu0 %v7033
        %v7035 = vpop.xlane.xlu0 %7034
        %v7036 = vsel %vm1008, %v7006, -inf
        %7037 = vmax.xlane.f32.xlu0 %v7036
        %v7038 = vpop.xlane.xlu0 %7037
        %v7039 = vsel %vm1008, %v7011, -inf
        %7040 = vmax.xlane.f32.xlu0 %v7039
        %v7041 = vpop.xlane.xlu0 %7040
        %v7042 = vsel %vm1008, %v7014, -inf
        %7043 = vmax.xlane.f32.xlu0 %v7042
        %v7044 = vpop.xlane.xlu0 %7043
        %v7045 = vsel %vm1008, %v7019, -inf
        %7046 = vmax.xlane.f32.xlu0 %v7045
        %v7047 = vpop.xlane.xlu0 %7046
        %v7048 = vsel %vm1008, %v7022, -inf
        %7049 = vmax.xlane.f32.xlu0 %v7048
        %v7050 = vpop.xlane.xlu0 %7049
        %v7051 = vsel %vm1008, %v7027, -inf
        %7052 = vmax.xlane.f32.xlu0 %v7051
        %v7053 = vpop.xlane.xlu0 %7052
        %v7054 = vsel %vm1008, %v7030, -inf
        %7055 = vmax.xlane.f32.xlu0 %v7054
        %v7056 = vpop.xlane.xlu0 %7055
        %v7057 = vsub.f32 %v7003, %v7035
        %v7058 = vsub.f32 %v7006, %v7038
        %v7059 = vsub.f32 %v7011, %v7041
        %v7060 = vsub.f32 %v7014, %v7044
        %v7061 = vsub.f32 %v7019, %v7047
        %v7062 = vsub.f32 %v7022, %v7050
        %v7063 = vsub.f32 %v7027, %v7053
        %v7064 = vsub.f32 %v7030, %v7056
        %v7065 = vmul.f32 %v7057, 1.442695
        %v7066 = vpow.pop %v7065
        %v7067 = vmul.f32 %v7058, 1.442695
        %v7068 = vpow.pop %v7067
        %v7069 = vmul.f32 %v7059, 1.442695
        %v7070 = vpow.pop %v7069
        %v7071 = vmul.f32 %v7060, 1.442695
        %v7072 = vpow.pop %v7071
        %v7073 = vmul.f32 %v7061, 1.442695
        %v7074 = vpow.pop %v7073
        %v7075 = vmul.f32 %v7062, 1.442695
        %v7076 = vpow.pop %v7075
        %v7077 = vmul.f32 %v7063, 1.442695
        %v7078 = vpow.pop %v7077
        %v7079 = vmul.f32 %v7064, 1.442695
        %v7080 = vpow.pop %v7079
        %v7081 = vsel %vm1008, %v7066, 0.0
        %7082 = vadd.xlane.f32.xlu0 %v7081
        %v7083 = vpop.xlane.xlu0 %7082
        %v7084 = vsel %vm1008, %v7068, 0.0
        %7085 = vadd.xlane.f32.xlu0 %v7084
        %v7086 = vpop.xlane.xlu0 %7085
        %v7087 = vsel %vm1008, %v7070, 0.0
        %7088 = vadd.xlane.f32.xlu0 %v7087
        %v7089 = vpop.xlane.xlu0 %7088
        %v7090 = vsel %vm1008, %v7072, 0.0
        %7091 = vadd.xlane.f32.xlu0 %v7090
        %v7092 = vpop.xlane.xlu0 %7091
        %v7093 = vsel %vm1008, %v7074, 0.0
        %7094 = vadd.xlane.f32.xlu0 %v7093
        %v7095 = vpop.xlane.xlu0 %7094
        %v7096 = vsel %vm1008, %v7076, 0.0
        %7097 = vadd.xlane.f32.xlu0 %v7096
        %v7098 = vpop.xlane.xlu0 %7097
        %v7099 = vsel %vm1008, %v7078, 0.0
        %7100 = vadd.xlane.f32.xlu0 %v7099
        %v7101 = vpop.xlane.xlu0 %7100
        %v7102 = vsel %vm1008, %v7080, 0.0
        %7103 = vadd.xlane.f32.xlu0 %v7102
        %v7104 = vpop.xlane.xlu0 %7103
        %v7105 = vrcp.pop %v7083
        %v7106 = vrcp.pop %v7086
        %v7107 = vrcp.pop %v7089
        %v7108 = vrcp.pop %v7092
        %v7109 = vrcp.pop %v7095
        %v7110 = vrcp.pop %v7098
        %v7111 = vrcp.pop %v7101
        %v7112 = vrcp.pop %v7104
        %v7113 = vmul.f32 %v7066, %v7105
        %v7114 = vmul.f32 %v7068, %v7106
        %v7115 = vmul.f32 %v7070, %v7107
        %v7116 = vmul.f32 %v7072, %v7108
        %v7117 = vmul.f32 %v7074, %v7109
        %v7118 = vmul.f32 %v7076, %v7110
        %v7119 = vmul.f32 %v7078, %v7111
        %v7120 = vmul.f32 %v7080, %v7112
        %v7121 = vpack.c.bf16 %v7114, %v7113
        %v7122 = vpack.c.bf16 %v7116, %v7115
        %v7123 = vpack.c.bf16 %v7118, %v7117
        %v7124 = vpack.c.bf16 %v7120, %v7119
        %7125 = vrot.lane.b32.xlu0 %v6082, 32
        %v7126 = vpop.permute.xlu0 %7125
        %7127 = vrot.lane.b32.xlu0 %v6083, 32
        %v7128 = vpop.permute.xlu0 %7127
        %7129 = vrot.lane.b32.xlu0 %v6084, 32
        %v7130 = vpop.permute.xlu0 %7129
        %7131 = vrot.lane.b32.xlu0 %v6085, 32
        %v7132 = vpop.permute.xlu0 %7131
        %v7138 = vsel %vm1008, %v7121, 0
        %v7141 = vsel %vm1008, %v7122, 0
        %v7144 = vsel %vm1008, %v7123, 0
        %v7147 = vsel %vm1008, %v7124, 0
        %7149 = vmatprep.subr.bf16.mxu0 0
        %7150 = vmatpush1.bf16.msra.mxu0 %v7126
        %7151 = vmatprep.subr.bf16.mxu0 0
        %7152 = vmatpush1.bf16.msra.mxu0 %v7128
        %7153 = vmatprep.subr.bf16.mxu0 0
        %7154 = vmatpush1.bf16.msra.mxu0 %v7130
        %7155 = vmatprep.subr.bf16.mxu0 0
        %7156 = vmatpush1.bf16.msra.mxu0 %v7132
        %7157 = vmatprep.subr.bf16.mxu0 0
        %7158 = vmatpush1.bf16.msra.mxu0 0
        %7159 = vmatprep.subr.bf16.mxu0 0
        %7160 = vmatpush1.bf16.msra.mxu0 0
        %7161 = vmatprep.subr.bf16.mxu0 0
        %7162 = vmatpush1.bf16.msra.mxu0 0
        %7163 = vmatprep.subr.bf16.mxu0 0
        %7164 = vmatpush1.bf16.msra.mxu0 0
        %7165 = vmatprep.subr.bf16.mxu0 0
        %7166 = vmatpush1.bf16.msra.mxu0 0
        %7167 = vmatprep.subr.bf16.mxu0 0
        %7168 = vmatpush1.bf16.msra.mxu0 0
        %7169 = vmatprep.subr.bf16.mxu0 0
        %7170 = vmatpush1.bf16.msra.mxu0 0
        %7171 = vmatprep.subr.bf16.mxu0 0
        %7172 = vmatpush1.bf16.msra.mxu0 0
        %7173 = vmatprep.subr.bf16.mxu0 0
        %7174 = vmatpush1.bf16.msra.mxu0 0
        %7175 = vmatprep.subr.bf16.mxu0 0
        %7176 = vmatpush1.bf16.msra.mxu0 0
        %7177 = vmatprep.subr.bf16.mxu0 0
        %7178 = vmatpush1.bf16.msra.mxu0 0
        %7179 = vmatprep.subr.bf16.mxu0 0
        %7180 = vmatpush1.bf16.msra.mxu0 0
        %7181 = vmatprep.mubr.bf16.mxu0 0
        %7182 = vmatmul.mubr.bf16.gmra.mrb[0].mxu0 %v7138
        %v7183 = vpop.f32.mrb[0].mxu0
        %v7184 = vadd.f32 0.0, %v7183
        %v7185 = vpop.f32.mrb[0].mxu0
        %v7186 = vpop.f32.mrb[0].mxu0
        %v7187 = vadd.f32 0.0, %v7186
        %v7188 = vpop.f32.mrb[0].mxu0
        %7189 = vmatprep.mubr.bf16.mxu0 0
        %7190 = vmatmul.mubr.bf16.gmra.mrb[0].mxu0 %v7141
        %v7191 = vpop.f32.mrb[0].mxu0
        %v7192 = vadd.f32 0.0, %v7191
        %v7193 = vpop.f32.mrb[0].mxu0
        %v7194 = vpop.f32.mrb[0].mxu0
        %v7195 = vadd.f32 0.0, %v7194
        %v7196 = vpop.f32.mrb[0].mxu0
        %7197 = vmatprep.mubr.bf16.mxu0 0
        %7198 = vmatmul.mubr.bf16.gmra.mrb[0].mxu0 %v7144
        %v7199 = vpop.f32.mrb[0].mxu0
        %v7200 = vadd.f32 0.0, %v7199
        %v7201 = vpop.f32.mrb[0].mxu0
        %v7202 = vpop.f32.mrb[0].mxu0
        %v7203 = vadd.f32 0.0, %v7202
        %v7204 = vpop.f32.mrb[0].mxu0
        %7205 = vmatprep.mubr.bf16.mxu0 0
        %7206 = vmatmul.mubr.bf16.gmra.mrb[0].mxu0 %v7147
        %v7207 = vpop.f32.mrb[0].mxu0
        %v7208 = vadd.f32 0.0, %v7207
        %v7209 = vpop.f32.mrb[0].mxu0
        %v7210 = vpop.f32.mrb[0].mxu0
        %v7211 = vadd.f32 0.0, %v7210
        %v7212 = vpop.f32.mrb[0].mxu0
        %7213 = vdwg.mxu0
        %7222 = vrot.lane.b32.xlu0 %v6612, 32
        %v7223 = vpop.permute.xlu0 %7222
        %7224 = vrot.lane.b32.xlu0 %v6615, 32
        %v7225 = vpop.permute.xlu0 %7224
        %7226 = vrot.lane.b32.xlu0 %v6620, 32
        %v7227 = vpop.permute.xlu0 %7226
        %7228 = vrot.lane.b32.xlu0 %v6623, 32
        %v7229 = vpop.permute.xlu0 %7228
        %7230 = vrot.lane.b32.xlu0 %v6628, 32
        %v7231 = vpop.permute.xlu0 %7230
        %7232 = vrot.lane.b32.xlu0 %v6631, 32
        %v7233 = vpop.permute.xlu0 %7232
        %7234 = vrot.lane.b32.xlu0 %v6636, 32
        %v7235 = vpop.permute.xlu0 %7234
        %7236 = vrot.lane.b32.xlu0 %v6639, 32
        %v7237 = vpop.permute.xlu0 %7236
        %7254 = vrot.lane.b32.xlu0 %v6898, 64
        %v7255 = vpop.permute.xlu0 %7254
        %7256 = vrot.lane.b32.xlu0 %v6901, 64
        %v7257 = vpop.permute.xlu0 %7256
        %7258 = vrot.lane.b32.xlu0 %v6906, 64
        %v7259 = vpop.permute.xlu0 %7258
        %7260 = vrot.lane.b32.xlu0 %v6909, 64
        %v7261 = vpop.permute.xlu0 %7260
        %7262 = vrot.lane.b32.xlu0 %v6914, 64
        %v7263 = vpop.permute.xlu0 %7262
        %7264 = vrot.lane.b32.xlu0 %v6917, 64
        %v7265 = vpop.permute.xlu0 %7264
        %7266 = vrot.lane.b32.xlu0 %v6922, 64
        %v7267 = vpop.permute.xlu0 %7266
        %7268 = vrot.lane.b32.xlu0 %v6925, 64
        %v7269 = vpop.permute.xlu0 %7268
        %7286 = vrot.lane.b32.xlu0 %v7184, 96
        %v7287 = vpop.permute.xlu0 %7286
        %7288 = vrot.lane.b32.xlu0 %v7187, 96
        %v7289 = vpop.permute.xlu0 %7288
        %7290 = vrot.lane.b32.xlu0 %v7192, 96
        %v7291 = vpop.permute.xlu0 %7290
        %7292 = vrot.lane.b32.xlu0 %v7195, 96
        %v7293 = vpop.permute.xlu0 %7292
        %7294 = vrot.lane.b32.xlu0 %v7200, 96
        %v7295 = vpop.permute.xlu0 %7294
        %7296 = vrot.lane.b32.xlu0 %v7203, 96
        %v7297 = vpop.permute.xlu0 %7296
        %7298 = vrot.lane.b32.xlu0 %v7208, 96
        %v7299 = vpop.permute.xlu0 %7298
        %7300 = vrot.lane.b32.xlu0 %v7211, 96
        %v7301 = vpop.permute.xlu0 %7300
        %v7310 = vsel %vm918, %v6314, %v7223
        %v7311 = vsel %vm918, %v6317, %v7225
        %v7312 = vsel %vm918, %v6322, %v7227
        %v7313 = vsel %vm918, %v6325, %v7229
        %v7314 = vsel %vm918, %v6330, %v7231
        %v7315 = vsel %vm918, %v6333, %v7233
        %v7316 = vsel %vm918, %v6338, %v7235
        %v7317 = vsel %vm918, %v6341, %v7237
        %v7318 = vsel %vm1008, %v7310, %v7255
        %v7319 = vsel %vm1008, %v7311, %v7257
        %v7320 = vsel %vm1008, %v7312, %v7259
        %v7321 = vsel %vm1008, %v7313, %v7261
        %v7322 = vsel %vm1008, %v7314, %v7263
        %v7323 = vsel %vm1008, %v7315, %v7265
        %v7324 = vsel %vm1008, %v7316, %v7267
        %v7325 = vsel %vm1008, %v7317, %v7269
        %v7326 = vsel %vm2160, %v7318, %v7287
        %v7327 = vsel %vm2160, %v7319, %v7289
        %v7328 = vsel %vm2160, %v7320, %v7291
        %v7329 = vsel %vm2160, %v7321, %v7293
        %v7330 = vsel %vm2160, %v7322, %v7295
        %v7331 = vsel %vm2160, %v7323, %v7297
        %v7332 = vsel %vm2160, %v7324, %v7299
        %v7333 = vsel %vm2160, %v7325, %v7301
        %s7334 = scalar_lea.vmem %s4, 64
        %v7335 = vld [vmem:[%s7334] sm:$0xf]
        %v7336 = vld [vmem:[%s7334 + $0x4] sm:$0xf]
        %v7337 = vld [vmem:[%s7334 + $0x8] sm:$0xf]
        %v7338 = vld [vmem:[%s7334 + $0xc] sm:$0xf]
        %v7339 = vld [vmem:[%s7334 + $0x10] sm:$0xf]
        %v7340 = vld [vmem:[%s7334 + $0x14] sm:$0xf]
        %v7341 = vld [vmem:[%s7334 + $0x18] sm:$0xf]
        %v7342 = vld [vmem:[%s7334 + $0x1c] sm:$0xf]
        %v7343 = vld [vmem:[%s7334 + $0x20] sm:$0xf]
        %v7344 = vld [vmem:[%s7334 + $0x24] sm:$0xf]
        %v7345 = vld [vmem:[%s7334 + $0x28] sm:$0xf]
        %v7346 = vld [vmem:[%s7334 + $0x2c] sm:$0xf]
        %v7347 = vld [vmem:[%s7334 + $0x30] sm:$0xf]
        %v7348 = vld [vmem:[%s7334 + $0x34] sm:$0xf]
        %v7349 = vld [vmem:[%s7334 + $0x38] sm:$0xf]
        %v7350 = vld [vmem:[%s7334 + $0x3c] sm:$0xf]
        %v7351 = vpack.c.bf16 %v7327, %v7326
        %v7352 = vpack.c.bf16 %v7329, %v7328
        %v7353 = vpack.c.bf16 %v7331, %v7330
        %v7354 = vpack.c.bf16 %v7333, %v7332
        %s7355 = scalar_lea.vmem %s5, 1
        %v7356 = vld [vmem:[%s7355] sm:$0x1]
        %v7358 = vlaneseq
        %v7359 = vshrl.u32 %v7358, 7
        %v7360 = vsub.s32 0, %v7359
        %v7361 = vrot.slane %v7356, %v7360
        %v7379 = vunpack.c.l.b16 %v7335
        %v7380 = vunpack.c.l.b16 %v7336
        %v7381 = vunpack.c.l.b16 %v7337
        %v7382 = vunpack.c.l.b16 %v7338
        %v7383 = vunpack.c.l.b16 %v7339
        %v7384 = vunpack.c.l.b16 %v7340
        %v7385 = vunpack.c.l.b16 %v7341
        %v7386 = vunpack.c.l.b16 %v7342
        %v7387 = vunpack.c.l.b16 %v7343
        %v7388 = vunpack.c.l.b16 %v7344
        %v7389 = vunpack.c.l.b16 %v7345
        %v7390 = vunpack.c.l.b16 %v7346
        %v7391 = vunpack.c.l.b16 %v7347
        %v7392 = vunpack.c.l.b16 %v7348
        %v7393 = vunpack.c.l.b16 %v7349
        %v7394 = vunpack.c.l.b16 %v7350
        %v7395 = vpack.c.b16 %v7380, %v7379
        %v7396 = vpack.c.b16 %v7382, %v7381
        %v7397 = vpack.c.b16 %v7384, %v7383
        %v7398 = vpack.c.b16 %v7386, %v7385
        %v7399 = vpack.c.b16 %v7388, %v7387
        %v7400 = vpack.c.b16 %v7390, %v7389
        %v7401 = vpack.c.b16 %v7392, %v7391
        %v7402 = vpack.c.b16 %v7394, %v7393
        %7411 = vmatprep.subr.bf16.mxu0 0
        %7412 = vmatpush1.bf16.msra.mxu0 %v7395
        %7413 = vmatprep.subr.bf16.mxu0 0
        %7414 = vmatpush1.bf16.msra.mxu0 %v7396
        %7415 = vmatprep.subr.bf16.mxu0 0
        %7416 = vmatpush1.bf16.msra.mxu0 %v7397
        %7417 = vmatprep.subr.bf16.mxu0 0
        %7418 = vmatpush1.bf16.msra.mxu0 %v7398
        %7419 = vmatprep.subr.bf16.mxu0 0
        %7420 = vmatpush1.bf16.msra.mxu0 %v7399
        %7421 = vmatprep.subr.bf16.mxu0 0
        %7422 = vmatpush1.bf16.msra.mxu0 %v7400
        %7423 = vmatprep.subr.bf16.mxu0 0
        %7424 = vmatpush1.bf16.msra.mxu0 %v7401
        %7425 = vmatprep.subr.bf16.mxu0 0
        %7426 = vmatpush1.bf16.msra.mxu0 %v7402
        %7427 = vmatprep.subr.bf16.mxu0 0
        %7428 = vmatpush1.bf16.msra.mxu0 0
        %7429 = vmatprep.subr.bf16.mxu0 0
        %7430 = vmatpush1.bf16.msra.mxu0 0
        %7431 = vmatprep.subr.bf16.mxu0 0
        %7432 = vmatpush1.bf16.msra.mxu0 0
        %7433 = vmatprep.subr.bf16.mxu0 0
        %7434 = vmatpush1.bf16.msra.mxu0 0
        %7435 = vmatprep.subr.bf16.mxu0 0
        %7436 = vmatpush1.bf16.msra.mxu0 0
        %7437 = vmatprep.subr.bf16.mxu0 0
        %7438 = vmatpush1.bf16.msra.mxu0 0
        %7439 = vmatprep.subr.bf16.mxu0 0
        %7440 = vmatpush1.bf16.msra.mxu0 0
        %7441 = vmatprep.subr.bf16.mxu0 0
        %7442 = vmatpush1.bf16.msra.mxu0 0
        %7443 = vmatprep.mubr.bf16.mxu0 0
        %7444 = vmatmul.mubr.bf16.gmra.mrb[0].mxu0 %v7351
        %v7445 = vpop.f32.mrb[0].mxu0
        %v7446 = vadd.f32 %v7361, %v7445
        %v7447 = vpop.f32.mrb[0].mxu0
        %v7448 = vpop.f32.mrb[0].mxu0
        %v7449 = vadd.f32 %v7361, %v7448
        %v7450 = vpop.f32.mrb[0].mxu0
        %7451 = vmatprep.mubr.bf16.mxu0 0
        %7452 = vmatmul.mubr.bf16.gmra.mrb[0].mxu0 %v7352
        %v7453 = vpop.f32.mrb[0].mxu0
        %v7454 = vadd.f32 %v7361, %v7453
        %v7455 = vpop.f32.mrb[0].mxu0
        %v7456 = vpop.f32.mrb[0].mxu0
        %v7457 = vadd.f32 %v7361, %v7456
        %v7458 = vpop.f32.mrb[0].mxu0
        %7459 = vmatprep.mubr.bf16.mxu0 0
        %7460 = vmatmul.mubr.bf16.gmra.mrb[0].mxu0 %v7353
        %v7461 = vpop.f32.mrb[0].mxu0
        %v7462 = vadd.f32 %v7361, %v7461
        %v7463 = vpop.f32.mrb[0].mxu0
        %v7464 = vpop.f32.mrb[0].mxu0
        %v7465 = vadd.f32 %v7361, %v7464
        %v7466 = vpop.f32.mrb[0].mxu0
        %7467 = vmatprep.mubr.bf16.mxu0 0
        %7468 = vmatmul.mubr.bf16.gmra.mrb[0].mxu0 %v7354
        %v7469 = vpop.f32.mrb[0].mxu0
        %v7470 = vadd.f32 %v7361, %v7469
        %v7471 = vpop.f32.mrb[0].mxu0
        %v7472 = vpop.f32.mrb[0].mxu0
        %v7473 = vadd.f32 %v7361, %v7472
        %v7474 = vpop.f32.mrb[0].mxu0
        %7475 = vdwg.mxu0
        %v7476 = vadd.f32 %v5737, %v7446
        %v7477 = vadd.f32 %v5738, %v7449
        %v7478 = vadd.f32 %v5739, %v7454
        %v7479 = vadd.f32 %v5740, %v7457
        %v7480 = vadd.f32 %v5741, %v7462
        %v7481 = vadd.f32 %v5742, %v7465
        %v7482 = vadd.f32 %v5743, %v7470
        %v7483 = vadd.f32 %v5744, %v7473
        %s7484 = scalar_lea.vmem %s10, 1
        %v7485 = vld [vmem:[%s7484] sm:$0x1]
        %s7486 = scalar_lea.vmem %s11, 1
        %v7487 = vld [vmem:[%s7486] sm:$0x1]
        %7488 = vadd.xlane.f32.xlu0 %v7476
        %v7489 = vpop.xlane.xlu0 %7488
        %7490 = vadd.xlane.f32.xlu0 %v7477
        %v7491 = vpop.xlane.xlu0 %7490
        %7492 = vadd.xlane.f32.xlu0 %v7478
        %v7493 = vpop.xlane.xlu0 %7492
        %7494 = vadd.xlane.f32.xlu0 %v7479
        %v7495 = vpop.xlane.xlu0 %7494
        %7496 = vadd.xlane.f32.xlu0 %v7480
        %v7497 = vpop.xlane.xlu0 %7496
        %7498 = vadd.xlane.f32.xlu0 %v7481
        %v7499 = vpop.xlane.xlu0 %7498
        %7500 = vadd.xlane.f32.xlu0 %v7482
        %v7501 = vpop.xlane.xlu0 %7500
        %7502 = vadd.xlane.f32.xlu0 %v7483
        %v7503 = vpop.xlane.xlu0 %7502
        %v7504 = vmul.f32 %v7489, %v2335
        %v7505 = vmul.f32 %v7491, %v2335
        %v7506 = vmul.f32 %v7493, %v2335
        %v7507 = vmul.f32 %v7495, %v2335
        %v7508 = vmul.f32 %v7497, %v2335
        %v7509 = vmul.f32 %v7499, %v2335
        %v7510 = vmul.f32 %v7501, %v2335
        %v7511 = vmul.f32 %v7503, %v2335
        %v7512 = vsub.f32 %v7476, %v7504
        %v7513 = vsub.f32 %v7477, %v7505
        %v7514 = vsub.f32 %v7478, %v7506
        %v7515 = vsub.f32 %v7479, %v7507
        %v7516 = vsub.f32 %v7480, %v7508
        %v7517 = vsub.f32 %v7481, %v7509
        %v7518 = vsub.f32 %v7482, %v7510
        %v7519 = vsub.f32 %v7483, %v7511
        %v7520 = vmul.f32 %v7512, %v7512
        %v7521 = vmul.f32 %v7513, %v7513
        %v7522 = vmul.f32 %v7514, %v7514
        %v7523 = vmul.f32 %v7515, %v7515
        %v7524 = vmul.f32 %v7516, %v7516
        %v7525 = vmul.f32 %v7517, %v7517
        %v7526 = vmul.f32 %v7518, %v7518
        %v7527 = vmul.f32 %v7519, %v7519
        %7528 = vadd.xlane.f32.xlu0 %v7520
        %v7529 = vpop.xlane.xlu0 %7528
        %7530 = vadd.xlane.f32.xlu0 %v7521
        %v7531 = vpop.xlane.xlu0 %7530
        %7532 = vadd.xlane.f32.xlu0 %v7522
        %v7533 = vpop.xlane.xlu0 %7532
        %7534 = vadd.xlane.f32.xlu0 %v7523
        %v7535 = vpop.xlane.xlu0 %7534
        %7536 = vadd.xlane.f32.xlu0 %v7524
        %v7537 = vpop.xlane.xlu0 %7536
        %7538 = vadd.xlane.f32.xlu0 %v7525
        %v7539 = vpop.xlane.xlu0 %7538
        %7540 = vadd.xlane.f32.xlu0 %v7526
        %v7541 = vpop.xlane.xlu0 %7540
        %7542 = vadd.xlane.f32.xlu0 %v7527
        %v7543 = vpop.xlane.xlu0 %7542
        %v7544 = vmul.f32 %v7529, %v2335
        %v7545 = vmul.f32 %v7531, %v2335
        %v7546 = vmul.f32 %v7533, %v2335
        %v7547 = vmul.f32 %v7535, %v2335
        %v7548 = vmul.f32 %v7537, %v2335
        %v7549 = vmul.f32 %v7539, %v2335
        %v7550 = vmul.f32 %v7541, %v2335
        %v7551 = vmul.f32 %v7543, %v2335
        %v7552 = vadd.f32 %v7544, 1e-05
        %v7553 = vadd.f32 %v7545, 1e-05
        %v7554 = vadd.f32 %v7546, 1e-05
        %v7555 = vadd.f32 %v7547, 1e-05
        %v7556 = vadd.f32 %v7548, 1e-05
        %v7557 = vadd.f32 %v7549, 1e-05
        %v7558 = vadd.f32 %v7550, 1e-05
        %v7559 = vadd.f32 %v7551, 1e-05
        %v7560 = vrsqrt.pop %v7552
        %v7561 = vrsqrt.pop %v7553
        %v7562 = vrsqrt.pop %v7554
        %v7563 = vrsqrt.pop %v7555
        %v7564 = vrsqrt.pop %v7556
        %v7565 = vrsqrt.pop %v7557
        %v7566 = vrsqrt.pop %v7558
        %v7567 = vrsqrt.pop %v7559
        %v7568 = vmul.f32 %v7512, %v7560
        %v7569 = vmul.f32 %v7513, %v7561
        %v7570 = vmul.f32 %v7514, %v7562
        %v7571 = vmul.f32 %v7515, %v7563
        %v7572 = vmul.f32 %v7516, %v7564
        %v7573 = vmul.f32 %v7517, %v7565
        %v7574 = vmul.f32 %v7518, %v7566
        %v7575 = vmul.f32 %v7519, %v7567
        %v7577 = vlaneseq
        %v7578 = vshrl.u32 %v7577, 7
        %v7579 = vsub.s32 0, %v7578
        %v7580 = vrot.slane %v7485, %v7579
        %v7582 = vmul.f32 %v7568, %v7580
        %v7583 = vmul.f32 %v7569, %v7580
        %v7584 = vmul.f32 %v7570, %v7580
        %v7585 = vmul.f32 %v7571, %v7580
        %v7586 = vmul.f32 %v7572, %v7580
        %v7587 = vmul.f32 %v7573, %v7580
        %v7588 = vmul.f32 %v7574, %v7580
        %v7589 = vmul.f32 %v7575, %v7580
        %v7591 = vlaneseq
        %v7592 = vshrl.u32 %v7591, 7
        %v7593 = vsub.s32 0, %v7592
        %v7594 = vrot.slane %v7487, %v7593
        %v7596 = vadd.f32 %v7582, %v7594
        %v7597 = vadd.f32 %v7583, %v7594
        %v7598 = vadd.f32 %v7584, %v7594
        %v7599 = vadd.f32 %v7585, %v7594
        %v7600 = vadd.f32 %v7586, %v7594
        %v7601 = vadd.f32 %v7587, %v7594
        %v7602 = vadd.f32 %v7588, %v7594
        %v7603 = vadd.f32 %v7589, %v7594
        %s7604 = scalar_lea.vmem [#allocation2], 1024
        %v7605 = vld [vmem:[%s7604] sm:$0xff]
        %v7606 = vld [vmem:[%s7604 + $0x8] sm:$0xff]
        %v7607 = vld [vmem:[%s7604 + $0x10] sm:$0xff]
        %v7608 = vld [vmem:[%s7604 + $0x18] sm:$0xff]
        %v7609 = vld [vmem:[%s7604 + $0x20] sm:$0xff]
        %v7610 = vld [vmem:[%s7604 + $0x28] sm:$0xff]
        %v7611 = vld [vmem:[%s7604 + $0x30] sm:$0xff]
        %v7612 = vld [vmem:[%s7604 + $0x38] sm:$0xff]
        %v7613 = vld [vmem:[%s7604 + $0x40] sm:$0xff]
        %v7614 = vld [vmem:[%s7604 + $0x48] sm:$0xff]
        %v7615 = vld [vmem:[%s7604 + $0x50] sm:$0xff]
        %v7616 = vld [vmem:[%s7604 + $0x58] sm:$0xff]
        %v7617 = vld [vmem:[%s7604 + $0x60] sm:$0xff]
        %v7618 = vld [vmem:[%s7604 + $0x68] sm:$0xff]
        %v7619 = vld [vmem:[%s7604 + $0x70] sm:$0xff]
        %v7620 = vld [vmem:[%s7604 + $0x78] sm:$0xff]
        %v7621 = vld [vmem:[%s7604 + $0x80] sm:$0xff]
        %v7622 = vld [vmem:[%s7604 + $0x88] sm:$0xff]
        %v7623 = vld [vmem:[%s7604 + $0x90] sm:$0xff]
        %v7624 = vld [vmem:[%s7604 + $0x98] sm:$0xff]
        %v7625 = vld [vmem:[%s7604 + $0xa0] sm:$0xff]
        %v7626 = vld [vmem:[%s7604 + $0xa8] sm:$0xff]
        %v7627 = vld [vmem:[%s7604 + $0xb0] sm:$0xff]
        %v7628 = vld [vmem:[%s7604 + $0xb8] sm:$0xff]
        %v7629 = vld [vmem:[%s7604 + $0xc0] sm:$0xff]
        %v7630 = vld [vmem:[%s7604 + $0xc8] sm:$0xff]
        %v7631 = vld [vmem:[%s7604 + $0xd0] sm:$0xff]
        %v7632 = vld [vmem:[%s7604 + $0xd8] sm:$0xff]
        %v7633 = vld [vmem:[%s7604 + $0xe0] sm:$0xff]
        %v7634 = vld [vmem:[%s7604 + $0xe8] sm:$0xff]
        %v7635 = vld [vmem:[%s7604 + $0xf0] sm:$0xff]
        %v7636 = vld [vmem:[%s7604 + $0xf8] sm:$0xff]
        %v7637 = vld [vmem:[%s7604 + $0x100] sm:$0xff]
        %v7638 = vld [vmem:[%s7604 + $0x108] sm:$0xff]
        %v7639 = vld [vmem:[%s7604 + $0x110] sm:$0xff]
        %v7640 = vld [vmem:[%s7604 + $0x118] sm:$0xff]
        %v7641 = vld [vmem:[%s7604 + $0x120] sm:$0xff]
        %v7642 = vld [vmem:[%s7604 + $0x128] sm:$0xff]
        %v7643 = vld [vmem:[%s7604 + $0x130] sm:$0xff]
        %v7644 = vld [vmem:[%s7604 + $0x138] sm:$0xff]
        %v7645 = vld [vmem:[%s7604 + $0x140] sm:$0xff]
        %v7646 = vld [vmem:[%s7604 + $0x148] sm:$0xff]
        %v7647 = vld [vmem:[%s7604 + $0x150] sm:$0xff]
        %v7648 = vld [vmem:[%s7604 + $0x158] sm:$0xff]
        %v7649 = vld [vmem:[%s7604 + $0x160] sm:$0xff]
        %v7650 = vld [vmem:[%s7604 + $0x168] sm:$0xff]
        %v7651 = vld [vmem:[%s7604 + $0x170] sm:$0xff]
        %v7652 = vld [vmem:[%s7604 + $0x178] sm:$0xff]
        %v7653 = vld [vmem:[%s7604 + $0x180] sm:$0xff]
        %v7654 = vld [vmem:[%s7604 + $0x188] sm:$0xff]
        %v7655 = vld [vmem:[%s7604 + $0x190] sm:$0xff]
        %v7656 = vld [vmem:[%s7604 + $0x198] sm:$0xff]
        %v7657 = vld [vmem:[%s7604 + $0x1a0] sm:$0xff]
        %v7658 = vld [vmem:[%s7604 + $0x1a8] sm:$0xff]
        %v7659 = vld [vmem:[%s7604 + $0x1b0] sm:$0xff]
        %v7660 = vld [vmem:[%s7604 + $0x1b8] sm:$0xff]
        %v7661 = vld [vmem:[%s7604 + $0x1c0] sm:$0xff]
        %v7662 = vld [vmem:[%s7604 + $0x1c8] sm:$0xff]
        %v7663 = vld [vmem:[%s7604 + $0x1d0] sm:$0xff]
        %v7664 = vld [vmem:[%s7604 + $0x1d8] sm:$0xff]
        %v7665 = vld [vmem:[%s7604 + $0x1e0] sm:$0xff]
        %v7666 = vld [vmem:[%s7604 + $0x1e8] sm:$0xff]
        %v7667 = vld [vmem:[%s7604 + $0x1f0] sm:$0xff]
        %v7668 = vld [vmem:[%s7604 + $0x1f8] sm:$0xff]
        %v7669 = vld [vmem:[%s7604 + $0x200] sm:$0xff]
        %v7670 = vld [vmem:[%s7604 + $0x208] sm:$0xff]
        %v7671 = vld [vmem:[%s7604 + $0x210] sm:$0xff]
        %v7672 = vld [vmem:[%s7604 + $0x218] sm:$0xff]
        %v7673 = vld [vmem:[%s7604 + $0x220] sm:$0xff]
        %v7674 = vld [vmem:[%s7604 + $0x228] sm:$0xff]
        %v7675 = vld [vmem:[%s7604 + $0x230] sm:$0xff]
        %v7676 = vld [vmem:[%s7604 + $0x238] sm:$0xff]
        %v7677 = vld [vmem:[%s7604 + $0x240] sm:$0xff]
        %v7678 = vld [vmem:[%s7604 + $0x248] sm:$0xff]
        %v7679 = vld [vmem:[%s7604 + $0x250] sm:$0xff]
        %v7680 = vld [vmem:[%s7604 + $0x258] sm:$0xff]
        %v7681 = vld [vmem:[%s7604 + $0x260] sm:$0xff]
        %v7682 = vld [vmem:[%s7604 + $0x268] sm:$0xff]
        %v7683 = vld [vmem:[%s7604 + $0x270] sm:$0xff]
        %v7684 = vld [vmem:[%s7604 + $0x278] sm:$0xff]
        %v7685 = vld [vmem:[%s7604 + $0x280] sm:$0xff]
        %v7686 = vld [vmem:[%s7604 + $0x288] sm:$0xff]
        %v7687 = vld [vmem:[%s7604 + $0x290] sm:$0xff]
        %v7688 = vld [vmem:[%s7604 + $0x298] sm:$0xff]
        %v7689 = vld [vmem:[%s7604 + $0x2a0] sm:$0xff]
        %v7690 = vld [vmem:[%s7604 + $0x2a8] sm:$0xff]
        %v7691 = vld [vmem:[%s7604 + $0x2b0] sm:$0xff]
        %v7692 = vld [vmem:[%s7604 + $0x2b8] sm:$0xff]
        %v7693 = vld [vmem:[%s7604 + $0x2c0] sm:$0xff]
        %v7694 = vld [vmem:[%s7604 + $0x2c8] sm:$0xff]
        %v7695 = vld [vmem:[%s7604 + $0x2d0] sm:$0xff]
        %v7696 = vld [vmem:[%s7604 + $0x2d8] sm:$0xff]
        %v7697 = vld [vmem:[%s7604 + $0x2e0] sm:$0xff]
        %v7698 = vld [vmem:[%s7604 + $0x2e8] sm:$0xff]
        %v7699 = vld [vmem:[%s7604 + $0x2f0] sm:$0xff]
        %v7700 = vld [vmem:[%s7604 + $0x2f8] sm:$0xff]
        %v7701 = vld [vmem:[%s7604 + $0x300] sm:$0xff]
        %v7702 = vld [vmem:[%s7604 + $0x308] sm:$0xff]
        %v7703 = vld [vmem:[%s7604 + $0x310] sm:$0xff]
        %v7704 = vld [vmem:[%s7604 + $0x318] sm:$0xff]
        %v7705 = vld [vmem:[%s7604 + $0x320] sm:$0xff]
        %v7706 = vld [vmem:[%s7604 + $0x328] sm:$0xff]
        %v7707 = vld [vmem:[%s7604 + $0x330] sm:$0xff]
        %v7708 = vld [vmem:[%s7604 + $0x338] sm:$0xff]
        %v7709 = vld [vmem:[%s7604 + $0x340] sm:$0xff]
        %v7710 = vld [vmem:[%s7604 + $0x348] sm:$0xff]
        %v7711 = vld [vmem:[%s7604 + $0x350] sm:$0xff]
        %v7712 = vld [vmem:[%s7604 + $0x358] sm:$0xff]
        %v7713 = vld [vmem:[%s7604 + $0x360] sm:$0xff]
        %v7714 = vld [vmem:[%s7604 + $0x368] sm:$0xff]
        %v7715 = vld [vmem:[%s7604 + $0x370] sm:$0xff]
        %v7716 = vld [vmem:[%s7604 + $0x378] sm:$0xff]
        %v7717 = vld [vmem:[%s7604 + $0x380] sm:$0xff]
        %v7718 = vld [vmem:[%s7604 + $0x388] sm:$0xff]
        %v7719 = vld [vmem:[%s7604 + $0x390] sm:$0xff]
        %v7720 = vld [vmem:[%s7604 + $0x398] sm:$0xff]
        %v7721 = vld [vmem:[%s7604 + $0x3a0] sm:$0xff]
        %v7722 = vld [vmem:[%s7604 + $0x3a8] sm:$0xff]
        %v7723 = vld [vmem:[%s7604 + $0x3b0] sm:$0xff]
        %v7724 = vld [vmem:[%s7604 + $0x3b8] sm:$0xff]
        %v7725 = vld [vmem:[%s7604 + $0x3c0] sm:$0xff]
        %v7726 = vld [vmem:[%s7604 + $0x3c8] sm:$0xff]
        %v7727 = vld [vmem:[%s7604 + $0x3d0] sm:$0xff]
        %v7728 = vld [vmem:[%s7604 + $0x3d8] sm:$0xff]
        %v7729 = vld [vmem:[%s7604 + $0x3e0] sm:$0xff]
        %v7730 = vld [vmem:[%s7604 + $0x3e8] sm:$0xff]
        %v7731 = vld [vmem:[%s7604 + $0x3f0] sm:$0xff]
        %v7732 = vld [vmem:[%s7604 + $0x3f8] sm:$0xff]
        %v7733 = vpack.c.bf16 %v7597, %v7596
        %v7734 = vpack.c.bf16 %v7599, %v7598
        %v7735 = vpack.c.bf16 %v7601, %v7600
        %v7736 = vpack.c.bf16 %v7603, %v7602
        %s7737 = scalar_lea.vmem %s7, 16
        %v7738 = vld [vmem:[%s7737] sm:$0xff]
        %v7739 = vld [vmem:[%s7737 + $0x8] sm:$0xff]
        %v7742 = vlaneseq
        %v7743 = vshrl.u32 %v7742, 7
        %v7744 = vsub.s32 0, %v7743
        %v7745 = vrot.slane %v7738, %v7744
        %v7746 = vlaneseq
        %v7747 = vshrl.u32 %v7746, 7
        %v7748 = vsub.s32 1, %v7747
        %v7749 = vrot.slane %v7738, %v7748
        %v7750 = vlaneseq
        %v7751 = vshrl.u32 %v7750, 7
        %v7752 = vsub.s32 2, %v7751
        %v7753 = vrot.slane %v7738, %v7752
        %v7754 = vlaneseq
        %v7755 = vshrl.u32 %v7754, 7
        %v7756 = vsub.s32 3, %v7755
        %v7757 = vrot.slane %v7738, %v7756
        %v7758 = vlaneseq
        %v7759 = vshrl.u32 %v7758, 7
        %v7760 = vsub.s32 4, %v7759
        %v7761 = vrot.slane %v7738, %v7760
        %v7762 = vlaneseq
        %v7763 = vshrl.u32 %v7762, 7
        %v7764 = vsub.s32 5, %v7763
        %v7765 = vrot.slane %v7738, %v7764
        %v7766 = vlaneseq
        %v7767 = vshrl.u32 %v7766, 7
        %v7768 = vsub.s32 6, %v7767
        %v7769 = vrot.slane %v7738, %v7768
        %v7770 = vlaneseq
        %v7771 = vshrl.u32 %v7770, 7
        %v7772 = vsub.s32 7, %v7771
        %v7773 = vrot.slane %v7738, %v7772
        %v7774 = vlaneseq
        %v7775 = vshrl.u32 %v7774, 7
        %v7776 = vsub.s32 0, %v7775
        %v7777 = vrot.slane %v7739, %v7776
        %v7778 = vlaneseq
        %v7779 = vshrl.u32 %v7778, 7
        %v7780 = vsub.s32 1, %v7779
        %v7781 = vrot.slane %v7739, %v7780
        %v7782 = vlaneseq
        %v7783 = vshrl.u32 %v7782, 7
        %v7784 = vsub.s32 2, %v7783
        %v7785 = vrot.slane %v7739, %v7784
        %v7786 = vlaneseq
        %v7787 = vshrl.u32 %v7786, 7
        %v7788 = vsub.s32 3, %v7787
        %v7789 = vrot.slane %v7739, %v7788
        %v7790 = vlaneseq
        %v7791 = vshrl.u32 %v7790, 7
        %v7792 = vsub.s32 4, %v7791
        %v7793 = vrot.slane %v7739, %v7792
        %v7794 = vlaneseq
        %v7795 = vshrl.u32 %v7794, 7
        %v7796 = vsub.s32 5, %v7795
        %v7797 = vrot.slane %v7739, %v7796
        %v7798 = vlaneseq
        %v7799 = vshrl.u32 %v7798, 7
        %v7800 = vsub.s32 6, %v7799
        %v7801 = vrot.slane %v7739, %v7800
        %v7802 = vlaneseq
        %v7803 = vshrl.u32 %v7802, 7
        %v7804 = vsub.s32 7, %v7803
        %v7805 = vrot.slane %v7739, %v7804
        %v7950 = vunpack.c.l.b16 %v7605
        %v7951 = vunpack.c.h.b16 %v7605
        %v7952 = vunpack.c.l.b16 %v7606
        %v7953 = vunpack.c.h.b16 %v7606
        %v7954 = vunpack.c.l.b16 %v7607
        %v7955 = vunpack.c.h.b16 %v7607
        %v7956 = vunpack.c.l.b16 %v7608
        %v7957 = vunpack.c.h.b16 %v7608
        %v7958 = vunpack.c.l.b16 %v7609
        %v7959 = vunpack.c.h.b16 %v7609
        %v7960 = vunpack.c.l.b16 %v7610
        %v7961 = vunpack.c.h.b16 %v7610
        %v7962 = vunpack.c.l.b16 %v7611
        %v7963 = vunpack.c.h.b16 %v7611
        %v7964 = vunpack.c.l.b16 %v7612
        %v7965 = vunpack.c.h.b16 %v7612
        %v7966 = vunpack.c.l.b16 %v7613
        %v7967 = vunpack.c.h.b16 %v7613
        %v7968 = vunpack.c.l.b16 %v7614
        %v7969 = vunpack.c.h.b16 %v7614
        %v7970 = vunpack.c.l.b16 %v7615
        %v7971 = vunpack.c.h.b16 %v7615
        %v7972 = vunpack.c.l.b16 %v7616
        %v7973 = vunpack.c.h.b16 %v7616
        %v7974 = vunpack.c.l.b16 %v7617
        %v7975 = vunpack.c.h.b16 %v7617
        %v7976 = vunpack.c.l.b16 %v7618
        %v7977 = vunpack.c.h.b16 %v7618
        %v7978 = vunpack.c.l.b16 %v7619
        %v7979 = vunpack.c.h.b16 %v7619
        %v7980 = vunpack.c.l.b16 %v7620
        %v7981 = vunpack.c.h.b16 %v7620
        %v7982 = vunpack.c.l.b16 %v7621
        %v7983 = vunpack.c.h.b16 %v7621
        %v7984 = vunpack.c.l.b16 %v7622
        %v7985 = vunpack.c.h.b16 %v7622
        %v7986 = vunpack.c.l.b16 %v7623
        %v7987 = vunpack.c.h.b16 %v7623
        %v7988 = vunpack.c.l.b16 %v7624
        %v7989 = vunpack.c.h.b16 %v7624
        %v7990 = vunpack.c.l.b16 %v7625
        %v7991 = vunpack.c.h.b16 %v7625
        %v7992 = vunpack.c.l.b16 %v7626
        %v7993 = vunpack.c.h.b16 %v7626
        %v7994 = vunpack.c.l.b16 %v7627
        %v7995 = vunpack.c.h.b16 %v7627
        %v7996 = vunpack.c.l.b16 %v7628
        %v7997 = vunpack.c.h.b16 %v7628
        %v7998 = vunpack.c.l.b16 %v7629
        %v7999 = vunpack.c.h.b16 %v7629
        %v8000 = vunpack.c.l.b16 %v7630
        %v8001 = vunpack.c.h.b16 %v7630
        %v8002 = vunpack.c.l.b16 %v7631
        %v8003 = vunpack.c.h.b16 %v7631
        %v8004 = vunpack.c.l.b16 %v7632
        %v8005 = vunpack.c.h.b16 %v7632
        %v8006 = vunpack.c.l.b16 %v7633
        %v8007 = vunpack.c.h.b16 %v7633
        %v8008 = vunpack.c.l.b16 %v7634
        %v8009 = vunpack.c.h.b16 %v7634
        %v8010 = vunpack.c.l.b16 %v7635
        %v8011 = vunpack.c.h.b16 %v7635
        %v8012 = vunpack.c.l.b16 %v7636
        %v8013 = vunpack.c.h.b16 %v7636
        %v8014 = vunpack.c.l.b16 %v7637
        %v8015 = vunpack.c.h.b16 %v7637
        %v8016 = vunpack.c.l.b16 %v7638
        %v8017 = vunpack.c.h.b16 %v7638
        %v8018 = vunpack.c.l.b16 %v7639
        %v8019 = vunpack.c.h.b16 %v7639
        %v8020 = vunpack.c.l.b16 %v7640
        %v8021 = vunpack.c.h.b16 %v7640
        %v8022 = vunpack.c.l.b16 %v7641
        %v8023 = vunpack.c.h.b16 %v7641
        %v8024 = vunpack.c.l.b16 %v7642
        %v8025 = vunpack.c.h.b16 %v7642
        %v8026 = vunpack.c.l.b16 %v7643
        %v8027 = vunpack.c.h.b16 %v7643
        %v8028 = vunpack.c.l.b16 %v7644
        %v8029 = vunpack.c.h.b16 %v7644
        %v8030 = vunpack.c.l.b16 %v7645
        %v8031 = vunpack.c.h.b16 %v7645
        %v8032 = vunpack.c.l.b16 %v7646
        %v8033 = vunpack.c.h.b16 %v7646
        %v8034 = vunpack.c.l.b16 %v7647
        %v8035 = vunpack.c.h.b16 %v7647
        %v8036 = vunpack.c.l.b16 %v7648
        %v8037 = vunpack.c.h.b16 %v7648
        %v8038 = vunpack.c.l.b16 %v7649
        %v8039 = vunpack.c.h.b16 %v7649
        %v8040 = vunpack.c.l.b16 %v7650
        %v8041 = vunpack.c.h.b16 %v7650
        %v8042 = vunpack.c.l.b16 %v7651
        %v8043 = vunpack.c.h.b16 %v7651
        %v8044 = vunpack.c.l.b16 %v7652
        %v8045 = vunpack.c.h.b16 %v7652
        %v8046 = vunpack.c.l.b16 %v7653
        %v8047 = vunpack.c.h.b16 %v7653
        %v8048 = vunpack.c.l.b16 %v7654
        %v8049 = vunpack.c.h.b16 %v7654
        %v8050 = vunpack.c.l.b16 %v7655
        %v8051 = vunpack.c.h.b16 %v7655
        %v8052 = vunpack.c.l.b16 %v7656
        %v8053 = vunpack.c.h.b16 %v7656
        %v8054 = vunpack.c.l.b16 %v7657
        %v8055 = vunpack.c.h.b16 %v7657
        %v8056 = vunpack.c.l.b16 %v7658
        %v8057 = vunpack.c.h.b16 %v7658
        %v8058 = vunpack.c.l.b16 %v7659
        %v8059 = vunpack.c.h.b16 %v7659
        %v8060 = vunpack.c.l.b16 %v7660
        %v8061 = vunpack.c.h.b16 %v7660
        %v8062 = vunpack.c.l.b16 %v7661
        %v8063 = vunpack.c.h.b16 %v7661
        %v8064 = vunpack.c.l.b16 %v7662
        %v8065 = vunpack.c.h.b16 %v7662
        %v8066 = vunpack.c.l.b16 %v7663
        %v8067 = vunpack.c.h.b16 %v7663
        %v8068 = vunpack.c.l.b16 %v7664
        %v8069 = vunpack.c.h.b16 %v7664
        %v8070 = vunpack.c.l.b16 %v7665
        %v8071 = vunpack.c.h.b16 %v7665
        %v8072 = vunpack.c.l.b16 %v7666
        %v8073 = vunpack.c.h.b16 %v7666
        %v8074 = vunpack.c.l.b16 %v7667
        %v8075 = vunpack.c.h.b16 %v7667
        %v8076 = vunpack.c.l.b16 %v7668
        %v8077 = vunpack.c.h.b16 %v7668
        %v8078 = vunpack.c.l.b16 %v7669
        %v8079 = vunpack.c.h.b16 %v7669
        %v8080 = vunpack.c.l.b16 %v7670
        %v8081 = vunpack.c.h.b16 %v7670
        %v8082 = vunpack.c.l.b16 %v7671
        %v8083 = vunpack.c.h.b16 %v7671
        %v8084 = vunpack.c.l.b16 %v7672
        %v8085 = vunpack.c.h.b16 %v7672
        %v8086 = vunpack.c.l.b16 %v7673
        %v8087 = vunpack.c.h.b16 %v7673
        %v8088 = vunpack.c.l.b16 %v7674
        %v8089 = vunpack.c.h.b16 %v7674
        %v8090 = vunpack.c.l.b16 %v7675
        %v8091 = vunpack.c.h.b16 %v7675
        %v8092 = vunpack.c.l.b16 %v7676
        %v8093 = vunpack.c.h.b16 %v7676
        %v8094 = vunpack.c.l.b16 %v7677
        %v8095 = vunpack.c.h.b16 %v7677
        %v8096 = vunpack.c.l.b16 %v7678
        %v8097 = vunpack.c.h.b16 %v7678
        %v8098 = vunpack.c.l.b16 %v7679
        %v8099 = vunpack.c.h.b16 %v7679
        %v8100 = vunpack.c.l.b16 %v7680
        %v8101 = vunpack.c.h.b16 %v7680
        %v8102 = vunpack.c.l.b16 %v7681
        %v8103 = vunpack.c.h.b16 %v7681
        %v8104 = vunpack.c.l.b16 %v7682
        %v8105 = vunpack.c.h.b16 %v7682
        %v8106 = vunpack.c.l.b16 %v7683
        %v8107 = vunpack.c.h.b16 %v7683
        %v8108 = vunpack.c.l.b16 %v7684
        %v8109 = vunpack.c.h.b16 %v7684
        %v8110 = vunpack.c.l.b16 %v7685
        %v8111 = vunpack.c.h.b16 %v7685
        %v8112 = vunpack.c.l.b16 %v7686
        %v8113 = vunpack.c.h.b16 %v7686
        %v8114 = vunpack.c.l.b16 %v7687
        %v8115 = vunpack.c.h.b16 %v7687
        %v8116 = vunpack.c.l.b16 %v7688
        %v8117 = vunpack.c.h.b16 %v7688
        %v8118 = vunpack.c.l.b16 %v7689
        %v8119 = vunpack.c.h.b16 %v7689
        %v8120 = vunpack.c.l.b16 %v7690
        %v8121 = vunpack.c.h.b16 %v7690
        %v8122 = vunpack.c.l.b16 %v7691
        %v8123 = vunpack.c.h.b16 %v7691
        %v8124 = vunpack.c.l.b16 %v7692
        %v8125 = vunpack.c.h.b16 %v7692
        %v8126 = vunpack.c.l.b16 %v7693
        %v8127 = vunpack.c.h.b16 %v7693
        %v8128 = vunpack.c.l.b16 %v7694
        %v8129 = vunpack.c.h.b16 %v7694
        %v8130 = vunpack.c.l.b16 %v7695
        %v8131 = vunpack.c.h.b16 %v7695
        %v8132 = vunpack.c.l.b16 %v7696
        %v8133 = vunpack.c.h.b16 %v7696
        %v8134 = vunpack.c.l.b16 %v7697
        %v8135 = vunpack.c.h.b16 %v7697
        %v8136 = vunpack.c.l.b16 %v7698
        %v8137 = vunpack.c.h.b16 %v7698
        %v8138 = vunpack.c.l.b16 %v7699
        %v8139 = vunpack.c.h.b16 %v7699
        %v8140 = vunpack.c.l.b16 %v7700
        %v8141 = vunpack.c.h.b16 %v7700
        %v8142 = vunpack.c.l.b16 %v7701
        %v8143 = vunpack.c.h.b16 %v7701
        %v8144 = vunpack.c.l.b16 %v7702
        %v8145 = vunpack.c.h.b16 %v7702
        %v8146 = vunpack.c.l.b16 %v7703
        %v8147 = vunpack.c.h.b16 %v7703
        %v8148 = vunpack.c.l.b16 %v7704
        %v8149 = vunpack.c.h.b16 %v7704
        %v8150 = vunpack.c.l.b16 %v7705
        %v8151 = vunpack.c.h.b16 %v7705
        %v8152 = vunpack.c.l.b16 %v7706
        %v8153 = vunpack.c.h.b16 %v7706
        %v8154 = vunpack.c.l.b16 %v7707
        %v8155 = vunpack.c.h.b16 %v7707
        %v8156 = vunpack.c.l.b16 %v7708
        %v8157 = vunpack.c.h.b16 %v7708
        %v8158 = vunpack.c.l.b16 %v7709
        %v8159 = vunpack.c.h.b16 %v7709
        %v8160 = vunpack.c.l.b16 %v7710
        %v8161 = vunpack.c.h.b16 %v7710
        %v8162 = vunpack.c.l.b16 %v7711
        %v8163 = vunpack.c.h.b16 %v7711
        %v8164 = vunpack.c.l.b16 %v7712
        %v8165 = vunpack.c.h.b16 %v7712
        %v8166 = vunpack.c.l.b16 %v7713
        %v8167 = vunpack.c.h.b16 %v7713
        %v8168 = vunpack.c.l.b16 %v7714
        %v8169 = vunpack.c.h.b16 %v7714
        %v8170 = vunpack.c.l.b16 %v7715
        %v8171 = vunpack.c.h.b16 %v7715
        %v8172 = vunpack.c.l.b16 %v7716
        %v8173 = vunpack.c.h.b16 %v7716
        %v8174 = vunpack.c.l.b16 %v7717
        %v8175 = vunpack.c.h.b16 %v7717
        %v8176 = vunpack.c.l.b16 %v7718
        %v8177 = vunpack.c.h.b16 %v7718
        %v8178 = vunpack.c.l.b16 %v7719
        %v8179 = vunpack.c.h.b16 %v7719
        %v8180 = vunpack.c.l.b16 %v7720
        %v8181 = vunpack.c.h.b16 %v7720
        %v8182 = vunpack.c.l.b16 %v7721
        %v8183 = vunpack.c.h.b16 %v7721
        %v8184 = vunpack.c.l.b16 %v7722
        %v8185 = vunpack.c.h.b16 %v7722
        %v8186 = vunpack.c.l.b16 %v7723
        %v8187 = vunpack.c.h.b16 %v7723
        %v8188 = vunpack.c.l.b16 %v7724
        %v8189 = vunpack.c.h.b16 %v7724
        %v8190 = vunpack.c.l.b16 %v7725
        %v8191 = vunpack.c.h.b16 %v7725
        %v8192 = vunpack.c.l.b16 %v7726
        %v8193 = vunpack.c.h.b16 %v7726
        %v8194 = vunpack.c.l.b16 %v7727
        %v8195 = vunpack.c.h.b16 %v7727
        %v8196 = vunpack.c.l.b16 %v7728
        %v8197 = vunpack.c.h.b16 %v7728
        %v8198 = vunpack.c.l.b16 %v7729
        %v8199 = vunpack.c.h.b16 %v7729
        %v8200 = vunpack.c.l.b16 %v7730
        %v8201 = vunpack.c.h.b16 %v7730
        %v8202 = vunpack.c.l.b16 %v7731
        %v8203 = vunpack.c.h.b16 %v7731
        %v8204 = vunpack.c.l.b16 %v7732
        %v8205 = vunpack.c.h.b16 %v7732
        %v8206 = vpack.c.b16 %v7966, %v7950
        %v8207 = vpack.c.b16 %v7967, %v7951
        %v8208 = vpack.c.b16 %v7968, %v7952
        %v8209 = vpack.c.b16 %v7969, %v7953
        %v8210 = vpack.c.b16 %v7970, %v7954
        %v8211 = vpack.c.b16 %v7971, %v7955
        %v8212 = vpack.c.b16 %v7972, %v7956
        %v8213 = vpack.c.b16 %v7973, %v7957
        %v8214 = vpack.c.b16 %v7974, %v7958
        %v8215 = vpack.c.b16 %v7975, %v7959
        %v8216 = vpack.c.b16 %v7976, %v7960
        %v8217 = vpack.c.b16 %v7977, %v7961
        %v8218 = vpack.c.b16 %v7978, %v7962
        %v8219 = vpack.c.b16 %v7979, %v7963
        %v8220 = vpack.c.b16 %v7980, %v7964
        %v8221 = vpack.c.b16 %v7981, %v7965
        %v8222 = vpack.c.b16 %v7998, %v7982
        %v8223 = vpack.c.b16 %v7999, %v7983
        %v8224 = vpack.c.b16 %v8000, %v7984
        %v8225 = vpack.c.b16 %v8001, %v7985
        %v8226 = vpack.c.b16 %v8002, %v7986
        %v8227 = vpack.c.b16 %v8003, %v7987
        %v8228 = vpack.c.b16 %v8004, %v7988
        %v8229 = vpack.c.b16 %v8005, %v7989
        %v8230 = vpack.c.b16 %v8006, %v7990
        %v8231 = vpack.c.b16 %v8007, %v7991
        %v8232 = vpack.c.b16 %v8008, %v7992
        %v8233 = vpack.c.b16 %v8009, %v7993
        %v8234 = vpack.c.b16 %v8010, %v7994
        %v8235 = vpack.c.b16 %v8011, %v7995
        %v8236 = vpack.c.b16 %v8012, %v7996
        %v8237 = vpack.c.b16 %v8013, %v7997
        %v8238 = vpack.c.b16 %v8030, %v8014
        %v8239 = vpack.c.b16 %v8031, %v8015
        %v8240 = vpack.c.b16 %v8032, %v8016
        %v8241 = vpack.c.b16 %v8033, %v8017
        %v8242 = vpack.c.b16 %v8034, %v8018
        %v8243 = vpack.c.b16 %v8035, %v8019
        %v8244 = vpack.c.b16 %v8036, %v8020
        %v8245 = vpack.c.b16 %v8037, %v8021
        %v8246 = vpack.c.b16 %v8038, %v8022
        %v8247 = vpack.c.b16 %v8039, %v8023
        %v8248 = vpack.c.b16 %v8040, %v8024
        %v8249 = vpack.c.b16 %v8041, %v8025
        %v8250 = vpack.c.b16 %v8042, %v8026
        %v8251 = vpack.c.b16 %v8043, %v8027
        %v8252 = vpack.c.b16 %v8044, %v8028
        %v8253 = vpack.c.b16 %v8045, %v8029
        %v8254 = vpack.c.b16 %v8062, %v8046
        %v8255 = vpack.c.b16 %v8063, %v8047
        %v8256 = vpack.c.b16 %v8064, %v8048
        %v8257 = vpack.c.b16 %v8065, %v8049
        %v8258 = vpack.c.b16 %v8066, %v8050
        %v8259 = vpack.c.b16 %v8067, %v8051
        %v8260 = vpack.c.b16 %v8068, %v8052
        %v8261 = vpack.c.b16 %v8069, %v8053
        %v8262 = vpack.c.b16 %v8070, %v8054
        %v8263 = vpack.c.b16 %v8071, %v8055
        %v8264 = vpack.c.b16 %v8072, %v8056
        %v8265 = vpack.c.b16 %v8073, %v8057
        %v8266 = vpack.c.b16 %v8074, %v8058
        %v8267 = vpack.c.b16 %v8075, %v8059
        %v8268 = vpack.c.b16 %v8076, %v8060
        %v8269 = vpack.c.b16 %v8077, %v8061
        %v8270 = vpack.c.b16 %v8094, %v8078
        %v8271 = vpack.c.b16 %v8095, %v8079
        %v8272 = vpack.c.b16 %v8096, %v8080
        %v8273 = vpack.c.b16 %v8097, %v8081
        %v8274 = vpack.c.b16 %v8098, %v8082
        %v8275 = vpack.c.b16 %v8099, %v8083
        %v8276 = vpack.c.b16 %v8100, %v8084
        %v8277 = vpack.c.b16 %v8101, %v8085
        %v8278 = vpack.c.b16 %v8102, %v8086
        %v8279 = vpack.c.b16 %v8103, %v8087
        %v8280 = vpack.c.b16 %v8104, %v8088
        %v8281 = vpack.c.b16 %v8105, %v8089
        %v8282 = vpack.c.b16 %v8106, %v8090
        %v8283 = vpack.c.b16 %v8107, %v8091
        %v8284 = vpack.c.b16 %v8108, %v8092
        %v8285 = vpack.c.b16 %v8109, %v8093
        %v8286 = vpack.c.b16 %v8126, %v8110
        %v8287 = vpack.c.b16 %v8127, %v8111
        %v8288 = vpack.c.b16 %v8128, %v8112
        %v8289 = vpack.c.b16 %v8129, %v8113
        %v8290 = vpack.c.b16 %v8130, %v8114
        %v8291 = vpack.c.b16 %v8131, %v8115
        %v8292 = vpack.c.b16 %v8132, %v8116
        %v8293 = vpack.c.b16 %v8133, %v8117
        %v8294 = vpack.c.b16 %v8134, %v8118
        %v8295 = vpack.c.b16 %v8135, %v8119
        %v8296 = vpack.c.b16 %v8136, %v8120
        %v8297 = vpack.c.b16 %v8137, %v8121
        %v8298 = vpack.c.b16 %v8138, %v8122
        %v8299 = vpack.c.b16 %v8139, %v8123
        %v8300 = vpack.c.b16 %v8140, %v8124
        %v8301 = vpack.c.b16 %v8141, %v8125
        %v8302 = vpack.c.b16 %v8158, %v8142
        %v8303 = vpack.c.b16 %v8159, %v8143
        %v8304 = vpack.c.b16 %v8160, %v8144
        %v8305 = vpack.c.b16 %v8161, %v8145
        %v8306 = vpack.c.b16 %v8162, %v8146
        %v8307 = vpack.c.b16 %v8163, %v8147
        %v8308 = vpack.c.b16 %v8164, %v8148
        %v8309 = vpack.c.b16 %v8165, %v8149
        %v8310 = vpack.c.b16 %v8166, %v8150
        %v8311 = vpack.c.b16 %v8167, %v8151
        %v8312 = vpack.c.b16 %v8168, %v8152
        %v8313 = vpack.c.b16 %v8169, %v8153
        %v8314 = vpack.c.b16 %v8170, %v8154
        %v8315 = vpack.c.b16 %v8171, %v8155
        %v8316 = vpack.c.b16 %v8172, %v8156
        %v8317 = vpack.c.b16 %v8173, %v8157
        %v8318 = vpack.c.b16 %v8190, %v8174
        %v8319 = vpack.c.b16 %v8191, %v8175
        %v8320 = vpack.c.b16 %v8192, %v8176
        %v8321 = vpack.c.b16 %v8193, %v8177
        %v8322 = vpack.c.b16 %v8194, %v8178
        %v8323 = vpack.c.b16 %v8195, %v8179
        %v8324 = vpack.c.b16 %v8196, %v8180
        %v8325 = vpack.c.b16 %v8197, %v8181
        %v8326 = vpack.c.b16 %v8198, %v8182
        %v8327 = vpack.c.b16 %v8199, %v8183
        %v8328 = vpack.c.b16 %v8200, %v8184
        %v8329 = vpack.c.b16 %v8201, %v8185
        %v8330 = vpack.c.b16 %v8202, %v8186
        %v8331 = vpack.c.b16 %v8203, %v8187
        %v8332 = vpack.c.b16 %v8204, %v8188
        %v8333 = vpack.c.b16 %v8205, %v8189
        %8462 = vmatprep.subr.bf16.mxu0 %v8207
        %8463 = vmatpush1.bf16.msra.mxu0 %v8206
        %8464 = vmatprep.subr.bf16.mxu0 %v8223
        %8465 = vmatpush1.bf16.msra.mxu0 %v8222
        %8466 = vmatprep.subr.bf16.mxu0 %v8239
        %8467 = vmatpush1.bf16.msra.mxu0 %v8238
        %8468 = vmatprep.subr.bf16.mxu0 %v8255
        %8469 = vmatpush1.bf16.msra.mxu0 %v8254
        %8470 = vmatprep.subr.bf16.mxu0 %v8271
        %8471 = vmatpush1.bf16.msra.mxu0 %v8270
        %8472 = vmatprep.subr.bf16.mxu0 %v8287
        %8473 = vmatpush1.bf16.msra.mxu0 %v8286
        %8474 = vmatprep.subr.bf16.mxu0 %v8303
        %8475 = vmatpush1.bf16.msra.mxu0 %v8302
        %8476 = vmatprep.subr.bf16.mxu0 %v8319
        %8477 = vmatpush1.bf16.msra.mxu0 %v8318
        %8478 = vmatprep.subr.bf16.mxu0 0
        %8479 = vmatpush1.bf16.msra.mxu0 0
        %8480 = vmatprep.subr.bf16.mxu0 0
        %8481 = vmatpush1.bf16.msra.mxu0 0
        %8482 = vmatprep.subr.bf16.mxu0 0
        %8483 = vmatpush1.bf16.msra.mxu0 0
        %8484 = vmatprep.subr.bf16.mxu0 0
        %8485 = vmatpush1.bf16.msra.mxu0 0
        %8486 = vmatprep.subr.bf16.mxu0 0
        %8487 = vmatpush1.bf16.msra.mxu0 0
        %8488 = vmatprep.subr.bf16.mxu0 0
        %8489 = vmatpush1.bf16.msra.mxu0 0
        %8490 = vmatprep.subr.bf16.mxu0 0
        %8491 = vmatpush1.bf16.msra.mxu0 0
        %8492 = vmatprep.subr.bf16.mxu0 0
        %8493 = vmatpush1.bf16.msra.mxu0 0
        %8494 = vmatprep.mubr.bf16.mxu0 0
        %8495 = vmatmul.mubr.bf16.gmra.mrb[0].mxu0 %v7733
        %v8496 = vpop.f32.mrb[0].mxu0
        %v8497 = vadd.f32 %v7745, %v8496
        %v8498 = vpop.f32.mrb[0].mxu0
        %v8499 = vadd.f32 %v7749, %v8498
        %v8500 = vpop.f32.mrb[0].mxu0
        %v8501 = vadd.f32 %v7745, %v8500
        %v8502 = vpop.f32.mrb[0].mxu0
        %v8503 = vadd.f32 %v7749, %v8502
        %8504 = vmatprep.mubr.bf16.mxu0 0
        %8505 = vmatmul.mubr.bf16.gmra.mrb[0].mxu0 %v7734
        %v8506 = vpop.f32.mrb[0].mxu0
        %v8507 = vadd.f32 %v7745, %v8506
        %v8508 = vpop.f32.mrb[0].mxu0
        %v8509 = vadd.f32 %v7749, %v8508
        %v8510 = vpop.f32.mrb[0].mxu0
        %v8511 = vadd.f32 %v7745, %v8510
        %v8512 = vpop.f32.mrb[0].mxu0
        %v8513 = vadd.f32 %v7749, %v8512
        %8514 = vmatprep.mubr.bf16.mxu0 0
        %8515 = vmatmul.mubr.bf16.gmra.mrb[0].mxu0 %v7735
        %v8516 = vpop.f32.mrb[0].mxu0
        %v8517 = vadd.f32 %v7745, %v8516
        %v8518 = vpop.f32.mrb[0].mxu0
        %v8519 = vadd.f32 %v7749, %v8518
        %v8520 = vpop.f32.mrb[0].mxu0
        %v8521 = vadd.f32 %v7745, %v8520
        %v8522 = vpop.f32.mrb[0].mxu0
        %v8523 = vadd.f32 %v7749, %v8522
        %8524 = vmatprep.mubr.bf16.mxu0 0
        %8525 = vmatmul.mubr.bf16.gmra.mrb[0].mxu0 %v7736
        %v8526 = vpop.f32.mrb[0].mxu0
        %v8527 = vadd.f32 %v7745, %v8526
        %v8528 = vpop.f32.mrb[0].mxu0
        %v8529 = vadd.f32 %v7749, %v8528
        %v8530 = vpop.f32.mrb[0].mxu0
        %v8531 = vadd.f32 %v7745, %v8530
        %v8532 = vpop.f32.mrb[0].mxu0
        %v8533 = vadd.f32 %v7749, %v8532
        %8534 = vdwg.mxu0
        %8535 = vmatprep.subr.bf16.mxu0 %v8209
        %8536 = vmatpush1.bf16.msra.mxu0 %v8208
        %8537 = vmatprep.subr.bf16.mxu0 %v8225
        %8538 = vmatpush1.bf16.msra.mxu0 %v8224
        %8539 = vmatprep.subr.bf16.mxu0 %v8241
        %8540 = vmatpush1.bf16.msra.mxu0 %v8240
        %8541 = vmatprep.subr.bf16.mxu0 %v8257
        %8542 = vmatpush1.bf16.msra.mxu0 %v8256
        %8543 = vmatprep.subr.bf16.mxu0 %v8273
        %8544 = vmatpush1.bf16.msra.mxu0 %v8272
        %8545 = vmatprep.subr.bf16.mxu0 %v8289
        %8546 = vmatpush1.bf16.msra.mxu0 %v8288
        %8547 = vmatprep.subr.bf16.mxu0 %v8305
        %8548 = vmatpush1.bf16.msra.mxu0 %v8304
        %8549 = vmatprep.subr.bf16.mxu0 %v8321
        %8550 = vmatpush1.bf16.msra.mxu0 %v8320
        %8551 = vmatprep.subr.bf16.mxu0 0
        %8552 = vmatpush1.bf16.msra.mxu0 0
        %8553 = vmatprep.subr.bf16.mxu0 0
        %8554 = vmatpush1.bf16.msra.mxu0 0
        %8555 = vmatprep.subr.bf16.mxu0 0
        %8556 = vmatpush1.bf16.msra.mxu0 0
        %8557 = vmatprep.subr.bf16.mxu0 0
        %8558 = vmatpush1.bf16.msra.mxu0 0
        %8559 = vmatprep.subr.bf16.mxu0 0
        %8560 = vmatpush1.bf16.msra.mxu0 0
        %8561 = vmatprep.subr.bf16.mxu0 0
        %8562 = vmatpush1.bf16.msra.mxu0 0
        %8563 = vmatprep.subr.bf16.mxu0 0
        %8564 = vmatpush1.bf16.msra.mxu0 0
        %8565 = vmatprep.subr.bf16.mxu0 0
        %8566 = vmatpush1.bf16.msra.mxu0 0
        %8567 = vmatprep.mubr.bf16.mxu0 0
        %8568 = vmatmul.mubr.bf16.gmra.mrb[0].mxu0 %v7733
        %v8569 = vpop.f32.mrb[0].mxu0
        %v8570 = vadd.f32 %v7753, %v8569
        %v8571 = vpop.f32.mrb[0].mxu0
        %v8572 = vadd.f32 %v7757, %v8571
        %v8573 = vpop.f32.mrb[0].mxu0
        %v8574 = vadd.f32 %v7753, %v8573
        %v8575 = vpop.f32.mrb[0].mxu0
        %v8576 = vadd.f32 %v7757, %v8575
        %8577 = vmatprep.mubr.bf16.mxu0 0
        %8578 = vmatmul.mubr.bf16.gmra.mrb[0].mxu0 %v7734
        %v8579 = vpop.f32.mrb[0].mxu0
        %v8580 = vadd.f32 %v7753, %v8579
        %v8581 = vpop.f32.mrb[0].mxu0
        %v8582 = vadd.f32 %v7757, %v8581
        %v8583 = vpop.f32.mrb[0].mxu0
        %v8584 = vadd.f32 %v7753, %v8583
        %v8585 = vpop.f32.mrb[0].mxu0
        %v8586 = vadd.f32 %v7757, %v8585
        %8587 = vmatprep.mubr.bf16.mxu0 0
        %8588 = vmatmul.mubr.bf16.gmra.mrb[0].mxu0 %v7735
        %v8589 = vpop.f32.mrb[0].mxu0
        %v8590 = vadd.f32 %v7753, %v8589
        %v8591 = vpop.f32.mrb[0].mxu0
        %v8592 = vadd.f32 %v7757, %v8591
        %v8593 = vpop.f32.mrb[0].mxu0
        %v8594 = vadd.f32 %v7753, %v8593
        %v8595 = vpop.f32.mrb[0].mxu0
        %v8596 = vadd.f32 %v7757, %v8595
        %8597 = vmatprep.mubr.bf16.mxu0 0
        %8598 = vmatmul.mubr.bf16.gmra.mrb[0].mxu0 %v7736
        %v8599 = vpop.f32.mrb[0].mxu0
        %v8600 = vadd.f32 %v7753, %v8599
        %v8601 = vpop.f32.mrb[0].mxu0
        %v8602 = vadd.f32 %v7757, %v8601
        %v8603 = vpop.f32.mrb[0].mxu0
        %v8604 = vadd.f32 %v7753, %v8603
        %v8605 = vpop.f32.mrb[0].mxu0
        %v8606 = vadd.f32 %v7757, %v8605
        %8607 = vdwg.mxu0
        %8608 = vmatprep.subr.bf16.mxu0 %v8211
        %8609 = vmatpush1.bf16.msra.mxu0 %v8210
        %8610 = vmatprep.subr.bf16.mxu0 %v8227
        %8611 = vmatpush1.bf16.msra.mxu0 %v8226
        %8612 = vmatprep.subr.bf16.mxu0 %v8243
        %8613 = vmatpush1.bf16.msra.mxu0 %v8242
        %8614 = vmatprep.subr.bf16.mxu0 %v8259
        %8615 = vmatpush1.bf16.msra.mxu0 %v8258
        %8616 = vmatprep.subr.bf16.mxu0 %v8275
        %8617 = vmatpush1.bf16.msra.mxu0 %v8274
        %8618 = vmatprep.subr.bf16.mxu0 %v8291
        %8619 = vmatpush1.bf16.msra.mxu0 %v8290
        %8620 = vmatprep.subr.bf16.mxu0 %v8307
        %8621 = vmatpush1.bf16.msra.mxu0 %v8306
        %8622 = vmatprep.subr.bf16.mxu0 %v8323
        %8623 = vmatpush1.bf16.msra.mxu0 %v8322
        %8624 = vmatprep.subr.bf16.mxu0 0
        %8625 = vmatpush1.bf16.msra.mxu0 0
        %8626 = vmatprep.subr.bf16.mxu0 0
        %8627 = vmatpush1.bf16.msra.mxu0 0
        %8628 = vmatprep.subr.bf16.mxu0 0
        %8629 = vmatpush1.bf16.msra.mxu0 0
        %8630 = vmatprep.subr.bf16.mxu0 0
        %8631 = vmatpush1.bf16.msra.mxu0 0
        %8632 = vmatprep.subr.bf16.mxu0 0
        %8633 = vmatpush1.bf16.msra.mxu0 0
        %8634 = vmatprep.subr.bf16.mxu0 0
        %8635 = vmatpush1.bf16.msra.mxu0 0
        %8636 = vmatprep.subr.bf16.mxu0 0
        %8637 = vmatpush1.bf16.msra.mxu0 0
        %8638 = vmatprep.subr.bf16.mxu0 0
        %8639 = vmatpush1.bf16.msra.mxu0 0
        %8640 = vmatprep.mubr.bf16.mxu0 0
        %8641 = vmatmul.mubr.bf16.gmra.mrb[0].mxu0 %v7733
        %v8642 = vpop.f32.mrb[0].mxu0
        %v8643 = vadd.f32 %v7761, %v8642
        %v8644 = vpop.f32.mrb[0].mxu0
        %v8645 = vadd.f32 %v7765, %v8644
        %v8646 = vpop.f32.mrb[0].mxu0
        %v8647 = vadd.f32 %v7761, %v8646
        %v8648 = vpop.f32.mrb[0].mxu0
        %v8649 = vadd.f32 %v7765, %v8648
        %8650 = vmatprep.mubr.bf16.mxu0 0
        %8651 = vmatmul.mubr.bf16.gmra.mrb[0].mxu0 %v7734
        %v8652 = vpop.f32.mrb[0].mxu0
        %v8653 = vadd.f32 %v7761, %v8652
        %v8654 = vpop.f32.mrb[0].mxu0
        %v8655 = vadd.f32 %v7765, %v8654
        %v8656 = vpop.f32.mrb[0].mxu0
        %v8657 = vadd.f32 %v7761, %v8656
        %v8658 = vpop.f32.mrb[0].mxu0
        %v8659 = vadd.f32 %v7765, %v8658
        %8660 = vmatprep.mubr.bf16.mxu0 0
        %8661 = vmatmul.mubr.bf16.gmra.mrb[0].mxu0 %v7735
        %v8662 = vpop.f32.mrb[0].mxu0
        %v8663 = vadd.f32 %v7761, %v8662
        %v8664 = vpop.f32.mrb[0].mxu0
        %v8665 = vadd.f32 %v7765, %v8664
        %v8666 = vpop.f32.mrb[0].mxu0
        %v8667 = vadd.f32 %v7761, %v8666
        %v8668 = vpop.f32.mrb[0].mxu0
        %v8669 = vadd.f32 %v7765, %v8668
        %8670 = vmatprep.mubr.bf16.mxu0 0
        %8671 = vmatmul.mubr.bf16.gmra.mrb[0].mxu0 %v7736
        %v8672 = vpop.f32.mrb[0].mxu0
        %v8673 = vadd.f32 %v7761, %v8672
        %v8674 = vpop.f32.mrb[0].mxu0
        %v8675 = vadd.f32 %v7765, %v8674
        %v8676 = vpop.f32.mrb[0].mxu0
        %v8677 = vadd.f32 %v7761, %v8676
        %v8678 = vpop.f32.mrb[0].mxu0
        %v8679 = vadd.f32 %v7765, %v8678
        %8680 = vdwg.mxu0
        %8681 = vmatprep.subr.bf16.mxu0 %v8213
        %8682 = vmatpush1.bf16.msra.mxu0 %v8212
        %8683 = vmatprep.subr.bf16.mxu0 %v8229
        %8684 = vmatpush1.bf16.msra.mxu0 %v8228
        %8685 = vmatprep.subr.bf16.mxu0 %v8245
        %8686 = vmatpush1.bf16.msra.mxu0 %v8244
        %8687 = vmatprep.subr.bf16.mxu0 %v8261
        %8688 = vmatpush1.bf16.msra.mxu0 %v8260
        %8689 = vmatprep.subr.bf16.mxu0 %v8277
        %8690 = vmatpush1.bf16.msra.mxu0 %v8276
        %8691 = vmatprep.subr.bf16.mxu0 %v8293
        %8692 = vmatpush1.bf16.msra.mxu0 %v8292
        %8693 = vmatprep.subr.bf16.mxu0 %v8309
        %8694 = vmatpush1.bf16.msra.mxu0 %v8308
        %8695 = vmatprep.subr.bf16.mxu0 %v8325
        %8696 = vmatpush1.bf16.msra.mxu0 %v8324
        %8697 = vmatprep.subr.bf16.mxu0 0
        %8698 = vmatpush1.bf16.msra.mxu0 0
        %8699 = vmatprep.subr.bf16.mxu0 0
        %8700 = vmatpush1.bf16.msra.mxu0 0
        %8701 = vmatprep.subr.bf16.mxu0 0
        %8702 = vmatpush1.bf16.msra.mxu0 0
        %8703 = vmatprep.subr.bf16.mxu0 0
        %8704 = vmatpush1.bf16.msra.mxu0 0
        %8705 = vmatprep.subr.bf16.mxu0 0
        %8706 = vmatpush1.bf16.msra.mxu0 0
        %8707 = vmatprep.subr.bf16.mxu0 0
        %8708 = vmatpush1.bf16.msra.mxu0 0
        %8709 = vmatprep.subr.bf16.mxu0 0
        %8710 = vmatpush1.bf16.msra.mxu0 0
        %8711 = vmatprep.subr.bf16.mxu0 0
        %8712 = vmatpush1.bf16.msra.mxu0 0
        %8713 = vmatprep.mubr.bf16.mxu0 0
        %8714 = vmatmul.mubr.bf16.gmra.mrb[0].mxu0 %v7733
        %v8715 = vpop.f32.mrb[0].mxu0
        %v8716 = vadd.f32 %v7769, %v8715
        %v8717 = vpop.f32.mrb[0].mxu0
        %v8718 = vadd.f32 %v7773, %v8717
        %v8719 = vpop.f32.mrb[0].mxu0
        %v8720 = vadd.f32 %v7769, %v8719
        %v8721 = vpop.f32.mrb[0].mxu0
        %v8722 = vadd.f32 %v7773, %v8721
        %8723 = vmatprep.mubr.bf16.mxu0 0
        %8724 = vmatmul.mubr.bf16.gmra.mrb[0].mxu0 %v7734
        %v8725 = vpop.f32.mrb[0].mxu0
        %v8726 = vadd.f32 %v7769, %v8725
        %v8727 = vpop.f32.mrb[0].mxu0
        %v8728 = vadd.f32 %v7773, %v8727
        %v8729 = vpop.f32.mrb[0].mxu0
        %v8730 = vadd.f32 %v7769, %v8729
        %v8731 = vpop.f32.mrb[0].mxu0
        %v8732 = vadd.f32 %v7773, %v8731
        %8733 = vmatprep.mubr.bf16.mxu0 0
        %8734 = vmatmul.mubr.bf16.gmra.mrb[0].mxu0 %v7735
        %v8735 = vpop.f32.mrb[0].mxu0
        %v8736 = vadd.f32 %v7769, %v8735
        %v8737 = vpop.f32.mrb[0].mxu0
        %v8738 = vadd.f32 %v7773, %v8737
        %v8739 = vpop.f32.mrb[0].mxu0
        %v8740 = vadd.f32 %v7769, %v8739
        %v8741 = vpop.f32.mrb[0].mxu0
        %v8742 = vadd.f32 %v7773, %v8741
        %8743 = vmatprep.mubr.bf16.mxu0 0
        %8744 = vmatmul.mubr.bf16.gmra.mrb[0].mxu0 %v7736
        %v8745 = vpop.f32.mrb[0].mxu0
        %v8746 = vadd.f32 %v7769, %v8745
        %v8747 = vpop.f32.mrb[0].mxu0
        %v8748 = vadd.f32 %v7773, %v8747
        %v8749 = vpop.f32.mrb[0].mxu0
        %v8750 = vadd.f32 %v7769, %v8749
        %v8751 = vpop.f32.mrb[0].mxu0
        %v8752 = vadd.f32 %v7773, %v8751
        %8753 = vdwg.mxu0
        %8754 = vmatprep.subr.bf16.mxu0 %v8215
        %8755 = vmatpush1.bf16.msra.mxu0 %v8214
        %8756 = vmatprep.subr.bf16.mxu0 %v8231
        %8757 = vmatpush1.bf16.msra.mxu0 %v8230
        %8758 = vmatprep.subr.bf16.mxu0 %v8247
        %8759 = vmatpush1.bf16.msra.mxu0 %v8246
        %8760 = vmatprep.subr.bf16.mxu0 %v8263
        %8761 = vmatpush1.bf16.msra.mxu0 %v8262
        %8762 = vmatprep.subr.bf16.mxu0 %v8279
        %8763 = vmatpush1.bf16.msra.mxu0 %v8278
        %8764 = vmatprep.subr.bf16.mxu0 %v8295
        %8765 = vmatpush1.bf16.msra.mxu0 %v8294
        %8766 = vmatprep.subr.bf16.mxu0 %v8311
        %8767 = vmatpush1.bf16.msra.mxu0 %v8310
        %8768 = vmatprep.subr.bf16.mxu0 %v8327
        %8769 = vmatpush1.bf16.msra.mxu0 %v8326
        %8770 = vmatprep.subr.bf16.mxu0 0
        %8771 = vmatpush1.bf16.msra.mxu0 0
        %8772 = vmatprep.subr.bf16.mxu0 0
        %8773 = vmatpush1.bf16.msra.mxu0 0
        %8774 = vmatprep.subr.bf16.mxu0 0
        %8775 = vmatpush1.bf16.msra.mxu0 0
        %8776 = vmatprep.subr.bf16.mxu0 0
        %8777 = vmatpush1.bf16.msra.mxu0 0
        %8778 = vmatprep.subr.bf16.mxu0 0
        %8779 = vmatpush1.bf16.msra.mxu0 0
        %8780 = vmatprep.subr.bf16.mxu0 0
        %8781 = vmatpush1.bf16.msra.mxu0 0
        %8782 = vmatprep.subr.bf16.mxu0 0
        %8783 = vmatpush1.bf16.msra.mxu0 0
        %8784 = vmatprep.subr.bf16.mxu0 0
        %8785 = vmatpush1.bf16.msra.mxu0 0
        %8786 = vmatprep.mubr.bf16.mxu0 0
        %8787 = vmatmul.mubr.bf16.gmra.mrb[0].mxu0 %v7733
        %v8788 = vpop.f32.mrb[0].mxu0
        %v8789 = vadd.f32 %v7777, %v8788
        %v8790 = vpop.f32.mrb[0].mxu0
        %v8791 = vadd.f32 %v7781, %v8790
        %v8792 = vpop.f32.mrb[0].mxu0
        %v8793 = vadd.f32 %v7777, %v8792
        %v8794 = vpop.f32.mrb[0].mxu0
        %v8795 = vadd.f32 %v7781, %v8794
        %8796 = vmatprep.mubr.bf16.mxu0 0
        %8797 = vmatmul.mubr.bf16.gmra.mrb[0].mxu0 %v7734
        %v8798 = vpop.f32.mrb[0].mxu0
        %v8799 = vadd.f32 %v7777, %v8798
        %v8800 = vpop.f32.mrb[0].mxu0
        %v8801 = vadd.f32 %v7781, %v8800
        %v8802 = vpop.f32.mrb[0].mxu0
        %v8803 = vadd.f32 %v7777, %v8802
        %v8804 = vpop.f32.mrb[0].mxu0
        %v8805 = vadd.f32 %v7781, %v8804
        %8806 = vmatprep.mubr.bf16.mxu0 0
        %8807 = vmatmul.mubr.bf16.gmra.mrb[0].mxu0 %v7735
        %v8808 = vpop.f32.mrb[0].mxu0
        %v8809 = vadd.f32 %v7777, %v8808
        %v8810 = vpop.f32.mrb[0].mxu0
        %v8811 = vadd.f32 %v7781, %v8810
        %v8812 = vpop.f32.mrb[0].mxu0
        %v8813 = vadd.f32 %v7777, %v8812
        %v8814 = vpop.f32.mrb[0].mxu0
        %v8815 = vadd.f32 %v7781, %v8814
        %8816 = vmatprep.mubr.bf16.mxu0 0
        %8817 = vmatmul.mubr.bf16.gmra.mrb[0].mxu0 %v7736
        %v8818 = vpop.f32.mrb[0].mxu0
        %v8819 = vadd.f32 %v7777, %v8818
        %v8820 = vpop.f32.mrb[0].mxu0
        %v8821 = vadd.f32 %v7781, %v8820
        %v8822 = vpop.f32.mrb[0].mxu0
        %v8823 = vadd.f32 %v7777, %v8822
        %v8824 = vpop.f32.mrb[0].mxu0
        %v8825 = vadd.f32 %v7781, %v8824
        %8826 = vdwg.mxu0
        %8827 = vmatprep.subr.bf16.mxu0 %v8217
        %8828 = vmatpush1.bf16.msra.mxu0 %v8216
        %8829 = vmatprep.subr.bf16.mxu0 %v8233
        %8830 = vmatpush1.bf16.msra.mxu0 %v8232
        %8831 = vmatprep.subr.bf16.mxu0 %v8249
        %8832 = vmatpush1.bf16.msra.mxu0 %v8248
        %8833 = vmatprep.subr.bf16.mxu0 %v8265
        %8834 = vmatpush1.bf16.msra.mxu0 %v8264
        %8835 = vmatprep.subr.bf16.mxu0 %v8281
        %8836 = vmatpush1.bf16.msra.mxu0 %v8280
        %8837 = vmatprep.subr.bf16.mxu0 %v8297
        %8838 = vmatpush1.bf16.msra.mxu0 %v8296
        %8839 = vmatprep.subr.bf16.mxu0 %v8313
        %8840 = vmatpush1.bf16.msra.mxu0 %v8312
        %8841 = vmatprep.subr.bf16.mxu0 %v8329
        %8842 = vmatpush1.bf16.msra.mxu0 %v8328
        %8843 = vmatprep.subr.bf16.mxu0 0
        %8844 = vmatpush1.bf16.msra.mxu0 0
        %8845 = vmatprep.subr.bf16.mxu0 0
        %8846 = vmatpush1.bf16.msra.mxu0 0
        %8847 = vmatprep.subr.bf16.mxu0 0
        %8848 = vmatpush1.bf16.msra.mxu0 0
        %8849 = vmatprep.subr.bf16.mxu0 0
        %8850 = vmatpush1.bf16.msra.mxu0 0
        %8851 = vmatprep.subr.bf16.mxu0 0
        %8852 = vmatpush1.bf16.msra.mxu0 0
        %8853 = vmatprep.subr.bf16.mxu0 0
        %8854 = vmatpush1.bf16.msra.mxu0 0
        %8855 = vmatprep.subr.bf16.mxu0 0
        %8856 = vmatpush1.bf16.msra.mxu0 0
        %8857 = vmatprep.subr.bf16.mxu0 0
        %8858 = vmatpush1.bf16.msra.mxu0 0
        %8859 = vmatprep.mubr.bf16.mxu0 0
        %8860 = vmatmul.mubr.bf16.gmra.mrb[0].mxu0 %v7733
        %v8861 = vpop.f32.mrb[0].mxu0
        %v8862 = vadd.f32 %v7785, %v8861
        %v8863 = vpop.f32.mrb[0].mxu0
        %v8864 = vadd.f32 %v7789, %v8863
        %v8865 = vpop.f32.mrb[0].mxu0
        %v8866 = vadd.f32 %v7785, %v8865
        %v8867 = vpop.f32.mrb[0].mxu0
        %v8868 = vadd.f32 %v7789, %v8867
        %8869 = vmatprep.mubr.bf16.mxu0 0
        %8870 = vmatmul.mubr.bf16.gmra.mrb[0].mxu0 %v7734
        %v8871 = vpop.f32.mrb[0].mxu0
        %v8872 = vadd.f32 %v7785, %v8871
        %v8873 = vpop.f32.mrb[0].mxu0
        %v8874 = vadd.f32 %v7789, %v8873
        %v8875 = vpop.f32.mrb[0].mxu0
        %v8876 = vadd.f32 %v7785, %v8875
        %v8877 = vpop.f32.mrb[0].mxu0
        %v8878 = vadd.f32 %v7789, %v8877
        %8879 = vmatprep.mubr.bf16.mxu0 0
        %8880 = vmatmul.mubr.bf16.gmra.mrb[0].mxu0 %v7735
        %v8881 = vpop.f32.mrb[0].mxu0
        %v8882 = vadd.f32 %v7785, %v8881
        %v8883 = vpop.f32.mrb[0].mxu0
        %v8884 = vadd.f32 %v7789, %v8883
        %v8885 = vpop.f32.mrb[0].mxu0
        %v8886 = vadd.f32 %v7785, %v8885
        %v8887 = vpop.f32.mrb[0].mxu0
        %v8888 = vadd.f32 %v7789, %v8887
        %8889 = vmatprep.mubr.bf16.mxu0 0
        %8890 = vmatmul.mubr.bf16.gmra.mrb[0].mxu0 %v7736
        %v8891 = vpop.f32.mrb[0].mxu0
        %v8892 = vadd.f32 %v7785, %v8891
        %v8893 = vpop.f32.mrb[0].mxu0
        %v8894 = vadd.f32 %v7789, %v8893
        %v8895 = vpop.f32.mrb[0].mxu0
        %v8896 = vadd.f32 %v7785, %v8895
        %v8897 = vpop.f32.mrb[0].mxu0
        %v8898 = vadd.f32 %v7789, %v8897
        %8899 = vdwg.mxu0
        %8900 = vmatprep.subr.bf16.mxu0 %v8219
        %8901 = vmatpush1.bf16.msra.mxu0 %v8218
        %8902 = vmatprep.subr.bf16.mxu0 %v8235
        %8903 = vmatpush1.bf16.msra.mxu0 %v8234
        %8904 = vmatprep.subr.bf16.mxu0 %v8251
        %8905 = vmatpush1.bf16.msra.mxu0 %v8250
        %8906 = vmatprep.subr.bf16.mxu0 %v8267
        %8907 = vmatpush1.bf16.msra.mxu0 %v8266
        %8908 = vmatprep.subr.bf16.mxu0 %v8283
        %8909 = vmatpush1.bf16.msra.mxu0 %v8282
        %8910 = vmatprep.subr.bf16.mxu0 %v8299
        %8911 = vmatpush1.bf16.msra.mxu0 %v8298
        %8912 = vmatprep.subr.bf16.mxu0 %v8315
        %8913 = vmatpush1.bf16.msra.mxu0 %v8314
        %8914 = vmatprep.subr.bf16.mxu0 %v8331
        %8915 = vmatpush1.bf16.msra.mxu0 %v8330
        %8916 = vmatprep.subr.bf16.mxu0 0
        %8917 = vmatpush1.bf16.msra.mxu0 0
        %8918 = vmatprep.subr.bf16.mxu0 0
        %8919 = vmatpush1.bf16.msra.mxu0 0
        %8920 = vmatprep.subr.bf16.mxu0 0
        %8921 = vmatpush1.bf16.msra.mxu0 0
        %8922 = vmatprep.subr.bf16.mxu0 0
        %8923 = vmatpush1.bf16.msra.mxu0 0
        %8924 = vmatprep.subr.bf16.mxu0 0
        %8925 = vmatpush1.bf16.msra.mxu0 0
        %8926 = vmatprep.subr.bf16.mxu0 0
        %8927 = vmatpush1.bf16.msra.mxu0 0
        %8928 = vmatprep.subr.bf16.mxu0 0
        %8929 = vmatpush1.bf16.msra.mxu0 0
        %8930 = vmatprep.subr.bf16.mxu0 0
        %8931 = vmatpush1.bf16.msra.mxu0 0
        %8932 = vmatprep.mubr.bf16.mxu0 0
        %8933 = vmatmul.mubr.bf16.gmra.mrb[0].mxu0 %v7733
        %v8934 = vpop.f32.mrb[0].mxu0
        %v8935 = vadd.f32 %v7793, %v8934
        %v8936 = vpop.f32.mrb[0].mxu0
        %v8937 = vadd.f32 %v7797, %v8936
        %v8938 = vpop.f32.mrb[0].mxu0
        %v8939 = vadd.f32 %v7793, %v8938
        %v8940 = vpop.f32.mrb[0].mxu0
        %v8941 = vadd.f32 %v7797, %v8940
        %8942 = vmatprep.mubr.bf16.mxu0 0
        %8943 = vmatmul.mubr.bf16.gmra.mrb[0].mxu0 %v7734
        %v8944 = vpop.f32.mrb[0].mxu0
        %v8945 = vadd.f32 %v7793, %v8944
        %v8946 = vpop.f32.mrb[0].mxu0
        %v8947 = vadd.f32 %v7797, %v8946
        %v8948 = vpop.f32.mrb[0].mxu0
        %v8949 = vadd.f32 %v7793, %v8948
        %v8950 = vpop.f32.mrb[0].mxu0
        %v8951 = vadd.f32 %v7797, %v8950
        %8952 = vmatprep.mubr.bf16.mxu0 0
        %8953 = vmatmul.mubr.bf16.gmra.mrb[0].mxu0 %v7735
        %v8954 = vpop.f32.mrb[0].mxu0
        %v8955 = vadd.f32 %v7793, %v8954
        %v8956 = vpop.f32.mrb[0].mxu0
        %v8957 = vadd.f32 %v7797, %v8956
        %v8958 = vpop.f32.mrb[0].mxu0
        %v8959 = vadd.f32 %v7793, %v8958
        %v8960 = vpop.f32.mrb[0].mxu0
        %v8961 = vadd.f32 %v7797, %v8960
        %8962 = vmatprep.mubr.bf16.mxu0 0
        %8963 = vmatmul.mubr.bf16.gmra.mrb[0].mxu0 %v7736
        %v8964 = vpop.f32.mrb[0].mxu0
        %v8965 = vadd.f32 %v7793, %v8964
        %v8966 = vpop.f32.mrb[0].mxu0
        %v8967 = vadd.f32 %v7797, %v8966
        %v8968 = vpop.f32.mrb[0].mxu0
        %v8969 = vadd.f32 %v7793, %v8968
        %v8970 = vpop.f32.mrb[0].mxu0
        %v8971 = vadd.f32 %v7797, %v8970
        %8972 = vdwg.mxu0
        %8973 = vmatprep.subr.bf16.mxu0 %v8221
        %8974 = vmatpush1.bf16.msra.mxu0 %v8220
        %8975 = vmatprep.subr.bf16.mxu0 %v8237
        %8976 = vmatpush1.bf16.msra.mxu0 %v8236
        %8977 = vmatprep.subr.bf16.mxu0 %v8253
        %8978 = vmatpush1.bf16.msra.mxu0 %v8252
        %8979 = vmatprep.subr.bf16.mxu0 %v8269
        %8980 = vmatpush1.bf16.msra.mxu0 %v8268
        %8981 = vmatprep.subr.bf16.mxu0 %v8285
        %8982 = vmatpush1.bf16.msra.mxu0 %v8284
        %8983 = vmatprep.subr.bf16.mxu0 %v8301
        %8984 = vmatpush1.bf16.msra.mxu0 %v8300
        %8985 = vmatprep.subr.bf16.mxu0 %v8317
        %8986 = vmatpush1.bf16.msra.mxu0 %v8316
        %8987 = vmatprep.subr.bf16.mxu0 %v8333
        %8988 = vmatpush1.bf16.msra.mxu0 %v8332
        %8989 = vmatprep.subr.bf16.mxu0 0
        %8990 = vmatpush1.bf16.msra.mxu0 0
        %8991 = vmatprep.subr.bf16.mxu0 0
        %8992 = vmatpush1.bf16.msra.mxu0 0
        %8993 = vmatprep.subr.bf16.mxu0 0
        %8994 = vmatpush1.bf16.msra.mxu0 0
        %8995 = vmatprep.subr.bf16.mxu0 0
        %8996 = vmatpush1.bf16.msra.mxu0 0
        %8997 = vmatprep.subr.bf16.mxu0 0
        %8998 = vmatpush1.bf16.msra.mxu0 0
        %8999 = vmatprep.subr.bf16.mxu0 0
        %9000 = vmatpush1.bf16.msra.mxu0 0
        %9001 = vmatprep.subr.bf16.mxu0 0
        %9002 = vmatpush1.bf16.msra.mxu0 0
        %9003 = vmatprep.subr.bf16.mxu0 0
        %9004 = vmatpush1.bf16.msra.mxu0 0
        %9005 = vmatprep.mubr.bf16.mxu0 0
        %9006 = vmatmul.mubr.bf16.gmra.mrb[0].mxu0 %v7733
        %v9007 = vpop.f32.mrb[0].mxu0
        %v9008 = vadd.f32 %v7801, %v9007
        %v9009 = vpop.f32.mrb[0].mxu0
        %v9010 = vadd.f32 %v7805, %v9009
        %v9011 = vpop.f32.mrb[0].mxu0
        %v9012 = vadd.f32 %v7801, %v9011
        %v9013 = vpop.f32.mrb[0].mxu0
        %v9014 = vadd.f32 %v7805, %v9013
        %9015 = vmatprep.mubr.bf16.mxu0 0
        %9016 = vmatmul.mubr.bf16.gmra.mrb[0].mxu0 %v7734
        %v9017 = vpop.f32.mrb[0].mxu0
        %v9018 = vadd.f32 %v7801, %v9017
        %v9019 = vpop.f32.mrb[0].mxu0
        %v9020 = vadd.f32 %v7805, %v9019
        %v9021 = vpop.f32.mrb[0].mxu0
        %v9022 = vadd.f32 %v7801, %v9021
        %v9023 = vpop.f32.mrb[0].mxu0
        %v9024 = vadd.f32 %v7805, %v9023
        %9025 = vmatprep.mubr.bf16.mxu0 0
        %9026 = vmatmul.mubr.bf16.gmra.mrb[0].mxu0 %v7735
        %v9027 = vpop.f32.mrb[0].mxu0
        %v9028 = vadd.f32 %v7801, %v9027
        %v9029 = vpop.f32.mrb[0].mxu0
        %v9030 = vadd.f32 %v7805, %v9029
        %v9031 = vpop.f32.mrb[0].mxu0
        %v9032 = vadd.f32 %v7801, %v9031
        %v9033 = vpop.f32.mrb[0].mxu0
        %v9034 = vadd.f32 %v7805, %v9033
        %9035 = vmatprep.mubr.bf16.mxu0 0
        %9036 = vmatmul.mubr.bf16.gmra.mrb[0].mxu0 %v7736
        %v9037 = vpop.f32.mrb[0].mxu0
        %v9038 = vadd.f32 %v7801, %v9037
        %v9039 = vpop.f32.mrb[0].mxu0
        %v9040 = vadd.f32 %v7805, %v9039
        %v9041 = vpop.f32.mrb[0].mxu0
        %v9042 = vadd.f32 %v7801, %v9041
        %v9043 = vpop.f32.mrb[0].mxu0
        %v9044 = vadd.f32 %v7805, %v9043
        %9045 = vdwg.mxu0
        %v9046 = vmax.f32 %v8497, 0.0
        %v9047 = vmax.f32 %v8499, 0.0
        %v9048 = vmax.f32 %v8570, 0.0
        %v9049 = vmax.f32 %v8572, 0.0
        %v9050 = vmax.f32 %v8643, 0.0
        %v9051 = vmax.f32 %v8645, 0.0
        %v9052 = vmax.f32 %v8716, 0.0
        %v9053 = vmax.f32 %v8718, 0.0
        %v9054 = vmax.f32 %v8789, 0.0
        %v9055 = vmax.f32 %v8791, 0.0
        %v9056 = vmax.f32 %v8862, 0.0
        %v9057 = vmax.f32 %v8864, 0.0
        %v9058 = vmax.f32 %v8935, 0.0
        %v9059 = vmax.f32 %v8937, 0.0
        %v9060 = vmax.f32 %v9008, 0.0
        %v9061 = vmax.f32 %v9010, 0.0
        %v9062 = vmax.f32 %v8501, 0.0
        %v9063 = vmax.f32 %v8503, 0.0
        %v9064 = vmax.f32 %v8574, 0.0
        %v9065 = vmax.f32 %v8576, 0.0
        %v9066 = vmax.f32 %v8647, 0.0
        %v9067 = vmax.f32 %v8649, 0.0
        %v9068 = vmax.f32 %v8720, 0.0
        %v9069 = vmax.f32 %v8722, 0.0
        %v9070 = vmax.f32 %v8793, 0.0
        %v9071 = vmax.f32 %v8795, 0.0
        %v9072 = vmax.f32 %v8866, 0.0
        %v9073 = vmax.f32 %v8868, 0.0
        %v9074 = vmax.f32 %v8939, 0.0
        %v9075 = vmax.f32 %v8941, 0.0
        %v9076 = vmax.f32 %v9012, 0.0
        %v9077 = vmax.f32 %v9014, 0.0
        %v9078 = vmax.f32 %v8507, 0.0
        %v9079 = vmax.f32 %v8509, 0.0
        %v9080 = vmax.f32 %v8580, 0.0
        %v9081 = vmax.f32 %v8582, 0.0
        %v9082 = vmax.f32 %v8653, 0.0
        %v9083 = vmax.f32 %v8655, 0.0
        %v9084 = vmax.f32 %v8726, 0.0
        %v9085 = vmax.f32 %v8728, 0.0
        %v9086 = vmax.f32 %v8799, 0.0
        %v9087 = vmax.f32 %v8801, 0.0
        %v9088 = vmax.f32 %v8872, 0.0
        %v9089 = vmax.f32 %v8874, 0.0
        %v9090 = vmax.f32 %v8945, 0.0
        %v9091 = vmax.f32 %v8947, 0.0
        %v9092 = vmax.f32 %v9018, 0.0
        %v9093 = vmax.f32 %v9020, 0.0
        %v9094 = vmax.f32 %v8511, 0.0
        %v9095 = vmax.f32 %v8513, 0.0
        %v9096 = vmax.f32 %v8584, 0.0
        %v9097 = vmax.f32 %v8586, 0.0
        %v9098 = vmax.f32 %v8657, 0.0
        %v9099 = vmax.f32 %v8659, 0.0
        %v9100 = vmax.f32 %v8730, 0.0
        %v9101 = vmax.f32 %v8732, 0.0
        %v9102 = vmax.f32 %v8803, 0.0
        %v9103 = vmax.f32 %v8805, 0.0
        %v9104 = vmax.f32 %v8876, 0.0
        %v9105 = vmax.f32 %v8878, 0.0
        %v9106 = vmax.f32 %v8949, 0.0
        %v9107 = vmax.f32 %v8951, 0.0
        %v9108 = vmax.f32 %v9022, 0.0
        %v9109 = vmax.f32 %v9024, 0.0
        %v9110 = vmax.f32 %v8517, 0.0
        %v9111 = vmax.f32 %v8519, 0.0
        %v9112 = vmax.f32 %v8590, 0.0
        %v9113 = vmax.f32 %v8592, 0.0
        %v9114 = vmax.f32 %v8663, 0.0
        %v9115 = vmax.f32 %v8665, 0.0
        %v9116 = vmax.f32 %v8736, 0.0
        %v9117 = vmax.f32 %v8738, 0.0
        %v9118 = vmax.f32 %v8809, 0.0
        %v9119 = vmax.f32 %v8811, 0.0
        %v9120 = vmax.f32 %v8882, 0.0
        %v9121 = vmax.f32 %v8884, 0.0
        %v9122 = vmax.f32 %v8955, 0.0
        %v9123 = vmax.f32 %v8957, 0.0
        %v9124 = vmax.f32 %v9028, 0.0
        %v9125 = vmax.f32 %v9030, 0.0
        %v9126 = vmax.f32 %v8521, 0.0
        %v9127 = vmax.f32 %v8523, 0.0
        %v9128 = vmax.f32 %v8594, 0.0
        %v9129 = vmax.f32 %v8596, 0.0
        %v9130 = vmax.f32 %v8667, 0.0
        %v9131 = vmax.f32 %v8669, 0.0
        %v9132 = vmax.f32 %v8740, 0.0
        %v9133 = vmax.f32 %v8742, 0.0
        %v9134 = vmax.f32 %v8813, 0.0
        %v9135 = vmax.f32 %v8815, 0.0
        %v9136 = vmax.f32 %v8886, 0.0
        %v9137 = vmax.f32 %v8888, 0.0
        %v9138 = vmax.f32 %v8959, 0.0
        %v9139 = vmax.f32 %v8961, 0.0
        %v9140 = vmax.f32 %v9032, 0.0
        %v9141 = vmax.f32 %v9034, 0.0
        %v9142 = vmax.f32 %v8527, 0.0
        %v9143 = vmax.f32 %v8529, 0.0
        %v9144 = vmax.f32 %v8600, 0.0
        %v9145 = vmax.f32 %v8602, 0.0
        %v9146 = vmax.f32 %v8673, 0.0
        %v9147 = vmax.f32 %v8675, 0.0
        %v9148 = vmax.f32 %v8746, 0.0
        %v9149 = vmax.f32 %v8748, 0.0
        %v9150 = vmax.f32 %v8819, 0.0
        %v9151 = vmax.f32 %v8821, 0.0
        %v9152 = vmax.f32 %v8892, 0.0
        %v9153 = vmax.f32 %v8894, 0.0
        %v9154 = vmax.f32 %v8965, 0.0
        %v9155 = vmax.f32 %v8967, 0.0
        %v9156 = vmax.f32 %v9038, 0.0
        %v9157 = vmax.f32 %v9040, 0.0
        %v9158 = vmax.f32 %v8531, 0.0
        %v9159 = vmax.f32 %v8533, 0.0
        %v9160 = vmax.f32 %v8604, 0.0
        %v9161 = vmax.f32 %v8606, 0.0
        %v9162 = vmax.f32 %v8677, 0.0
        %v9163 = vmax.f32 %v8679, 0.0
        %v9164 = vmax.f32 %v8750, 0.0
        %v9165 = vmax.f32 %v8752, 0.0
        %v9166 = vmax.f32 %v8823, 0.0
        %v9167 = vmax.f32 %v8825, 0.0
        %v9168 = vmax.f32 %v8896, 0.0
        %v9169 = vmax.f32 %v8898, 0.0
        %v9170 = vmax.f32 %v8969, 0.0
        %v9171 = vmax.f32 %v8971, 0.0
        %v9172 = vmax.f32 %v9042, 0.0
        %v9173 = vmax.f32 %v9044, 0.0
        %s9174 = scalar_lea.vmem [#allocation5], 1024
        %v9175 = vld [vmem:[%s9174] sm:$0xf]
        %v9176 = vld [vmem:[%s9174 + $0x4] sm:$0xf]
        %v9177 = vld [vmem:[%s9174 + $0x8] sm:$0xf]
        %v9178 = vld [vmem:[%s9174 + $0xc] sm:$0xf]
        %v9179 = vld [vmem:[%s9174 + $0x10] sm:$0xf]
        %v9180 = vld [vmem:[%s9174 + $0x14] sm:$0xf]
        %v9181 = vld [vmem:[%s9174 + $0x18] sm:$0xf]
        %v9182 = vld [vmem:[%s9174 + $0x1c] sm:$0xf]
        %v9183 = vld [vmem:[%s9174 + $0x20] sm:$0xf]
        %v9184 = vld [vmem:[%s9174 + $0x24] sm:$0xf]
        %v9185 = vld [vmem:[%s9174 + $0x28] sm:$0xf]
        %v9186 = vld [vmem:[%s9174 + $0x2c] sm:$0xf]
        %v9187 = vld [vmem:[%s9174 + $0x30] sm:$0xf]
        %v9188 = vld [vmem:[%s9174 + $0x34] sm:$0xf]
        %v9189 = vld [vmem:[%s9174 + $0x38] sm:$0xf]
        %v9190 = vld [vmem:[%s9174 + $0x3c] sm:$0xf]
        %v9191 = vld [vmem:[%s9174 + $0x40] sm:$0xf]
        %v9192 = vld [vmem:[%s9174 + $0x44] sm:$0xf]
        %v9193 = vld [vmem:[%s9174 + $0x48] sm:$0xf]
        %v9194 = vld [vmem:[%s9174 + $0x4c] sm:$0xf]
        %v9195 = vld [vmem:[%s9174 + $0x50] sm:$0xf]
        %v9196 = vld [vmem:[%s9174 + $0x54] sm:$0xf]
        %v9197 = vld [vmem:[%s9174 + $0x58] sm:$0xf]
        %v9198 = vld [vmem:[%s9174 + $0x5c] sm:$0xf]
        %v9199 = vld [vmem:[%s9174 + $0x60] sm:$0xf]
        %v9200 = vld [vmem:[%s9174 + $0x64] sm:$0xf]
        %v9201 = vld [vmem:[%s9174 + $0x68] sm:$0xf]
        %v9202 = vld [vmem:[%s9174 + $0x6c] sm:$0xf]
        %v9203 = vld [vmem:[%s9174 + $0x70] sm:$0xf]
        %v9204 = vld [vmem:[%s9174 + $0x74] sm:$0xf]
        %v9205 = vld [vmem:[%s9174 + $0x78] sm:$0xf]
        %v9206 = vld [vmem:[%s9174 + $0x7c] sm:$0xf]
        %v9207 = vld [vmem:[%s9174 + $0x80] sm:$0xf]
        %v9208 = vld [vmem:[%s9174 + $0x84] sm:$0xf]
        %v9209 = vld [vmem:[%s9174 + $0x88] sm:$0xf]
        %v9210 = vld [vmem:[%s9174 + $0x8c] sm:$0xf]
        %v9211 = vld [vmem:[%s9174 + $0x90] sm:$0xf]
        %v9212 = vld [vmem:[%s9174 + $0x94] sm:$0xf]
        %v9213 = vld [vmem:[%s9174 + $0x98] sm:$0xf]
        %v9214 = vld [vmem:[%s9174 + $0x9c] sm:$0xf]
        %v9215 = vld [vmem:[%s9174 + $0xa0] sm:$0xf]
        %v9216 = vld [vmem:[%s9174 + $0xa4] sm:$0xf]
        %v9217 = vld [vmem:[%s9174 + $0xa8] sm:$0xf]
        %v9218 = vld [vmem:[%s9174 + $0xac] sm:$0xf]
        %v9219 = vld [vmem:[%s9174 + $0xb0] sm:$0xf]
        %v9220 = vld [vmem:[%s9174 + $0xb4] sm:$0xf]
        %v9221 = vld [vmem:[%s9174 + $0xb8] sm:$0xf]
        %v9222 = vld [vmem:[%s9174 + $0xbc] sm:$0xf]
        %v9223 = vld [vmem:[%s9174 + $0xc0] sm:$0xf]
        %v9224 = vld [vmem:[%s9174 + $0xc4] sm:$0xf]
        %v9225 = vld [vmem:[%s9174 + $0xc8] sm:$0xf]
        %v9226 = vld [vmem:[%s9174 + $0xcc] sm:$0xf]
        %v9227 = vld [vmem:[%s9174 + $0xd0] sm:$0xf]
        %v9228 = vld [vmem:[%s9174 + $0xd4] sm:$0xf]
        %v9229 = vld [vmem:[%s9174 + $0xd8] sm:$0xf]
        %v9230 = vld [vmem:[%s9174 + $0xdc] sm:$0xf]
        %v9231 = vld [vmem:[%s9174 + $0xe0] sm:$0xf]
        %v9232 = vld [vmem:[%s9174 + $0xe4] sm:$0xf]
        %v9233 = vld [vmem:[%s9174 + $0xe8] sm:$0xf]
        %v9234 = vld [vmem:[%s9174 + $0xec] sm:$0xf]
        %v9235 = vld [vmem:[%s9174 + $0xf0] sm:$0xf]
        %v9236 = vld [vmem:[%s9174 + $0xf4] sm:$0xf]
        %v9237 = vld [vmem:[%s9174 + $0xf8] sm:$0xf]
        %v9238 = vld [vmem:[%s9174 + $0xfc] sm:$0xf]
        %v9239 = vld [vmem:[%s9174 + $0x100] sm:$0xf]
        %v9240 = vld [vmem:[%s9174 + $0x104] sm:$0xf]
        %v9241 = vld [vmem:[%s9174 + $0x108] sm:$0xf]
        %v9242 = vld [vmem:[%s9174 + $0x10c] sm:$0xf]
        %v9243 = vld [vmem:[%s9174 + $0x110] sm:$0xf]
        %v9244 = vld [vmem:[%s9174 + $0x114] sm:$0xf]
        %v9245 = vld [vmem:[%s9174 + $0x118] sm:$0xf]
        %v9246 = vld [vmem:[%s9174 + $0x11c] sm:$0xf]
        %v9247 = vld [vmem:[%s9174 + $0x120] sm:$0xf]
        %v9248 = vld [vmem:[%s9174 + $0x124] sm:$0xf]
        %v9249 = vld [vmem:[%s9174 + $0x128] sm:$0xf]
        %v9250 = vld [vmem:[%s9174 + $0x12c] sm:$0xf]
        %v9251 = vld [vmem:[%s9174 + $0x130] sm:$0xf]
        %v9252 = vld [vmem:[%s9174 + $0x134] sm:$0xf]
        %v9253 = vld [vmem:[%s9174 + $0x138] sm:$0xf]
        %v9254 = vld [vmem:[%s9174 + $0x13c] sm:$0xf]
        %v9255 = vld [vmem:[%s9174 + $0x140] sm:$0xf]
        %v9256 = vld [vmem:[%s9174 + $0x144] sm:$0xf]
        %v9257 = vld [vmem:[%s9174 + $0x148] sm:$0xf]
        %v9258 = vld [vmem:[%s9174 + $0x14c] sm:$0xf]
        %v9259 = vld [vmem:[%s9174 + $0x150] sm:$0xf]
        %v9260 = vld [vmem:[%s9174 + $0x154] sm:$0xf]
        %v9261 = vld [vmem:[%s9174 + $0x158] sm:$0xf]
        %v9262 = vld [vmem:[%s9174 + $0x15c] sm:$0xf]
        %v9263 = vld [vmem:[%s9174 + $0x160] sm:$0xf]
        %v9264 = vld [vmem:[%s9174 + $0x164] sm:$0xf]
        %v9265 = vld [vmem:[%s9174 + $0x168] sm:$0xf]
        %v9266 = vld [vmem:[%s9174 + $0x16c] sm:$0xf]
        %v9267 = vld [vmem:[%s9174 + $0x170] sm:$0xf]
        %v9268 = vld [vmem:[%s9174 + $0x174] sm:$0xf]
        %v9269 = vld [vmem:[%s9174 + $0x178] sm:$0xf]
        %v9270 = vld [vmem:[%s9174 + $0x17c] sm:$0xf]
        %v9271 = vld [vmem:[%s9174 + $0x180] sm:$0xf]
        %v9272 = vld [vmem:[%s9174 + $0x184] sm:$0xf]
        %v9273 = vld [vmem:[%s9174 + $0x188] sm:$0xf]
        %v9274 = vld [vmem:[%s9174 + $0x18c] sm:$0xf]
        %v9275 = vld [vmem:[%s9174 + $0x190] sm:$0xf]
        %v9276 = vld [vmem:[%s9174 + $0x194] sm:$0xf]
        %v9277 = vld [vmem:[%s9174 + $0x198] sm:$0xf]
        %v9278 = vld [vmem:[%s9174 + $0x19c] sm:$0xf]
        %v9279 = vld [vmem:[%s9174 + $0x1a0] sm:$0xf]
        %v9280 = vld [vmem:[%s9174 + $0x1a4] sm:$0xf]
        %v9281 = vld [vmem:[%s9174 + $0x1a8] sm:$0xf]
        %v9282 = vld [vmem:[%s9174 + $0x1ac] sm:$0xf]
        %v9283 = vld [vmem:[%s9174 + $0x1b0] sm:$0xf]
        %v9284 = vld [vmem:[%s9174 + $0x1b4] sm:$0xf]
        %v9285 = vld [vmem:[%s9174 + $0x1b8] sm:$0xf]
        %v9286 = vld [vmem:[%s9174 + $0x1bc] sm:$0xf]
        %v9287 = vld [vmem:[%s9174 + $0x1c0] sm:$0xf]
        %v9288 = vld [vmem:[%s9174 + $0x1c4] sm:$0xf]
        %v9289 = vld [vmem:[%s9174 + $0x1c8] sm:$0xf]
        %v9290 = vld [vmem:[%s9174 + $0x1cc] sm:$0xf]
        %v9291 = vld [vmem:[%s9174 + $0x1d0] sm:$0xf]
        %v9292 = vld [vmem:[%s9174 + $0x1d4] sm:$0xf]
        %v9293 = vld [vmem:[%s9174 + $0x1d8] sm:$0xf]
        %v9294 = vld [vmem:[%s9174 + $0x1dc] sm:$0xf]
        %v9295 = vld [vmem:[%s9174 + $0x1e0] sm:$0xf]
        %v9296 = vld [vmem:[%s9174 + $0x1e4] sm:$0xf]
        %v9297 = vld [vmem:[%s9174 + $0x1e8] sm:$0xf]
        %v9298 = vld [vmem:[%s9174 + $0x1ec] sm:$0xf]
        %v9299 = vld [vmem:[%s9174 + $0x1f0] sm:$0xf]
        %v9300 = vld [vmem:[%s9174 + $0x1f4] sm:$0xf]
        %v9301 = vld [vmem:[%s9174 + $0x1f8] sm:$0xf]
        %v9302 = vld [vmem:[%s9174 + $0x1fc] sm:$0xf]
        %v9303 = vld [vmem:[%s9174 + $0x200] sm:$0xf]
        %v9304 = vld [vmem:[%s9174 + $0x204] sm:$0xf]
        %v9305 = vld [vmem:[%s9174 + $0x208] sm:$0xf]
        %v9306 = vld [vmem:[%s9174 + $0x20c] sm:$0xf]
        %v9307 = vld [vmem:[%s9174 + $0x210] sm:$0xf]
        %v9308 = vld [vmem:[%s9174 + $0x214] sm:$0xf]
        %v9309 = vld [vmem:[%s9174 + $0x218] sm:$0xf]
        %v9310 = vld [vmem:[%s9174 + $0x21c] sm:$0xf]
        %v9311 = vld [vmem:[%s9174 + $0x220] sm:$0xf]
        %v9312 = vld [vmem:[%s9174 + $0x224] sm:$0xf]
        %v9313 = vld [vmem:[%s9174 + $0x228] sm:$0xf]
        %v9314 = vld [vmem:[%s9174 + $0x22c] sm:$0xf]
        %v9315 = vld [vmem:[%s9174 + $0x230] sm:$0xf]
        %v9316 = vld [vmem:[%s9174 + $0x234] sm:$0xf]
        %v9317 = vld [vmem:[%s9174 + $0x238] sm:$0xf]
        %v9318 = vld [vmem:[%s9174 + $0x23c] sm:$0xf]
        %v9319 = vld [vmem:[%s9174 + $0x240] sm:$0xf]
        %v9320 = vld [vmem:[%s9174 + $0x244] sm:$0xf]
        %v9321 = vld [vmem:[%s9174 + $0x248] sm:$0xf]
        %v9322 = vld [vmem:[%s9174 + $0x24c] sm:$0xf]
        %v9323 = vld [vmem:[%s9174 + $0x250] sm:$0xf]
        %v9324 = vld [vmem:[%s9174 + $0x254] sm:$0xf]
        %v9325 = vld [vmem:[%s9174 + $0x258] sm:$0xf]
        %v9326 = vld [vmem:[%s9174 + $0x25c] sm:$0xf]
        %v9327 = vld [vmem:[%s9174 + $0x260] sm:$0xf]
        %v9328 = vld [vmem:[%s9174 + $0x264] sm:$0xf]
        %v9329 = vld [vmem:[%s9174 + $0x268] sm:$0xf]
        %v9330 = vld [vmem:[%s9174 + $0x26c] sm:$0xf]
        %v9331 = vld [vmem:[%s9174 + $0x270] sm:$0xf]
        %v9332 = vld [vmem:[%s9174 + $0x274] sm:$0xf]
        %v9333 = vld [vmem:[%s9174 + $0x278] sm:$0xf]
        %v9334 = vld [vmem:[%s9174 + $0x27c] sm:$0xf]
        %v9335 = vld [vmem:[%s9174 + $0x280] sm:$0xf]
        %v9336 = vld [vmem:[%s9174 + $0x284] sm:$0xf]
        %v9337 = vld [vmem:[%s9174 + $0x288] sm:$0xf]
        %v9338 = vld [vmem:[%s9174 + $0x28c] sm:$0xf]
        %v9339 = vld [vmem:[%s9174 + $0x290] sm:$0xf]
        %v9340 = vld [vmem:[%s9174 + $0x294] sm:$0xf]
        %v9341 = vld [vmem:[%s9174 + $0x298] sm:$0xf]
        %v9342 = vld [vmem:[%s9174 + $0x29c] sm:$0xf]
        %v9343 = vld [vmem:[%s9174 + $0x2a0] sm:$0xf]
        %v9344 = vld [vmem:[%s9174 + $0x2a4] sm:$0xf]
        %v9345 = vld [vmem:[%s9174 + $0x2a8] sm:$0xf]
        %v9346 = vld [vmem:[%s9174 + $0x2ac] sm:$0xf]
        %v9347 = vld [vmem:[%s9174 + $0x2b0] sm:$0xf]
        %v9348 = vld [vmem:[%s9174 + $0x2b4] sm:$0xf]
        %v9349 = vld [vmem:[%s9174 + $0x2b8] sm:$0xf]
        %v9350 = vld [vmem:[%s9174 + $0x2bc] sm:$0xf]
        %v9351 = vld [vmem:[%s9174 + $0x2c0] sm:$0xf]
        %v9352 = vld [vmem:[%s9174 + $0x2c4] sm:$0xf]
        %v9353 = vld [vmem:[%s9174 + $0x2c8] sm:$0xf]
        %v9354 = vld [vmem:[%s9174 + $0x2cc] sm:$0xf]
        %v9355 = vld [vmem:[%s9174 + $0x2d0] sm:$0xf]
        %v9356 = vld [vmem:[%s9174 + $0x2d4] sm:$0xf]
        %v9357 = vld [vmem:[%s9174 + $0x2d8] sm:$0xf]
        %v9358 = vld [vmem:[%s9174 + $0x2dc] sm:$0xf]
        %v9359 = vld [vmem:[%s9174 + $0x2e0] sm:$0xf]
        %v9360 = vld [vmem:[%s9174 + $0x2e4] sm:$0xf]
        %v9361 = vld [vmem:[%s9174 + $0x2e8] sm:$0xf]
        %v9362 = vld [vmem:[%s9174 + $0x2ec] sm:$0xf]
        %v9363 = vld [vmem:[%s9174 + $0x2f0] sm:$0xf]
        %v9364 = vld [vmem:[%s9174 + $0x2f4] sm:$0xf]
        %v9365 = vld [vmem:[%s9174 + $0x2f8] sm:$0xf]
        %v9366 = vld [vmem:[%s9174 + $0x2fc] sm:$0xf]
        %v9367 = vld [vmem:[%s9174 + $0x300] sm:$0xf]
        %v9368 = vld [vmem:[%s9174 + $0x304] sm:$0xf]
        %v9369 = vld [vmem:[%s9174 + $0x308] sm:$0xf]
        %v9370 = vld [vmem:[%s9174 + $0x30c] sm:$0xf]
        %v9371 = vld [vmem:[%s9174 + $0x310] sm:$0xf]
        %v9372 = vld [vmem:[%s9174 + $0x314] sm:$0xf]
        %v9373 = vld [vmem:[%s9174 + $0x318] sm:$0xf]
        %v9374 = vld [vmem:[%s9174 + $0x31c] sm:$0xf]
        %v9375 = vld [vmem:[%s9174 + $0x320] sm:$0xf]
        %v9376 = vld [vmem:[%s9174 + $0x324] sm:$0xf]
        %v9377 = vld [vmem:[%s9174 + $0x328] sm:$0xf]
        %v9378 = vld [vmem:[%s9174 + $0x32c] sm:$0xf]
        %v9379 = vld [vmem:[%s9174 + $0x330] sm:$0xf]
        %v9380 = vld [vmem:[%s9174 + $0x334] sm:$0xf]
        %v9381 = vld [vmem:[%s9174 + $0x338] sm:$0xf]
        %v9382 = vld [vmem:[%s9174 + $0x33c] sm:$0xf]
        %v9383 = vld [vmem:[%s9174 + $0x340] sm:$0xf]
        %v9384 = vld [vmem:[%s9174 + $0x344] sm:$0xf]
        %v9385 = vld [vmem:[%s9174 + $0x348] sm:$0xf]
        %v9386 = vld [vmem:[%s9174 + $0x34c] sm:$0xf]
        %v9387 = vld [vmem:[%s9174 + $0x350] sm:$0xf]
        %v9388 = vld [vmem:[%s9174 + $0x354] sm:$0xf]
        %v9389 = vld [vmem:[%s9174 + $0x358] sm:$0xf]
        %v9390 = vld [vmem:[%s9174 + $0x35c] sm:$0xf]
        %v9391 = vld [vmem:[%s9174 + $0x360] sm:$0xf]
        %v9392 = vld [vmem:[%s9174 + $0x364] sm:$0xf]
        %v9393 = vld [vmem:[%s9174 + $0x368] sm:$0xf]
        %v9394 = vld [vmem:[%s9174 + $0x36c] sm:$0xf]
        %v9395 = vld [vmem:[%s9174 + $0x370] sm:$0xf]
        %v9396 = vld [vmem:[%s9174 + $0x374] sm:$0xf]
        %v9397 = vld [vmem:[%s9174 + $0x378] sm:$0xf]
        %v9398 = vld [vmem:[%s9174 + $0x37c] sm:$0xf]
        %v9399 = vld [vmem:[%s9174 + $0x380] sm:$0xf]
        %v9400 = vld [vmem:[%s9174 + $0x384] sm:$0xf]
        %v9401 = vld [vmem:[%s9174 + $0x388] sm:$0xf]
        %v9402 = vld [vmem:[%s9174 + $0x38c] sm:$0xf]
        %v9403 = vld [vmem:[%s9174 + $0x390] sm:$0xf]
        %v9404 = vld [vmem:[%s9174 + $0x394] sm:$0xf]
        %v9405 = vld [vmem:[%s9174 + $0x398] sm:$0xf]
        %v9406 = vld [vmem:[%s9174 + $0x39c] sm:$0xf]
        %v9407 = vld [vmem:[%s9174 + $0x3a0] sm:$0xf]
        %v9408 = vld [vmem:[%s9174 + $0x3a4] sm:$0xf]
        %v9409 = vld [vmem:[%s9174 + $0x3a8] sm:$0xf]
        %v9410 = vld [vmem:[%s9174 + $0x3ac] sm:$0xf]
        %v9411 = vld [vmem:[%s9174 + $0x3b0] sm:$0xf]
        %v9412 = vld [vmem:[%s9174 + $0x3b4] sm:$0xf]
        %v9413 = vld [vmem:[%s9174 + $0x3b8] sm:$0xf]
        %v9414 = vld [vmem:[%s9174 + $0x3bc] sm:$0xf]
        %v9415 = vld [vmem:[%s9174 + $0x3c0] sm:$0xf]
        %v9416 = vld [vmem:[%s9174 + $0x3c4] sm:$0xf]
        %v9417 = vld [vmem:[%s9174 + $0x3c8] sm:$0xf]
        %v9418 = vld [vmem:[%s9174 + $0x3cc] sm:$0xf]
        %v9419 = vld [vmem:[%s9174 + $0x3d0] sm:$0xf]
        %v9420 = vld [vmem:[%s9174 + $0x3d4] sm:$0xf]
        %v9421 = vld [vmem:[%s9174 + $0x3d8] sm:$0xf]
        %v9422 = vld [vmem:[%s9174 + $0x3dc] sm:$0xf]
        %v9423 = vld [vmem:[%s9174 + $0x3e0] sm:$0xf]
        %v9424 = vld [vmem:[%s9174 + $0x3e4] sm:$0xf]
        %v9425 = vld [vmem:[%s9174 + $0x3e8] sm:$0xf]
        %v9426 = vld [vmem:[%s9174 + $0x3ec] sm:$0xf]
        %v9427 = vld [vmem:[%s9174 + $0x3f0] sm:$0xf]
        %v9428 = vld [vmem:[%s9174 + $0x3f4] sm:$0xf]
        %v9429 = vld [vmem:[%s9174 + $0x3f8] sm:$0xf]
        %v9430 = vld [vmem:[%s9174 + $0x3fc] sm:$0xf]
        %v9431 = vpack.c.bf16 %v9062, %v9046
        %v9432 = vpack.c.bf16 %v9063, %v9047
        %v9433 = vpack.c.bf16 %v9064, %v9048
        %v9434 = vpack.c.bf16 %v9065, %v9049
        %v9435 = vpack.c.bf16 %v9066, %v9050
        %v9436 = vpack.c.bf16 %v9067, %v9051
        %v9437 = vpack.c.bf16 %v9068, %v9052
        %v9438 = vpack.c.bf16 %v9069, %v9053
        %v9439 = vpack.c.bf16 %v9070, %v9054
        %v9440 = vpack.c.bf16 %v9071, %v9055
        %v9441 = vpack.c.bf16 %v9072, %v9056
        %v9442 = vpack.c.bf16 %v9073, %v9057
        %v9443 = vpack.c.bf16 %v9074, %v9058
        %v9444 = vpack.c.bf16 %v9075, %v9059
        %v9445 = vpack.c.bf16 %v9076, %v9060
        %v9446 = vpack.c.bf16 %v9077, %v9061
        %v9447 = vpack.c.bf16 %v9094, %v9078
        %v9448 = vpack.c.bf16 %v9095, %v9079
        %v9449 = vpack.c.bf16 %v9096, %v9080
        %v9450 = vpack.c.bf16 %v9097, %v9081
        %v9451 = vpack.c.bf16 %v9098, %v9082
        %v9452 = vpack.c.bf16 %v9099, %v9083
        %v9453 = vpack.c.bf16 %v9100, %v9084
        %v9454 = vpack.c.bf16 %v9101, %v9085
        %v9455 = vpack.c.bf16 %v9102, %v9086
        %v9456 = vpack.c.bf16 %v9103, %v9087
        %v9457 = vpack.c.bf16 %v9104, %v9088
        %v9458 = vpack.c.bf16 %v9105, %v9089
        %v9459 = vpack.c.bf16 %v9106, %v9090
        %v9460 = vpack.c.bf16 %v9107, %v9091
        %v9461 = vpack.c.bf16 %v9108, %v9092
        %v9462 = vpack.c.bf16 %v9109, %v9093
        %v9463 = vpack.c.bf16 %v9126, %v9110
        %v9464 = vpack.c.bf16 %v9127, %v9111
        %v9465 = vpack.c.bf16 %v9128, %v9112
        %v9466 = vpack.c.bf16 %v9129, %v9113
        %v9467 = vpack.c.bf16 %v9130, %v9114
        %v9468 = vpack.c.bf16 %v9131, %v9115
        %v9469 = vpack.c.bf16 %v9132, %v9116
        %v9470 = vpack.c.bf16 %v9133, %v9117
        %v9471 = vpack.c.bf16 %v9134, %v9118
        %v9472 = vpack.c.bf16 %v9135, %v9119
        %v9473 = vpack.c.bf16 %v9136, %v9120
        %v9474 = vpack.c.bf16 %v9137, %v9121
        %v9475 = vpack.c.bf16 %v9138, %v9122
        %v9476 = vpack.c.bf16 %v9139, %v9123
        %v9477 = vpack.c.bf16 %v9140, %v9124
        %v9478 = vpack.c.bf16 %v9141, %v9125
        %v9479 = vpack.c.bf16 %v9158, %v9142
        %v9480 = vpack.c.bf16 %v9159, %v9143
        %v9481 = vpack.c.bf16 %v9160, %v9144
        %v9482 = vpack.c.bf16 %v9161, %v9145
        %v9483 = vpack.c.bf16 %v9162, %v9146
        %v9484 = vpack.c.bf16 %v9163, %v9147
        %v9485 = vpack.c.bf16 %v9164, %v9148
        %v9486 = vpack.c.bf16 %v9165, %v9149
        %v9487 = vpack.c.bf16 %v9166, %v9150
        %v9488 = vpack.c.bf16 %v9167, %v9151
        %v9489 = vpack.c.bf16 %v9168, %v9152
        %v9490 = vpack.c.bf16 %v9169, %v9153
        %v9491 = vpack.c.bf16 %v9170, %v9154
        %v9492 = vpack.c.bf16 %v9171, %v9155
        %v9493 = vpack.c.bf16 %v9172, %v9156
        %v9494 = vpack.c.bf16 %v9173, %v9157
        %s9495 = scalar_lea.vmem %s9, 1
        %v9496 = vld [vmem:[%s9495] sm:$0x1]
        %v9498 = vlaneseq
        %v9499 = vshrl.u32 %v9498, 7
        %v9500 = vsub.s32 0, %v9499
        %v9501 = vrot.slane %v9496, %v9500
        %v9759 = vunpack.c.l.b16 %v9175
        %v9760 = vunpack.c.l.b16 %v9176
        %v9761 = vunpack.c.l.b16 %v9177
        %v9762 = vunpack.c.l.b16 %v9178
        %v9763 = vunpack.c.l.b16 %v9179
        %v9764 = vunpack.c.l.b16 %v9180
        %v9765 = vunpack.c.l.b16 %v9181
        %v9766 = vunpack.c.l.b16 %v9182
        %v9767 = vunpack.c.l.b16 %v9183
        %v9768 = vunpack.c.l.b16 %v9184
        %v9769 = vunpack.c.l.b16 %v9185
        %v9770 = vunpack.c.l.b16 %v9186
        %v9771 = vunpack.c.l.b16 %v9187
        %v9772 = vunpack.c.l.b16 %v9188
        %v9773 = vunpack.c.l.b16 %v9189
        %v9774 = vunpack.c.l.b16 %v9190
        %v9775 = vunpack.c.l.b16 %v9191
        %v9776 = vunpack.c.l.b16 %v9192
        %v9777 = vunpack.c.l.b16 %v9193
        %v9778 = vunpack.c.l.b16 %v9194
        %v9779 = vunpack.c.l.b16 %v9195
        %v9780 = vunpack.c.l.b16 %v9196
        %v9781 = vunpack.c.l.b16 %v9197
        %v9782 = vunpack.c.l.b16 %v9198
        %v9783 = vunpack.c.l.b16 %v9199
        %v9784 = vunpack.c.l.b16 %v9200
        %v9785 = vunpack.c.l.b16 %v9201
        %v9786 = vunpack.c.l.b16 %v9202
        %v9787 = vunpack.c.l.b16 %v9203
        %v9788 = vunpack.c.l.b16 %v9204
        %v9789 = vunpack.c.l.b16 %v9205
        %v9790 = vunpack.c.l.b16 %v9206
        %v9791 = vunpack.c.l.b16 %v9207
        %v9792 = vunpack.c.l.b16 %v9208
        %v9793 = vunpack.c.l.b16 %v9209
        %v9794 = vunpack.c.l.b16 %v9210
        %v9795 = vunpack.c.l.b16 %v9211
        %v9796 = vunpack.c.l.b16 %v9212
        %v9797 = vunpack.c.l.b16 %v9213
        %v9798 = vunpack.c.l.b16 %v9214
        %v9799 = vunpack.c.l.b16 %v9215
        %v9800 = vunpack.c.l.b16 %v9216
        %v9801 = vunpack.c.l.b16 %v9217
        %v9802 = vunpack.c.l.b16 %v9218
        %v9803 = vunpack.c.l.b16 %v9219
        %v9804 = vunpack.c.l.b16 %v9220
        %v9805 = vunpack.c.l.b16 %v9221
        %v9806 = vunpack.c.l.b16 %v9222
        %v9807 = vunpack.c.l.b16 %v9223
        %v9808 = vunpack.c.l.b16 %v9224
        %v9809 = vunpack.c.l.b16 %v9225
        %v9810 = vunpack.c.l.b16 %v9226
        %v9811 = vunpack.c.l.b16 %v9227
        %v9812 = vunpack.c.l.b16 %v9228
        %v9813 = vunpack.c.l.b16 %v9229
        %v9814 = vunpack.c.l.b16 %v9230
        %v9815 = vunpack.c.l.b16 %v9231
        %v9816 = vunpack.c.l.b16 %v9232
        %v9817 = vunpack.c.l.b16 %v9233
        %v9818 = vunpack.c.l.b16 %v9234
        %v9819 = vunpack.c.l.b16 %v9235
        %v9820 = vunpack.c.l.b16 %v9236
        %v9821 = vunpack.c.l.b16 %v9237
        %v9822 = vunpack.c.l.b16 %v9238
        %v9823 = vunpack.c.l.b16 %v9239
        %v9824 = vunpack.c.l.b16 %v9240
        %v9825 = vunpack.c.l.b16 %v9241
        %v9826 = vunpack.c.l.b16 %v9242
        %v9827 = vunpack.c.l.b16 %v9243
        %v9828 = vunpack.c.l.b16 %v9244
        %v9829 = vunpack.c.l.b16 %v9245
        %v9830 = vunpack.c.l.b16 %v9246
        %v9831 = vunpack.c.l.b16 %v9247
        %v9832 = vunpack.c.l.b16 %v9248
        %v9833 = vunpack.c.l.b16 %v9249
        %v9834 = vunpack.c.l.b16 %v9250
        %v9835 = vunpack.c.l.b16 %v9251
        %v9836 = vunpack.c.l.b16 %v9252
        %v9837 = vunpack.c.l.b16 %v9253
        %v9838 = vunpack.c.l.b16 %v9254
        %v9839 = vunpack.c.l.b16 %v9255
        %v9840 = vunpack.c.l.b16 %v9256
        %v9841 = vunpack.c.l.b16 %v9257
        %v9842 = vunpack.c.l.b16 %v9258
        %v9843 = vunpack.c.l.b16 %v9259
        %v9844 = vunpack.c.l.b16 %v9260
        %v9845 = vunpack.c.l.b16 %v9261
        %v9846 = vunpack.c.l.b16 %v9262
        %v9847 = vunpack.c.l.b16 %v9263
        %v9848 = vunpack.c.l.b16 %v9264
        %v9849 = vunpack.c.l.b16 %v9265
        %v9850 = vunpack.c.l.b16 %v9266
        %v9851 = vunpack.c.l.b16 %v9267
        %v9852 = vunpack.c.l.b16 %v9268
        %v9853 = vunpack.c.l.b16 %v9269
        %v9854 = vunpack.c.l.b16 %v9270
        %v9855 = vunpack.c.l.b16 %v9271
        %v9856 = vunpack.c.l.b16 %v9272
        %v9857 = vunpack.c.l.b16 %v9273
        %v9858 = vunpack.c.l.b16 %v9274
        %v9859 = vunpack.c.l.b16 %v9275
        %v9860 = vunpack.c.l.b16 %v9276
        %v9861 = vunpack.c.l.b16 %v9277
        %v9862 = vunpack.c.l.b16 %v9278
        %v9863 = vunpack.c.l.b16 %v9279
        %v9864 = vunpack.c.l.b16 %v9280
        %v9865 = vunpack.c.l.b16 %v9281
        %v9866 = vunpack.c.l.b16 %v9282
        %v9867 = vunpack.c.l.b16 %v9283
        %v9868 = vunpack.c.l.b16 %v9284
        %v9869 = vunpack.c.l.b16 %v9285
        %v9870 = vunpack.c.l.b16 %v9286
        %v9871 = vunpack.c.l.b16 %v9287
        %v9872 = vunpack.c.l.b16 %v9288
        %v9873 = vunpack.c.l.b16 %v9289
        %v9874 = vunpack.c.l.b16 %v9290
        %v9875 = vunpack.c.l.b16 %v9291
        %v9876 = vunpack.c.l.b16 %v9292
        %v9877 = vunpack.c.l.b16 %v9293
        %v9878 = vunpack.c.l.b16 %v9294
        %v9879 = vunpack.c.l.b16 %v9295
        %v9880 = vunpack.c.l.b16 %v9296
        %v9881 = vunpack.c.l.b16 %v9297
        %v9882 = vunpack.c.l.b16 %v9298
        %v9883 = vunpack.c.l.b16 %v9299
        %v9884 = vunpack.c.l.b16 %v9300
        %v9885 = vunpack.c.l.b16 %v9301
        %v9886 = vunpack.c.l.b16 %v9302
        %v9887 = vunpack.c.l.b16 %v9303
        %v9888 = vunpack.c.l.b16 %v9304
        %v9889 = vunpack.c.l.b16 %v9305
        %v9890 = vunpack.c.l.b16 %v9306
        %v9891 = vunpack.c.l.b16 %v9307
        %v9892 = vunpack.c.l.b16 %v9308
        %v9893 = vunpack.c.l.b16 %v9309
        %v9894 = vunpack.c.l.b16 %v9310
        %v9895 = vunpack.c.l.b16 %v9311
        %v9896 = vunpack.c.l.b16 %v9312
        %v9897 = vunpack.c.l.b16 %v9313
        %v9898 = vunpack.c.l.b16 %v9314
        %v9899 = vunpack.c.l.b16 %v9315
        %v9900 = vunpack.c.l.b16 %v9316
        %v9901 = vunpack.c.l.b16 %v9317
        %v9902 = vunpack.c.l.b16 %v9318
        %v9903 = vunpack.c.l.b16 %v9319
        %v9904 = vunpack.c.l.b16 %v9320
        %v9905 = vunpack.c.l.b16 %v9321
        %v9906 = vunpack.c.l.b16 %v9322
        %v9907 = vunpack.c.l.b16 %v9323
        %v9908 = vunpack.c.l.b16 %v9324
        %v9909 = vunpack.c.l.b16 %v9325
        %v9910 = vunpack.c.l.b16 %v9326
        %v9911 = vunpack.c.l.b16 %v9327
        %v9912 = vunpack.c.l.b16 %v9328
        %v9913 = vunpack.c.l.b16 %v9329
        %v9914 = vunpack.c.l.b16 %v9330
        %v9915 = vunpack.c.l.b16 %v9331
        %v9916 = vunpack.c.l.b16 %v9332
        %v9917 = vunpack.c.l.b16 %v9333
        %v9918 = vunpack.c.l.b16 %v9334
        %v9919 = vunpack.c.l.b16 %v9335
        %v9920 = vunpack.c.l.b16 %v9336
        %v9921 = vunpack.c.l.b16 %v9337
        %v9922 = vunpack.c.l.b16 %v9338
        %v9923 = vunpack.c.l.b16 %v9339
        %v9924 = vunpack.c.l.b16 %v9340
        %v9925 = vunpack.c.l.b16 %v9341
        %v9926 = vunpack.c.l.b16 %v9342
        %v9927 = vunpack.c.l.b16 %v9343
        %v9928 = vunpack.c.l.b16 %v9344
        %v9929 = vunpack.c.l.b16 %v9345
        %v9930 = vunpack.c.l.b16 %v9346
        %v9931 = vunpack.c.l.b16 %v9347
        %v9932 = vunpack.c.l.b16 %v9348
        %v9933 = vunpack.c.l.b16 %v9349
        %v9934 = vunpack.c.l.b16 %v9350
        %v9935 = vunpack.c.l.b16 %v9351
        %v9936 = vunpack.c.l.b16 %v9352
        %v9937 = vunpack.c.l.b16 %v9353
        %v9938 = vunpack.c.l.b16 %v9354
        %v9939 = vunpack.c.l.b16 %v9355
        %v9940 = vunpack.c.l.b16 %v9356
        %v9941 = vunpack.c.l.b16 %v9357
        %v9942 = vunpack.c.l.b16 %v9358
        %v9943 = vunpack.c.l.b16 %v9359
        %v9944 = vunpack.c.l.b16 %v9360
        %v9945 = vunpack.c.l.b16 %v9361
        %v9946 = vunpack.c.l.b16 %v9362
        %v9947 = vunpack.c.l.b16 %v9363
        %v9948 = vunpack.c.l.b16 %v9364
        %v9949 = vunpack.c.l.b16 %v9365
        %v9950 = vunpack.c.l.b16 %v9366
        %v9951 = vunpack.c.l.b16 %v9367
        %v9952 = vunpack.c.l.b16 %v9368
        %v9953 = vunpack.c.l.b16 %v9369
        %v9954 = vunpack.c.l.b16 %v9370
        %v9955 = vunpack.c.l.b16 %v9371
        %v9956 = vunpack.c.l.b16 %v9372
        %v9957 = vunpack.c.l.b16 %v9373
        %v9958 = vunpack.c.l.b16 %v9374
        %v9959 = vunpack.c.l.b16 %v9375
        %v9960 = vunpack.c.l.b16 %v9376
        %v9961 = vunpack.c.l.b16 %v9377
        %v9962 = vunpack.c.l.b16 %v9378
        %v9963 = vunpack.c.l.b16 %v9379
        %v9964 = vunpack.c.l.b16 %v9380
        %v9965 = vunpack.c.l.b16 %v9381
        %v9966 = vunpack.c.l.b16 %v9382
        %v9967 = vunpack.c.l.b16 %v9383
        %v9968 = vunpack.c.l.b16 %v9384
        %v9969 = vunpack.c.l.b16 %v9385
        %v9970 = vunpack.c.l.b16 %v9386
        %v9971 = vunpack.c.l.b16 %v9387
        %v9972 = vunpack.c.l.b16 %v9388
        %v9973 = vunpack.c.l.b16 %v9389
        %v9974 = vunpack.c.l.b16 %v9390
        %v9975 = vunpack.c.l.b16 %v9391
        %v9976 = vunpack.c.l.b16 %v9392
        %v9977 = vunpack.c.l.b16 %v9393
        %v9978 = vunpack.c.l.b16 %v9394
        %v9979 = vunpack.c.l.b16 %v9395
        %v9980 = vunpack.c.l.b16 %v9396
        %v9981 = vunpack.c.l.b16 %v9397
        %v9982 = vunpack.c.l.b16 %v9398
        %v9983 = vunpack.c.l.b16 %v9399
        %v9984 = vunpack.c.l.b16 %v9400
        %v9985 = vunpack.c.l.b16 %v9401
        %v9986 = vunpack.c.l.b16 %v9402
        %v9987 = vunpack.c.l.b16 %v9403
        %v9988 = vunpack.c.l.b16 %v9404
        %v9989 = vunpack.c.l.b16 %v9405
        %v9990 = vunpack.c.l.b16 %v9406
        %v9991 = vunpack.c.l.b16 %v9407
        %v9992 = vunpack.c.l.b16 %v9408
        %v9993 = vunpack.c.l.b16 %v9409
        %v9994 = vunpack.c.l.b16 %v9410
        %v9995 = vunpack.c.l.b16 %v9411
        %v9996 = vunpack.c.l.b16 %v9412
        %v9997 = vunpack.c.l.b16 %v9413
        %v9998 = vunpack.c.l.b16 %v9414
        %v9999 = vunpack.c.l.b16 %v9415
        %v10000 = vunpack.c.l.b16 %v9416
        %v10001 = vunpack.c.l.b16 %v9417
        %v10002 = vunpack.c.l.b16 %v9418
        %v10003 = vunpack.c.l.b16 %v9419
        %v10004 = vunpack.c.l.b16 %v9420
        %v10005 = vunpack.c.l.b16 %v9421
        %v10006 = vunpack.c.l.b16 %v9422
        %v10007 = vunpack.c.l.b16 %v9423
        %v10008 = vunpack.c.l.b16 %v9424
        %v10009 = vunpack.c.l.b16 %v9425
        %v10010 = vunpack.c.l.b16 %v9426
        %v10011 = vunpack.c.l.b16 %v9427
        %v10012 = vunpack.c.l.b16 %v9428
        %v10013 = vunpack.c.l.b16 %v9429
        %v10014 = vunpack.c.l.b16 %v9430
        %v10015 = vpack.c.b16 %v9760, %v9759
        %v10016 = vpack.c.b16 %v9762, %v9761
        %v10017 = vpack.c.b16 %v9764, %v9763
        %v10018 = vpack.c.b16 %v9766, %v9765
        %v10019 = vpack.c.b16 %v9768, %v9767
        %v10020 = vpack.c.b16 %v9770, %v9769
        %v10021 = vpack.c.b16 %v9772, %v9771
        %v10022 = vpack.c.b16 %v9774, %v9773
        %v10023 = vpack.c.b16 %v9776, %v9775
        %v10024 = vpack.c.b16 %v9778, %v9777
        %v10025 = vpack.c.b16 %v9780, %v9779
        %v10026 = vpack.c.b16 %v9782, %v9781
        %v10027 = vpack.c.b16 %v9784, %v9783
        %v10028 = vpack.c.b16 %v9786, %v9785
        %v10029 = vpack.c.b16 %v9788, %v9787
        %v10030 = vpack.c.b16 %v9790, %v9789
        %v10031 = vpack.c.b16 %v9792, %v9791
        %v10032 = vpack.c.b16 %v9794, %v9793
        %v10033 = vpack.c.b16 %v9796, %v9795
        %v10034 = vpack.c.b16 %v9798, %v9797
        %v10035 = vpack.c.b16 %v9800, %v9799
        %v10036 = vpack.c.b16 %v9802, %v9801
        %v10037 = vpack.c.b16 %v9804, %v9803
        %v10038 = vpack.c.b16 %v9806, %v9805
        %v10039 = vpack.c.b16 %v9808, %v9807
        %v10040 = vpack.c.b16 %v9810, %v9809
        %v10041 = vpack.c.b16 %v9812, %v9811
        %v10042 = vpack.c.b16 %v9814, %v9813
        %v10043 = vpack.c.b16 %v9816, %v9815
        %v10044 = vpack.c.b16 %v9818, %v9817
        %v10045 = vpack.c.b16 %v9820, %v9819
        %v10046 = vpack.c.b16 %v9822, %v9821
        %v10047 = vpack.c.b16 %v9824, %v9823
        %v10048 = vpack.c.b16 %v9826, %v9825
        %v10049 = vpack.c.b16 %v9828, %v9827
        %v10050 = vpack.c.b16 %v9830, %v9829
        %v10051 = vpack.c.b16 %v9832, %v9831
        %v10052 = vpack.c.b16 %v9834, %v9833
        %v10053 = vpack.c.b16 %v9836, %v9835
        %v10054 = vpack.c.b16 %v9838, %v9837
        %v10055 = vpack.c.b16 %v9840, %v9839
        %v10056 = vpack.c.b16 %v9842, %v9841
        %v10057 = vpack.c.b16 %v9844, %v9843
        %v10058 = vpack.c.b16 %v9846, %v9845
        %v10059 = vpack.c.b16 %v9848, %v9847
        %v10060 = vpack.c.b16 %v9850, %v9849
        %v10061 = vpack.c.b16 %v9852, %v9851
        %v10062 = vpack.c.b16 %v9854, %v9853
        %v10063 = vpack.c.b16 %v9856, %v9855
        %v10064 = vpack.c.b16 %v9858, %v9857
        %v10065 = vpack.c.b16 %v9860, %v9859
        %v10066 = vpack.c.b16 %v9862, %v9861
        %v10067 = vpack.c.b16 %v9864, %v9863
        %v10068 = vpack.c.b16 %v9866, %v9865
        %v10069 = vpack.c.b16 %v9868, %v9867
        %v10070 = vpack.c.b16 %v9870, %v9869
        %v10071 = vpack.c.b16 %v9872, %v9871
        %v10072 = vpack.c.b16 %v9874, %v9873
        %v10073 = vpack.c.b16 %v9876, %v9875
        %v10074 = vpack.c.b16 %v9878, %v9877
        %v10075 = vpack.c.b16 %v9880, %v9879
        %v10076 = vpack.c.b16 %v9882, %v9881
        %v10077 = vpack.c.b16 %v9884, %v9883
        %v10078 = vpack.c.b16 %v9886, %v9885
        %v10079 = vpack.c.b16 %v9888, %v9887
        %v10080 = vpack.c.b16 %v9890, %v9889
        %v10081 = vpack.c.b16 %v9892, %v9891
        %v10082 = vpack.c.b16 %v9894, %v9893
        %v10083 = vpack.c.b16 %v9896, %v9895
        %v10084 = vpack.c.b16 %v9898, %v9897
        %v10085 = vpack.c.b16 %v9900, %v9899
        %v10086 = vpack.c.b16 %v9902, %v9901
        %v10087 = vpack.c.b16 %v9904, %v9903
        %v10088 = vpack.c.b16 %v9906, %v9905
        %v10089 = vpack.c.b16 %v9908, %v9907
        %v10090 = vpack.c.b16 %v9910, %v9909
        %v10091 = vpack.c.b16 %v9912, %v9911
        %v10092 = vpack.c.b16 %v9914, %v9913
        %v10093 = vpack.c.b16 %v9916, %v9915
        %v10094 = vpack.c.b16 %v9918, %v9917
        %v10095 = vpack.c.b16 %v9920, %v9919
        %v10096 = vpack.c.b16 %v9922, %v9921
        %v10097 = vpack.c.b16 %v9924, %v9923
        %v10098 = vpack.c.b16 %v9926, %v9925
        %v10099 = vpack.c.b16 %v9928, %v9927
        %v10100 = vpack.c.b16 %v9930, %v9929
        %v10101 = vpack.c.b16 %v9932, %v9931
        %v10102 = vpack.c.b16 %v9934, %v9933
        %v10103 = vpack.c.b16 %v9936, %v9935
        %v10104 = vpack.c.b16 %v9938, %v9937
        %v10105 = vpack.c.b16 %v9940, %v9939
        %v10106 = vpack.c.b16 %v9942, %v9941
        %v10107 = vpack.c.b16 %v9944, %v9943
        %v10108 = vpack.c.b16 %v9946, %v9945
        %v10109 = vpack.c.b16 %v9948, %v9947
        %v10110 = vpack.c.b16 %v9950, %v9949
        %v10111 = vpack.c.b16 %v9952, %v9951
        %v10112 = vpack.c.b16 %v9954, %v9953
        %v10113 = vpack.c.b16 %v9956, %v9955
        %v10114 = vpack.c.b16 %v9958, %v9957
        %v10115 = vpack.c.b16 %v9960, %v9959
        %v10116 = vpack.c.b16 %v9962, %v9961
        %v10117 = vpack.c.b16 %v9964, %v9963
        %v10118 = vpack.c.b16 %v9966, %v9965
        %v10119 = vpack.c.b16 %v9968, %v9967
        %v10120 = vpack.c.b16 %v9970, %v9969
        %v10121 = vpack.c.b16 %v9972, %v9971
        %v10122 = vpack.c.b16 %v9974, %v9973
        %v10123 = vpack.c.b16 %v9976, %v9975
        %v10124 = vpack.c.b16 %v9978, %v9977
        %v10125 = vpack.c.b16 %v9980, %v9979
        %v10126 = vpack.c.b16 %v9982, %v9981
        %v10127 = vpack.c.b16 %v9984, %v9983
        %v10128 = vpack.c.b16 %v9986, %v9985
        %v10129 = vpack.c.b16 %v9988, %v9987
        %v10130 = vpack.c.b16 %v9990, %v9989
        %v10131 = vpack.c.b16 %v9992, %v9991
        %v10132 = vpack.c.b16 %v9994, %v9993
        %v10133 = vpack.c.b16 %v9996, %v9995
        %v10134 = vpack.c.b16 %v9998, %v9997
        %v10135 = vpack.c.b16 %v10000, %v9999
        %v10136 = vpack.c.b16 %v10002, %v10001
        %v10137 = vpack.c.b16 %v10004, %v10003
        %v10138 = vpack.c.b16 %v10006, %v10005
        %v10139 = vpack.c.b16 %v10008, %v10007
        %v10140 = vpack.c.b16 %v10010, %v10009
        %v10141 = vpack.c.b16 %v10012, %v10011
        %v10142 = vpack.c.b16 %v10014, %v10013
        %10271 = vmatprep.subr.bf16.mxu0 0
        %10272 = vmatpush1.bf16.msra.mxu0 %v10015
        %10273 = vmatprep.subr.bf16.mxu0 0
        %10274 = vmatpush1.bf16.msra.mxu0 %v10016
        %10275 = vmatprep.subr.bf16.mxu0 0
        %10276 = vmatpush1.bf16.msra.mxu0 %v10017
        %10277 = vmatprep.subr.bf16.mxu0 0
        %10278 = vmatpush1.bf16.msra.mxu0 %v10018
        %10279 = vmatprep.subr.bf16.mxu0 0
        %10280 = vmatpush1.bf16.msra.mxu0 %v10019
        %10281 = vmatprep.subr.bf16.mxu0 0
        %10282 = vmatpush1.bf16.msra.mxu0 %v10020
        %10283 = vmatprep.subr.bf16.mxu0 0
        %10284 = vmatpush1.bf16.msra.mxu0 %v10021
        %10285 = vmatprep.subr.bf16.mxu0 0
        %10286 = vmatpush1.bf16.msra.mxu0 %v10022
        %10287 = vmatprep.subr.bf16.mxu0 0
        %10288 = vmatpush1.bf16.msra.mxu0 %v10023
        %10289 = vmatprep.subr.bf16.mxu0 0
        %10290 = vmatpush1.bf16.msra.mxu0 %v10024
        %10291 = vmatprep.subr.bf16.mxu0 0
        %10292 = vmatpush1.bf16.msra.mxu0 %v10025
        %10293 = vmatprep.subr.bf16.mxu0 0
        %10294 = vmatpush1.bf16.msra.mxu0 %v10026
        %10295 = vmatprep.subr.bf16.mxu0 0
        %10296 = vmatpush1.bf16.msra.mxu0 %v10027
        %10297 = vmatprep.subr.bf16.mxu0 0
        %10298 = vmatpush1.bf16.msra.mxu0 %v10028
        %10299 = vmatprep.subr.bf16.mxu0 0
        %10300 = vmatpush1.bf16.msra.mxu0 %v10029
        %10301 = vmatprep.subr.bf16.mxu0 0
        %10302 = vmatpush1.bf16.msra.mxu0 %v10030
        %10303 = vmatprep.mubr.bf16.mxu0 %v9432
        %10304 = vmatmul.mubr.bf16.gmra.mrb[0].mxu0 %v9431
        %v10305 = vpop.f32.mrb[0].mxu0
        %v10306 = vadd.f32 %v9501, %v10305
        %v10307 = vpop.f32.mrb[0].mxu0
        %v10308 = vpop.f32.mrb[0].mxu0
        %v10309 = vpop.f32.mrb[0].mxu0
        %10310 = vmatprep.mubr.bf16.mxu0 %v9448
        %10311 = vmatmul.mubr.bf16.gmra.mrb[0].mxu0 %v9447
        %v10312 = vpop.f32.mrb[0].mxu0
        %v10313 = vpop.f32.mrb[0].mxu0
        %v10314 = vpop.f32.mrb[0].mxu0
        %v10315 = vpop.f32.mrb[0].mxu0
        %10316 = vmatprep.mubr.bf16.mxu0 %v9464
        %10317 = vmatmul.mubr.bf16.gmra.mrb[0].mxu0 %v9463
        %v10318 = vpop.f32.mrb[0].mxu0
        %v10319 = vpop.f32.mrb[0].mxu0
        %v10320 = vpop.f32.mrb[0].mxu0
        %v10321 = vpop.f32.mrb[0].mxu0
        %10322 = vmatprep.mubr.bf16.mxu0 %v9480
        %10323 = vmatmul.mubr.bf16.gmra.mrb[0].mxu0 %v9479
        %v10324 = vpop.f32.mrb[0].mxu0
        %v10325 = vpop.f32.mrb[0].mxu0
        %v10326 = vpop.f32.mrb[0].mxu0
        %v10327 = vpop.f32.mrb[0].mxu0
        %10328 = vdwg.mxu0
        %10329 = vmatprep.subr.bf16.mxu0 0
        %10330 = vmatpush1.bf16.msra.mxu0 %v10031
        %10331 = vmatprep.subr.bf16.mxu0 0
        %10332 = vmatpush1.bf16.msra.mxu0 %v10032
        %10333 = vmatprep.subr.bf16.mxu0 0
        %10334 = vmatpush1.bf16.msra.mxu0 %v10033
        %10335 = vmatprep.subr.bf16.mxu0 0
        %10336 = vmatpush1.bf16.msra.mxu0 %v10034
        %10337 = vmatprep.subr.bf16.mxu0 0
        %10338 = vmatpush1.bf16.msra.mxu0 %v10035
        %10339 = vmatprep.subr.bf16.mxu0 0
        %10340 = vmatpush1.bf16.msra.mxu0 %v10036
        %10341 = vmatprep.subr.bf16.mxu0 0
        %10342 = vmatpush1.bf16.msra.mxu0 %v10037
        %10343 = vmatprep.subr.bf16.mxu0 0
        %10344 = vmatpush1.bf16.msra.mxu0 %v10038
        %10345 = vmatprep.subr.bf16.mxu0 0
        %10346 = vmatpush1.bf16.msra.mxu0 %v10039
        %10347 = vmatprep.subr.bf16.mxu0 0
        %10348 = vmatpush1.bf16.msra.mxu0 %v10040
        %10349 = vmatprep.subr.bf16.mxu0 0
        %10350 = vmatpush1.bf16.msra.mxu0 %v10041
        %10351 = vmatprep.subr.bf16.mxu0 0
        %10352 = vmatpush1.bf16.msra.mxu0 %v10042
        %10353 = vmatprep.subr.bf16.mxu0 0
        %10354 = vmatpush1.bf16.msra.mxu0 %v10043
        %10355 = vmatprep.subr.bf16.mxu0 0
        %10356 = vmatpush1.bf16.msra.mxu0 %v10044
        %10357 = vmatprep.subr.bf16.mxu0 0
        %10358 = vmatpush1.bf16.msra.mxu0 %v10045
        %10359 = vmatprep.subr.bf16.mxu0 0
        %10360 = vmatpush1.bf16.msra.mxu0 %v10046
        %10361 = vmatprep.mubr.bf16.mxu0 %v9434
        %10362 = vmatmul.mubr.bf16.gmra.mrb[0].mxu0 %v9433
        %v10363 = vpop.f32.mrb[0].mxu0
        %v10364 = vadd.f32 %v10306, %v10363
        %v10365 = vpop.f32.mrb[0].mxu0
        %v10366 = vpop.f32.mrb[0].mxu0
        %v10367 = vpop.f32.mrb[0].mxu0
        %10368 = vmatprep.mubr.bf16.mxu0 %v9450
        %10369 = vmatmul.mubr.bf16.gmra.mrb[0].mxu0 %v9449
        %v10370 = vpop.f32.mrb[0].mxu0
        %v10371 = vpop.f32.mrb[0].mxu0
        %v10372 = vpop.f32.mrb[0].mxu0
        %v10373 = vpop.f32.mrb[0].mxu0
        %10374 = vmatprep.mubr.bf16.mxu0 %v9466
        %10375 = vmatmul.mubr.bf16.gmra.mrb[0].mxu0 %v9465
        %v10376 = vpop.f32.mrb[0].mxu0
        %v10377 = vpop.f32.mrb[0].mxu0
        %v10378 = vpop.f32.mrb[0].mxu0
        %v10379 = vpop.f32.mrb[0].mxu0
        %10380 = vmatprep.mubr.bf16.mxu0 %v9482
        %10381 = vmatmul.mubr.bf16.gmra.mrb[0].mxu0 %v9481
        %v10382 = vpop.f32.mrb[0].mxu0
        %v10383 = vpop.f32.mrb[0].mxu0
        %v10384 = vpop.f32.mrb[0].mxu0
        %v10385 = vpop.f32.mrb[0].mxu0
        %10386 = vdwg.mxu0
        %10387 = vmatprep.subr.bf16.mxu0 0
        %10388 = vmatpush1.bf16.msra.mxu0 %v10047
        %10389 = vmatprep.subr.bf16.mxu0 0
        %10390 = vmatpush1.bf16.msra.mxu0 %v10048
        %10391 = vmatprep.subr.bf16.mxu0 0
        %10392 = vmatpush1.bf16.msra.mxu0 %v10049
        %10393 = vmatprep.subr.bf16.mxu0 0
        %10394 = vmatpush1.bf16.msra.mxu0 %v10050
        %10395 = vmatprep.subr.bf16.mxu0 0
        %10396 = vmatpush1.bf16.msra.mxu0 %v10051
        %10397 = vmatprep.subr.bf16.mxu0 0
        %10398 = vmatpush1.bf16.msra.mxu0 %v10052
        %10399 = vmatprep.subr.bf16.mxu0 0
        %10400 = vmatpush1.bf16.msra.mxu0 %v10053
        %10401 = vmatprep.subr.bf16.mxu0 0
        %10402 = vmatpush1.bf16.msra.mxu0 %v10054
        %10403 = vmatprep.subr.bf16.mxu0 0
        %10404 = vmatpush1.bf16.msra.mxu0 %v10055
        %10405 = vmatprep.subr.bf16.mxu0 0
        %10406 = vmatpush1.bf16.msra.mxu0 %v10056
        %10407 = vmatprep.subr.bf16.mxu0 0
        %10408 = vmatpush1.bf16.msra.mxu0 %v10057
        %10409 = vmatprep.subr.bf16.mxu0 0
        %10410 = vmatpush1.bf16.msra.mxu0 %v10058
        %10411 = vmatprep.subr.bf16.mxu0 0
        %10412 = vmatpush1.bf16.msra.mxu0 %v10059
        %10413 = vmatprep.subr.bf16.mxu0 0
        %10414 = vmatpush1.bf16.msra.mxu0 %v10060
        %10415 = vmatprep.subr.bf16.mxu0 0
        %10416 = vmatpush1.bf16.msra.mxu0 %v10061
        %10417 = vmatprep.subr.bf16.mxu0 0
        %10418 = vmatpush1.bf16.msra.mxu0 %v10062
        %10419 = vmatprep.mubr.bf16.mxu0 %v9436
        %10420 = vmatmul.mubr.bf16.gmra.mrb[0].mxu0 %v9435
        %v10421 = vpop.f32.mrb[0].mxu0
        %v10422 = vadd.f32 %v10364, %v10421
        %v10423 = vpop.f32.mrb[0].mxu0
        %v10424 = vpop.f32.mrb[0].mxu0
        %v10425 = vpop.f32.mrb[0].mxu0
        %10426 = vmatprep.mubr.bf16.mxu0 %v9452
        %10427 = vmatmul.mubr.bf16.gmra.mrb[0].mxu0 %v9451
        %v10428 = vpop.f32.mrb[0].mxu0
        %v10429 = vpop.f32.mrb[0].mxu0
        %v10430 = vpop.f32.mrb[0].mxu0
        %v10431 = vpop.f32.mrb[0].mxu0
        %10432 = vmatprep.mubr.bf16.mxu0 %v9468
        %10433 = vmatmul.mubr.bf16.gmra.mrb[0].mxu0 %v9467
        %v10434 = vpop.f32.mrb[0].mxu0
        %v10435 = vpop.f32.mrb[0].mxu0
        %v10436 = vpop.f32.mrb[0].mxu0
        %v10437 = vpop.f32.mrb[0].mxu0
        %10438 = vmatprep.mubr.bf16.mxu0 %v9484
        %10439 = vmatmul.mubr.bf16.gmra.mrb[0].mxu0 %v9483
        %v10440 = vpop.f32.mrb[0].mxu0
        %v10441 = vpop.f32.mrb[0].mxu0
        %v10442 = vpop.f32.mrb[0].mxu0
        %v10443 = vpop.f32.mrb[0].mxu0
        %10444 = vdwg.mxu0
        %10445 = vmatprep.subr.bf16.mxu0 0
        %10446 = vmatpush1.bf16.msra.mxu0 %v10063
        %10447 = vmatprep.subr.bf16.mxu0 0
        %10448 = vmatpush1.bf16.msra.mxu0 %v10064
        %10449 = vmatprep.subr.bf16.mxu0 0
        %10450 = vmatpush1.bf16.msra.mxu0 %v10065
        %10451 = vmatprep.subr.bf16.mxu0 0
        %10452 = vmatpush1.bf16.msra.mxu0 %v10066
        %10453 = vmatprep.subr.bf16.mxu0 0
        %10454 = vmatpush1.bf16.msra.mxu0 %v10067
        %10455 = vmatprep.subr.bf16.mxu0 0
        %10456 = vmatpush1.bf16.msra.mxu0 %v10068
        %10457 = vmatprep.subr.bf16.mxu0 0
        %10458 = vmatpush1.bf16.msra.mxu0 %v10069
        %10459 = vmatprep.subr.bf16.mxu0 0
        %10460 = vmatpush1.bf16.msra.mxu0 %v10070
        %10461 = vmatprep.subr.bf16.mxu0 0
        %10462 = vmatpush1.bf16.msra.mxu0 %v10071
        %10463 = vmatprep.subr.bf16.mxu0 0
        %10464 = vmatpush1.bf16.msra.mxu0 %v10072
        %10465 = vmatprep.subr.bf16.mxu0 0
        %10466 = vmatpush1.bf16.msra.mxu0 %v10073
        %10467 = vmatprep.subr.bf16.mxu0 0
        %10468 = vmatpush1.bf16.msra.mxu0 %v10074
        %10469 = vmatprep.subr.bf16.mxu0 0
        %10470 = vmatpush1.bf16.msra.mxu0 %v10075
        %10471 = vmatprep.subr.bf16.mxu0 0
        %10472 = vmatpush1.bf16.msra.mxu0 %v10076
        %10473 = vmatprep.subr.bf16.mxu0 0
        %10474 = vmatpush1.bf16.msra.mxu0 %v10077
        %10475 = vmatprep.subr.bf16.mxu0 0
        %10476 = vmatpush1.bf16.msra.mxu0 %v10078
        %10477 = vmatprep.mubr.bf16.mxu0 %v9438
        %10478 = vmatmul.mubr.bf16.gmra.mrb[0].mxu0 %v9437
        %v10479 = vpop.f32.mrb[0].mxu0
        %v10480 = vadd.f32 %v10422, %v10479
        %v10481 = vpop.f32.mrb[0].mxu0
        %v10482 = vpop.f32.mrb[0].mxu0
        %v10483 = vpop.f32.mrb[0].mxu0
        %10484 = vmatprep.mubr.bf16.mxu0 %v9454
        %10485 = vmatmul.mubr.bf16.gmra.mrb[0].mxu0 %v9453
        %v10486 = vpop.f32.mrb[0].mxu0
        %v10487 = vpop.f32.mrb[0].mxu0
        %v10488 = vpop.f32.mrb[0].mxu0
        %v10489 = vpop.f32.mrb[0].mxu0
        %10490 = vmatprep.mubr.bf16.mxu0 %v9470
        %10491 = vmatmul.mubr.bf16.gmra.mrb[0].mxu0 %v9469
        %v10492 = vpop.f32.mrb[0].mxu0
        %v10493 = vpop.f32.mrb[0].mxu0
        %v10494 = vpop.f32.mrb[0].mxu0
        %v10495 = vpop.f32.mrb[0].mxu0
        %10496 = vmatprep.mubr.bf16.mxu0 %v9486
        %10497 = vmatmul.mubr.bf16.gmra.mrb[0].mxu0 %v9485
        %v10498 = vpop.f32.mrb[0].mxu0
        %v10499 = vpop.f32.mrb[0].mxu0
        %v10500 = vpop.f32.mrb[0].mxu0
        %v10501 = vpop.f32.mrb[0].mxu0
        %10502 = vdwg.mxu0
        %10503 = vmatprep.subr.bf16.mxu0 0
        %10504 = vmatpush1.bf16.msra.mxu0 %v10079
        %10505 = vmatprep.subr.bf16.mxu0 0
        %10506 = vmatpush1.bf16.msra.mxu0 %v10080
        %10507 = vmatprep.subr.bf16.mxu0 0
        %10508 = vmatpush1.bf16.msra.mxu0 %v10081
        %10509 = vmatprep.subr.bf16.mxu0 0
        %10510 = vmatpush1.bf16.msra.mxu0 %v10082
        %10511 = vmatprep.subr.bf16.mxu0 0
        %10512 = vmatpush1.bf16.msra.mxu0 %v10083
        %10513 = vmatprep.subr.bf16.mxu0 0
        %10514 = vmatpush1.bf16.msra.mxu0 %v10084
        %10515 = vmatprep.subr.bf16.mxu0 0
        %10516 = vmatpush1.bf16.msra.mxu0 %v10085
        %10517 = vmatprep.subr.bf16.mxu0 0
        %10518 = vmatpush1.bf16.msra.mxu0 %v10086
        %10519 = vmatprep.subr.bf16.mxu0 0
        %10520 = vmatpush1.bf16.msra.mxu0 %v10087
        %10521 = vmatprep.subr.bf16.mxu0 0
        %10522 = vmatpush1.bf16.msra.mxu0 %v10088
        %10523 = vmatprep.subr.bf16.mxu0 0
        %10524 = vmatpush1.bf16.msra.mxu0 %v10089
        %10525 = vmatprep.subr.bf16.mxu0 0
        %10526 = vmatpush1.bf16.msra.mxu0 %v10090
        %10527 = vmatprep.subr.bf16.mxu0 0
        %10528 = vmatpush1.bf16.msra.mxu0 %v10091
        %10529 = vmatprep.subr.bf16.mxu0 0
        %10530 = vmatpush1.bf16.msra.mxu0 %v10092
        %10531 = vmatprep.subr.bf16.mxu0 0
        %10532 = vmatpush1.bf16.msra.mxu0 %v10093
        %10533 = vmatprep.subr.bf16.mxu0 0
        %10534 = vmatpush1.bf16.msra.mxu0 %v10094
        %10535 = vmatprep.mubr.bf16.mxu0 %v9440
        %10536 = vmatmul.mubr.bf16.gmra.mrb[0].mxu0 %v9439
        %v10537 = vpop.f32.mrb[0].mxu0
        %v10538 = vadd.f32 %v10480, %v10537
        %v10539 = vpop.f32.mrb[0].mxu0
        %v10540 = vpop.f32.mrb[0].mxu0
        %v10541 = vpop.f32.mrb[0].mxu0
        %10542 = vmatprep.mubr.bf16.mxu0 %v9456
        %10543 = vmatmul.mubr.bf16.gmra.mrb[0].mxu0 %v9455
        %v10544 = vpop.f32.mrb[0].mxu0
        %v10545 = vpop.f32.mrb[0].mxu0
        %v10546 = vpop.f32.mrb[0].mxu0
        %v10547 = vpop.f32.mrb[0].mxu0
        %10548 = vmatprep.mubr.bf16.mxu0 %v9472
        %10549 = vmatmul.mubr.bf16.gmra.mrb[0].mxu0 %v9471
        %v10550 = vpop.f32.mrb[0].mxu0
        %v10551 = vpop.f32.mrb[0].mxu0
        %v10552 = vpop.f32.mrb[0].mxu0
        %v10553 = vpop.f32.mrb[0].mxu0
        %10554 = vmatprep.mubr.bf16.mxu0 %v9488
        %10555 = vmatmul.mubr.bf16.gmra.mrb[0].mxu0 %v9487
        %v10556 = vpop.f32.mrb[0].mxu0
        %v10557 = vpop.f32.mrb[0].mxu0
        %v10558 = vpop.f32.mrb[0].mxu0
        %v10559 = vpop.f32.mrb[0].mxu0
        %10560 = vdwg.mxu0
        %10561 = vmatprep.subr.bf16.mxu0 0
        %10562 = vmatpush1.bf16.msra.mxu0 %v10095
        %10563 = vmatprep.subr.bf16.mxu0 0
        %10564 = vmatpush1.bf16.msra.mxu0 %v10096
        %10565 = vmatprep.subr.bf16.mxu0 0
        %10566 = vmatpush1.bf16.msra.mxu0 %v10097
        %10567 = vmatprep.subr.bf16.mxu0 0
        %10568 = vmatpush1.bf16.msra.mxu0 %v10098
        %10569 = vmatprep.subr.bf16.mxu0 0
        %10570 = vmatpush1.bf16.msra.mxu0 %v10099
        %10571 = vmatprep.subr.bf16.mxu0 0
        %10572 = vmatpush1.bf16.msra.mxu0 %v10100
        %10573 = vmatprep.subr.bf16.mxu0 0
        %10574 = vmatpush1.bf16.msra.mxu0 %v10101
        %10575 = vmatprep.subr.bf16.mxu0 0
        %10576 = vmatpush1.bf16.msra.mxu0 %v10102
        %10577 = vmatprep.subr.bf16.mxu0 0
        %10578 = vmatpush1.bf16.msra.mxu0 %v10103
        %10579 = vmatprep.subr.bf16.mxu0 0
        %10580 = vmatpush1.bf16.msra.mxu0 %v10104
        %10581 = vmatprep.subr.bf16.mxu0 0
        %10582 = vmatpush1.bf16.msra.mxu0 %v10105
        %10583 = vmatprep.subr.bf16.mxu0 0
        %10584 = vmatpush1.bf16.msra.mxu0 %v10106
        %10585 = vmatprep.subr.bf16.mxu0 0
        %10586 = vmatpush1.bf16.msra.mxu0 %v10107
        %10587 = vmatprep.subr.bf16.mxu0 0
        %10588 = vmatpush1.bf16.msra.mxu0 %v10108
        %10589 = vmatprep.subr.bf16.mxu0 0
        %10590 = vmatpush1.bf16.msra.mxu0 %v10109
        %10591 = vmatprep.subr.bf16.mxu0 0
        %10592 = vmatpush1.bf16.msra.mxu0 %v10110
        %10593 = vmatprep.mubr.bf16.mxu0 %v9442
        %10594 = vmatmul.mubr.bf16.gmra.mrb[0].mxu0 %v9441
        %v10595 = vpop.f32.mrb[0].mxu0
        %v10596 = vadd.f32 %v10538, %v10595
        %v10597 = vpop.f32.mrb[0].mxu0
        %v10598 = vpop.f32.mrb[0].mxu0
        %v10599 = vpop.f32.mrb[0].mxu0
        %10600 = vmatprep.mubr.bf16.mxu0 %v9458
        %10601 = vmatmul.mubr.bf16.gmra.mrb[0].mxu0 %v9457
        %v10602 = vpop.f32.mrb[0].mxu0
        %v10603 = vpop.f32.mrb[0].mxu0
        %v10604 = vpop.f32.mrb[0].mxu0
        %v10605 = vpop.f32.mrb[0].mxu0
        %10606 = vmatprep.mubr.bf16.mxu0 %v9474
        %10607 = vmatmul.mubr.bf16.gmra.mrb[0].mxu0 %v9473
        %v10608 = vpop.f32.mrb[0].mxu0
        %v10609 = vpop.f32.mrb[0].mxu0
        %v10610 = vpop.f32.mrb[0].mxu0
        %v10611 = vpop.f32.mrb[0].mxu0
        %10612 = vmatprep.mubr.bf16.mxu0 %v9490
        %10613 = vmatmul.mubr.bf16.gmra.mrb[0].mxu0 %v9489
        %v10614 = vpop.f32.mrb[0].mxu0
        %v10615 = vpop.f32.mrb[0].mxu0
        %v10616 = vpop.f32.mrb[0].mxu0
        %v10617 = vpop.f32.mrb[0].mxu0
        %10618 = vdwg.mxu0
        %10619 = vmatprep.subr.bf16.mxu0 0
        %10620 = vmatpush1.bf16.msra.mxu0 %v10111
        %10621 = vmatprep.subr.bf16.mxu0 0
        %10622 = vmatpush1.bf16.msra.mxu0 %v10112
        %10623 = vmatprep.subr.bf16.mxu0 0
        %10624 = vmatpush1.bf16.msra.mxu0 %v10113
        %10625 = vmatprep.subr.bf16.mxu0 0
        %10626 = vmatpush1.bf16.msra.mxu0 %v10114
        %10627 = vmatprep.subr.bf16.mxu0 0
        %10628 = vmatpush1.bf16.msra.mxu0 %v10115
        %10629 = vmatprep.subr.bf16.mxu0 0
        %10630 = vmatpush1.bf16.msra.mxu0 %v10116
        %10631 = vmatprep.subr.bf16.mxu0 0
        %10632 = vmatpush1.bf16.msra.mxu0 %v10117
        %10633 = vmatprep.subr.bf16.mxu0 0
        %10634 = vmatpush1.bf16.msra.mxu0 %v10118
        %10635 = vmatprep.subr.bf16.mxu0 0
        %10636 = vmatpush1.bf16.msra.mxu0 %v10119
        %10637 = vmatprep.subr.bf16.mxu0 0
        %10638 = vmatpush1.bf16.msra.mxu0 %v10120
        %10639 = vmatprep.subr.bf16.mxu0 0
        %10640 = vmatpush1.bf16.msra.mxu0 %v10121
        %10641 = vmatprep.subr.bf16.mxu0 0
        %10642 = vmatpush1.bf16.msra.mxu0 %v10122
        %10643 = vmatprep.subr.bf16.mxu0 0
        %10644 = vmatpush1.bf16.msra.mxu0 %v10123
        %10645 = vmatprep.subr.bf16.mxu0 0
        %10646 = vmatpush1.bf16.msra.mxu0 %v10124
        %10647 = vmatprep.subr.bf16.mxu0 0
        %10648 = vmatpush1.bf16.msra.mxu0 %v10125
        %10649 = vmatprep.subr.bf16.mxu0 0
        %10650 = vmatpush1.bf16.msra.mxu0 %v10126
        %10651 = vmatprep.mubr.bf16.mxu0 %v9444
        %10652 = vmatmul.mubr.bf16.gmra.mrb[0].mxu0 %v9443
        %v10653 = vpop.f32.mrb[0].mxu0
        %v10654 = vadd.f32 %v10596, %v10653
        %v10655 = vpop.f32.mrb[0].mxu0
        %v10656 = vpop.f32.mrb[0].mxu0
        %v10657 = vpop.f32.mrb[0].mxu0
        %10658 = vmatprep.mubr.bf16.mxu0 %v9460
        %10659 = vmatmul.mubr.bf16.gmra.mrb[0].mxu0 %v9459
        %v10660 = vpop.f32.mrb[0].mxu0
        %v10661 = vpop.f32.mrb[0].mxu0
        %v10662 = vpop.f32.mrb[0].mxu0
        %v10663 = vpop.f32.mrb[0].mxu0
        %10664 = vmatprep.mubr.bf16.mxu0 %v9476
        %10665 = vmatmul.mubr.bf16.gmra.mrb[0].mxu0 %v9475
        %v10666 = vpop.f32.mrb[0].mxu0
        %v10667 = vpop.f32.mrb[0].mxu0
        %v10668 = vpop.f32.mrb[0].mxu0
        %v10669 = vpop.f32.mrb[0].mxu0
        %10670 = vmatprep.mubr.bf16.mxu0 %v9492
        %10671 = vmatmul.mubr.bf16.gmra.mrb[0].mxu0 %v9491
        %v10672 = vpop.f32.mrb[0].mxu0
        %v10673 = vpop.f32.mrb[0].mxu0
        %v10674 = vpop.f32.mrb[0].mxu0
        %v10675 = vpop.f32.mrb[0].mxu0
        %10676 = vdwg.mxu0
        %10677 = vmatprep.subr.bf16.mxu0 0
        %10678 = vmatpush1.bf16.msra.mxu0 %v10127
        %10679 = vmatprep.subr.bf16.mxu0 0
        %10680 = vmatpush1.bf16.msra.mxu0 %v10128
        %10681 = vmatprep.subr.bf16.mxu0 0
        %10682 = vmatpush1.bf16.msra.mxu0 %v10129
        %10683 = vmatprep.subr.bf16.mxu0 0
        %10684 = vmatpush1.bf16.msra.mxu0 %v10130
        %10685 = vmatprep.subr.bf16.mxu0 0
        %10686 = vmatpush1.bf16.msra.mxu0 %v10131
        %10687 = vmatprep.subr.bf16.mxu0 0
        %10688 = vmatpush1.bf16.msra.mxu0 %v10132
        %10689 = vmatprep.subr.bf16.mxu0 0
        %10690 = vmatpush1.bf16.msra.mxu0 %v10133
        %10691 = vmatprep.subr.bf16.mxu0 0
        %10692 = vmatpush1.bf16.msra.mxu0 %v10134
        %10693 = vmatprep.subr.bf16.mxu0 0
        %10694 = vmatpush1.bf16.msra.mxu0 %v10135
        %10695 = vmatprep.subr.bf16.mxu0 0
        %10696 = vmatpush1.bf16.msra.mxu0 %v10136
        %10697 = vmatprep.subr.bf16.mxu0 0
        %10698 = vmatpush1.bf16.msra.mxu0 %v10137
        %10699 = vmatprep.subr.bf16.mxu0 0
        %10700 = vmatpush1.bf16.msra.mxu0 %v10138
        %10701 = vmatprep.subr.bf16.mxu0 0
        %10702 = vmatpush1.bf16.msra.mxu0 %v10139
        %10703 = vmatprep.subr.bf16.mxu0 0
        %10704 = vmatpush1.bf16.msra.mxu0 %v10140
        %10705 = vmatprep.subr.bf16.mxu0 0
        %10706 = vmatpush1.bf16.msra.mxu0 %v10141
        %10707 = vmatprep.subr.bf16.mxu0 0
        %10708 = vmatpush1.bf16.msra.mxu0 %v10142
        %10709 = vmatprep.mubr.bf16.mxu0 %v9446
        %10710 = vmatmul.mubr.bf16.gmra.mrb[0].mxu0 %v9445
        %v10711 = vpop.f32.mrb[0].mxu0
        %v10712 = vadd.f32 %v10654, %v10711
        %v10713 = vpop.f32.mrb[0].mxu0
        %v10714 = vpop.f32.mrb[0].mxu0
        %v10715 = vpop.f32.mrb[0].mxu0
        %10716 = vmatprep.mubr.bf16.mxu0 %v9462
        %10717 = vmatmul.mubr.bf16.gmra.mrb[0].mxu0 %v9461
        %v10718 = vpop.f32.mrb[0].mxu0
        %v10719 = vpop.f32.mrb[0].mxu0
        %v10720 = vpop.f32.mrb[0].mxu0
        %v10721 = vpop.f32.mrb[0].mxu0
        %10722 = vmatprep.mubr.bf16.mxu0 %v9478
        %10723 = vmatmul.mubr.bf16.gmra.mrb[0].mxu0 %v9477
        %v10724 = vpop.f32.mrb[0].mxu0
        %v10725 = vpop.f32.mrb[0].mxu0
        %v10726 = vpop.f32.mrb[0].mxu0
        %v10727 = vpop.f32.mrb[0].mxu0
        %10728 = vmatprep.mubr.bf16.mxu0 %v9494
        %10729 = vmatmul.mubr.bf16.gmra.mrb[0].mxu0 %v9493
        %v10730 = vpop.f32.mrb[0].mxu0
        %v10731 = vpop.f32.mrb[0].mxu0
        %v10732 = vpop.f32.mrb[0].mxu0
        %v10733 = vpop.f32.mrb[0].mxu0
        %10734 = vdwg.mxu0
        %v10735 = vadd.f32 %v7596, %v10712
        %s10736 = scalar_lea.vmem %s12, 1
        %v10737 = vld [vmem:[%s10736] sm:$0x1]
        %s10738 = scalar_lea.vmem %s13, 1
        %v10739 = vld [vmem:[%s10738] sm:$0x1]
        %10740 = vadd.xlane.f32.xlu0 %v10735
        %v10741 = vpop.xlane.xlu0 %10740
        %v10742 = vmul.f32 %v10741, %v2335
        %v10743 = vsub.f32 %v10735, %v10742
        %v10744 = vmul.f32 %v10743, %v10743
        %10745 = vadd.xlane.f32.xlu0 %v10744
        %v10746 = vpop.xlane.xlu0 %10745
        %v10747 = vmul.f32 %v10746, %v2335
        %v10748 = vadd.f32 %v10747, 1e-05
        %v10749 = vrsqrt.pop %v10748
        %v10750 = vmul.f32 %v10743, %v10749
        %v10752 = vlaneseq
        %v10753 = vshrl.u32 %v10752, 7
        %v10754 = vsub.s32 0, %v10753
        %v10755 = vrot.slane %v10737, %v10754
        %v10757 = vmul.f32 %v10750, %v10755
        %v10759 = vlaneseq
        %v10760 = vshrl.u32 %v10759, 7
        %v10761 = vsub.s32 0, %v10760
        %v10762 = vrot.slane %v10739, %v10761
        %v10764 = vadd.f32 %v10757, %v10762
        %v10765 = vld [vmem:[%s14] sm:$0xf]
        %v10766 = vld [vmem:[%s14 + $0x4] sm:$0xf]
        %v10767 = vld [vmem:[%s14 + $0x8] sm:$0xf]
        %v10768 = vld [vmem:[%s14 + $0xc] sm:$0xf]
        %v10769 = vld [vmem:[%s14 + $0x10] sm:$0xf]
        %v10770 = vld [vmem:[%s14 + $0x14] sm:$0xf]
        %v10771 = vld [vmem:[%s14 + $0x18] sm:$0xf]
        %v10772 = vld [vmem:[%s14 + $0x1c] sm:$0xf]
        %v10773 = vld [vmem:[%s14 + $0x20] sm:$0xf]
        %v10774 = vld [vmem:[%s14 + $0x24] sm:$0xf]
        %v10775 = vld [vmem:[%s14 + $0x28] sm:$0xf]
        %v10776 = vld [vmem:[%s14 + $0x2c] sm:$0xf]
        %v10777 = vld [vmem:[%s14 + $0x30] sm:$0xf]
        %v10778 = vld [vmem:[%s14 + $0x34] sm:$0xf]
        %v10779 = vld [vmem:[%s14 + $0x38] sm:$0xf]
        %v10780 = vld [vmem:[%s14 + $0x3c] sm:$0xf]
        %v10781 = vpack.c.bf16 %v10764, %v10764
        %v10782 = vld [vmem:[%s15] sm:$0x1]
        %v10799 = vunpack.c.l.b16 %v10765
        %v10800 = vunpack.c.l.b16 %v10766
        %v10801 = vunpack.c.l.b16 %v10767
        %v10802 = vunpack.c.l.b16 %v10768
        %v10803 = vunpack.c.l.b16 %v10769
        %v10804 = vunpack.c.l.b16 %v10770
        %v10805 = vunpack.c.l.b16 %v10771
        %v10806 = vunpack.c.l.b16 %v10772
        %v10807 = vunpack.c.l.b16 %v10773
        %v10808 = vunpack.c.l.b16 %v10774
        %v10809 = vunpack.c.l.b16 %v10775
        %v10810 = vunpack.c.l.b16 %v10776
        %v10811 = vunpack.c.l.b16 %v10777
        %v10812 = vunpack.c.l.b16 %v10778
        %v10813 = vunpack.c.l.b16 %v10779
        %v10814 = vunpack.c.l.b16 %v10780
        %v10815 = vpack.c.b16 %v10800, %v10799
        %v10816 = vpack.c.b16 %v10802, %v10801
        %v10817 = vpack.c.b16 %v10804, %v10803
        %v10818 = vpack.c.b16 %v10806, %v10805
        %v10819 = vpack.c.b16 %v10808, %v10807
        %v10820 = vpack.c.b16 %v10810, %v10809
        %v10821 = vpack.c.b16 %v10812, %v10811
        %v10822 = vpack.c.b16 %v10814, %v10813
        %10831 = vmatprep.subr.bf16.mxu0 0
        %10832 = vmatpush1.bf16.msra.mxu0 %v10815
        %10833 = vmatprep.subr.bf16.mxu0 0
        %10834 = vmatpush1.bf16.msra.mxu0 %v10816
        %10835 = vmatprep.subr.bf16.mxu0 0
        %10836 = vmatpush1.bf16.msra.mxu0 %v10817
        %10837 = vmatprep.subr.bf16.mxu0 0
        %10838 = vmatpush1.bf16.msra.mxu0 %v10818
        %10839 = vmatprep.subr.bf16.mxu0 0
        %10840 = vmatpush1.bf16.msra.mxu0 %v10819
        %10841 = vmatprep.subr.bf16.mxu0 0
        %10842 = vmatpush1.bf16.msra.mxu0 %v10820
        %10843 = vmatprep.subr.bf16.mxu0 0
        %10844 = vmatpush1.bf16.msra.mxu0 %v10821
        %10845 = vmatprep.subr.bf16.mxu0 0
        %10846 = vmatpush1.bf16.msra.mxu0 %v10822
        %10847 = vmatprep.subr.bf16.mxu0 0
        %10848 = vmatpush1.bf16.msra.mxu0 0
        %10849 = vmatprep.subr.bf16.mxu0 0
        %10850 = vmatpush1.bf16.msra.mxu0 0
        %10851 = vmatprep.subr.bf16.mxu0 0
        %10852 = vmatpush1.bf16.msra.mxu0 0
        %10853 = vmatprep.subr.bf16.mxu0 0
        %10854 = vmatpush1.bf16.msra.mxu0 0
        %10855 = vmatprep.subr.bf16.mxu0 0
        %10856 = vmatpush1.bf16.msra.mxu0 0
        %10857 = vmatprep.subr.bf16.mxu0 0
        %10858 = vmatpush1.bf16.msra.mxu0 0
        %10859 = vmatprep.subr.bf16.mxu0 0
        %10860 = vmatpush1.bf16.msra.mxu0 0
        %10861 = vmatprep.subr.bf16.mxu0 0
        %10862 = vmatpush1.bf16.msra.mxu0 0
        %10863 = vmatprep.mubr.bf16.mxu0 0
        %10864 = vmatmul.mubr.bf16.gmra.mrb[0].mxu0 %v10781
        %v10865 = vpop.f32.mrb[0].mxu0
        %v10866 = vadd.f32 %v10782, %v10865
        %v10867 = vpop.f32.mrb[0].mxu0
        %v10868 = vpop.f32.mrb[0].mxu0
        %v10869 = vpop.f32.mrb[0].mxu0
        %10870 = vdwg.mxu0
        %10871 = vst [vmem:[%s554] sm:$0x1] %v10866
        %s10872 = sand.u32 %s386, 1
        %s10873 = scalar_lea.sflag [#allocation4], %s10872
        %s10874 = sand.u32 %s386, 1
        %s10875 = scalar_lea.vmem [#allocation7], %s10874
        // Predicated region
        $region93: #{transformer_encoder_forward.1} parent=83 // pred_check
          %p10876 = pneg %p396
        $region94: #{transformer_encoder_forward.1} parent=83 // pred_check_branch
          %10878 = sbr.rel (%p10876) target = $region96
        $region95: #{transformer_encoder_forward.1} parent=83 // pred_region
          %s10880 = ssub.s32 16, 16
          %10881 = vsyncadd %s10873, %s10880
          %s10882 = smul.addr %s32, 16
          %s10883 = scalar_lea.hbm %s16, %s10882
          %s10885 = sshll.u32 %s10875, 4
          %s10886 = int_to_ptr.vmem [resolvable:$true] %s10885
          %10888 = dma.vmem_to_hbm [thread:$0]  %s10886, 16, %s10883, %s10873
        $region96: #{transformer_encoder_forward.1} parent=83 // pred_fallthru
          _
      $region84: #{transformer_encoder_forward.1} parent=5 // pred_fallthru
        _
      %p10889 = scmp.le.s32.totalorder 2, %s27
      // Predicated region
      $region97: #{transformer_encoder_forward.1} parent=5 // pred_check
        %p10890 = pneg %p10889
      $region98: #{transformer_encoder_forward.1} parent=5 // pred_check_branch
        %10892 = sbr.rel (%p10890) target = $region100
      $region99: #{transformer_encoder_forward.1} parent=5 // pred_region
        %s10893 = ssub.s32 %s27, 2
        // Predicated region
        $region101: #{transformer_encoder_forward.1} parent=99 // pred_check
          %p10894 = pneg %p402
        $region102: #{transformer_encoder_forward.1} parent=99 // pred_check_branch
          %10896 = sbr.rel (%p10894) target = $region104
        $region103: #{transformer_encoder_forward.1} parent=99 // pred_region
          %s10897 = sand.u32 %s387, 1
          %s10898 = scalar_lea.sflag [#allocation4], %s10897
          %s10899 = sand.u32 %s387, 1
          %s10900 = scalar_lea.vmem [#allocation7], %s10899
          %10901 = dma.done %s10898, 16
        $region104: #{transformer_encoder_forward.1} parent=99 // pred_fallthru
          _
      $region100: #{transformer_encoder_forward.1} parent=5 // pred_fallthru
        _
    $region6: #{transformer_encoder_forward.1} parent=1 // loop_footer
      %s31 = sadd.s32 1, %s27
    $region7: #{transformer_encoder_forward.1} parent=1 // loop_footer_branch
      %26 = sbr.rel target = $region3
    $region8: #{transformer_encoder_forward.1} parent=1 // loop_exit
      _
    %10902 = vsyncpa [#allocation3], 1
    %s10903 = scalar_lea.sflag [#allocation3], 1
    %10904 = vsyncpa %s10903, 1
    %10905 = vsyncpa [#allocation6], 1
    %10906 = vsyncpa [#allocation4], 1
    %s10907 = scalar_lea.sflag [#allocation4], 1
    %10908 = vsyncpa %s10907, 1

</llo_original>
